<compile_context>
chip_gen: v5e
topology: v5e:2x2
jax: 0.10.0
libtpu: 0.0.40
codegen_flags: <defaults>
</compile_context>

<pallas_src>
import jax
import jax.numpy as jnp
from jax.experimental import pallas as pl
from jax.experimental.pallas import tpu as pltpu

PAD = 8  # sublane-aligned halo rows around each staged activation


# ----------------------------- conv tower kernel ----------------------------
def tower_kernel(x_ref, e1_ref, e2_ref, e3_ref,
                 w1_ref, b1_ref, w2_ref, b2_ref, w3_ref, b3_ref,
                 feat_ref,
                 hp1, y1, hp2, y2, hp3, y3):
    """One program = one Siamese branch (all batches / H rows / W positions)."""

    def stage(dst_ref, value):
        # Place `value` at rows [PAD, PAD+M) of the halo'd scratch and zero the
        # single halo row touched on each side by the shifted reads below.
        M = value.shape[0]
        C = dst_ref.shape[1]
        dst_ref[pl.ds(PAD - 1, 1), :] = jnp.zeros((1, C), jnp.float32)
        dst_ref[pl.ds(PAD, M), :] = value
        dst_ref[pl.ds(PAD + M, 1), :] = jnp.zeros((1, C), jnp.float32)

    def conv_relu(hp_ref, e_ref, w_ref, b_ref, y_ref):
        # Conv2d(kernel=(1,3), padding=(0,1)) + bias + ReLU as ONE matmul:
        # im2col the three taps into (M, 3*Cin) and contract with (3*Cin, Cout).
        M = e_ref.shape[0]
        center = hp_ref[pl.ds(PAD, M), :]
        left = hp_ref[pl.ds(PAD - 1, M), :]      # x[w-1]
        right = hp_ref[pl.ds(PAD + 1, M), :]     # x[w+1]
        # Kill taps that would cross a (batch, h)-row boundary (= the conv's
        # zero padding).  Masks are host-precomputed from the row width, so no
        # in-kernel integer mod is needed.
        left = jnp.where(e_ref[:, 0:1] > 0.5, left, 0.0)
        right = jnp.where(e_ref[:, 1:2] > 0.5, right, 0.0)
        patches = jnp.concatenate([left, center, right], axis=1)   # (M, 3*Cin)
        y = (jnp.dot(patches, w_ref[...], preferred_element_type=jnp.float32)
             + b_ref[...])
        y_ref[...] = jnp.maximum(y, 0.0)

    def pooled(y_ref):
        # MaxPool2d((1, 2)): widths are even at every stage (72->36->18), so
        # adjacent row pairs of the flattened layout never straddle an
        # (batch, h) row.  Stride-2 sublane reads replace the old 0/1
        # selection-matrix matmul.
        M = y_ref.shape[0]
        ev = y_ref[pl.ds(0, M // 2, stride=2), :]
        od = y_ref[pl.ds(1, M // 2, stride=2), :]
        return jnp.maximum(ev, od)

    stage(hp1, x_ref[0])
    conv_relu(hp1, e1_ref, w1_ref, b1_ref, y1)      # (720, 12) @ (12, 32)
    stage(hp2, pooled(y1))
    conv_relu(hp2, e2_ref, w2_ref, b2_ref, y2)      # (360, 96) @ (96, 64)
    stage(hp3, pooled(y2))
    conv_relu(hp3, e3_ref, w3_ref, b3_ref, y3)      # (180, 192) @ (192, 16)
    feat_ref[0] = pooled(y3)                        # (90, 16) per branch


def tower(x_flat, e1, e2, e3, w1c, b1, w2c, b2, w3c, b3):
    """x_flat: (2, M0, Cin) with M0 = B*H*W; returns (2, M0//8, 16)."""
    _, M0, Cin = x_flat.shape
    Mf = M0 // 8
    c1 = w1c.shape[1]
    c2 = w2c.shape[1]
    c3 = w3c.shape[1]

    def full(a):
        return pl.BlockSpec(a.shape, lambda i: (0,) * a.ndim)

    return pl.pallas_call(
        tower_kernel,
        out_shape=jax.ShapeDtypeStruct((2, Mf, c3), jnp.float32),
        grid=(2,),
        in_specs=[
            pl.BlockSpec((1, M0, Cin), lambda i: (i, 0, 0)),
            full(e1), full(e2), full(e3),
            full(w1c), full(b1), full(w2c), full(b2), full(w3c), full(b3),
        ],
        out_specs=pl.BlockSpec((1, Mf, c3), lambda i: (i, 0, 0)),
        scratch_shapes=[
            pltpu.VMEM((PAD + M0 + PAD, Cin), jnp.float32),           # hp1
            pltpu.VMEM((M0, c1), jnp.float32),                        # y1
            pltpu.VMEM((PAD + M0 // 2 + PAD, c1), jnp.float32),       # hp2
            pltpu.VMEM((M0 // 2, c2), jnp.float32),                   # y2
            pltpu.VMEM((PAD + M0 // 4 + PAD, c2), jnp.float32),       # hp3
            pltpu.VMEM((M0 // 4, c3), jnp.float32),                   # y3
        ],
        compiler_params=pltpu.CompilerParams(
            dimension_semantics=("parallel",)),   # one branch per TC on v7x
    )(x_flat, e1, e2, e3, w1c, b1, w2c, b2, w3c, b3)


# -------------------------------- head kernel -------------------------------
def head_kernel(f1_ref, f2_ref, lw_ref, lb_ref, w1_ref, b1_ref,
                w2_ref, b2_ref, o_ref):
    def embed(f):                                           # Linear(720,16)+ReLU
        return jnp.maximum(
            jnp.dot(f, lw_ref[...], preferred_element_type=jnp.float32)
            + lb_ref[...], 0.0)

    y1 = embed(f1_ref[...])
    y2 = embed(f2_ref[...])
    mid = jnp.abs(y1 - y2)                                  # abs(y1 - y2)
    h = jnp.maximum(
        jnp.dot(mid, w1_ref[...], preferred_element_type=jnp.float32)
        + b1_ref[...], 0.0)                                 # Linear(16,128)+ReLU
    z = (jnp.dot(h, w2_ref[...], preferred_element_type=jnp.float32)
         + b2_ref[...])                                     # Linear(128,2)
    # Sigmoid: exp + reciprocal both land on the EUP slot.
    o_ref[...] = pl.reciprocal(1.0 + jnp.exp(-z), approx=True)


def head(f1, f2, lw, lb, hw1, hb1, hw2, hb2):
    B = f1.shape[0]

    def full(a):
        return pl.BlockSpec(a.shape, lambda i: (0,) * a.ndim)

    return pl.pallas_call(
        head_kernel,
        out_shape=jax.ShapeDtypeStruct((B, 2), jnp.float32),
        grid=(1,),
        in_specs=[full(f1), full(f2), full(lw), full(lb),
                  full(hw1), full(hb1), full(hw2), full(hb2)],
        out_specs=pl.BlockSpec((B, 2), lambda i: (0, 0)),
        compiler_params=pltpu.CompilerParams(
            dimension_semantics=("arbitrary",)),
    )(f1, f2, lw, lb, hw1, hb1, hw2, hb2)


# ------------------------------ host-side glue -------------------------------
def edge_mask(rows, width):
    """(rows*width, 2) f32: col0 = keep left tap, col1 = keep right tap."""
    col = jnp.arange(rows * width, dtype=jnp.int32) % width
    keep_l = (col != 0).astype(jnp.float32)
    keep_r = (col != width - 1).astype(jnp.float32)
    return jnp.stack([keep_l, keep_r], axis=1)


def siamese_forward(x1_nchw, x2_nchw, params):
    (w1, b1, w2, b2, w3, b3, lw, lb, hw1, hb1, hw2, hb2) = params
    B, Cin, H, W = x1_nchw.shape
    W8 = W // 8
    S = H * W8                     # positions per sample after the tower (45)
    c3 = w3.shape[2]               # final conv channels (16)
    M0 = B * H * W

    # Tiny XLA-side layout plumbing (no compute): stack branches, go NHWC, and
    # flatten (b, h, w) into the matmul M dimension.
    x = jnp.stack([x1_nchw, x2_nchw], axis=0)            # (2, B, C, H, W)
    x = jnp.transpose(x, (0, 1, 3, 4, 2))                # (2, B, H, W, C)
    x = x.reshape(2, M0, Cin)

    # im2col conv weights: rows [k*Cin,(k+1)*Cin) = tap k (k=0 left,1 center,2 right)
    w1c = w1.reshape(-1, w1.shape[-1])                   # (3*Cin, 32)
    w2c = w2.reshape(-1, w2.shape[-1])                   # (96, 64)
    w3c = w3.reshape(-1, w3.shape[-1])                   # (192, 16)

    # Permute Linear(720,16) rows from PyTorch's channel-major (c, h, w)
    # flatten order to the kernel's (h, w, c) row-major order.
    lw_k = jnp.transpose(lw.reshape(c3, S, -1), (1, 0, 2)).reshape(c3 * S, -1)

    e1 = edge_mask(B * H, W)
    e2 = edge_mask(B * H, W // 2)
    e3 = edge_mask(B * H, W // 4)

    feats = tower(x, e1, e2, e3, w1c, b1, w2c, b2, w3c, b3)   # (2, B*S, 16)
    feats = feats.reshape(2, B, S * c3)                       # free reshape
    return head(feats[0], feats[1], lw_k, lb, hw1, hb1, hw2, hb2)


# --------------------------- params & pure-JAX reference ---------------------
def init_params(key, in_dim):
    ks = jax.random.split(key, 12)
    s = 0.1
    w1 = s * jax.random.normal(ks[0], (3, in_dim, 32), jnp.float32)
    b1 = s * jax.random.normal(ks[1], (1, 32), jnp.float32)
    w2 = s * jax.random.normal(ks[2], (3, 32, 64), jnp.float32)
    b2 = s * jax.random.normal(ks[3], (1, 64), jnp.float32)
    w3 = s * jax.random.normal(ks[4], (3, 64, 16), jnp.float32)
    b3 = s * jax.random.normal(ks[5], (1, 16), jnp.float32)
    lw = s * jax.random.normal(ks[6], (720, 16), jnp.float32)
    lb = s * jax.random.normal(ks[7], (1, 16), jnp.float32)
    hw1 = s * jax.random.normal(ks[8], (16, 128), jnp.float32)
    hb1 = s * jax.random.normal(ks[9], (1, 128), jnp.float32)
    hw2 = s * jax.random.normal(ks[10], (128, 2), jnp.float32)
    hb2 = s * jax.random.normal(ks[11], (1, 2), jnp.float32)
    return (w1, b1, w2, b2, w3, b3, lw, lb, hw1, hb1, hw2, hb2)


def reference_forward(x1_nchw, x2_nchw, params):
    """Pure-JAX reference with identical semantics (for correctness check)."""
    (w1, b1, w2, b2, w3, b3, lw, lb, hw1, hb1, hw2, hb2) = params

    def conv(x, w, b):                                   # x: (B,H,W,C) NHWC
        Wd = x.shape[2]
        xp = jnp.pad(x, ((0, 0), (0, 0), (1, 1), (0, 0)))
        acc = sum(jnp.einsum('bhwc,cd->bhwd', xp[:, :, k:k + Wd, :], w[k])
                  for k in range(3))
        return acc + b[0]

    def tower_ref(x_nchw):
        x = jnp.transpose(x_nchw, (0, 2, 3, 1))
        for w, b in ((w1, b1), (w2, b2), (w3, b3)):
            x = jnp.maximum(conv(x, w, b), 0.0)
            x = jnp.maximum(x[:, :, 0::2, :], x[:, :, 1::2, :])
        x = jnp.transpose(x, (0, 3, 1, 2)).reshape(x.shape[0], -1)   # Flatten
        return jnp.maximum(x @ lw + lb, 0.0)

    y1, y2 = tower_ref(x1_nchw), tower_ref(x2_nchw)
    mid = jnp.abs(y1 - y2)
    h = jnp.maximum(mid @ hw1 + hb1, 0.0)
    return jax.nn.sigmoid(h @ hw2 + hb2)


if __name__ == "__main__":
    # Flatten feeds Linear(720, 16)  =>  16 * H * (W // 8) = 720.
    B, in_dim, H, W = 2, 4, 5, 72
    key = jax.random.PRNGKey(0)
    kx1, kx2, kp = jax.random.split(key, 3)
    x1 = jax.random.normal(kx1, (B, in_dim, H, W), jnp.float32)   # NCHW, like PyTorch
    x2 = jax.random.normal(kx2, (B, in_dim, H, W), jnp.float32)
    params = init_params(kp, in_dim)

    out = jax.block_until_ready(siamese_forward(x1, x2, params))
    ref = jax.block_until_ready(reference_forward(x1, x2, params))

    assert out.shape == (B, 2), out.shape
    assert jnp.allclose(out, ref, rtol=2e-3, atol=2e-3), (out, ref)
    print("KERNEL_OK")
</pallas_src>

<mosaic_0001>
module attributes {stable_mosaic.version = 11 : i64} {
  func.func @tower_kernel(%arg0: i32, %arg1: memref<1x720x4xf32, #tpu.memory_space<vmem>>, %arg2: memref<720x2xf32, #tpu.memory_space<vmem>>, %arg3: memref<360x2xf32, #tpu.memory_space<vmem>>, %arg4: memref<180x2xf32, #tpu.memory_space<vmem>>, %arg5: memref<12x32xf32, #tpu.memory_space<vmem>>, %arg6: memref<1x32xf32, #tpu.memory_space<vmem>>, %arg7: memref<96x64xf32, #tpu.memory_space<vmem>>, %arg8: memref<1x64xf32, #tpu.memory_space<vmem>>, %arg9: memref<192x16xf32, #tpu.memory_space<vmem>>, %arg10: memref<1x16xf32, #tpu.memory_space<vmem>>, %arg11: memref<1x90x16xf32, #tpu.memory_space<vmem>>, %arg12: memref<736x4xf32, #tpu.memory_space<vmem>>, %arg13: memref<720x32xf32, #tpu.memory_space<vmem>>, %arg14: memref<376x32xf32, #tpu.memory_space<vmem>>, %arg15: memref<360x64xf32, #tpu.memory_space<vmem>>, %arg16: memref<196x64xf32, #tpu.memory_space<vmem>>, %arg17: memref<180x16xf32, #tpu.memory_space<vmem>>) attributes {dimension_semantics = [#tpu.dimension_semantics<parallel>], iteration_bounds = array<i64: 2>, scalar_prefetch = 0 : i64, scratch_operands = 6 : i64, tpu.core_type = #tpu.core_type<tc>, window_params = [{transform_indices = @transform_0, window_bounds = array<i64: 1, 720, 4>}, {pipeline_mode = #tpu.pipeline_mode<synchronous>, transform_indices = @transform_1, window_bounds = array<i64: 720, 2>}, {pipeline_mode = #tpu.pipeline_mode<synchronous>, transform_indices = @transform_2, window_bounds = array<i64: 360, 2>}, {pipeline_mode = #tpu.pipeline_mode<synchronous>, transform_indices = @transform_3, window_bounds = array<i64: 180, 2>}, {pipeline_mode = #tpu.pipeline_mode<synchronous>, transform_indices = @transform_4, window_bounds = array<i64: 12, 32>}, {pipeline_mode = #tpu.pipeline_mode<synchronous>, transform_indices = @transform_5, window_bounds = array<i64: 1, 32>}, {pipeline_mode = #tpu.pipeline_mode<synchronous>, transform_indices = @transform_6, window_bounds = array<i64: 96, 64>}, {pipeline_mode = #tpu.pipeline_mode<synchronous>, transform_indices = @transform_7, window_bounds = array<i64: 1, 64>}, {pipeline_mode = #tpu.pipeline_mode<synchronous>, transform_indices = @transform_8, window_bounds = array<i64: 192, 16>}, {pipeline_mode = #tpu.pipeline_mode<synchronous>, transform_indices = @transform_9, window_bounds = array<i64: 1, 16>}, {transform_indices = @transform_10, window_bounds = array<i64: 1, 90, 16>}]} {
    %c0 = arith.constant 0 : index
    %c0_0 = arith.constant 0 : index
    %c0_1 = arith.constant 0 : index
    %0 = vector.load %arg1[%c0, %c0_0, %c0_1] : memref<1x720x4xf32, #tpu.memory_space<vmem>>, vector<1x720x4xf32>
    %1 = vector.shape_cast %0 : vector<1x720x4xf32> to vector<720x4xf32>
    %cst = arith.constant 0.000000e+00 : f32
    %2 = vector.broadcast %cst : f32 to vector<1x4xf32>
    %c7 = arith.constant 7 : index
    %c0_2 = arith.constant 0 : index
    %3 = vector.load %arg12[%c7, %c0_2] : memref<736x4xf32, #tpu.memory_space<vmem>>, vector<1x4xf32>
    tpu.vector_store %arg12[%c7, %c0_2], %2 {strides = array<i32>} : memref<736x4xf32, #tpu.memory_space<vmem>>, vector<1x4xf32>,
    %c8 = arith.constant 8 : index
    %c0_3 = arith.constant 0 : index
    %4 = vector.load %arg12[%c8, %c0_3] : memref<736x4xf32, #tpu.memory_space<vmem>>, vector<720x4xf32>
    tpu.vector_store %arg12[%c8, %c0_3], %1 {strides = array<i32>} : memref<736x4xf32, #tpu.memory_space<vmem>>, vector<720x4xf32>,
    %cst_4 = arith.constant 0.000000e+00 : f32
    %5 = vector.broadcast %cst_4 : f32 to vector<1x4xf32>
    %c728 = arith.constant 728 : index
    %c0_5 = arith.constant 0 : index
    %6 = vector.load %arg12[%c728, %c0_5] : memref<736x4xf32, #tpu.memory_space<vmem>>, vector<1x4xf32>
    tpu.vector_store %arg12[%c728, %c0_5], %5 {strides = array<i32>} : memref<736x4xf32, #tpu.memory_space<vmem>>, vector<1x4xf32>,
    %c8_6 = arith.constant 8 : index
    %c0_7 = arith.constant 0 : index
    %7 = vector.load %arg12[%c8_6, %c0_7] : memref<736x4xf32, #tpu.memory_space<vmem>>, vector<720x4xf32>
    %c7_8 = arith.constant 7 : index
    %c0_9 = arith.constant 0 : index
    %8 = vector.load %arg12[%c7_8, %c0_9] : memref<736x4xf32, #tpu.memory_space<vmem>>, vector<720x4xf32>
    %c9 = arith.constant 9 : index
    %c0_10 = arith.constant 0 : index
    %9 = vector.load %arg12[%c9, %c0_10] : memref<736x4xf32, #tpu.memory_space<vmem>>, vector<720x4xf32>
    %c0_11 = arith.constant 0 : index
    %c0_12 = arith.constant 0 : index
    %10 = vector.load %arg2[%c0_11, %c0_12] : memref<720x2xf32, #tpu.memory_space<vmem>>, vector<720x1xf32>
    %cst_13 = arith.constant 5.000000e-01 : f32
    %11 = vector.broadcast %cst_13 : f32 to vector<720x1xf32>
    %12 = arith.cmpf ogt, %10, %11 : vector<720x1xf32>
    %cst_14 = arith.constant 0.000000e+00 : f32
    %13 = vector.shape_cast %12 : vector<720x1xi1> to vector<720x1xi1>
    %14 = vector.broadcast %13 : vector<720x1xi1> to vector<720x4xi1>
    %15 = vector.broadcast %cst_14 : f32 to vector<720x4xf32>
    %16 = arith.select %14, %8, %15 : vector<720x4xi1>, vector<720x4xf32>
    %c0_15 = arith.constant 0 : index
    %c1 = arith.constant 1 : index
    %17 = vector.load %arg2[%c0_15, %c1] : memref<720x2xf32, #tpu.memory_space<vmem>>, vector<720x1xf32>
    %cst_16 = arith.constant 5.000000e-01 : f32
    %18 = vector.broadcast %cst_16 : f32 to vector<720x1xf32>
    %19 = arith.cmpf ogt, %17, %18 : vector<720x1xf32>
    %cst_17 = arith.constant 0.000000e+00 : f32
    %20 = vector.shape_cast %19 : vector<720x1xi1> to vector<720x1xi1>
    %21 = vector.broadcast %20 : vector<720x1xi1> to vector<720x4xi1>
    %22 = vector.broadcast %cst_17 : f32 to vector<720x4xf32>
    %23 = arith.select %21, %9, %22 : vector<720x4xi1>, vector<720x4xf32>
    %24 = tpu.concatenate %16, %7, %23 in 1 : vector<720x4xf32>, vector<720x4xf32>, vector<720x4xf32> -> vector<720x12xf32>
    %c0_18 = arith.constant 0 : index
    %c0_19 = arith.constant 0 : index
    %25 = vector.load %arg5[%c0_18, %c0_19] : memref<12x32xf32, #tpu.memory_space<vmem>>, vector<12x32xf32>
    %cst_20 = arith.constant dense<0.000000e+00> : vector<720x32xf32>
    %26 = tpu.matmul %24, %25, %cst_20 {dimension_numbers = #tpu.dot_dimension_numbers<[1], [0], [0], [1], [0, 0, 1, 1], [], []>} : vector<720x12xf32>, vector<12x32xf32>, vector<720x32xf32> -> vector<720x32xf32>
    %c0_21 = arith.constant 0 : index
    %c0_22 = arith.constant 0 : index
    %27 = vector.load %arg6[%c0_21, %c0_22] : memref<1x32xf32, #tpu.memory_space<vmem>>, vector<1x32xf32>
    %28 = vector.broadcast %27 : vector<1x32xf32> to vector<720x32xf32>
    %29 = arith.addf %26, %28 : vector<720x32xf32>
    %cst_23 = arith.constant 0.000000e+00 : f32
    %30 = vector.broadcast %cst_23 : f32 to vector<720x32xf32>
    %31 = arith.maximumf %29, %30 : vector<720x32xf32>
    %c0_24 = arith.constant 0 : index
    %c0_25 = arith.constant 0 : index
    %32 = vector.load %arg13[%c0_24, %c0_25] : memref<720x32xf32, #tpu.memory_space<vmem>>, vector<720x32xf32>
    tpu.vector_store %arg13[%c0_24, %c0_25], %31 {strides = array<i32>} : memref<720x32xf32, #tpu.memory_space<vmem>>, vector<720x32xf32>,
    %c0_26 = arith.constant 0 : index
    %c0_27 = arith.constant 0 : index
    %33 = tpu.strided_load %arg13[%c0_26, %c0_27] {strides = array<i32: 2, 1>} : memref<720x32xf32, #tpu.memory_space<vmem>>, vector<360x32xf32>
    %c1_28 = arith.constant 1 : index
    %c0_29 = arith.constant 0 : index
    %34 = tpu.strided_load %arg13[%c1_28, %c0_29] {strides = array<i32: 2, 1>} : memref<720x32xf32, #tpu.memory_space<vmem>>, vector<360x32xf32>
    %35 = arith.maximumf %33, %34 : vector<360x32xf32>
    %cst_30 = arith.constant 0.000000e+00 : f32
    %36 = vector.broadcast %cst_30 : f32 to vector<1x32xf32>
    %c7_31 = arith.constant 7 : index
    %c0_32 = arith.constant 0 : index
    %37 = vector.load %arg14[%c7_31, %c0_32] : memref<376x32xf32, #tpu.memory_space<vmem>>, vector<1x32xf32>
    tpu.vector_store %arg14[%c7_31, %c0_32], %36 {strides = array<i32>} : memref<376x32xf32, #tpu.memory_space<vmem>>, vector<1x32xf32>,
    %c8_33 = arith.constant 8 : index
    %c0_34 = arith.constant 0 : index
    %38 = vector.load %arg14[%c8_33, %c0_34] : memref<376x32xf32, #tpu.memory_space<vmem>>, vector<360x32xf32>
    tpu.vector_store %arg14[%c8_33, %c0_34], %35 {strides = array<i32>} : memref<376x32xf32, #tpu.memory_space<vmem>>, vector<360x32xf32>,
    %cst_35 = arith.constant 0.000000e+00 : f32
    %39 = vector.broadcast %cst_35 : f32 to vector<1x32xf32>
    %c368 = arith.constant 368 : index
    %c0_36 = arith.constant 0 : index
    %40 = vector.load %arg14[%c368, %c0_36] : memref<376x32xf32, #tpu.memory_space<vmem>>, vector<1x32xf32>
    tpu.vector_store %arg14[%c368, %c0_36], %39 {strides = array<i32>} : memref<376x32xf32, #tpu.memory_space<vmem>>, vector<1x32xf32>,
    %c8_37 = arith.constant 8 : index
    %c0_38 = arith.constant 0 : index
    %41 = vector.load %arg14[%c8_37, %c0_38] : memref<376x32xf32, #tpu.memory_space<vmem>>, vector<360x32xf32>
    %c7_39 = arith.constant 7 : index
    %c0_40 = arith.constant 0 : index
    %42 = vector.load %arg14[%c7_39, %c0_40] : memref<376x32xf32, #tpu.memory_space<vmem>>, vector<360x32xf32>
    %c9_41 = arith.constant 9 : index
    %c0_42 = arith.constant 0 : index
    %43 = vector.load %arg14[%c9_41, %c0_42] : memref<376x32xf32, #tpu.memory_space<vmem>>, vector<360x32xf32>
    %c0_43 = arith.constant 0 : index
    %c0_44 = arith.constant 0 : index
    %44 = vector.load %arg3[%c0_43, %c0_44] : memref<360x2xf32, #tpu.memory_space<vmem>>, vector<360x1xf32>
    %cst_45 = arith.constant 5.000000e-01 : f32
    %45 = vector.broadcast %cst_45 : f32 to vector<360x1xf32>
    %46 = arith.cmpf ogt, %44, %45 : vector<360x1xf32>
    %cst_46 = arith.constant 0.000000e+00 : f32
    %47 = vector.shape_cast %46 : vector<360x1xi1> to vector<360x1xi1>
    %48 = vector.broadcast %47 : vector<360x1xi1> to vector<360x32xi1>
    %49 = vector.broadcast %cst_46 : f32 to vector<360x32xf32>
    %50 = arith.select %48, %42, %49 : vector<360x32xi1>, vector<360x32xf32>
    %c0_47 = arith.constant 0 : index
    %c1_48 = arith.constant 1 : index
    %51 = vector.load %arg3[%c0_47, %c1_48] : memref<360x2xf32, #tpu.memory_space<vmem>>, vector<360x1xf32>
    %cst_49 = arith.constant 5.000000e-01 : f32
    %52 = vector.broadcast %cst_49 : f32 to vector<360x1xf32>
    %53 = arith.cmpf ogt, %51, %52 : vector<360x1xf32>
    %cst_50 = arith.constant 0.000000e+00 : f32
    %54 = vector.shape_cast %53 : vector<360x1xi1> to vector<360x1xi1>
    %55 = vector.broadcast %54 : vector<360x1xi1> to vector<360x32xi1>
    %56 = vector.broadcast %cst_50 : f32 to vector<360x32xf32>
    %57 = arith.select %55, %43, %56 : vector<360x32xi1>, vector<360x32xf32>
    %58 = tpu.concatenate %50, %41, %57 in 1 : vector<360x32xf32>, vector<360x32xf32>, vector<360x32xf32> -> vector<360x96xf32>
    %c0_51 = arith.constant 0 : index
    %c0_52 = arith.constant 0 : index
    %59 = vector.load %arg7[%c0_51, %c0_52] : memref<96x64xf32, #tpu.memory_space<vmem>>, vector<96x64xf32>
    %cst_53 = arith.constant dense<0.000000e+00> : vector<360x64xf32>
    %60 = tpu.matmul %58, %59, %cst_53 {dimension_numbers = #tpu.dot_dimension_numbers<[1], [0], [0], [1], [0, 0, 1, 1], [], []>} : vector<360x96xf32>, vector<96x64xf32>, vector<360x64xf32> -> vector<360x64xf32>
    %c0_54 = arith.constant 0 : index
    %c0_55 = arith.constant 0 : index
    %61 = vector.load %arg8[%c0_54, %c0_55] : memref<1x64xf32, #tpu.memory_space<vmem>>, vector<1x64xf32>
    %62 = vector.broadcast %61 : vector<1x64xf32> to vector<360x64xf32>
    %63 = arith.addf %60, %62 : vector<360x64xf32>
    %cst_56 = arith.constant 0.000000e+00 : f32
    %64 = vector.broadcast %cst_56 : f32 to vector<360x64xf32>
    %65 = arith.maximumf %63, %64 : vector<360x64xf32>
    %c0_57 = arith.constant 0 : index
    %c0_58 = arith.constant 0 : index
    %66 = vector.load %arg15[%c0_57, %c0_58] : memref<360x64xf32, #tpu.memory_space<vmem>>, vector<360x64xf32>
    tpu.vector_store %arg15[%c0_57, %c0_58], %65 {strides = array<i32>} : memref<360x64xf32, #tpu.memory_space<vmem>>, vector<360x64xf32>,
    %c0_59 = arith.constant 0 : index
    %c0_60 = arith.constant 0 : index
    %67 = tpu.strided_load %arg15[%c0_59, %c0_60] {strides = array<i32: 2, 1>} : memref<360x64xf32, #tpu.memory_space<vmem>>, vector<180x64xf32>
    %c1_61 = arith.constant 1 : index
    %c0_62 = arith.constant 0 : index
    %68 = tpu.strided_load %arg15[%c1_61, %c0_62] {strides = array<i32: 2, 1>} : memref<360x64xf32, #tpu.memory_space<vmem>>, vector<180x64xf32>
    %69 = arith.maximumf %67, %68 : vector<180x64xf32>
    %cst_63 = arith.constant 0.000000e+00 : f32
    %70 = vector.broadcast %cst_63 : f32 to vector<1x64xf32>
    %c7_64 = arith.constant 7 : index
    %c0_65 = arith.constant 0 : index
    %71 = vector.load %arg16[%c7_64, %c0_65] : memref<196x64xf32, #tpu.memory_space<vmem>>, vector<1x64xf32>
    tpu.vector_store %arg16[%c7_64, %c0_65], %70 {strides = array<i32>} : memref<196x64xf32, #tpu.memory_space<vmem>>, vector<1x64xf32>,
    %c8_66 = arith.constant 8 : index
    %c0_67 = arith.constant 0 : index
    %72 = vector.load %arg16[%c8_66, %c0_67] : memref<196x64xf32, #tpu.memory_space<vmem>>, vector<180x64xf32>
    tpu.vector_store %arg16[%c8_66, %c0_67], %69 {strides = array<i32>} : memref<196x64xf32, #tpu.memory_space<vmem>>, vector<180x64xf32>,
    %cst_68 = arith.constant 0.000000e+00 : f32
    %73 = vector.broadcast %cst_68 : f32 to vector<1x64xf32>
    %c188 = arith.constant 188 : index
    %c0_69 = arith.constant 0 : index
    %74 = vector.load %arg16[%c188, %c0_69] : memref<196x64xf32, #tpu.memory_space<vmem>>, vector<1x64xf32>
    tpu.vector_store %arg16[%c188, %c0_69], %73 {strides = array<i32>} : memref<196x64xf32, #tpu.memory_space<vmem>>, vector<1x64xf32>,
    %c8_70 = arith.constant 8 : index
    %c0_71 = arith.constant 0 : index
    %75 = vector.load %arg16[%c8_70, %c0_71] : memref<196x64xf32, #tpu.memory_space<vmem>>, vector<180x64xf32>
    %c7_72 = arith.constant 7 : index
    %c0_73 = arith.constant 0 : index
    %76 = vector.load %arg16[%c7_72, %c0_73] : memref<196x64xf32, #tpu.memory_space<vmem>>, vector<180x64xf32>
    %c9_74 = arith.constant 9 : index
    %c0_75 = arith.constant 0 : index
    %77 = vector.load %arg16[%c9_74, %c0_75] : memref<196x64xf32, #tpu.memory_space<vmem>>, vector<180x64xf32>
    %c0_76 = arith.constant 0 : index
    %c0_77 = arith.constant 0 : index
    %78 = vector.load %arg4[%c0_76, %c0_77] : memref<180x2xf32, #tpu.memory_space<vmem>>, vector<180x1xf32>
    %cst_78 = arith.constant 5.000000e-01 : f32
    %79 = vector.broadcast %cst_78 : f32 to vector<180x1xf32>
    %80 = arith.cmpf ogt, %78, %79 : vector<180x1xf32>
    %cst_79 = arith.constant 0.000000e+00 : f32
    %81 = vector.shape_cast %80 : vector<180x1xi1> to vector<180x1xi1>
    %82 = vector.broadcast %81 : vector<180x1xi1> to vector<180x64xi1>
    %83 = vector.broadcast %cst_79 : f32 to vector<180x64xf32>
    %84 = arith.select %82, %76, %83 : vector<180x64xi1>, vector<180x64xf32>
    %c0_80 = arith.constant 0 : index
    %c1_81 = arith.constant 1 : index
    %85 = vector.load %arg4[%c0_80, %c1_81] : memref<180x2xf32, #tpu.memory_space<vmem>>, vector<180x1xf32>
    %cst_82 = arith.constant 5.000000e-01 : f32
    %86 = vector.broadcast %cst_82 : f32 to vector<180x1xf32>
    %87 = arith.cmpf ogt, %85, %86 : vector<180x1xf32>
    %cst_83 = arith.constant 0.000000e+00 : f32
    %88 = vector.shape_cast %87 : vector<180x1xi1> to vector<180x1xi1>
    %89 = vector.broadcast %88 : vector<180x1xi1> to vector<180x64xi1>
    %90 = vector.broadcast %cst_83 : f32 to vector<180x64xf32>
    %91 = arith.select %89, %77, %90 : vector<180x64xi1>, vector<180x64xf32>
    %92 = tpu.concatenate %84, %75, %91 in 1 : vector<180x64xf32>, vector<180x64xf32>, vector<180x64xf32> -> vector<180x192xf32>
    %c0_84 = arith.constant 0 : index
    %c0_85 = arith.constant 0 : index
    %93 = vector.load %arg9[%c0_84, %c0_85] : memref<192x16xf32, #tpu.memory_space<vmem>>, vector<192x16xf32>
    %cst_86 = arith.constant dense<0.000000e+00> : vector<180x16xf32>
    %94 = tpu.matmul %92, %93, %cst_86 {dimension_numbers = #tpu.dot_dimension_numbers<[1], [0], [0], [1], [0, 0, 1, 1], [], []>} : vector<180x192xf32>, vector<192x16xf32>, vector<180x16xf32> -> vector<180x16xf32>
    %c0_87 = arith.constant 0 : index
    %c0_88 = arith.constant 0 : index
    %95 = vector.load %arg10[%c0_87, %c0_88] : memref<1x16xf32, #tpu.memory_space<vmem>>, vector<1x16xf32>
    %96 = vector.broadcast %95 : vector<1x16xf32> to vector<180x16xf32>
    %97 = arith.addf %94, %96 : vector<180x16xf32>
    %cst_89 = arith.constant 0.000000e+00 : f32
    %98 = vector.broadcast %cst_89 : f32 to vector<180x16xf32>
    %99 = arith.maximumf %97, %98 : vector<180x16xf32>
    %c0_90 = arith.constant 0 : index
    %c0_91 = arith.constant 0 : index
    %100 = vector.load %arg17[%c0_90, %c0_91] : memref<180x16xf32, #tpu.memory_space<vmem>>, vector<180x16xf32>
    tpu.vector_store %arg17[%c0_90, %c0_91], %99 {strides = array<i32>} : memref<180x16xf32, #tpu.memory_space<vmem>>, vector<180x16xf32>,
    %c0_92 = arith.constant 0 : index
    %c0_93 = arith.constant 0 : index
    %101 = tpu.strided_load %arg17[%c0_92, %c0_93] {strides = array<i32: 2, 1>} : memref<180x16xf32, #tpu.memory_space<vmem>>, vector<90x16xf32>
    %c1_94 = arith.constant 1 : index
    %c0_95 = arith.constant 0 : index
    %102 = tpu.strided_load %arg17[%c1_94, %c0_95] {strides = array<i32: 2, 1>} : memref<180x16xf32, #tpu.memory_space<vmem>>, vector<90x16xf32>
    %103 = arith.maximumf %101, %102 : vector<90x16xf32>
    %c0_96 = arith.constant 0 : index
    %c0_97 = arith.constant 0 : index
    %c0_98 = arith.constant 0 : index
    %104 = vector.load %arg11[%c0_96, %c0_97, %c0_98] : memref<1x90x16xf32, #tpu.memory_space<vmem>>, vector<1x90x16xf32>
    %105 = vector.shape_cast %104 : vector<1x90x16xf32> to vector<90x16xf32>
    %106 = vector.shape_cast %103 : vector<90x16xf32> to vector<1x90x16xf32>
    tpu.vector_store %arg11[%c0_96, %c0_97, %c0_98], %106 {strides = array<i32>} : memref<1x90x16xf32, #tpu.memory_space<vmem>>, vector<1x90x16xf32>,
    return
  }
  func.func @transform_0(%arg0: i32) -> (i32, i32, i32) {
    %c0_i32 = arith.constant 0 : i32
    %c0_i32_0 = arith.constant 0 : i32
    %c0_i32_1 = arith.constant 0 : i32
    return %arg0, %c0_i32, %c0_i32_0 : i32, i32, i32
  }
  func.func @transform_1(%arg0: i32) -> (i32, i32) {
    %c0_i32 = arith.constant 0 : i32
    %c0_i32_0 = arith.constant 0 : i32
    %c0_i32_1 = arith.constant 0 : i32
    return %c0_i32, %c0_i32_0 : i32, i32
  }
  func.func @transform_2(%arg0: i32) -> (i32, i32) {
    %c0_i32 = arith.constant 0 : i32
    %c0_i32_0 = arith.constant 0 : i32
    %c0_i32_1 = arith.constant 0 : i32
    return %c0_i32, %c0_i32_0 : i32, i32
  }
  func.func @transform_3(%arg0: i32) -> (i32, i32) {
    %c0_i32 = arith.constant 0 : i32
    %c0_i32_0 = arith.constant 0 : i32
    %c0_i32_1 = arith.constant 0 : i32
    return %c0_i32, %c0_i32_0 : i32, i32
  }
  func.func @transform_4(%arg0: i32) -> (i32, i32) {
    %c0_i32 = arith.constant 0 : i32
    %c0_i32_0 = arith.constant 0 : i32
    %c0_i32_1 = arith.constant 0 : i32
    return %c0_i32, %c0_i32_0 : i32, i32
  }
  func.func @transform_5(%arg0: i32) -> (i32, i32) {
    %c0_i32 = arith.constant 0 : i32
    %c0_i32_0 = arith.constant 0 : i32
    %c0_i32_1 = arith.constant 0 : i32
    return %c0_i32, %c0_i32_0 : i32, i32
  }
  func.func @transform_6(%arg0: i32) -> (i32, i32) {
    %c0_i32 = arith.constant 0 : i32
    %c0_i32_0 = arith.constant 0 : i32
    %c0_i32_1 = arith.constant 0 : i32
    return %c0_i32, %c0_i32_0 : i32, i32
  }
  func.func @transform_7(%arg0: i32) -> (i32, i32) {
    %c0_i32 = arith.constant 0 : i32
    %c0_i32_0 = arith.constant 0 : i32
    %c0_i32_1 = arith.constant 0 : i32
    return %c0_i32, %c0_i32_0 : i32, i32
  }
  func.func @transform_8(%arg0: i32) -> (i32, i32) {
    %c0_i32 = arith.constant 0 : i32
    %c0_i32_0 = arith.constant 0 : i32
    %c0_i32_1 = arith.constant 0 : i32
    return %c0_i32, %c0_i32_0 : i32, i32
  }
  func.func @transform_9(%arg0: i32) -> (i32, i32) {
    %c0_i32 = arith.constant 0 : i32
    %c0_i32_0 = arith.constant 0 : i32
    %c0_i32_1 = arith.constant 0 : i32
    return %c0_i32, %c0_i32_0 : i32, i32
  }
  func.func @transform_10(%arg0: i32) -> (i32, i32, i32) {
    %c0_i32 = arith.constant 0 : i32
    %c0_i32_0 = arith.constant 0 : i32
    %c0_i32_1 = arith.constant 0 : i32
    return %arg0, %c0_i32, %c0_i32_0 : i32, i32, i32
  }
}

</mosaic_0001>

<llo_original>
// kernel: tpu_custom_call.1
$region0: #{tpu_custom_call.1}
  #allocation0 [shape = 'u32[]', space=smem, size = 0x4, offset = 0x4, fixed_abs, tag = 'smem constant byte address 0x4 - core index']
  #allocation1 [shape = 'u32[72,128]{1,0:T(1,128)}', space=vmem, size = 0x9000, scoped, tag = 'internal scratch']
  #allocation2 [shape = 'f32[736,4]{1,0:T(8,128)}', space=vmem, size = 0x5c000, scoped, tag = 'scratch operand']
  #allocation3 [shape = 'f32[720,32]{1,0:T(8,128)}', space=vmem, size = 0x5a000, scoped, tag = 'scratch operand']
  #allocation4 [shape = 'f32[376,32]{1,0:T(8,128)}', space=vmem, size = 0x2f000, scoped, tag = 'scratch operand']
  #allocation5 [shape = 'f32[360,64]{1,0:T(8,128)}', space=vmem, size = 0x2d000, scoped, tag = 'scratch operand']
  #allocation6 [shape = 'f32[196,64]{1,0:T(8,128)}', space=vmem, size = 0x19000, scoped, tag = 'scratch operand']
  #allocation7 [shape = 'f32[180,16]{1,0:T(8,128)}', space=vmem, size = 0x17000, scoped, tag = 'scratch operand']
  %s0 = inlined_call_operand.vmem [shape: f32[2,720,4], index: 0, kind: input, shape index: {}]
  %s1 = inlined_call_operand.vmem [shape: f32[720,2], index: 1, kind: input, shape index: {}]
  %s2 = inlined_call_operand.vmem [shape: f32[360,2], index: 2, kind: input, shape index: {}]
  %s3 = inlined_call_operand.vmem [shape: f32[180,2], index: 3, kind: input, shape index: {}]
  %s4 = inlined_call_operand.vmem [shape: f32[12,32], index: 4, kind: input, shape index: {}]
  %s5 = inlined_call_operand.vmem [shape: f32[1,32], index: 5, kind: input, shape index: {}]
  %s6 = inlined_call_operand.vmem [shape: f32[96,64], index: 6, kind: input, shape index: {}]
  %s7 = inlined_call_operand.vmem [shape: f32[1,64], index: 7, kind: input, shape index: {}]
  %s8 = inlined_call_operand.vmem [shape: f32[192,16], index: 8, kind: input, shape index: {}]
  %s9 = inlined_call_operand.vmem [shape: f32[1,16], index: 9, kind: input, shape index: {}]
  %s10 = inlined_call_operand.vmem [shape: f32[2,90,16], index: 10, kind: output, shape index: {}]
  %s11 = sld [smem:[#allocation0]]
  $region73: #{tpu_custom_call.1} parent=0
    _
  %s13 = ssub.s32 1, %s11
  %s14 = scalar_select 0, %s13, %s11
  loop: start=0, step=1, limit=4
  $region2: #{tpu_custom_call.1} parent=0 // loop_pre_header
    _
  $region3: #{tpu_custom_call.1} parent=0 // loop_header
    %s16 = sphi 0, %s20
    %p17 = scmp.ge.s32.totalorder %s16, 4
    %s26 = sphi 0, %s28
    %s29 = sphi 0, %s26
    %s30 = sphi 0, %s29
    %s46 = sphi 0, %s30
    %s50 = sphi 0, %s50
    %s52 = sphi 0, %s50
    %s53 = sphi 0, %s52
    %s67 = sphi 0, %s53
    %s71 = sphi 0, %s71
    %s73 = sphi 0, %s71
    %s74 = sphi 0, %s73
    %s88 = sphi 0, %s74
    %s92 = sphi 0, %s92
    %s94 = sphi 0, %s92
    %s95 = sphi 0, %s94
    %s109 = sphi 0, %s95
    %s113 = sphi 0, %s113
    %s115 = sphi 0, %s113
    %s116 = sphi 0, %s115
    %s130 = sphi 0, %s116
    %s134 = sphi 0, %s134
    %s136 = sphi 0, %s134
    %s137 = sphi 0, %s136
    %s151 = sphi 0, %s137
    %s155 = sphi 0, %s155
    %s157 = sphi 0, %s155
    %s158 = sphi 0, %s157
    %s172 = sphi 0, %s158
    %s176 = sphi 0, %s176
    %s178 = sphi 0, %s176
    %s179 = sphi 0, %s178
    %s193 = sphi 0, %s179
    %s197 = sphi 0, %s197
    %s199 = sphi 0, %s197
    %s200 = sphi 0, %s199
    %s214 = sphi 0, %s200
    %s218 = sphi 0, %s218
    %s220 = sphi 0, %s218
    %s221 = sphi 0, %s220
    %s235 = sphi 0, %s221
    %s241 = sphi 0, %s243
    %s244 = sphi 0, %s241
    %s245 = sphi 0, %s244
    %s261 = sphi 0, %s245
  $region4: #{tpu_custom_call.1} parent=0 // loop_header_branch
    %19 = sbr.rel (%p17) target = $region8
  $region5: #{tpu_custom_call.1} parent=0 // loop_body
    %s21 = ssub.s32 %s16, 1
    %s22 = ssub.s32 %s16, 2
    %s23 = sadd.s32 %s16, 1
    %s24 = ssub.s32 %s16, %s23
    %p25 = scmp.eq.s32.totalorder %s24, 0
    %s27 = sadd.s32 %s26, 1
    %s28 = scalar_select %p25, %s26, %s27
    %p31 = pneg %p25
    %p32 = scmp.eq.s32.totalorder %s16, 1
    %p33 = por %p31, %p32
    %p34 = scmp.ne.s32.totalorder %s26, %s29
    %p35 = scmp.eq.s32.totalorder %s16, 0
    %p36 = por %p34, %p35
    %p37 = scmp.ne.s32.totalorder %s26, %s29
    %p38 = scmp.eq.s32.totalorder %s21, 1
    %p39 = por %p37, %p38
    %p40 = scmp.ne.s32.totalorder %s29, %s30
    %p41 = scmp.eq.s32.totalorder %s21, 0
    %p42 = por %p40, %p41
    %p43 = scmp.ne.s32.totalorder %s29, %s30
    %p44 = scmp.eq.s32.totalorder %s22, 1
    %p45 = por %p43, %p44
    %p47 = scmp.ne.s32.totalorder %s30, %s46
    %p48 = scmp.eq.s32.totalorder %s22, 0
    %p49 = por %p47, %p48
    %s51 = sadd.s32 %s50, 1
    %p54 = scmp.eq.s32.totalorder %s16, 1
    %p55 = scmp.ne.s32.totalorder %s50, %s52
    %p56 = scmp.eq.s32.totalorder %s16, 0
    %p57 = por %p55, %p56
    %p58 = scmp.ne.s32.totalorder %s50, %s52
    %p59 = scmp.eq.s32.totalorder %s21, 1
    %p60 = por %p58, %p59
    %p61 = scmp.ne.s32.totalorder %s52, %s53
    %p62 = scmp.eq.s32.totalorder %s21, 0
    %p63 = por %p61, %p62
    %p64 = scmp.ne.s32.totalorder %s52, %s53
    %p65 = scmp.eq.s32.totalorder %s22, 1
    %p66 = por %p64, %p65
    %p68 = scmp.ne.s32.totalorder %s53, %s67
    %p69 = scmp.eq.s32.totalorder %s22, 0
    %p70 = por %p68, %p69
    %s72 = sadd.s32 %s71, 1
    %p75 = scmp.eq.s32.totalorder %s16, 1
    %p76 = scmp.ne.s32.totalorder %s71, %s73
    %p77 = scmp.eq.s32.totalorder %s16, 0
    %p78 = por %p76, %p77
    %p79 = scmp.ne.s32.totalorder %s71, %s73
    %p80 = scmp.eq.s32.totalorder %s21, 1
    %p81 = por %p79, %p80
    %p82 = scmp.ne.s32.totalorder %s73, %s74
    %p83 = scmp.eq.s32.totalorder %s21, 0
    %p84 = por %p82, %p83
    %p85 = scmp.ne.s32.totalorder %s73, %s74
    %p86 = scmp.eq.s32.totalorder %s22, 1
    %p87 = por %p85, %p86
    %p89 = scmp.ne.s32.totalorder %s74, %s88
    %p90 = scmp.eq.s32.totalorder %s22, 0
    %p91 = por %p89, %p90
    %s93 = sadd.s32 %s92, 1
    %p96 = scmp.eq.s32.totalorder %s16, 1
    %p97 = scmp.ne.s32.totalorder %s92, %s94
    %p98 = scmp.eq.s32.totalorder %s16, 0
    %p99 = por %p97, %p98
    %p100 = scmp.ne.s32.totalorder %s92, %s94
    %p101 = scmp.eq.s32.totalorder %s21, 1
    %p102 = por %p100, %p101
    %p103 = scmp.ne.s32.totalorder %s94, %s95
    %p104 = scmp.eq.s32.totalorder %s21, 0
    %p105 = por %p103, %p104
    %p106 = scmp.ne.s32.totalorder %s94, %s95
    %p107 = scmp.eq.s32.totalorder %s22, 1
    %p108 = por %p106, %p107
    %p110 = scmp.ne.s32.totalorder %s95, %s109
    %p111 = scmp.eq.s32.totalorder %s22, 0
    %p112 = por %p110, %p111
    %s114 = sadd.s32 %s113, 1
    %p117 = scmp.eq.s32.totalorder %s16, 1
    %p118 = scmp.ne.s32.totalorder %s113, %s115
    %p119 = scmp.eq.s32.totalorder %s16, 0
    %p120 = por %p118, %p119
    %p121 = scmp.ne.s32.totalorder %s113, %s115
    %p122 = scmp.eq.s32.totalorder %s21, 1
    %p123 = por %p121, %p122
    %p124 = scmp.ne.s32.totalorder %s115, %s116
    %p125 = scmp.eq.s32.totalorder %s21, 0
    %p126 = por %p124, %p125
    %p127 = scmp.ne.s32.totalorder %s115, %s116
    %p128 = scmp.eq.s32.totalorder %s22, 1
    %p129 = por %p127, %p128
    %p131 = scmp.ne.s32.totalorder %s116, %s130
    %p132 = scmp.eq.s32.totalorder %s22, 0
    %p133 = por %p131, %p132
    %s135 = sadd.s32 %s134, 1
    %p138 = scmp.eq.s32.totalorder %s16, 1
    %p139 = scmp.ne.s32.totalorder %s134, %s136
    %p140 = scmp.eq.s32.totalorder %s16, 0
    %p141 = por %p139, %p140
    %p142 = scmp.ne.s32.totalorder %s134, %s136
    %p143 = scmp.eq.s32.totalorder %s21, 1
    %p144 = por %p142, %p143
    %p145 = scmp.ne.s32.totalorder %s136, %s137
    %p146 = scmp.eq.s32.totalorder %s21, 0
    %p147 = por %p145, %p146
    %p148 = scmp.ne.s32.totalorder %s136, %s137
    %p149 = scmp.eq.s32.totalorder %s22, 1
    %p150 = por %p148, %p149
    %p152 = scmp.ne.s32.totalorder %s137, %s151
    %p153 = scmp.eq.s32.totalorder %s22, 0
    %p154 = por %p152, %p153
    %s156 = sadd.s32 %s155, 1
    %p159 = scmp.eq.s32.totalorder %s16, 1
    %p160 = scmp.ne.s32.totalorder %s155, %s157
    %p161 = scmp.eq.s32.totalorder %s16, 0
    %p162 = por %p160, %p161
    %p163 = scmp.ne.s32.totalorder %s155, %s157
    %p164 = scmp.eq.s32.totalorder %s21, 1
    %p165 = por %p163, %p164
    %p166 = scmp.ne.s32.totalorder %s157, %s158
    %p167 = scmp.eq.s32.totalorder %s21, 0
    %p168 = por %p166, %p167
    %p169 = scmp.ne.s32.totalorder %s157, %s158
    %p170 = scmp.eq.s32.totalorder %s22, 1
    %p171 = por %p169, %p170
    %p173 = scmp.ne.s32.totalorder %s158, %s172
    %p174 = scmp.eq.s32.totalorder %s22, 0
    %p175 = por %p173, %p174
    %s177 = sadd.s32 %s176, 1
    %p180 = scmp.eq.s32.totalorder %s16, 1
    %p181 = scmp.ne.s32.totalorder %s176, %s178
    %p182 = scmp.eq.s32.totalorder %s16, 0
    %p183 = por %p181, %p182
    %p184 = scmp.ne.s32.totalorder %s176, %s178
    %p185 = scmp.eq.s32.totalorder %s21, 1
    %p186 = por %p184, %p185
    %p187 = scmp.ne.s32.totalorder %s178, %s179
    %p188 = scmp.eq.s32.totalorder %s21, 0
    %p189 = por %p187, %p188
    %p190 = scmp.ne.s32.totalorder %s178, %s179
    %p191 = scmp.eq.s32.totalorder %s22, 1
    %p192 = por %p190, %p191
    %p194 = scmp.ne.s32.totalorder %s179, %s193
    %p195 = scmp.eq.s32.totalorder %s22, 0
    %p196 = por %p194, %p195
    %s198 = sadd.s32 %s197, 1
    %p201 = scmp.eq.s32.totalorder %s16, 1
    %p202 = scmp.ne.s32.totalorder %s197, %s199
    %p203 = scmp.eq.s32.totalorder %s16, 0
    %p204 = por %p202, %p203
    %p205 = scmp.ne.s32.totalorder %s197, %s199
    %p206 = scmp.eq.s32.totalorder %s21, 1
    %p207 = por %p205, %p206
    %p208 = scmp.ne.s32.totalorder %s199, %s200
    %p209 = scmp.eq.s32.totalorder %s21, 0
    %p210 = por %p208, %p209
    %p211 = scmp.ne.s32.totalorder %s199, %s200
    %p212 = scmp.eq.s32.totalorder %s22, 1
    %p213 = por %p211, %p212
    %p215 = scmp.ne.s32.totalorder %s200, %s214
    %p216 = scmp.eq.s32.totalorder %s22, 0
    %p217 = por %p215, %p216
    %s219 = sadd.s32 %s218, 1
    %p222 = scmp.eq.s32.totalorder %s16, 1
    %p223 = scmp.ne.s32.totalorder %s218, %s220
    %p224 = scmp.eq.s32.totalorder %s16, 0
    %p225 = por %p223, %p224
    %p226 = scmp.ne.s32.totalorder %s218, %s220
    %p227 = scmp.eq.s32.totalorder %s21, 1
    %p228 = por %p226, %p227
    %p229 = scmp.ne.s32.totalorder %s220, %s221
    %p230 = scmp.eq.s32.totalorder %s21, 0
    %p231 = por %p229, %p230
    %p232 = scmp.ne.s32.totalorder %s220, %s221
    %p233 = scmp.eq.s32.totalorder %s22, 1
    %p234 = por %p232, %p233
    %p236 = scmp.ne.s32.totalorder %s221, %s235
    %p237 = scmp.eq.s32.totalorder %s22, 0
    %p238 = por %p236, %p237
    %s239 = ssub.s32 %s16, %s23
    %p240 = scmp.eq.s32.totalorder %s239, 0
    %s242 = sadd.s32 %s241, 1
    %s243 = scalar_select %p240, %s241, %s242
    %p246 = pneg %p240
    %p247 = scmp.eq.s32.totalorder %s16, 1
    %p248 = por %p246, %p247
    %p249 = scmp.ne.s32.totalorder %s241, %s244
    %p250 = scmp.eq.s32.totalorder %s16, 0
    %p251 = por %p249, %p250
    %p252 = scmp.ne.s32.totalorder %s241, %s244
    %p253 = scmp.eq.s32.totalorder %s21, 1
    %p254 = por %p252, %p253
    %p255 = scmp.ne.s32.totalorder %s244, %s245
    %p256 = scmp.eq.s32.totalorder %s21, 0
    %p257 = por %p255, %p256
    %p258 = scmp.ne.s32.totalorder %s244, %s245
    %p259 = scmp.eq.s32.totalorder %s22, 1
    %p260 = por %p258, %p259
    %p262 = scmp.ne.s32.totalorder %s245, %s261
    %p263 = scmp.eq.s32.totalorder %s22, 0
    %p264 = por %p262, %p263
    %p265 = scmp.le.s32.totalorder 1, %s16
    %p266 = scmp.lt.s32.totalorder %s16, 3
    %p267 = pnand %p265, %p266
    %p268 = pneg %p267
    // Predicated region
    $region9: #{tpu_custom_call.1} parent=5 // pred_check
      _
    $region10: #{tpu_custom_call.1} parent=5 // pred_check_branch
      %270 = sbr.rel (%p267) target = $region12
    $region11: #{tpu_custom_call.1} parent=5 // pred_region
      %s271 = ssub.s32 %s16, 1
      // Predicated region
      $region13: #{tpu_custom_call.1} parent=11 // pred_check
        %p272 = pneg %p63
      $region14: #{tpu_custom_call.1} parent=11 // pred_check_branch
        %274 = sbr.rel (%p272) target = $region16
      $region15: #{tpu_custom_call.1} parent=11 // pred_region
        _
      $region16: #{tpu_custom_call.1} parent=11 // pred_fallthru
        _
      // Predicated region
      $region17: #{tpu_custom_call.1} parent=11 // pred_check
        %p275 = pneg %p84
      $region18: #{tpu_custom_call.1} parent=11 // pred_check_branch
        %277 = sbr.rel (%p275) target = $region20
      $region19: #{tpu_custom_call.1} parent=11 // pred_region
        _
      $region20: #{tpu_custom_call.1} parent=11 // pred_fallthru
        _
      // Predicated region
      $region21: #{tpu_custom_call.1} parent=11 // pred_check
        %p278 = pneg %p105
      $region22: #{tpu_custom_call.1} parent=11 // pred_check_branch
        %280 = sbr.rel (%p278) target = $region24
      $region23: #{tpu_custom_call.1} parent=11 // pred_region
        _
      $region24: #{tpu_custom_call.1} parent=11 // pred_fallthru
        _
      // Predicated region
      $region25: #{tpu_custom_call.1} parent=11 // pred_check
        %p281 = pneg %p126
      $region26: #{tpu_custom_call.1} parent=11 // pred_check_branch
        %283 = sbr.rel (%p281) target = $region28
      $region27: #{tpu_custom_call.1} parent=11 // pred_region
        _
      $region28: #{tpu_custom_call.1} parent=11 // pred_fallthru
        _
      // Predicated region
      $region29: #{tpu_custom_call.1} parent=11 // pred_check
        %p284 = pneg %p147
      $region30: #{tpu_custom_call.1} parent=11 // pred_check_branch
        %286 = sbr.rel (%p284) target = $region32
      $region31: #{tpu_custom_call.1} parent=11 // pred_region
        _
      $region32: #{tpu_custom_call.1} parent=11 // pred_fallthru
        _
      // Predicated region
      $region33: #{tpu_custom_call.1} parent=11 // pred_check
        %p287 = pneg %p168
      $region34: #{tpu_custom_call.1} parent=11 // pred_check_branch
        %289 = sbr.rel (%p287) target = $region36
      $region35: #{tpu_custom_call.1} parent=11 // pred_region
        _
      $region36: #{tpu_custom_call.1} parent=11 // pred_fallthru
        _
      // Predicated region
      $region37: #{tpu_custom_call.1} parent=11 // pred_check
        %p290 = pneg %p189
      $region38: #{tpu_custom_call.1} parent=11 // pred_check_branch
        %292 = sbr.rel (%p290) target = $region40
      $region39: #{tpu_custom_call.1} parent=11 // pred_region
        _
      $region40: #{tpu_custom_call.1} parent=11 // pred_fallthru
        _
      // Predicated region
      $region41: #{tpu_custom_call.1} parent=11 // pred_check
        %p293 = pneg %p210
      $region42: #{tpu_custom_call.1} parent=11 // pred_check_branch
        %295 = sbr.rel (%p293) target = $region44
      $region43: #{tpu_custom_call.1} parent=11 // pred_region
        _
      $region44: #{tpu_custom_call.1} parent=11 // pred_fallthru
        _
      // Predicated region
      $region45: #{tpu_custom_call.1} parent=11 // pred_check
        %p296 = pneg %p231
      $region46: #{tpu_custom_call.1} parent=11 // pred_check_branch
        %298 = sbr.rel (%p296) target = $region48
      $region47: #{tpu_custom_call.1} parent=11 // pred_region
        _
      $region48: #{tpu_custom_call.1} parent=11 // pred_fallthru
        _
    $region12: #{tpu_custom_call.1} parent=5 // pred_fallthru
      _
    %p299 = scmp.lt.s32.totalorder %s16, 2
    // Predicated region
    $region49: #{tpu_custom_call.1} parent=5 // pred_check
      %p300 = pneg %p299
    $region50: #{tpu_custom_call.1} parent=5 // pred_check_branch
      %302 = sbr.rel (%p300) target = $region52
    $region51: #{tpu_custom_call.1} parent=5 // pred_region
      // Predicated region
      $region53: #{tpu_custom_call.1} parent=51 // pred_check
        %p303 = pneg %p36
      $region54: #{tpu_custom_call.1} parent=51 // pred_check_branch
        %305 = sbr.rel (%p303) target = $region56
      $region55: #{tpu_custom_call.1} parent=51 // pred_region
        %p306 = scmp.lt.s32.totalorder %s16, 1
        %s307 = scalar_select %p306, %s16, 1
        %s308 = smul.addr %s307, 90
        %s309 = smul.addr %s308, 8
        %s310 = scalar_lea.vmem %s0, %s309
      $region56: #{tpu_custom_call.1} parent=51 // pred_fallthru
        _
    $region52: #{tpu_custom_call.1} parent=5 // pred_fallthru
      _
    %p311 = scmp.le.s32.totalorder 1, %s16
    %p312 = scmp.lt.s32.totalorder %s16, 3
    %p313 = pnand %p311, %p312
    %p314 = pneg %p313
    // Predicated region
    $region57: #{tpu_custom_call.1} parent=5 // pred_check
      _
    $region58: #{tpu_custom_call.1} parent=5 // pred_check_branch
      %316 = sbr.rel (%p313) target = $region60
    $region59: #{tpu_custom_call.1} parent=5 // pred_region
      %s317 = ssub.s32 %s16, 1
      %p318 = scmp.lt.s32.totalorder %s21, 1
      %s319 = scalar_select %p318, %s21, 1
      %s320 = smul.addr %s319, 90
      %s321 = smul.addr %s320, 8
      %s322 = scalar_lea.vmem %s0, %s321
      %p323 = pneg %p42
      %p324 = pneg %p39
      %p325 = pneg %p63
      %p326 = pneg %p60
      %p327 = pneg %p84
      %p328 = pneg %p81
      %p329 = pneg %p105
      %p330 = pneg %p102
      %p331 = pneg %p126
      %p332 = pneg %p123
      %p333 = pneg %p147
      %p334 = pneg %p144
      %p335 = pneg %p168
      %p336 = pneg %p165
      %p337 = pneg %p189
      %p338 = pneg %p186
      %p339 = pneg %p210
      %p340 = pneg %p207
      %p341 = pneg %p231
      %p342 = pneg %p228
      %p343 = pneg %p257
      %p344 = pneg %p254
      %p345 = scmp.lt.s32.totalorder %s21, 1
      %s346 = scalar_select %p345, %s21, 1
      %s347 = smul.addr %s346, 12
      %s348 = smul.addr %s347, 8
      %s349 = scalar_lea.vmem %s10, %s348
      %p350 = scmp.lt.s32.totalorder %s21, 1
      %s351 = scalar_select %p350, %s21, 1
      %s352 = smul.addr %s351, 90
      %s353 = smul.addr %s352, 8
      %s354 = scalar_lea.vmem %s0, %s353
      %p355 = scmp.lt.s32.totalorder %s21, 1
      %s356 = scalar_select %p355, %s21, 1
      %s357 = smul.addr %s356, 12
      %s358 = smul.addr %s357, 8
      %s359 = scalar_lea.vmem %s10, %s358
      %v360 = vld [vmem:[%s354] sm:$0xff]
      %v361 = vld [vmem:[%s354 + $0x8] sm:$0xff]
      %v362 = vld [vmem:[%s354 + $0x10] sm:$0xff]
      %v363 = vld [vmem:[%s354 + $0x18] sm:$0xff]
      %v364 = vld [vmem:[%s354 + $0x20] sm:$0xff]
      %v365 = vld [vmem:[%s354 + $0x28] sm:$0xff]
      %v366 = vld [vmem:[%s354 + $0x30] sm:$0xff]
      %v367 = vld [vmem:[%s354 + $0x38] sm:$0xff]
      %v368 = vld [vmem:[%s354 + $0x40] sm:$0xff]
      %v369 = vld [vmem:[%s354 + $0x48] sm:$0xff]
      %v370 = vld [vmem:[%s354 + $0x50] sm:$0xff]
      %v371 = vld [vmem:[%s354 + $0x58] sm:$0xff]
      %v372 = vld [vmem:[%s354 + $0x60] sm:$0xff]
      %v373 = vld [vmem:[%s354 + $0x68] sm:$0xff]
      %v374 = vld [vmem:[%s354 + $0x70] sm:$0xff]
      %v375 = vld [vmem:[%s354 + $0x78] sm:$0xff]
      %v376 = vld [vmem:[%s354 + $0x80] sm:$0xff]
      %v377 = vld [vmem:[%s354 + $0x88] sm:$0xff]
      %v378 = vld [vmem:[%s354 + $0x90] sm:$0xff]
      %v379 = vld [vmem:[%s354 + $0x98] sm:$0xff]
      %v380 = vld [vmem:[%s354 + $0xa0] sm:$0xff]
      %v381 = vld [vmem:[%s354 + $0xa8] sm:$0xff]
      %v382 = vld [vmem:[%s354 + $0xb0] sm:$0xff]
      %v383 = vld [vmem:[%s354 + $0xb8] sm:$0xff]
      %v384 = vld [vmem:[%s354 + $0xc0] sm:$0xff]
      %v385 = vld [vmem:[%s354 + $0xc8] sm:$0xff]
      %v386 = vld [vmem:[%s354 + $0xd0] sm:$0xff]
      %v387 = vld [vmem:[%s354 + $0xd8] sm:$0xff]
      %v388 = vld [vmem:[%s354 + $0xe0] sm:$0xff]
      %v389 = vld [vmem:[%s354 + $0xe8] sm:$0xff]
      %v390 = vld [vmem:[%s354 + $0xf0] sm:$0xff]
      %v391 = vld [vmem:[%s354 + $0xf8] sm:$0xff]
      %v392 = vld [vmem:[%s354 + $0x100] sm:$0xff]
      %v393 = vld [vmem:[%s354 + $0x108] sm:$0xff]
      %v394 = vld [vmem:[%s354 + $0x110] sm:$0xff]
      %v395 = vld [vmem:[%s354 + $0x118] sm:$0xff]
      %v396 = vld [vmem:[%s354 + $0x120] sm:$0xff]
      %v397 = vld [vmem:[%s354 + $0x128] sm:$0xff]
      %v398 = vld [vmem:[%s354 + $0x130] sm:$0xff]
      %v399 = vld [vmem:[%s354 + $0x138] sm:$0xff]
      %v400 = vld [vmem:[%s354 + $0x140] sm:$0xff]
      %v401 = vld [vmem:[%s354 + $0x148] sm:$0xff]
      %v402 = vld [vmem:[%s354 + $0x150] sm:$0xff]
      %v403 = vld [vmem:[%s354 + $0x158] sm:$0xff]
      %v404 = vld [vmem:[%s354 + $0x160] sm:$0xff]
      %v405 = vld [vmem:[%s354 + $0x168] sm:$0xff]
      %v406 = vld [vmem:[%s354 + $0x170] sm:$0xff]
      %v407 = vld [vmem:[%s354 + $0x178] sm:$0xff]
      %v408 = vld [vmem:[%s354 + $0x180] sm:$0xff]
      %v409 = vld [vmem:[%s354 + $0x188] sm:$0xff]
      %v410 = vld [vmem:[%s354 + $0x190] sm:$0xff]
      %v411 = vld [vmem:[%s354 + $0x198] sm:$0xff]
      %v412 = vld [vmem:[%s354 + $0x1a0] sm:$0xff]
      %v413 = vld [vmem:[%s354 + $0x1a8] sm:$0xff]
      %v414 = vld [vmem:[%s354 + $0x1b0] sm:$0xff]
      %v415 = vld [vmem:[%s354 + $0x1b8] sm:$0xff]
      %v416 = vld [vmem:[%s354 + $0x1c0] sm:$0xff]
      %v417 = vld [vmem:[%s354 + $0x1c8] sm:$0xff]
      %v418 = vld [vmem:[%s354 + $0x1d0] sm:$0xff]
      %v419 = vld [vmem:[%s354 + $0x1d8] sm:$0xff]
      %v420 = vld [vmem:[%s354 + $0x1e0] sm:$0xff]
      %v421 = vld [vmem:[%s354 + $0x1e8] sm:$0xff]
      %v422 = vld [vmem:[%s354 + $0x1f0] sm:$0xff]
      %v423 = vld [vmem:[%s354 + $0x1f8] sm:$0xff]
      %v424 = vld [vmem:[%s354 + $0x200] sm:$0xff]
      %v425 = vld [vmem:[%s354 + $0x208] sm:$0xff]
      %v426 = vld [vmem:[%s354 + $0x210] sm:$0xff]
      %v427 = vld [vmem:[%s354 + $0x218] sm:$0xff]
      %v428 = vld [vmem:[%s354 + $0x220] sm:$0xff]
      %v429 = vld [vmem:[%s354 + $0x228] sm:$0xff]
      %v430 = vld [vmem:[%s354 + $0x230] sm:$0xff]
      %v431 = vld [vmem:[%s354 + $0x238] sm:$0xff]
      %v432 = vld [vmem:[%s354 + $0x240] sm:$0xff]
      %v433 = vld [vmem:[%s354 + $0x248] sm:$0xff]
      %v434 = vld [vmem:[%s354 + $0x250] sm:$0xff]
      %v435 = vld [vmem:[%s354 + $0x258] sm:$0xff]
      %v436 = vld [vmem:[%s354 + $0x260] sm:$0xff]
      %v437 = vld [vmem:[%s354 + $0x268] sm:$0xff]
      %v438 = vld [vmem:[%s354 + $0x270] sm:$0xff]
      %v439 = vld [vmem:[%s354 + $0x278] sm:$0xff]
      %v440 = vld [vmem:[%s354 + $0x280] sm:$0xff]
      %v441 = vld [vmem:[%s354 + $0x288] sm:$0xff]
      %v442 = vld [vmem:[%s354 + $0x290] sm:$0xff]
      %v443 = vld [vmem:[%s354 + $0x298] sm:$0xff]
      %v444 = vld [vmem:[%s354 + $0x2a0] sm:$0xff]
      %v445 = vld [vmem:[%s354 + $0x2a8] sm:$0xff]
      %v446 = vld [vmem:[%s354 + $0x2b0] sm:$0xff]
      %v447 = vld [vmem:[%s354 + $0x2b8] sm:$0xff]
      %v448 = vld [vmem:[%s354 + $0x2c0] sm:$0xff]
      %v449 = vld [vmem:[%s354 + $0x2c8] sm:$0xff]
      %vm450 = vcmask 24576
      %451 = vst.msk [vmem:[#allocation2 + $0x7] sm:$0x1] %vm450, 0.0
      %vm452 = vcmask 31744
      %453 = vst.msk [vmem:[#allocation2 + $0x8] sm:$0xff] %vm452, %v360
      %454 = vst.msk [vmem:[#allocation2 + $0x10] sm:$0xff] %vm452, %v361
      %455 = vst.msk [vmem:[#allocation2 + $0x18] sm:$0xff] %vm452, %v362
      %456 = vst.msk [vmem:[#allocation2 + $0x20] sm:$0xff] %vm452, %v363
      %457 = vst.msk [vmem:[#allocation2 + $0x28] sm:$0xff] %vm452, %v364
      %458 = vst.msk [vmem:[#allocation2 + $0x30] sm:$0xff] %vm452, %v365
      %459 = vst.msk [vmem:[#allocation2 + $0x38] sm:$0xff] %vm452, %v366
      %460 = vst.msk [vmem:[#allocation2 + $0x40] sm:$0xff] %vm452, %v367
      %461 = vst.msk [vmem:[#allocation2 + $0x48] sm:$0xff] %vm452, %v368
      %462 = vst.msk [vmem:[#allocation2 + $0x50] sm:$0xff] %vm452, %v369
      %463 = vst.msk [vmem:[#allocation2 + $0x58] sm:$0xff] %vm452, %v370
      %464 = vst.msk [vmem:[#allocation2 + $0x60] sm:$0xff] %vm452, %v371
      %465 = vst.msk [vmem:[#allocation2 + $0x68] sm:$0xff] %vm452, %v372
      %466 = vst.msk [vmem:[#allocation2 + $0x70] sm:$0xff] %vm452, %v373
      %467 = vst.msk [vmem:[#allocation2 + $0x78] sm:$0xff] %vm452, %v374
      %468 = vst.msk [vmem:[#allocation2 + $0x80] sm:$0xff] %vm452, %v375
      %469 = vst.msk [vmem:[#allocation2 + $0x88] sm:$0xff] %vm452, %v376
      %470 = vst.msk [vmem:[#allocation2 + $0x90] sm:$0xff] %vm452, %v377
      %471 = vst.msk [vmem:[#allocation2 + $0x98] sm:$0xff] %vm452, %v378
      %472 = vst.msk [vmem:[#allocation2 + $0xa0] sm:$0xff] %vm452, %v379
      %473 = vst.msk [vmem:[#allocation2 + $0xa8] sm:$0xff] %vm452, %v380
      %474 = vst.msk [vmem:[#allocation2 + $0xb0] sm:$0xff] %vm452, %v381
      %475 = vst.msk [vmem:[#allocation2 + $0xb8] sm:$0xff] %vm452, %v382
      %476 = vst.msk [vmem:[#allocation2 + $0xc0] sm:$0xff] %vm452, %v383
      %477 = vst.msk [vmem:[#allocation2 + $0xc8] sm:$0xff] %vm452, %v384
      %478 = vst.msk [vmem:[#allocation2 + $0xd0] sm:$0xff] %vm452, %v385
      %479 = vst.msk [vmem:[#allocation2 + $0xd8] sm:$0xff] %vm452, %v386
      %480 = vst.msk [vmem:[#allocation2 + $0xe0] sm:$0xff] %vm452, %v387
      %481 = vst.msk [vmem:[#allocation2 + $0xe8] sm:$0xff] %vm452, %v388
      %482 = vst.msk [vmem:[#allocation2 + $0xf0] sm:$0xff] %vm452, %v389
      %483 = vst.msk [vmem:[#allocation2 + $0xf8] sm:$0xff] %vm452, %v390
      %484 = vst.msk [vmem:[#allocation2 + $0x100] sm:$0xff] %vm452, %v391
      %485 = vst.msk [vmem:[#allocation2 + $0x108] sm:$0xff] %vm452, %v392
      %486 = vst.msk [vmem:[#allocation2 + $0x110] sm:$0xff] %vm452, %v393
      %487 = vst.msk [vmem:[#allocation2 + $0x118] sm:$0xff] %vm452, %v394
      %488 = vst.msk [vmem:[#allocation2 + $0x120] sm:$0xff] %vm452, %v395
      %489 = vst.msk [vmem:[#allocation2 + $0x128] sm:$0xff] %vm452, %v396
      %490 = vst.msk [vmem:[#allocation2 + $0x130] sm:$0xff] %vm452, %v397
      %491 = vst.msk [vmem:[#allocation2 + $0x138] sm:$0xff] %vm452, %v398
      %492 = vst.msk [vmem:[#allocation2 + $0x140] sm:$0xff] %vm452, %v399
      %493 = vst.msk [vmem:[#allocation2 + $0x148] sm:$0xff] %vm452, %v400
      %494 = vst.msk [vmem:[#allocation2 + $0x150] sm:$0xff] %vm452, %v401
      %495 = vst.msk [vmem:[#allocation2 + $0x158] sm:$0xff] %vm452, %v402
      %496 = vst.msk [vmem:[#allocation2 + $0x160] sm:$0xff] %vm452, %v403
      %497 = vst.msk [vmem:[#allocation2 + $0x168] sm:$0xff] %vm452, %v404
      %498 = vst.msk [vmem:[#allocation2 + $0x170] sm:$0xff] %vm452, %v405
      %499 = vst.msk [vmem:[#allocation2 + $0x178] sm:$0xff] %vm452, %v406
      %500 = vst.msk [vmem:[#allocation2 + $0x180] sm:$0xff] %vm452, %v407
      %501 = vst.msk [vmem:[#allocation2 + $0x188] sm:$0xff] %vm452, %v408
      %502 = vst.msk [vmem:[#allocation2 + $0x190] sm:$0xff] %vm452, %v409
      %503 = vst.msk [vmem:[#allocation2 + $0x198] sm:$0xff] %vm452, %v410
      %504 = vst.msk [vmem:[#allocation2 + $0x1a0] sm:$0xff] %vm452, %v411
      %505 = vst.msk [vmem:[#allocation2 + $0x1a8] sm:$0xff] %vm452, %v412
      %506 = vst.msk [vmem:[#allocation2 + $0x1b0] sm:$0xff] %vm452, %v413
      %507 = vst.msk [vmem:[#allocation2 + $0x1b8] sm:$0xff] %vm452, %v414
      %508 = vst.msk [vmem:[#allocation2 + $0x1c0] sm:$0xff] %vm452, %v415
      %509 = vst.msk [vmem:[#allocation2 + $0x1c8] sm:$0xff] %vm452, %v416
      %510 = vst.msk [vmem:[#allocation2 + $0x1d0] sm:$0xff] %vm452, %v417
      %511 = vst.msk [vmem:[#allocation2 + $0x1d8] sm:$0xff] %vm452, %v418
      %512 = vst.msk [vmem:[#allocation2 + $0x1e0] sm:$0xff] %vm452, %v419
      %513 = vst.msk [vmem:[#allocation2 + $0x1e8] sm:$0xff] %vm452, %v420
      %514 = vst.msk [vmem:[#allocation2 + $0x1f0] sm:$0xff] %vm452, %v421
      %515 = vst.msk [vmem:[#allocation2 + $0x1f8] sm:$0xff] %vm452, %v422
      %516 = vst.msk [vmem:[#allocation2 + $0x200] sm:$0xff] %vm452, %v423
      %517 = vst.msk [vmem:[#allocation2 + $0x208] sm:$0xff] %vm452, %v424
      %518 = vst.msk [vmem:[#allocation2 + $0x210] sm:$0xff] %vm452, %v425
      %519 = vst.msk [vmem:[#allocation2 + $0x218] sm:$0xff] %vm452, %v426
      %520 = vst.msk [vmem:[#allocation2 + $0x220] sm:$0xff] %vm452, %v427
      %521 = vst.msk [vmem:[#allocation2 + $0x228] sm:$0xff] %vm452, %v428
      %522 = vst.msk [vmem:[#allocation2 + $0x230] sm:$0xff] %vm452, %v429
      %523 = vst.msk [vmem:[#allocation2 + $0x238] sm:$0xff] %vm452, %v430
      %524 = vst.msk [vmem:[#allocation2 + $0x240] sm:$0xff] %vm452, %v431
      %525 = vst.msk [vmem:[#allocation2 + $0x248] sm:$0xff] %vm452, %v432
      %526 = vst.msk [vmem:[#allocation2 + $0x250] sm:$0xff] %vm452, %v433
      %527 = vst.msk [vmem:[#allocation2 + $0x258] sm:$0xff] %vm452, %v434
      %528 = vst.msk [vmem:[#allocation2 + $0x260] sm:$0xff] %vm452, %v435
      %529 = vst.msk [vmem:[#allocation2 + $0x268] sm:$0xff] %vm452, %v436
      %530 = vst.msk [vmem:[#allocation2 + $0x270] sm:$0xff] %vm452, %v437
      %531 = vst.msk [vmem:[#allocation2 + $0x278] sm:$0xff] %vm452, %v438
      %532 = vst.msk [vmem:[#allocation2 + $0x280] sm:$0xff] %vm452, %v439
      %533 = vst.msk [vmem:[#allocation2 + $0x288] sm:$0xff] %vm452, %v440
      %534 = vst.msk [vmem:[#allocation2 + $0x290] sm:$0xff] %vm452, %v441
      %535 = vst.msk [vmem:[#allocation2 + $0x298] sm:$0xff] %vm452, %v442
      %536 = vst.msk [vmem:[#allocation2 + $0x2a0] sm:$0xff] %vm452, %v443
      %537 = vst.msk [vmem:[#allocation2 + $0x2a8] sm:$0xff] %vm452, %v444
      %538 = vst.msk [vmem:[#allocation2 + $0x2b0] sm:$0xff] %vm452, %v445
      %539 = vst.msk [vmem:[#allocation2 + $0x2b8] sm:$0xff] %vm452, %v446
      %540 = vst.msk [vmem:[#allocation2 + $0x2c0] sm:$0xff] %vm452, %v447
      %541 = vst.msk [vmem:[#allocation2 + $0x2c8] sm:$0xff] %vm452, %v448
      %542 = vst.msk [vmem:[#allocation2 + $0x2d0] sm:$0xff] %vm452, %v449
      %543 = vst.msk [vmem:[#allocation2 + $0x2d8] sm:$0x1] %vm450, 0.0
      %v544 = vld [vmem:[#allocation2 + $0x8] sm:$0xff]
      %v545 = vld [vmem:[#allocation2 + $0x10] sm:$0xff]
      %v546 = vld [vmem:[#allocation2 + $0x18] sm:$0xff]
      %v547 = vld [vmem:[#allocation2 + $0x20] sm:$0xff]
      %v548 = vld [vmem:[#allocation2 + $0x28] sm:$0xff]
      %v549 = vld [vmem:[#allocation2 + $0x30] sm:$0xff]
      %v550 = vld [vmem:[#allocation2 + $0x38] sm:$0xff]
      %v551 = vld [vmem:[#allocation2 + $0x40] sm:$0xff]
      %v552 = vld [vmem:[#allocation2 + $0x48] sm:$0xff]
      %v553 = vld [vmem:[#allocation2 + $0x50] sm:$0xff]
      %v554 = vld [vmem:[#allocation2 + $0x58] sm:$0xff]
      %v555 = vld [vmem:[#allocation2 + $0x60] sm:$0xff]
      %v556 = vld [vmem:[#allocation2 + $0x68] sm:$0xff]
      %v557 = vld [vmem:[#allocation2 + $0x70] sm:$0xff]
      %v558 = vld [vmem:[#allocation2 + $0x78] sm:$0xff]
      %v559 = vld [vmem:[#allocation2 + $0x80] sm:$0xff]
      %v560 = vld [vmem:[#allocation2 + $0x88] sm:$0xff]
      %v561 = vld [vmem:[#allocation2 + $0x90] sm:$0xff]
      %v562 = vld [vmem:[#allocation2 + $0x98] sm:$0xff]
      %v563 = vld [vmem:[#allocation2 + $0xa0] sm:$0xff]
      %v564 = vld [vmem:[#allocation2 + $0xa8] sm:$0xff]
      %v565 = vld [vmem:[#allocation2 + $0xb0] sm:$0xff]
      %v566 = vld [vmem:[#allocation2 + $0xb8] sm:$0xff]
      %v567 = vld [vmem:[#allocation2 + $0xc0] sm:$0xff]
      %v568 = vld [vmem:[#allocation2 + $0xc8] sm:$0xff]
      %v569 = vld [vmem:[#allocation2 + $0xd0] sm:$0xff]
      %v570 = vld [vmem:[#allocation2 + $0xd8] sm:$0xff]
      %v571 = vld [vmem:[#allocation2 + $0xe0] sm:$0xff]
      %v572 = vld [vmem:[#allocation2 + $0xe8] sm:$0xff]
      %v573 = vld [vmem:[#allocation2 + $0xf0] sm:$0xff]
      %v574 = vld [vmem:[#allocation2 + $0xf8] sm:$0xff]
      %v575 = vld [vmem:[#allocation2 + $0x100] sm:$0xff]
      %v576 = vld [vmem:[#allocation2 + $0x108] sm:$0xff]
      %v577 = vld [vmem:[#allocation2 + $0x110] sm:$0xff]
      %v578 = vld [vmem:[#allocation2 + $0x118] sm:$0xff]
      %v579 = vld [vmem:[#allocation2 + $0x120] sm:$0xff]
      %v580 = vld [vmem:[#allocation2 + $0x128] sm:$0xff]
      %v581 = vld [vmem:[#allocation2 + $0x130] sm:$0xff]
      %v582 = vld [vmem:[#allocation2 + $0x138] sm:$0xff]
      %v583 = vld [vmem:[#allocation2 + $0x140] sm:$0xff]
      %v584 = vld [vmem:[#allocation2 + $0x148] sm:$0xff]
      %v585 = vld [vmem:[#allocation2 + $0x150] sm:$0xff]
      %v586 = vld [vmem:[#allocation2 + $0x158] sm:$0xff]
      %v587 = vld [vmem:[#allocation2 + $0x160] sm:$0xff]
      %v588 = vld [vmem:[#allocation2 + $0x168] sm:$0xff]
      %v589 = vld [vmem:[#allocation2 + $0x170] sm:$0xff]
      %v590 = vld [vmem:[#allocation2 + $0x178] sm:$0xff]
      %v591 = vld [vmem:[#allocation2 + $0x180] sm:$0xff]
      %v592 = vld [vmem:[#allocation2 + $0x188] sm:$0xff]
      %v593 = vld [vmem:[#allocation2 + $0x190] sm:$0xff]
      %v594 = vld [vmem:[#allocation2 + $0x198] sm:$0xff]
      %v595 = vld [vmem:[#allocation2 + $0x1a0] sm:$0xff]
      %v596 = vld [vmem:[#allocation2 + $0x1a8] sm:$0xff]
      %v597 = vld [vmem:[#allocation2 + $0x1b0] sm:$0xff]
      %v598 = vld [vmem:[#allocation2 + $0x1b8] sm:$0xff]
      %v599 = vld [vmem:[#allocation2 + $0x1c0] sm:$0xff]
      %v600 = vld [vmem:[#allocation2 + $0x1c8] sm:$0xff]
      %v601 = vld [vmem:[#allocation2 + $0x1d0] sm:$0xff]
      %v602 = vld [vmem:[#allocation2 + $0x1d8] sm:$0xff]
      %v603 = vld [vmem:[#allocation2 + $0x1e0] sm:$0xff]
      %v604 = vld [vmem:[#allocation2 + $0x1e8] sm:$0xff]
      %v605 = vld [vmem:[#allocation2 + $0x1f0] sm:$0xff]
      %v606 = vld [vmem:[#allocation2 + $0x1f8] sm:$0xff]
      %v607 = vld [vmem:[#allocation2 + $0x200] sm:$0xff]
      %v608 = vld [vmem:[#allocation2 + $0x208] sm:$0xff]
      %v609 = vld [vmem:[#allocation2 + $0x210] sm:$0xff]
      %v610 = vld [vmem:[#allocation2 + $0x218] sm:$0xff]
      %v611 = vld [vmem:[#allocation2 + $0x220] sm:$0xff]
      %v612 = vld [vmem:[#allocation2 + $0x228] sm:$0xff]
      %v613 = vld [vmem:[#allocation2 + $0x230] sm:$0xff]
      %v614 = vld [vmem:[#allocation2 + $0x238] sm:$0xff]
      %v615 = vld [vmem:[#allocation2 + $0x240] sm:$0xff]
      %v616 = vld [vmem:[#allocation2 + $0x248] sm:$0xff]
      %v617 = vld [vmem:[#allocation2 + $0x250] sm:$0xff]
      %v618 = vld [vmem:[#allocation2 + $0x258] sm:$0xff]
      %v619 = vld [vmem:[#allocation2 + $0x260] sm:$0xff]
      %v620 = vld [vmem:[#allocation2 + $0x268] sm:$0xff]
      %v621 = vld [vmem:[#allocation2 + $0x270] sm:$0xff]
      %v622 = vld [vmem:[#allocation2 + $0x278] sm:$0xff]
      %v623 = vld [vmem:[#allocation2 + $0x280] sm:$0xff]
      %v624 = vld [vmem:[#allocation2 + $0x288] sm:$0xff]
      %v625 = vld [vmem:[#allocation2 + $0x290] sm:$0xff]
      %v626 = vld [vmem:[#allocation2 + $0x298] sm:$0xff]
      %v627 = vld [vmem:[#allocation2 + $0x2a0] sm:$0xff]
      %v628 = vld [vmem:[#allocation2 + $0x2a8] sm:$0xff]
      %v629 = vld [vmem:[#allocation2 + $0x2b0] sm:$0xff]
      %v630 = vld [vmem:[#allocation2 + $0x2b8] sm:$0xff]
      %v631 = vld [vmem:[#allocation2 + $0x2c0] sm:$0xff]
      %v632 = vld [vmem:[#allocation2 + $0x2c8] sm:$0xff]
      %v633 = vld [vmem:[#allocation2 + $0x2d0] sm:$0xff]
      %v634 = vld [vmem:[#allocation2 + $0x7] sm:$0xff]
      %v635 = vld [vmem:[#allocation2 + $0xf] sm:$0xff]
      %v636 = vld [vmem:[#allocation2 + $0x17] sm:$0xff]
      %v637 = vld [vmem:[#allocation2 + $0x1f] sm:$0xff]
      %v638 = vld [vmem:[#allocation2 + $0x27] sm:$0xff]
      %v639 = vld [vmem:[#allocation2 + $0x2f] sm:$0xff]
      %v640 = vld [vmem:[#allocation2 + $0x37] sm:$0xff]
      %v641 = vld [vmem:[#allocation2 + $0x3f] sm:$0xff]
      %v642 = vld [vmem:[#allocation2 + $0x47] sm:$0xff]
      %v643 = vld [vmem:[#allocation2 + $0x4f] sm:$0xff]
      %v644 = vld [vmem:[#allocation2 + $0x57] sm:$0xff]
      %v645 = vld [vmem:[#allocation2 + $0x5f] sm:$0xff]
      %v646 = vld [vmem:[#allocation2 + $0x67] sm:$0xff]
      %v647 = vld [vmem:[#allocation2 + $0x6f] sm:$0xff]
      %v648 = vld [vmem:[#allocation2 + $0x77] sm:$0xff]
      %v649 = vld [vmem:[#allocation2 + $0x7f] sm:$0xff]
      %v650 = vld [vmem:[#allocation2 + $0x87] sm:$0xff]
      %v651 = vld [vmem:[#allocation2 + $0x8f] sm:$0xff]
      %v652 = vld [vmem:[#allocation2 + $0x97] sm:$0xff]
      %v653 = vld [vmem:[#allocation2 + $0x9f] sm:$0xff]
      %v654 = vld [vmem:[#allocation2 + $0xa7] sm:$0xff]
      %v655 = vld [vmem:[#allocation2 + $0xaf] sm:$0xff]
      %v656 = vld [vmem:[#allocation2 + $0xb7] sm:$0xff]
      %v657 = vld [vmem:[#allocation2 + $0xbf] sm:$0xff]
      %v658 = vld [vmem:[#allocation2 + $0xc7] sm:$0xff]
      %v659 = vld [vmem:[#allocation2 + $0xcf] sm:$0xff]
      %v660 = vld [vmem:[#allocation2 + $0xd7] sm:$0xff]
      %v661 = vld [vmem:[#allocation2 + $0xdf] sm:$0xff]
      %v662 = vld [vmem:[#allocation2 + $0xe7] sm:$0xff]
      %v663 = vld [vmem:[#allocation2 + $0xef] sm:$0xff]
      %v664 = vld [vmem:[#allocation2 + $0xf7] sm:$0xff]
      %v665 = vld [vmem:[#allocation2 + $0xff] sm:$0xff]
      %v666 = vld [vmem:[#allocation2 + $0x107] sm:$0xff]
      %v667 = vld [vmem:[#allocation2 + $0x10f] sm:$0xff]
      %v668 = vld [vmem:[#allocation2 + $0x117] sm:$0xff]
      %v669 = vld [vmem:[#allocation2 + $0x11f] sm:$0xff]
      %v670 = vld [vmem:[#allocation2 + $0x127] sm:$0xff]
      %v671 = vld [vmem:[#allocation2 + $0x12f] sm:$0xff]
      %v672 = vld [vmem:[#allocation2 + $0x137] sm:$0xff]
      %v673 = vld [vmem:[#allocation2 + $0x13f] sm:$0xff]
      %v674 = vld [vmem:[#allocation2 + $0x147] sm:$0xff]
      %v675 = vld [vmem:[#allocation2 + $0x14f] sm:$0xff]
      %v676 = vld [vmem:[#allocation2 + $0x157] sm:$0xff]
      %v677 = vld [vmem:[#allocation2 + $0x15f] sm:$0xff]
      %v678 = vld [vmem:[#allocation2 + $0x167] sm:$0xff]
      %v679 = vld [vmem:[#allocation2 + $0x16f] sm:$0xff]
      %v680 = vld [vmem:[#allocation2 + $0x177] sm:$0xff]
      %v681 = vld [vmem:[#allocation2 + $0x17f] sm:$0xff]
      %v682 = vld [vmem:[#allocation2 + $0x187] sm:$0xff]
      %v683 = vld [vmem:[#allocation2 + $0x18f] sm:$0xff]
      %v684 = vld [vmem:[#allocation2 + $0x197] sm:$0xff]
      %v685 = vld [vmem:[#allocation2 + $0x19f] sm:$0xff]
      %v686 = vld [vmem:[#allocation2 + $0x1a7] sm:$0xff]
      %v687 = vld [vmem:[#allocation2 + $0x1af] sm:$0xff]
      %v688 = vld [vmem:[#allocation2 + $0x1b7] sm:$0xff]
      %v689 = vld [vmem:[#allocation2 + $0x1bf] sm:$0xff]
      %v690 = vld [vmem:[#allocation2 + $0x1c7] sm:$0xff]
      %v691 = vld [vmem:[#allocation2 + $0x1cf] sm:$0xff]
      %v692 = vld [vmem:[#allocation2 + $0x1d7] sm:$0xff]
      %v693 = vld [vmem:[#allocation2 + $0x1df] sm:$0xff]
      %v694 = vld [vmem:[#allocation2 + $0x1e7] sm:$0xff]
      %v695 = vld [vmem:[#allocation2 + $0x1ef] sm:$0xff]
      %v696 = vld [vmem:[#allocation2 + $0x1f7] sm:$0xff]
      %v697 = vld [vmem:[#allocation2 + $0x1ff] sm:$0xff]
      %v698 = vld [vmem:[#allocation2 + $0x207] sm:$0xff]
      %v699 = vld [vmem:[#allocation2 + $0x20f] sm:$0xff]
      %v700 = vld [vmem:[#allocation2 + $0x217] sm:$0xff]
      %v701 = vld [vmem:[#allocation2 + $0x21f] sm:$0xff]
      %v702 = vld [vmem:[#allocation2 + $0x227] sm:$0xff]
      %v703 = vld [vmem:[#allocation2 + $0x22f] sm:$0xff]
      %v704 = vld [vmem:[#allocation2 + $0x237] sm:$0xff]
      %v705 = vld [vmem:[#allocation2 + $0x23f] sm:$0xff]
      %v706 = vld [vmem:[#allocation2 + $0x247] sm:$0xff]
      %v707 = vld [vmem:[#allocation2 + $0x24f] sm:$0xff]
      %v708 = vld [vmem:[#allocation2 + $0x257] sm:$0xff]
      %v709 = vld [vmem:[#allocation2 + $0x25f] sm:$0xff]
      %v710 = vld [vmem:[#allocation2 + $0x267] sm:$0xff]
      %v711 = vld [vmem:[#allocation2 + $0x26f] sm:$0xff]
      %v712 = vld [vmem:[#allocation2 + $0x277] sm:$0xff]
      %v713 = vld [vmem:[#allocation2 + $0x27f] sm:$0xff]
      %v714 = vld [vmem:[#allocation2 + $0x287] sm:$0xff]
      %v715 = vld [vmem:[#allocation2 + $0x28f] sm:$0xff]
      %v716 = vld [vmem:[#allocation2 + $0x297] sm:$0xff]
      %v717 = vld [vmem:[#allocation2 + $0x29f] sm:$0xff]
      %v718 = vld [vmem:[#allocation2 + $0x2a7] sm:$0xff]
      %v719 = vld [vmem:[#allocation2 + $0x2af] sm:$0xff]
      %v720 = vld [vmem:[#allocation2 + $0x2b7] sm:$0xff]
      %v721 = vld [vmem:[#allocation2 + $0x2bf] sm:$0xff]
      %v722 = vld [vmem:[#allocation2 + $0x2c7] sm:$0xff]
      %v723 = vld [vmem:[#allocation2 + $0x2cf] sm:$0xff]
      %v724 = vld [vmem:[#allocation2 + $0x9] sm:$0xff]
      %v725 = vld [vmem:[#allocation2 + $0x11] sm:$0xff]
      %v726 = vld [vmem:[#allocation2 + $0x19] sm:$0xff]
      %v727 = vld [vmem:[#allocation2 + $0x21] sm:$0xff]
      %v728 = vld [vmem:[#allocation2 + $0x29] sm:$0xff]
      %v729 = vld [vmem:[#allocation2 + $0x31] sm:$0xff]
      %v730 = vld [vmem:[#allocation2 + $0x39] sm:$0xff]
      %v731 = vld [vmem:[#allocation2 + $0x41] sm:$0xff]
      %v732 = vld [vmem:[#allocation2 + $0x49] sm:$0xff]
      %v733 = vld [vmem:[#allocation2 + $0x51] sm:$0xff]
      %v734 = vld [vmem:[#allocation2 + $0x59] sm:$0xff]
      %v735 = vld [vmem:[#allocation2 + $0x61] sm:$0xff]
      %v736 = vld [vmem:[#allocation2 + $0x69] sm:$0xff]
      %v737 = vld [vmem:[#allocation2 + $0x71] sm:$0xff]
      %v738 = vld [vmem:[#allocation2 + $0x79] sm:$0xff]
      %v739 = vld [vmem:[#allocation2 + $0x81] sm:$0xff]
      %v740 = vld [vmem:[#allocation2 + $0x89] sm:$0xff]
      %v741 = vld [vmem:[#allocation2 + $0x91] sm:$0xff]
      %v742 = vld [vmem:[#allocation2 + $0x99] sm:$0xff]
      %v743 = vld [vmem:[#allocation2 + $0xa1] sm:$0xff]
      %v744 = vld [vmem:[#allocation2 + $0xa9] sm:$0xff]
      %v745 = vld [vmem:[#allocation2 + $0xb1] sm:$0xff]
      %v746 = vld [vmem:[#allocation2 + $0xb9] sm:$0xff]
      %v747 = vld [vmem:[#allocation2 + $0xc1] sm:$0xff]
      %v748 = vld [vmem:[#allocation2 + $0xc9] sm:$0xff]
      %v749 = vld [vmem:[#allocation2 + $0xd1] sm:$0xff]
      %v750 = vld [vmem:[#allocation2 + $0xd9] sm:$0xff]
      %v751 = vld [vmem:[#allocation2 + $0xe1] sm:$0xff]
      %v752 = vld [vmem:[#allocation2 + $0xe9] sm:$0xff]
      %v753 = vld [vmem:[#allocation2 + $0xf1] sm:$0xff]
      %v754 = vld [vmem:[#allocation2 + $0xf9] sm:$0xff]
      %v755 = vld [vmem:[#allocation2 + $0x101] sm:$0xff]
      %v756 = vld [vmem:[#allocation2 + $0x109] sm:$0xff]
      %v757 = vld [vmem:[#allocation2 + $0x111] sm:$0xff]
      %v758 = vld [vmem:[#allocation2 + $0x119] sm:$0xff]
      %v759 = vld [vmem:[#allocation2 + $0x121] sm:$0xff]
      %v760 = vld [vmem:[#allocation2 + $0x129] sm:$0xff]
      %v761 = vld [vmem:[#allocation2 + $0x131] sm:$0xff]
      %v762 = vld [vmem:[#allocation2 + $0x139] sm:$0xff]
      %v763 = vld [vmem:[#allocation2 + $0x141] sm:$0xff]
      %v764 = vld [vmem:[#allocation2 + $0x149] sm:$0xff]
      %v765 = vld [vmem:[#allocation2 + $0x151] sm:$0xff]
      %v766 = vld [vmem:[#allocation2 + $0x159] sm:$0xff]
      %v767 = vld [vmem:[#allocation2 + $0x161] sm:$0xff]
      %v768 = vld [vmem:[#allocation2 + $0x169] sm:$0xff]
      %v769 = vld [vmem:[#allocation2 + $0x171] sm:$0xff]
      %v770 = vld [vmem:[#allocation2 + $0x179] sm:$0xff]
      %v771 = vld [vmem:[#allocation2 + $0x181] sm:$0xff]
      %v772 = vld [vmem:[#allocation2 + $0x189] sm:$0xff]
      %v773 = vld [vmem:[#allocation2 + $0x191] sm:$0xff]
      %v774 = vld [vmem:[#allocation2 + $0x199] sm:$0xff]
      %v775 = vld [vmem:[#allocation2 + $0x1a1] sm:$0xff]
      %v776 = vld [vmem:[#allocation2 + $0x1a9] sm:$0xff]
      %v777 = vld [vmem:[#allocation2 + $0x1b1] sm:$0xff]
      %v778 = vld [vmem:[#allocation2 + $0x1b9] sm:$0xff]
      %v779 = vld [vmem:[#allocation2 + $0x1c1] sm:$0xff]
      %v780 = vld [vmem:[#allocation2 + $0x1c9] sm:$0xff]
      %v781 = vld [vmem:[#allocation2 + $0x1d1] sm:$0xff]
      %v782 = vld [vmem:[#allocation2 + $0x1d9] sm:$0xff]
      %v783 = vld [vmem:[#allocation2 + $0x1e1] sm:$0xff]
      %v784 = vld [vmem:[#allocation2 + $0x1e9] sm:$0xff]
      %v785 = vld [vmem:[#allocation2 + $0x1f1] sm:$0xff]
      %v786 = vld [vmem:[#allocation2 + $0x1f9] sm:$0xff]
      %v787 = vld [vmem:[#allocation2 + $0x201] sm:$0xff]
      %v788 = vld [vmem:[#allocation2 + $0x209] sm:$0xff]
      %v789 = vld [vmem:[#allocation2 + $0x211] sm:$0xff]
      %v790 = vld [vmem:[#allocation2 + $0x219] sm:$0xff]
      %v791 = vld [vmem:[#allocation2 + $0x221] sm:$0xff]
      %v792 = vld [vmem:[#allocation2 + $0x229] sm:$0xff]
      %v793 = vld [vmem:[#allocation2 + $0x231] sm:$0xff]
      %v794 = vld [vmem:[#allocation2 + $0x239] sm:$0xff]
      %v795 = vld [vmem:[#allocation2 + $0x241] sm:$0xff]
      %v796 = vld [vmem:[#allocation2 + $0x249] sm:$0xff]
      %v797 = vld [vmem:[#allocation2 + $0x251] sm:$0xff]
      %v798 = vld [vmem:[#allocation2 + $0x259] sm:$0xff]
      %v799 = vld [vmem:[#allocation2 + $0x261] sm:$0xff]
      %v800 = vld [vmem:[#allocation2 + $0x269] sm:$0xff]
      %v801 = vld [vmem:[#allocation2 + $0x271] sm:$0xff]
      %v802 = vld [vmem:[#allocation2 + $0x279] sm:$0xff]
      %v803 = vld [vmem:[#allocation2 + $0x281] sm:$0xff]
      %v804 = vld [vmem:[#allocation2 + $0x289] sm:$0xff]
      %v805 = vld [vmem:[#allocation2 + $0x291] sm:$0xff]
      %v806 = vld [vmem:[#allocation2 + $0x299] sm:$0xff]
      %v807 = vld [vmem:[#allocation2 + $0x2a1] sm:$0xff]
      %v808 = vld [vmem:[#allocation2 + $0x2a9] sm:$0xff]
      %v809 = vld [vmem:[#allocation2 + $0x2b1] sm:$0xff]
      %v810 = vld [vmem:[#allocation2 + $0x2b9] sm:$0xff]
      %v811 = vld [vmem:[#allocation2 + $0x2c1] sm:$0xff]
      %v812 = vld [vmem:[#allocation2 + $0x2c9] sm:$0xff]
      %v813 = vld [vmem:[#allocation2 + $0x2d1] sm:$0xff]
      %v814 = vld [vmem:[%s1] sm:$0xff]
      %v815 = vld [vmem:[%s1 + $0x8] sm:$0xff]
      %v816 = vld [vmem:[%s1 + $0x10] sm:$0xff]
      %v817 = vld [vmem:[%s1 + $0x18] sm:$0xff]
      %v818 = vld [vmem:[%s1 + $0x20] sm:$0xff]
      %v819 = vld [vmem:[%s1 + $0x28] sm:$0xff]
      %v820 = vld [vmem:[%s1 + $0x30] sm:$0xff]
      %v821 = vld [vmem:[%s1 + $0x38] sm:$0xff]
      %v822 = vld [vmem:[%s1 + $0x40] sm:$0xff]
      %v823 = vld [vmem:[%s1 + $0x48] sm:$0xff]
      %v824 = vld [vmem:[%s1 + $0x50] sm:$0xff]
      %v825 = vld [vmem:[%s1 + $0x58] sm:$0xff]
      %v826 = vld [vmem:[%s1 + $0x60] sm:$0xff]
      %v827 = vld [vmem:[%s1 + $0x68] sm:$0xff]
      %v828 = vld [vmem:[%s1 + $0x70] sm:$0xff]
      %v829 = vld [vmem:[%s1 + $0x78] sm:$0xff]
      %v830 = vld [vmem:[%s1 + $0x80] sm:$0xff]
      %v831 = vld [vmem:[%s1 + $0x88] sm:$0xff]
      %v832 = vld [vmem:[%s1 + $0x90] sm:$0xff]
      %v833 = vld [vmem:[%s1 + $0x98] sm:$0xff]
      %v834 = vld [vmem:[%s1 + $0xa0] sm:$0xff]
      %v835 = vld [vmem:[%s1 + $0xa8] sm:$0xff]
      %v836 = vld [vmem:[%s1 + $0xb0] sm:$0xff]
      %v837 = vld [vmem:[%s1 + $0xb8] sm:$0xff]
      %v838 = vld [vmem:[%s1 + $0xc0] sm:$0xff]
      %v839 = vld [vmem:[%s1 + $0xc8] sm:$0xff]
      %v840 = vld [vmem:[%s1 + $0xd0] sm:$0xff]
      %v841 = vld [vmem:[%s1 + $0xd8] sm:$0xff]
      %v842 = vld [vmem:[%s1 + $0xe0] sm:$0xff]
      %v843 = vld [vmem:[%s1 + $0xe8] sm:$0xff]
      %v844 = vld [vmem:[%s1 + $0xf0] sm:$0xff]
      %v845 = vld [vmem:[%s1 + $0xf8] sm:$0xff]
      %v846 = vld [vmem:[%s1 + $0x100] sm:$0xff]
      %v847 = vld [vmem:[%s1 + $0x108] sm:$0xff]
      %v848 = vld [vmem:[%s1 + $0x110] sm:$0xff]
      %v849 = vld [vmem:[%s1 + $0x118] sm:$0xff]
      %v850 = vld [vmem:[%s1 + $0x120] sm:$0xff]
      %v851 = vld [vmem:[%s1 + $0x128] sm:$0xff]
      %v852 = vld [vmem:[%s1 + $0x130] sm:$0xff]
      %v853 = vld [vmem:[%s1 + $0x138] sm:$0xff]
      %v854 = vld [vmem:[%s1 + $0x140] sm:$0xff]
      %v855 = vld [vmem:[%s1 + $0x148] sm:$0xff]
      %v856 = vld [vmem:[%s1 + $0x150] sm:$0xff]
      %v857 = vld [vmem:[%s1 + $0x158] sm:$0xff]
      %v858 = vld [vmem:[%s1 + $0x160] sm:$0xff]
      %v859 = vld [vmem:[%s1 + $0x168] sm:$0xff]
      %v860 = vld [vmem:[%s1 + $0x170] sm:$0xff]
      %v861 = vld [vmem:[%s1 + $0x178] sm:$0xff]
      %v862 = vld [vmem:[%s1 + $0x180] sm:$0xff]
      %v863 = vld [vmem:[%s1 + $0x188] sm:$0xff]
      %v864 = vld [vmem:[%s1 + $0x190] sm:$0xff]
      %v865 = vld [vmem:[%s1 + $0x198] sm:$0xff]
      %v866 = vld [vmem:[%s1 + $0x1a0] sm:$0xff]
      %v867 = vld [vmem:[%s1 + $0x1a8] sm:$0xff]
      %v868 = vld [vmem:[%s1 + $0x1b0] sm:$0xff]
      %v869 = vld [vmem:[%s1 + $0x1b8] sm:$0xff]
      %v870 = vld [vmem:[%s1 + $0x1c0] sm:$0xff]
      %v871 = vld [vmem:[%s1 + $0x1c8] sm:$0xff]
      %v872 = vld [vmem:[%s1 + $0x1d0] sm:$0xff]
      %v873 = vld [vmem:[%s1 + $0x1d8] sm:$0xff]
      %v874 = vld [vmem:[%s1 + $0x1e0] sm:$0xff]
      %v875 = vld [vmem:[%s1 + $0x1e8] sm:$0xff]
      %v876 = vld [vmem:[%s1 + $0x1f0] sm:$0xff]
      %v877 = vld [vmem:[%s1 + $0x1f8] sm:$0xff]
      %v878 = vld [vmem:[%s1 + $0x200] sm:$0xff]
      %v879 = vld [vmem:[%s1 + $0x208] sm:$0xff]
      %v880 = vld [vmem:[%s1 + $0x210] sm:$0xff]
      %v881 = vld [vmem:[%s1 + $0x218] sm:$0xff]
      %v882 = vld [vmem:[%s1 + $0x220] sm:$0xff]
      %v883 = vld [vmem:[%s1 + $0x228] sm:$0xff]
      %v884 = vld [vmem:[%s1 + $0x230] sm:$0xff]
      %v885 = vld [vmem:[%s1 + $0x238] sm:$0xff]
      %v886 = vld [vmem:[%s1 + $0x240] sm:$0xff]
      %v887 = vld [vmem:[%s1 + $0x248] sm:$0xff]
      %v888 = vld [vmem:[%s1 + $0x250] sm:$0xff]
      %v889 = vld [vmem:[%s1 + $0x258] sm:$0xff]
      %v890 = vld [vmem:[%s1 + $0x260] sm:$0xff]
      %v891 = vld [vmem:[%s1 + $0x268] sm:$0xff]
      %v892 = vld [vmem:[%s1 + $0x270] sm:$0xff]
      %v893 = vld [vmem:[%s1 + $0x278] sm:$0xff]
      %v894 = vld [vmem:[%s1 + $0x280] sm:$0xff]
      %v895 = vld [vmem:[%s1 + $0x288] sm:$0xff]
      %v896 = vld [vmem:[%s1 + $0x290] sm:$0xff]
      %v897 = vld [vmem:[%s1 + $0x298] sm:$0xff]
      %v898 = vld [vmem:[%s1 + $0x2a0] sm:$0xff]
      %v899 = vld [vmem:[%s1 + $0x2a8] sm:$0xff]
      %v900 = vld [vmem:[%s1 + $0x2b0] sm:$0xff]
      %v901 = vld [vmem:[%s1 + $0x2b8] sm:$0xff]
      %v902 = vld [vmem:[%s1 + $0x2c0] sm:$0xff]
      %v903 = vld [vmem:[%s1 + $0x2c8] sm:$0xff]
      %vm904 = vcmp.gt.f32.partialorder %v814, 0.5
      %vm905 = vcmp.gt.f32.partialorder %v815, 0.5
      %vm906 = vcmp.gt.f32.partialorder %v816, 0.5
      %vm907 = vcmp.gt.f32.partialorder %v817, 0.5
      %vm908 = vcmp.gt.f32.partialorder %v818, 0.5
      %vm909 = vcmp.gt.f32.partialorder %v819, 0.5
      %vm910 = vcmp.gt.f32.partialorder %v820, 0.5
      %vm911 = vcmp.gt.f32.partialorder %v821, 0.5
      %vm912 = vcmp.gt.f32.partialorder %v822, 0.5
      %vm913 = vcmp.gt.f32.partialorder %v823, 0.5
      %vm914 = vcmp.gt.f32.partialorder %v824, 0.5
      %vm915 = vcmp.gt.f32.partialorder %v825, 0.5
      %vm916 = vcmp.gt.f32.partialorder %v826, 0.5
      %vm917 = vcmp.gt.f32.partialorder %v827, 0.5
      %vm918 = vcmp.gt.f32.partialorder %v828, 0.5
      %vm919 = vcmp.gt.f32.partialorder %v829, 0.5
      %vm920 = vcmp.gt.f32.partialorder %v830, 0.5
      %vm921 = vcmp.gt.f32.partialorder %v831, 0.5
      %vm922 = vcmp.gt.f32.partialorder %v832, 0.5
      %vm923 = vcmp.gt.f32.partialorder %v833, 0.5
      %vm924 = vcmp.gt.f32.partialorder %v834, 0.5
      %vm925 = vcmp.gt.f32.partialorder %v835, 0.5
      %vm926 = vcmp.gt.f32.partialorder %v836, 0.5
      %vm927 = vcmp.gt.f32.partialorder %v837, 0.5
      %vm928 = vcmp.gt.f32.partialorder %v838, 0.5
      %vm929 = vcmp.gt.f32.partialorder %v839, 0.5
      %vm930 = vcmp.gt.f32.partialorder %v840, 0.5
      %vm931 = vcmp.gt.f32.partialorder %v841, 0.5
      %vm932 = vcmp.gt.f32.partialorder %v842, 0.5
      %vm933 = vcmp.gt.f32.partialorder %v843, 0.5
      %vm934 = vcmp.gt.f32.partialorder %v844, 0.5
      %vm935 = vcmp.gt.f32.partialorder %v845, 0.5
      %vm936 = vcmp.gt.f32.partialorder %v846, 0.5
      %vm937 = vcmp.gt.f32.partialorder %v847, 0.5
      %vm938 = vcmp.gt.f32.partialorder %v848, 0.5
      %vm939 = vcmp.gt.f32.partialorder %v849, 0.5
      %vm940 = vcmp.gt.f32.partialorder %v850, 0.5
      %vm941 = vcmp.gt.f32.partialorder %v851, 0.5
      %vm942 = vcmp.gt.f32.partialorder %v852, 0.5
      %vm943 = vcmp.gt.f32.partialorder %v853, 0.5
      %vm944 = vcmp.gt.f32.partialorder %v854, 0.5
      %vm945 = vcmp.gt.f32.partialorder %v855, 0.5
      %vm946 = vcmp.gt.f32.partialorder %v856, 0.5
      %vm947 = vcmp.gt.f32.partialorder %v857, 0.5
      %vm948 = vcmp.gt.f32.partialorder %v858, 0.5
      %vm949 = vcmp.gt.f32.partialorder %v859, 0.5
      %vm950 = vcmp.gt.f32.partialorder %v860, 0.5
      %vm951 = vcmp.gt.f32.partialorder %v861, 0.5
      %vm952 = vcmp.gt.f32.partialorder %v862, 0.5
      %vm953 = vcmp.gt.f32.partialorder %v863, 0.5
      %vm954 = vcmp.gt.f32.partialorder %v864, 0.5
      %vm955 = vcmp.gt.f32.partialorder %v865, 0.5
      %vm956 = vcmp.gt.f32.partialorder %v866, 0.5
      %vm957 = vcmp.gt.f32.partialorder %v867, 0.5
      %vm958 = vcmp.gt.f32.partialorder %v868, 0.5
      %vm959 = vcmp.gt.f32.partialorder %v869, 0.5
      %vm960 = vcmp.gt.f32.partialorder %v870, 0.5
      %vm961 = vcmp.gt.f32.partialorder %v871, 0.5
      %vm962 = vcmp.gt.f32.partialorder %v872, 0.5
      %vm963 = vcmp.gt.f32.partialorder %v873, 0.5
      %vm964 = vcmp.gt.f32.partialorder %v874, 0.5
      %vm965 = vcmp.gt.f32.partialorder %v875, 0.5
      %vm966 = vcmp.gt.f32.partialorder %v876, 0.5
      %vm967 = vcmp.gt.f32.partialorder %v877, 0.5
      %vm968 = vcmp.gt.f32.partialorder %v878, 0.5
      %vm969 = vcmp.gt.f32.partialorder %v879, 0.5
      %vm970 = vcmp.gt.f32.partialorder %v880, 0.5
      %vm971 = vcmp.gt.f32.partialorder %v881, 0.5
      %vm972 = vcmp.gt.f32.partialorder %v882, 0.5
      %vm973 = vcmp.gt.f32.partialorder %v883, 0.5
      %vm974 = vcmp.gt.f32.partialorder %v884, 0.5
      %vm975 = vcmp.gt.f32.partialorder %v885, 0.5
      %vm976 = vcmp.gt.f32.partialorder %v886, 0.5
      %vm977 = vcmp.gt.f32.partialorder %v887, 0.5
      %vm978 = vcmp.gt.f32.partialorder %v888, 0.5
      %vm979 = vcmp.gt.f32.partialorder %v889, 0.5
      %vm980 = vcmp.gt.f32.partialorder %v890, 0.5
      %vm981 = vcmp.gt.f32.partialorder %v891, 0.5
      %vm982 = vcmp.gt.f32.partialorder %v892, 0.5
      %vm983 = vcmp.gt.f32.partialorder %v893, 0.5
      %vm984 = vcmp.gt.f32.partialorder %v894, 0.5
      %vm985 = vcmp.gt.f32.partialorder %v895, 0.5
      %vm986 = vcmp.gt.f32.partialorder %v896, 0.5
      %vm987 = vcmp.gt.f32.partialorder %v897, 0.5
      %vm988 = vcmp.gt.f32.partialorder %v898, 0.5
      %vm989 = vcmp.gt.f32.partialorder %v899, 0.5
      %vm990 = vcmp.gt.f32.partialorder %v900, 0.5
      %vm991 = vcmp.gt.f32.partialorder %v901, 0.5
      %vm992 = vcmp.gt.f32.partialorder %v902, 0.5
      %vm993 = vcmp.gt.f32.partialorder %v903, 0.5
      %v994 = vsel %vm904, 1, 0
      %v995 = vsel %vm905, 1, 0
      %v996 = vsel %vm906, 1, 0
      %v997 = vsel %vm907, 1, 0
      %v998 = vsel %vm908, 1, 0
      %v999 = vsel %vm909, 1, 0
      %v1000 = vsel %vm910, 1, 0
      %v1001 = vsel %vm911, 1, 0
      %v1002 = vsel %vm912, 1, 0
      %v1003 = vsel %vm913, 1, 0
      %v1004 = vsel %vm914, 1, 0
      %v1005 = vsel %vm915, 1, 0
      %v1006 = vsel %vm916, 1, 0
      %v1007 = vsel %vm917, 1, 0
      %v1008 = vsel %vm918, 1, 0
      %v1009 = vsel %vm919, 1, 0
      %v1010 = vsel %vm920, 1, 0
      %v1011 = vsel %vm921, 1, 0
      %v1012 = vsel %vm922, 1, 0
      %v1013 = vsel %vm923, 1, 0
      %v1014 = vsel %vm924, 1, 0
      %v1015 = vsel %vm925, 1, 0
      %v1016 = vsel %vm926, 1, 0
      %v1017 = vsel %vm927, 1, 0
      %v1018 = vsel %vm928, 1, 0
      %v1019 = vsel %vm929, 1, 0
      %v1020 = vsel %vm930, 1, 0
      %v1021 = vsel %vm931, 1, 0
      %v1022 = vsel %vm932, 1, 0
      %v1023 = vsel %vm933, 1, 0
      %v1024 = vsel %vm934, 1, 0
      %v1025 = vsel %vm935, 1, 0
      %v1026 = vsel %vm936, 1, 0
      %v1027 = vsel %vm937, 1, 0
      %v1028 = vsel %vm938, 1, 0
      %v1029 = vsel %vm939, 1, 0
      %v1030 = vsel %vm940, 1, 0
      %v1031 = vsel %vm941, 1, 0
      %v1032 = vsel %vm942, 1, 0
      %v1033 = vsel %vm943, 1, 0
      %v1034 = vsel %vm944, 1, 0
      %v1035 = vsel %vm945, 1, 0
      %v1036 = vsel %vm946, 1, 0
      %v1037 = vsel %vm947, 1, 0
      %v1038 = vsel %vm948, 1, 0
      %v1039 = vsel %vm949, 1, 0
      %v1040 = vsel %vm950, 1, 0
      %v1041 = vsel %vm951, 1, 0
      %v1042 = vsel %vm952, 1, 0
      %v1043 = vsel %vm953, 1, 0
      %v1044 = vsel %vm954, 1, 0
      %v1045 = vsel %vm955, 1, 0
      %v1046 = vsel %vm956, 1, 0
      %v1047 = vsel %vm957, 1, 0
      %v1048 = vsel %vm958, 1, 0
      %v1049 = vsel %vm959, 1, 0
      %v1050 = vsel %vm960, 1, 0
      %v1051 = vsel %vm961, 1, 0
      %v1052 = vsel %vm962, 1, 0
      %v1053 = vsel %vm963, 1, 0
      %v1054 = vsel %vm964, 1, 0
      %v1055 = vsel %vm965, 1, 0
      %v1056 = vsel %vm966, 1, 0
      %v1057 = vsel %vm967, 1, 0
      %v1058 = vsel %vm968, 1, 0
      %v1059 = vsel %vm969, 1, 0
      %v1060 = vsel %vm970, 1, 0
      %v1061 = vsel %vm971, 1, 0
      %v1062 = vsel %vm972, 1, 0
      %v1063 = vsel %vm973, 1, 0
      %v1064 = vsel %vm974, 1, 0
      %v1065 = vsel %vm975, 1, 0
      %v1066 = vsel %vm976, 1, 0
      %v1067 = vsel %vm977, 1, 0
      %v1068 = vsel %vm978, 1, 0
      %v1069 = vsel %vm979, 1, 0
      %v1070 = vsel %vm980, 1, 0
      %v1071 = vsel %vm981, 1, 0
      %v1072 = vsel %vm982, 1, 0
      %v1073 = vsel %vm983, 1, 0
      %v1074 = vsel %vm984, 1, 0
      %v1075 = vsel %vm985, 1, 0
      %v1076 = vsel %vm986, 1, 0
      %v1077 = vsel %vm987, 1, 0
      %v1078 = vsel %vm988, 1, 0
      %v1079 = vsel %vm989, 1, 0
      %v1080 = vsel %vm990, 1, 0
      %v1081 = vsel %vm991, 1, 0
      %v1082 = vsel %vm992, 1, 0
      %v1083 = vsel %vm993, 1, 0
      %1084 = vset.pattern.permute.xlu0 0
      %1085 = vperm.xlu0 %1084, %v994
      %v1086 = vpop.permute.xlu0 %1085
      %1087 = vset.pattern.permute.xlu0 0
      %1088 = vperm.xlu0 %1087, %v995
      %v1089 = vpop.permute.xlu0 %1088
      %1090 = vset.pattern.permute.xlu0 0
      %1091 = vperm.xlu0 %1090, %v996
      %v1092 = vpop.permute.xlu0 %1091
      %1093 = vset.pattern.permute.xlu0 0
      %1094 = vperm.xlu0 %1093, %v997
      %v1095 = vpop.permute.xlu0 %1094
      %1096 = vset.pattern.permute.xlu0 0
      %1097 = vperm.xlu0 %1096, %v998
      %v1098 = vpop.permute.xlu0 %1097
      %1099 = vset.pattern.permute.xlu0 0
      %1100 = vperm.xlu0 %1099, %v999
      %v1101 = vpop.permute.xlu0 %1100
      %1102 = vset.pattern.permute.xlu0 0
      %1103 = vperm.xlu0 %1102, %v1000
      %v1104 = vpop.permute.xlu0 %1103
      %1105 = vset.pattern.permute.xlu0 0
      %1106 = vperm.xlu0 %1105, %v1001
      %v1107 = vpop.permute.xlu0 %1106
      %1108 = vset.pattern.permute.xlu0 0
      %1109 = vperm.xlu0 %1108, %v1002
      %v1110 = vpop.permute.xlu0 %1109
      %1111 = vset.pattern.permute.xlu0 0
      %1112 = vperm.xlu0 %1111, %v1003
      %v1113 = vpop.permute.xlu0 %1112
      %1114 = vset.pattern.permute.xlu0 0
      %1115 = vperm.xlu0 %1114, %v1004
      %v1116 = vpop.permute.xlu0 %1115
      %1117 = vset.pattern.permute.xlu0 0
      %1118 = vperm.xlu0 %1117, %v1005
      %v1119 = vpop.permute.xlu0 %1118
      %1120 = vset.pattern.permute.xlu0 0
      %1121 = vperm.xlu0 %1120, %v1006
      %v1122 = vpop.permute.xlu0 %1121
      %1123 = vset.pattern.permute.xlu0 0
      %1124 = vperm.xlu0 %1123, %v1007
      %v1125 = vpop.permute.xlu0 %1124
      %1126 = vset.pattern.permute.xlu0 0
      %1127 = vperm.xlu0 %1126, %v1008
      %v1128 = vpop.permute.xlu0 %1127
      %1129 = vset.pattern.permute.xlu0 0
      %1130 = vperm.xlu0 %1129, %v1009
      %v1131 = vpop.permute.xlu0 %1130
      %1132 = vset.pattern.permute.xlu0 0
      %1133 = vperm.xlu0 %1132, %v1010
      %v1134 = vpop.permute.xlu0 %1133
      %1135 = vset.pattern.permute.xlu0 0
      %1136 = vperm.xlu0 %1135, %v1011
      %v1137 = vpop.permute.xlu0 %1136
      %1138 = vset.pattern.permute.xlu0 0
      %1139 = vperm.xlu0 %1138, %v1012
      %v1140 = vpop.permute.xlu0 %1139
      %1141 = vset.pattern.permute.xlu0 0
      %1142 = vperm.xlu0 %1141, %v1013
      %v1143 = vpop.permute.xlu0 %1142
      %1144 = vset.pattern.permute.xlu0 0
      %1145 = vperm.xlu0 %1144, %v1014
      %v1146 = vpop.permute.xlu0 %1145
      %1147 = vset.pattern.permute.xlu0 0
      %1148 = vperm.xlu0 %1147, %v1015
      %v1149 = vpop.permute.xlu0 %1148
      %1150 = vset.pattern.permute.xlu0 0
      %1151 = vperm.xlu0 %1150, %v1016
      %v1152 = vpop.permute.xlu0 %1151
      %1153 = vset.pattern.permute.xlu0 0
      %1154 = vperm.xlu0 %1153, %v1017
      %v1155 = vpop.permute.xlu0 %1154
      %1156 = vset.pattern.permute.xlu0 0
      %1157 = vperm.xlu0 %1156, %v1018
      %v1158 = vpop.permute.xlu0 %1157
      %1159 = vset.pattern.permute.xlu0 0
      %1160 = vperm.xlu0 %1159, %v1019
      %v1161 = vpop.permute.xlu0 %1160
      %1162 = vset.pattern.permute.xlu0 0
      %1163 = vperm.xlu0 %1162, %v1020
      %v1164 = vpop.permute.xlu0 %1163
      %1165 = vset.pattern.permute.xlu0 0
      %1166 = vperm.xlu0 %1165, %v1021
      %v1167 = vpop.permute.xlu0 %1166
      %1168 = vset.pattern.permute.xlu0 0
      %1169 = vperm.xlu0 %1168, %v1022
      %v1170 = vpop.permute.xlu0 %1169
      %1171 = vset.pattern.permute.xlu0 0
      %1172 = vperm.xlu0 %1171, %v1023
      %v1173 = vpop.permute.xlu0 %1172
      %1174 = vset.pattern.permute.xlu0 0
      %1175 = vperm.xlu0 %1174, %v1024
      %v1176 = vpop.permute.xlu0 %1175
      %1177 = vset.pattern.permute.xlu0 0
      %1178 = vperm.xlu0 %1177, %v1025
      %v1179 = vpop.permute.xlu0 %1178
      %1180 = vset.pattern.permute.xlu0 0
      %1181 = vperm.xlu0 %1180, %v1026
      %v1182 = vpop.permute.xlu0 %1181
      %1183 = vset.pattern.permute.xlu0 0
      %1184 = vperm.xlu0 %1183, %v1027
      %v1185 = vpop.permute.xlu0 %1184
      %1186 = vset.pattern.permute.xlu0 0
      %1187 = vperm.xlu0 %1186, %v1028
      %v1188 = vpop.permute.xlu0 %1187
      %1189 = vset.pattern.permute.xlu0 0
      %1190 = vperm.xlu0 %1189, %v1029
      %v1191 = vpop.permute.xlu0 %1190
      %1192 = vset.pattern.permute.xlu0 0
      %1193 = vperm.xlu0 %1192, %v1030
      %v1194 = vpop.permute.xlu0 %1193
      %1195 = vset.pattern.permute.xlu0 0
      %1196 = vperm.xlu0 %1195, %v1031
      %v1197 = vpop.permute.xlu0 %1196
      %1198 = vset.pattern.permute.xlu0 0
      %1199 = vperm.xlu0 %1198, %v1032
      %v1200 = vpop.permute.xlu0 %1199
      %1201 = vset.pattern.permute.xlu0 0
      %1202 = vperm.xlu0 %1201, %v1033
      %v1203 = vpop.permute.xlu0 %1202
      %1204 = vset.pattern.permute.xlu0 0
      %1205 = vperm.xlu0 %1204, %v1034
      %v1206 = vpop.permute.xlu0 %1205
      %1207 = vset.pattern.permute.xlu0 0
      %1208 = vperm.xlu0 %1207, %v1035
      %v1209 = vpop.permute.xlu0 %1208
      %1210 = vset.pattern.permute.xlu0 0
      %1211 = vperm.xlu0 %1210, %v1036
      %v1212 = vpop.permute.xlu0 %1211
      %1213 = vset.pattern.permute.xlu0 0
      %1214 = vperm.xlu0 %1213, %v1037
      %v1215 = vpop.permute.xlu0 %1214
      %1216 = vset.pattern.permute.xlu0 0
      %1217 = vperm.xlu0 %1216, %v1038
      %v1218 = vpop.permute.xlu0 %1217
      %1219 = vset.pattern.permute.xlu0 0
      %1220 = vperm.xlu0 %1219, %v1039
      %v1221 = vpop.permute.xlu0 %1220
      %1222 = vset.pattern.permute.xlu0 0
      %1223 = vperm.xlu0 %1222, %v1040
      %v1224 = vpop.permute.xlu0 %1223
      %1225 = vset.pattern.permute.xlu0 0
      %1226 = vperm.xlu0 %1225, %v1041
      %v1227 = vpop.permute.xlu0 %1226
      %1228 = vset.pattern.permute.xlu0 0
      %1229 = vperm.xlu0 %1228, %v1042
      %v1230 = vpop.permute.xlu0 %1229
      %1231 = vset.pattern.permute.xlu0 0
      %1232 = vperm.xlu0 %1231, %v1043
      %v1233 = vpop.permute.xlu0 %1232
      %1234 = vset.pattern.permute.xlu0 0
      %1235 = vperm.xlu0 %1234, %v1044
      %v1236 = vpop.permute.xlu0 %1235
      %1237 = vset.pattern.permute.xlu0 0
      %1238 = vperm.xlu0 %1237, %v1045
      %v1239 = vpop.permute.xlu0 %1238
      %1240 = vset.pattern.permute.xlu0 0
      %1241 = vperm.xlu0 %1240, %v1046
      %v1242 = vpop.permute.xlu0 %1241
      %1243 = vset.pattern.permute.xlu0 0
      %1244 = vperm.xlu0 %1243, %v1047
      %v1245 = vpop.permute.xlu0 %1244
      %1246 = vset.pattern.permute.xlu0 0
      %1247 = vperm.xlu0 %1246, %v1048
      %v1248 = vpop.permute.xlu0 %1247
      %1249 = vset.pattern.permute.xlu0 0
      %1250 = vperm.xlu0 %1249, %v1049
      %v1251 = vpop.permute.xlu0 %1250
      %1252 = vset.pattern.permute.xlu0 0
      %1253 = vperm.xlu0 %1252, %v1050
      %v1254 = vpop.permute.xlu0 %1253
      %1255 = vset.pattern.permute.xlu0 0
      %1256 = vperm.xlu0 %1255, %v1051
      %v1257 = vpop.permute.xlu0 %1256
      %1258 = vset.pattern.permute.xlu0 0
      %1259 = vperm.xlu0 %1258, %v1052
      %v1260 = vpop.permute.xlu0 %1259
      %1261 = vset.pattern.permute.xlu0 0
      %1262 = vperm.xlu0 %1261, %v1053
      %v1263 = vpop.permute.xlu0 %1262
      %1264 = vset.pattern.permute.xlu0 0
      %1265 = vperm.xlu0 %1264, %v1054
      %v1266 = vpop.permute.xlu0 %1265
      %1267 = vset.pattern.permute.xlu0 0
      %1268 = vperm.xlu0 %1267, %v1055
      %v1269 = vpop.permute.xlu0 %1268
      %1270 = vset.pattern.permute.xlu0 0
      %1271 = vperm.xlu0 %1270, %v1056
      %v1272 = vpop.permute.xlu0 %1271
      %1273 = vset.pattern.permute.xlu0 0
      %1274 = vperm.xlu0 %1273, %v1057
      %v1275 = vpop.permute.xlu0 %1274
      %1276 = vset.pattern.permute.xlu0 0
      %1277 = vperm.xlu0 %1276, %v1058
      %v1278 = vpop.permute.xlu0 %1277
      %1279 = vset.pattern.permute.xlu0 0
      %1280 = vperm.xlu0 %1279, %v1059
      %v1281 = vpop.permute.xlu0 %1280
      %1282 = vset.pattern.permute.xlu0 0
      %1283 = vperm.xlu0 %1282, %v1060
      %v1284 = vpop.permute.xlu0 %1283
      %1285 = vset.pattern.permute.xlu0 0
      %1286 = vperm.xlu0 %1285, %v1061
      %v1287 = vpop.permute.xlu0 %1286
      %1288 = vset.pattern.permute.xlu0 0
      %1289 = vperm.xlu0 %1288, %v1062
      %v1290 = vpop.permute.xlu0 %1289
      %1291 = vset.pattern.permute.xlu0 0
      %1292 = vperm.xlu0 %1291, %v1063
      %v1293 = vpop.permute.xlu0 %1292
      %1294 = vset.pattern.permute.xlu0 0
      %1295 = vperm.xlu0 %1294, %v1064
      %v1296 = vpop.permute.xlu0 %1295
      %1297 = vset.pattern.permute.xlu0 0
      %1298 = vperm.xlu0 %1297, %v1065
      %v1299 = vpop.permute.xlu0 %1298
      %1300 = vset.pattern.permute.xlu0 0
      %1301 = vperm.xlu0 %1300, %v1066
      %v1302 = vpop.permute.xlu0 %1301
      %1303 = vset.pattern.permute.xlu0 0
      %1304 = vperm.xlu0 %1303, %v1067
      %v1305 = vpop.permute.xlu0 %1304
      %1306 = vset.pattern.permute.xlu0 0
      %1307 = vperm.xlu0 %1306, %v1068
      %v1308 = vpop.permute.xlu0 %1307
      %1309 = vset.pattern.permute.xlu0 0
      %1310 = vperm.xlu0 %1309, %v1069
      %v1311 = vpop.permute.xlu0 %1310
      %1312 = vset.pattern.permute.xlu0 0
      %1313 = vperm.xlu0 %1312, %v1070
      %v1314 = vpop.permute.xlu0 %1313
      %1315 = vset.pattern.permute.xlu0 0
      %1316 = vperm.xlu0 %1315, %v1071
      %v1317 = vpop.permute.xlu0 %1316
      %1318 = vset.pattern.permute.xlu0 0
      %1319 = vperm.xlu0 %1318, %v1072
      %v1320 = vpop.permute.xlu0 %1319
      %1321 = vset.pattern.permute.xlu0 0
      %1322 = vperm.xlu0 %1321, %v1073
      %v1323 = vpop.permute.xlu0 %1322
      %1324 = vset.pattern.permute.xlu0 0
      %1325 = vperm.xlu0 %1324, %v1074
      %v1326 = vpop.permute.xlu0 %1325
      %1327 = vset.pattern.permute.xlu0 0
      %1328 = vperm.xlu0 %1327, %v1075
      %v1329 = vpop.permute.xlu0 %1328
      %1330 = vset.pattern.permute.xlu0 0
      %1331 = vperm.xlu0 %1330, %v1076
      %v1332 = vpop.permute.xlu0 %1331
      %1333 = vset.pattern.permute.xlu0 0
      %1334 = vperm.xlu0 %1333, %v1077
      %v1335 = vpop.permute.xlu0 %1334
      %1336 = vset.pattern.permute.xlu0 0
      %1337 = vperm.xlu0 %1336, %v1078
      %v1338 = vpop.permute.xlu0 %1337
      %1339 = vset.pattern.permute.xlu0 0
      %1340 = vperm.xlu0 %1339, %v1079
      %v1341 = vpop.permute.xlu0 %1340
      %1342 = vset.pattern.permute.xlu0 0
      %1343 = vperm.xlu0 %1342, %v1080
      %v1344 = vpop.permute.xlu0 %1343
      %1345 = vset.pattern.permute.xlu0 0
      %1346 = vperm.xlu0 %1345, %v1081
      %v1347 = vpop.permute.xlu0 %1346
      %1348 = vset.pattern.permute.xlu0 0
      %1349 = vperm.xlu0 %1348, %v1082
      %v1350 = vpop.permute.xlu0 %1349
      %1351 = vset.pattern.permute.xlu0 0
      %1352 = vperm.xlu0 %1351, %v1083
      %v1353 = vpop.permute.xlu0 %1352
      %vm1354 = vcmp.eq.s32.totalorder %v1086, 1
      %vm1355 = vcmp.eq.s32.totalorder %v1089, 1
      %vm1356 = vcmp.eq.s32.totalorder %v1092, 1
      %vm1357 = vcmp.eq.s32.totalorder %v1095, 1
      %vm1358 = vcmp.eq.s32.totalorder %v1098, 1
      %vm1359 = vcmp.eq.s32.totalorder %v1101, 1
      %vm1360 = vcmp.eq.s32.totalorder %v1104, 1
      %vm1361 = vcmp.eq.s32.totalorder %v1107, 1
      %vm1362 = vcmp.eq.s32.totalorder %v1110, 1
      %vm1363 = vcmp.eq.s32.totalorder %v1113, 1
      %vm1364 = vcmp.eq.s32.totalorder %v1116, 1
      %vm1365 = vcmp.eq.s32.totalorder %v1119, 1
      %vm1366 = vcmp.eq.s32.totalorder %v1122, 1
      %vm1367 = vcmp.eq.s32.totalorder %v1125, 1
      %vm1368 = vcmp.eq.s32.totalorder %v1128, 1
      %vm1369 = vcmp.eq.s32.totalorder %v1131, 1
      %vm1370 = vcmp.eq.s32.totalorder %v1134, 1
      %vm1371 = vcmp.eq.s32.totalorder %v1137, 1
      %vm1372 = vcmp.eq.s32.totalorder %v1140, 1
      %vm1373 = vcmp.eq.s32.totalorder %v1143, 1
      %vm1374 = vcmp.eq.s32.totalorder %v1146, 1
      %vm1375 = vcmp.eq.s32.totalorder %v1149, 1
      %vm1376 = vcmp.eq.s32.totalorder %v1152, 1
      %vm1377 = vcmp.eq.s32.totalorder %v1155, 1
      %vm1378 = vcmp.eq.s32.totalorder %v1158, 1
      %vm1379 = vcmp.eq.s32.totalorder %v1161, 1
      %vm1380 = vcmp.eq.s32.totalorder %v1164, 1
      %vm1381 = vcmp.eq.s32.totalorder %v1167, 1
      %vm1382 = vcmp.eq.s32.totalorder %v1170, 1
      %vm1383 = vcmp.eq.s32.totalorder %v1173, 1
      %vm1384 = vcmp.eq.s32.totalorder %v1176, 1
      %vm1385 = vcmp.eq.s32.totalorder %v1179, 1
      %vm1386 = vcmp.eq.s32.totalorder %v1182, 1
      %vm1387 = vcmp.eq.s32.totalorder %v1185, 1
      %vm1388 = vcmp.eq.s32.totalorder %v1188, 1
      %vm1389 = vcmp.eq.s32.totalorder %v1191, 1
      %vm1390 = vcmp.eq.s32.totalorder %v1194, 1
      %vm1391 = vcmp.eq.s32.totalorder %v1197, 1
      %vm1392 = vcmp.eq.s32.totalorder %v1200, 1
      %vm1393 = vcmp.eq.s32.totalorder %v1203, 1
      %vm1394 = vcmp.eq.s32.totalorder %v1206, 1
      %vm1395 = vcmp.eq.s32.totalorder %v1209, 1
      %vm1396 = vcmp.eq.s32.totalorder %v1212, 1
      %vm1397 = vcmp.eq.s32.totalorder %v1215, 1
      %vm1398 = vcmp.eq.s32.totalorder %v1218, 1
      %vm1399 = vcmp.eq.s32.totalorder %v1221, 1
      %vm1400 = vcmp.eq.s32.totalorder %v1224, 1
      %vm1401 = vcmp.eq.s32.totalorder %v1227, 1
      %vm1402 = vcmp.eq.s32.totalorder %v1230, 1
      %vm1403 = vcmp.eq.s32.totalorder %v1233, 1
      %vm1404 = vcmp.eq.s32.totalorder %v1236, 1
      %vm1405 = vcmp.eq.s32.totalorder %v1239, 1
      %vm1406 = vcmp.eq.s32.totalorder %v1242, 1
      %vm1407 = vcmp.eq.s32.totalorder %v1245, 1
      %vm1408 = vcmp.eq.s32.totalorder %v1248, 1
      %vm1409 = vcmp.eq.s32.totalorder %v1251, 1
      %vm1410 = vcmp.eq.s32.totalorder %v1254, 1
      %vm1411 = vcmp.eq.s32.totalorder %v1257, 1
      %vm1412 = vcmp.eq.s32.totalorder %v1260, 1
      %vm1413 = vcmp.eq.s32.totalorder %v1263, 1
      %vm1414 = vcmp.eq.s32.totalorder %v1266, 1
      %vm1415 = vcmp.eq.s32.totalorder %v1269, 1
      %vm1416 = vcmp.eq.s32.totalorder %v1272, 1
      %vm1417 = vcmp.eq.s32.totalorder %v1275, 1
      %vm1418 = vcmp.eq.s32.totalorder %v1278, 1
      %vm1419 = vcmp.eq.s32.totalorder %v1281, 1
      %vm1420 = vcmp.eq.s32.totalorder %v1284, 1
      %vm1421 = vcmp.eq.s32.totalorder %v1287, 1
      %vm1422 = vcmp.eq.s32.totalorder %v1290, 1
      %vm1423 = vcmp.eq.s32.totalorder %v1293, 1
      %vm1424 = vcmp.eq.s32.totalorder %v1296, 1
      %vm1425 = vcmp.eq.s32.totalorder %v1299, 1
      %vm1426 = vcmp.eq.s32.totalorder %v1302, 1
      %vm1427 = vcmp.eq.s32.totalorder %v1305, 1
      %vm1428 = vcmp.eq.s32.totalorder %v1308, 1
      %vm1429 = vcmp.eq.s32.totalorder %v1311, 1
      %vm1430 = vcmp.eq.s32.totalorder %v1314, 1
      %vm1431 = vcmp.eq.s32.totalorder %v1317, 1
      %vm1432 = vcmp.eq.s32.totalorder %v1320, 1
      %vm1433 = vcmp.eq.s32.totalorder %v1323, 1
      %vm1434 = vcmp.eq.s32.totalorder %v1326, 1
      %vm1435 = vcmp.eq.s32.totalorder %v1329, 1
      %vm1436 = vcmp.eq.s32.totalorder %v1332, 1
      %vm1437 = vcmp.eq.s32.totalorder %v1335, 1
      %vm1438 = vcmp.eq.s32.totalorder %v1338, 1
      %vm1439 = vcmp.eq.s32.totalorder %v1341, 1
      %vm1440 = vcmp.eq.s32.totalorder %v1344, 1
      %vm1441 = vcmp.eq.s32.totalorder %v1347, 1
      %vm1442 = vcmp.eq.s32.totalorder %v1350, 1
      %vm1443 = vcmp.eq.s32.totalorder %v1353, 1
      %v1444 = vsel %vm1354, %v634, 0.0
      %v1445 = vsel %vm1355, %v635, 0.0
      %v1446 = vsel %vm1356, %v636, 0.0
      %v1447 = vsel %vm1357, %v637, 0.0
      %v1448 = vsel %vm1358, %v638, 0.0
      %v1449 = vsel %vm1359, %v639, 0.0
      %v1450 = vsel %vm1360, %v640, 0.0
      %v1451 = vsel %vm1361, %v641, 0.0
      %v1452 = vsel %vm1362, %v642, 0.0
      %v1453 = vsel %vm1363, %v643, 0.0
      %v1454 = vsel %vm1364, %v644, 0.0
      %v1455 = vsel %vm1365, %v645, 0.0
      %v1456 = vsel %vm1366, %v646, 0.0
      %v1457 = vsel %vm1367, %v647, 0.0
      %v1458 = vsel %vm1368, %v648, 0.0
      %v1459 = vsel %vm1369, %v649, 0.0
      %v1460 = vsel %vm1370, %v650, 0.0
      %v1461 = vsel %vm1371, %v651, 0.0
      %v1462 = vsel %vm1372, %v652, 0.0
      %v1463 = vsel %vm1373, %v653, 0.0
      %v1464 = vsel %vm1374, %v654, 0.0
      %v1465 = vsel %vm1375, %v655, 0.0
      %v1466 = vsel %vm1376, %v656, 0.0
      %v1467 = vsel %vm1377, %v657, 0.0
      %v1468 = vsel %vm1378, %v658, 0.0
      %v1469 = vsel %vm1379, %v659, 0.0
      %v1470 = vsel %vm1380, %v660, 0.0
      %v1471 = vsel %vm1381, %v661, 0.0
      %v1472 = vsel %vm1382, %v662, 0.0
      %v1473 = vsel %vm1383, %v663, 0.0
      %v1474 = vsel %vm1384, %v664, 0.0
      %v1475 = vsel %vm1385, %v665, 0.0
      %v1476 = vsel %vm1386, %v666, 0.0
      %v1477 = vsel %vm1387, %v667, 0.0
      %v1478 = vsel %vm1388, %v668, 0.0
      %v1479 = vsel %vm1389, %v669, 0.0
      %v1480 = vsel %vm1390, %v670, 0.0
      %v1481 = vsel %vm1391, %v671, 0.0
      %v1482 = vsel %vm1392, %v672, 0.0
      %v1483 = vsel %vm1393, %v673, 0.0
      %v1484 = vsel %vm1394, %v674, 0.0
      %v1485 = vsel %vm1395, %v675, 0.0
      %v1486 = vsel %vm1396, %v676, 0.0
      %v1487 = vsel %vm1397, %v677, 0.0
      %v1488 = vsel %vm1398, %v678, 0.0
      %v1489 = vsel %vm1399, %v679, 0.0
      %v1490 = vsel %vm1400, %v680, 0.0
      %v1491 = vsel %vm1401, %v681, 0.0
      %v1492 = vsel %vm1402, %v682, 0.0
      %v1493 = vsel %vm1403, %v683, 0.0
      %v1494 = vsel %vm1404, %v684, 0.0
      %v1495 = vsel %vm1405, %v685, 0.0
      %v1496 = vsel %vm1406, %v686, 0.0
      %v1497 = vsel %vm1407, %v687, 0.0
      %v1498 = vsel %vm1408, %v688, 0.0
      %v1499 = vsel %vm1409, %v689, 0.0
      %v1500 = vsel %vm1410, %v690, 0.0
      %v1501 = vsel %vm1411, %v691, 0.0
      %v1502 = vsel %vm1412, %v692, 0.0
      %v1503 = vsel %vm1413, %v693, 0.0
      %v1504 = vsel %vm1414, %v694, 0.0
      %v1505 = vsel %vm1415, %v695, 0.0
      %v1506 = vsel %vm1416, %v696, 0.0
      %v1507 = vsel %vm1417, %v697, 0.0
      %v1508 = vsel %vm1418, %v698, 0.0
      %v1509 = vsel %vm1419, %v699, 0.0
      %v1510 = vsel %vm1420, %v700, 0.0
      %v1511 = vsel %vm1421, %v701, 0.0
      %v1512 = vsel %vm1422, %v702, 0.0
      %v1513 = vsel %vm1423, %v703, 0.0
      %v1514 = vsel %vm1424, %v704, 0.0
      %v1515 = vsel %vm1425, %v705, 0.0
      %v1516 = vsel %vm1426, %v706, 0.0
      %v1517 = vsel %vm1427, %v707, 0.0
      %v1518 = vsel %vm1428, %v708, 0.0
      %v1519 = vsel %vm1429, %v709, 0.0
      %v1520 = vsel %vm1430, %v710, 0.0
      %v1521 = vsel %vm1431, %v711, 0.0
      %v1522 = vsel %vm1432, %v712, 0.0
      %v1523 = vsel %vm1433, %v713, 0.0
      %v1524 = vsel %vm1434, %v714, 0.0
      %v1525 = vsel %vm1435, %v715, 0.0
      %v1526 = vsel %vm1436, %v716, 0.0
      %v1527 = vsel %vm1437, %v717, 0.0
      %v1528 = vsel %vm1438, %v718, 0.0
      %v1529 = vsel %vm1439, %v719, 0.0
      %v1530 = vsel %vm1440, %v720, 0.0
      %v1531 = vsel %vm1441, %v721, 0.0
      %v1532 = vsel %vm1442, %v722, 0.0
      %v1533 = vsel %vm1443, %v723, 0.0
      %1534 = vset.pattern.permute.xlu0 1
      %1535 = vperm.xlu0 %1534, %v994
      %v1536 = vpop.permute.xlu0 %1535
      %1537 = vset.pattern.permute.xlu0 1
      %1538 = vperm.xlu0 %1537, %v995
      %v1539 = vpop.permute.xlu0 %1538
      %1540 = vset.pattern.permute.xlu0 1
      %1541 = vperm.xlu0 %1540, %v996
      %v1542 = vpop.permute.xlu0 %1541
      %1543 = vset.pattern.permute.xlu0 1
      %1544 = vperm.xlu0 %1543, %v997
      %v1545 = vpop.permute.xlu0 %1544
      %1546 = vset.pattern.permute.xlu0 1
      %1547 = vperm.xlu0 %1546, %v998
      %v1548 = vpop.permute.xlu0 %1547
      %1549 = vset.pattern.permute.xlu0 1
      %1550 = vperm.xlu0 %1549, %v999
      %v1551 = vpop.permute.xlu0 %1550
      %1552 = vset.pattern.permute.xlu0 1
      %1553 = vperm.xlu0 %1552, %v1000
      %v1554 = vpop.permute.xlu0 %1553
      %1555 = vset.pattern.permute.xlu0 1
      %1556 = vperm.xlu0 %1555, %v1001
      %v1557 = vpop.permute.xlu0 %1556
      %1558 = vset.pattern.permute.xlu0 1
      %1559 = vperm.xlu0 %1558, %v1002
      %v1560 = vpop.permute.xlu0 %1559
      %1561 = vset.pattern.permute.xlu0 1
      %1562 = vperm.xlu0 %1561, %v1003
      %v1563 = vpop.permute.xlu0 %1562
      %1564 = vset.pattern.permute.xlu0 1
      %1565 = vperm.xlu0 %1564, %v1004
      %v1566 = vpop.permute.xlu0 %1565
      %1567 = vset.pattern.permute.xlu0 1
      %1568 = vperm.xlu0 %1567, %v1005
      %v1569 = vpop.permute.xlu0 %1568
      %1570 = vset.pattern.permute.xlu0 1
      %1571 = vperm.xlu0 %1570, %v1006
      %v1572 = vpop.permute.xlu0 %1571
      %1573 = vset.pattern.permute.xlu0 1
      %1574 = vperm.xlu0 %1573, %v1007
      %v1575 = vpop.permute.xlu0 %1574
      %1576 = vset.pattern.permute.xlu0 1
      %1577 = vperm.xlu0 %1576, %v1008
      %v1578 = vpop.permute.xlu0 %1577
      %1579 = vset.pattern.permute.xlu0 1
      %1580 = vperm.xlu0 %1579, %v1009
      %v1581 = vpop.permute.xlu0 %1580
      %1582 = vset.pattern.permute.xlu0 1
      %1583 = vperm.xlu0 %1582, %v1010
      %v1584 = vpop.permute.xlu0 %1583
      %1585 = vset.pattern.permute.xlu0 1
      %1586 = vperm.xlu0 %1585, %v1011
      %v1587 = vpop.permute.xlu0 %1586
      %1588 = vset.pattern.permute.xlu0 1
      %1589 = vperm.xlu0 %1588, %v1012
      %v1590 = vpop.permute.xlu0 %1589
      %1591 = vset.pattern.permute.xlu0 1
      %1592 = vperm.xlu0 %1591, %v1013
      %v1593 = vpop.permute.xlu0 %1592
      %1594 = vset.pattern.permute.xlu0 1
      %1595 = vperm.xlu0 %1594, %v1014
      %v1596 = vpop.permute.xlu0 %1595
      %1597 = vset.pattern.permute.xlu0 1
      %1598 = vperm.xlu0 %1597, %v1015
      %v1599 = vpop.permute.xlu0 %1598
      %1600 = vset.pattern.permute.xlu0 1
      %1601 = vperm.xlu0 %1600, %v1016
      %v1602 = vpop.permute.xlu0 %1601
      %1603 = vset.pattern.permute.xlu0 1
      %1604 = vperm.xlu0 %1603, %v1017
      %v1605 = vpop.permute.xlu0 %1604
      %1606 = vset.pattern.permute.xlu0 1
      %1607 = vperm.xlu0 %1606, %v1018
      %v1608 = vpop.permute.xlu0 %1607
      %1609 = vset.pattern.permute.xlu0 1
      %1610 = vperm.xlu0 %1609, %v1019
      %v1611 = vpop.permute.xlu0 %1610
      %1612 = vset.pattern.permute.xlu0 1
      %1613 = vperm.xlu0 %1612, %v1020
      %v1614 = vpop.permute.xlu0 %1613
      %1615 = vset.pattern.permute.xlu0 1
      %1616 = vperm.xlu0 %1615, %v1021
      %v1617 = vpop.permute.xlu0 %1616
      %1618 = vset.pattern.permute.xlu0 1
      %1619 = vperm.xlu0 %1618, %v1022
      %v1620 = vpop.permute.xlu0 %1619
      %1621 = vset.pattern.permute.xlu0 1
      %1622 = vperm.xlu0 %1621, %v1023
      %v1623 = vpop.permute.xlu0 %1622
      %1624 = vset.pattern.permute.xlu0 1
      %1625 = vperm.xlu0 %1624, %v1024
      %v1626 = vpop.permute.xlu0 %1625
      %1627 = vset.pattern.permute.xlu0 1
      %1628 = vperm.xlu0 %1627, %v1025
      %v1629 = vpop.permute.xlu0 %1628
      %1630 = vset.pattern.permute.xlu0 1
      %1631 = vperm.xlu0 %1630, %v1026
      %v1632 = vpop.permute.xlu0 %1631
      %1633 = vset.pattern.permute.xlu0 1
      %1634 = vperm.xlu0 %1633, %v1027
      %v1635 = vpop.permute.xlu0 %1634
      %1636 = vset.pattern.permute.xlu0 1
      %1637 = vperm.xlu0 %1636, %v1028
      %v1638 = vpop.permute.xlu0 %1637
      %1639 = vset.pattern.permute.xlu0 1
      %1640 = vperm.xlu0 %1639, %v1029
      %v1641 = vpop.permute.xlu0 %1640
      %1642 = vset.pattern.permute.xlu0 1
      %1643 = vperm.xlu0 %1642, %v1030
      %v1644 = vpop.permute.xlu0 %1643
      %1645 = vset.pattern.permute.xlu0 1
      %1646 = vperm.xlu0 %1645, %v1031
      %v1647 = vpop.permute.xlu0 %1646
      %1648 = vset.pattern.permute.xlu0 1
      %1649 = vperm.xlu0 %1648, %v1032
      %v1650 = vpop.permute.xlu0 %1649
      %1651 = vset.pattern.permute.xlu0 1
      %1652 = vperm.xlu0 %1651, %v1033
      %v1653 = vpop.permute.xlu0 %1652
      %1654 = vset.pattern.permute.xlu0 1
      %1655 = vperm.xlu0 %1654, %v1034
      %v1656 = vpop.permute.xlu0 %1655
      %1657 = vset.pattern.permute.xlu0 1
      %1658 = vperm.xlu0 %1657, %v1035
      %v1659 = vpop.permute.xlu0 %1658
      %1660 = vset.pattern.permute.xlu0 1
      %1661 = vperm.xlu0 %1660, %v1036
      %v1662 = vpop.permute.xlu0 %1661
      %1663 = vset.pattern.permute.xlu0 1
      %1664 = vperm.xlu0 %1663, %v1037
      %v1665 = vpop.permute.xlu0 %1664
      %1666 = vset.pattern.permute.xlu0 1
      %1667 = vperm.xlu0 %1666, %v1038
      %v1668 = vpop.permute.xlu0 %1667
      %1669 = vset.pattern.permute.xlu0 1
      %1670 = vperm.xlu0 %1669, %v1039
      %v1671 = vpop.permute.xlu0 %1670
      %1672 = vset.pattern.permute.xlu0 1
      %1673 = vperm.xlu0 %1672, %v1040
      %v1674 = vpop.permute.xlu0 %1673
      %1675 = vset.pattern.permute.xlu0 1
      %1676 = vperm.xlu0 %1675, %v1041
      %v1677 = vpop.permute.xlu0 %1676
      %1678 = vset.pattern.permute.xlu0 1
      %1679 = vperm.xlu0 %1678, %v1042
      %v1680 = vpop.permute.xlu0 %1679
      %1681 = vset.pattern.permute.xlu0 1
      %1682 = vperm.xlu0 %1681, %v1043
      %v1683 = vpop.permute.xlu0 %1682
      %1684 = vset.pattern.permute.xlu0 1
      %1685 = vperm.xlu0 %1684, %v1044
      %v1686 = vpop.permute.xlu0 %1685
      %1687 = vset.pattern.permute.xlu0 1
      %1688 = vperm.xlu0 %1687, %v1045
      %v1689 = vpop.permute.xlu0 %1688
      %1690 = vset.pattern.permute.xlu0 1
      %1691 = vperm.xlu0 %1690, %v1046
      %v1692 = vpop.permute.xlu0 %1691
      %1693 = vset.pattern.permute.xlu0 1
      %1694 = vperm.xlu0 %1693, %v1047
      %v1695 = vpop.permute.xlu0 %1694
      %1696 = vset.pattern.permute.xlu0 1
      %1697 = vperm.xlu0 %1696, %v1048
      %v1698 = vpop.permute.xlu0 %1697
      %1699 = vset.pattern.permute.xlu0 1
      %1700 = vperm.xlu0 %1699, %v1049
      %v1701 = vpop.permute.xlu0 %1700
      %1702 = vset.pattern.permute.xlu0 1
      %1703 = vperm.xlu0 %1702, %v1050
      %v1704 = vpop.permute.xlu0 %1703
      %1705 = vset.pattern.permute.xlu0 1
      %1706 = vperm.xlu0 %1705, %v1051
      %v1707 = vpop.permute.xlu0 %1706
      %1708 = vset.pattern.permute.xlu0 1
      %1709 = vperm.xlu0 %1708, %v1052
      %v1710 = vpop.permute.xlu0 %1709
      %1711 = vset.pattern.permute.xlu0 1
      %1712 = vperm.xlu0 %1711, %v1053
      %v1713 = vpop.permute.xlu0 %1712
      %1714 = vset.pattern.permute.xlu0 1
      %1715 = vperm.xlu0 %1714, %v1054
      %v1716 = vpop.permute.xlu0 %1715
      %1717 = vset.pattern.permute.xlu0 1
      %1718 = vperm.xlu0 %1717, %v1055
      %v1719 = vpop.permute.xlu0 %1718
      %1720 = vset.pattern.permute.xlu0 1
      %1721 = vperm.xlu0 %1720, %v1056
      %v1722 = vpop.permute.xlu0 %1721
      %1723 = vset.pattern.permute.xlu0 1
      %1724 = vperm.xlu0 %1723, %v1057
      %v1725 = vpop.permute.xlu0 %1724
      %1726 = vset.pattern.permute.xlu0 1
      %1727 = vperm.xlu0 %1726, %v1058
      %v1728 = vpop.permute.xlu0 %1727
      %1729 = vset.pattern.permute.xlu0 1
      %1730 = vperm.xlu0 %1729, %v1059
      %v1731 = vpop.permute.xlu0 %1730
      %1732 = vset.pattern.permute.xlu0 1
      %1733 = vperm.xlu0 %1732, %v1060
      %v1734 = vpop.permute.xlu0 %1733
      %1735 = vset.pattern.permute.xlu0 1
      %1736 = vperm.xlu0 %1735, %v1061
      %v1737 = vpop.permute.xlu0 %1736
      %1738 = vset.pattern.permute.xlu0 1
      %1739 = vperm.xlu0 %1738, %v1062
      %v1740 = vpop.permute.xlu0 %1739
      %1741 = vset.pattern.permute.xlu0 1
      %1742 = vperm.xlu0 %1741, %v1063
      %v1743 = vpop.permute.xlu0 %1742
      %1744 = vset.pattern.permute.xlu0 1
      %1745 = vperm.xlu0 %1744, %v1064
      %v1746 = vpop.permute.xlu0 %1745
      %1747 = vset.pattern.permute.xlu0 1
      %1748 = vperm.xlu0 %1747, %v1065
      %v1749 = vpop.permute.xlu0 %1748
      %1750 = vset.pattern.permute.xlu0 1
      %1751 = vperm.xlu0 %1750, %v1066
      %v1752 = vpop.permute.xlu0 %1751
      %1753 = vset.pattern.permute.xlu0 1
      %1754 = vperm.xlu0 %1753, %v1067
      %v1755 = vpop.permute.xlu0 %1754
      %1756 = vset.pattern.permute.xlu0 1
      %1757 = vperm.xlu0 %1756, %v1068
      %v1758 = vpop.permute.xlu0 %1757
      %1759 = vset.pattern.permute.xlu0 1
      %1760 = vperm.xlu0 %1759, %v1069
      %v1761 = vpop.permute.xlu0 %1760
      %1762 = vset.pattern.permute.xlu0 1
      %1763 = vperm.xlu0 %1762, %v1070
      %v1764 = vpop.permute.xlu0 %1763
      %1765 = vset.pattern.permute.xlu0 1
      %1766 = vperm.xlu0 %1765, %v1071
      %v1767 = vpop.permute.xlu0 %1766
      %1768 = vset.pattern.permute.xlu0 1
      %1769 = vperm.xlu0 %1768, %v1072
      %v1770 = vpop.permute.xlu0 %1769
      %1771 = vset.pattern.permute.xlu0 1
      %1772 = vperm.xlu0 %1771, %v1073
      %v1773 = vpop.permute.xlu0 %1772
      %1774 = vset.pattern.permute.xlu0 1
      %1775 = vperm.xlu0 %1774, %v1074
      %v1776 = vpop.permute.xlu0 %1775
      %1777 = vset.pattern.permute.xlu0 1
      %1778 = vperm.xlu0 %1777, %v1075
      %v1779 = vpop.permute.xlu0 %1778
      %1780 = vset.pattern.permute.xlu0 1
      %1781 = vperm.xlu0 %1780, %v1076
      %v1782 = vpop.permute.xlu0 %1781
      %1783 = vset.pattern.permute.xlu0 1
      %1784 = vperm.xlu0 %1783, %v1077
      %v1785 = vpop.permute.xlu0 %1784
      %1786 = vset.pattern.permute.xlu0 1
      %1787 = vperm.xlu0 %1786, %v1078
      %v1788 = vpop.permute.xlu0 %1787
      %1789 = vset.pattern.permute.xlu0 1
      %1790 = vperm.xlu0 %1789, %v1079
      %v1791 = vpop.permute.xlu0 %1790
      %1792 = vset.pattern.permute.xlu0 1
      %1793 = vperm.xlu0 %1792, %v1080
      %v1794 = vpop.permute.xlu0 %1793
      %1795 = vset.pattern.permute.xlu0 1
      %1796 = vperm.xlu0 %1795, %v1081
      %v1797 = vpop.permute.xlu0 %1796
      %1798 = vset.pattern.permute.xlu0 1
      %1799 = vperm.xlu0 %1798, %v1082
      %v1800 = vpop.permute.xlu0 %1799
      %1801 = vset.pattern.permute.xlu0 1
      %1802 = vperm.xlu0 %1801, %v1083
      %v1803 = vpop.permute.xlu0 %1802
      %vm1804 = vcmp.eq.s32.totalorder %v1536, 1
      %vm1805 = vcmp.eq.s32.totalorder %v1539, 1
      %vm1806 = vcmp.eq.s32.totalorder %v1542, 1
      %vm1807 = vcmp.eq.s32.totalorder %v1545, 1
      %vm1808 = vcmp.eq.s32.totalorder %v1548, 1
      %vm1809 = vcmp.eq.s32.totalorder %v1551, 1
      %vm1810 = vcmp.eq.s32.totalorder %v1554, 1
      %vm1811 = vcmp.eq.s32.totalorder %v1557, 1
      %vm1812 = vcmp.eq.s32.totalorder %v1560, 1
      %vm1813 = vcmp.eq.s32.totalorder %v1563, 1
      %vm1814 = vcmp.eq.s32.totalorder %v1566, 1
      %vm1815 = vcmp.eq.s32.totalorder %v1569, 1
      %vm1816 = vcmp.eq.s32.totalorder %v1572, 1
      %vm1817 = vcmp.eq.s32.totalorder %v1575, 1
      %vm1818 = vcmp.eq.s32.totalorder %v1578, 1
      %vm1819 = vcmp.eq.s32.totalorder %v1581, 1
      %vm1820 = vcmp.eq.s32.totalorder %v1584, 1
      %vm1821 = vcmp.eq.s32.totalorder %v1587, 1
      %vm1822 = vcmp.eq.s32.totalorder %v1590, 1
      %vm1823 = vcmp.eq.s32.totalorder %v1593, 1
      %vm1824 = vcmp.eq.s32.totalorder %v1596, 1
      %vm1825 = vcmp.eq.s32.totalorder %v1599, 1
      %vm1826 = vcmp.eq.s32.totalorder %v1602, 1
      %vm1827 = vcmp.eq.s32.totalorder %v1605, 1
      %vm1828 = vcmp.eq.s32.totalorder %v1608, 1
      %vm1829 = vcmp.eq.s32.totalorder %v1611, 1
      %vm1830 = vcmp.eq.s32.totalorder %v1614, 1
      %vm1831 = vcmp.eq.s32.totalorder %v1617, 1
      %vm1832 = vcmp.eq.s32.totalorder %v1620, 1
      %vm1833 = vcmp.eq.s32.totalorder %v1623, 1
      %vm1834 = vcmp.eq.s32.totalorder %v1626, 1
      %vm1835 = vcmp.eq.s32.totalorder %v1629, 1
      %vm1836 = vcmp.eq.s32.totalorder %v1632, 1
      %vm1837 = vcmp.eq.s32.totalorder %v1635, 1
      %vm1838 = vcmp.eq.s32.totalorder %v1638, 1
      %vm1839 = vcmp.eq.s32.totalorder %v1641, 1
      %vm1840 = vcmp.eq.s32.totalorder %v1644, 1
      %vm1841 = vcmp.eq.s32.totalorder %v1647, 1
      %vm1842 = vcmp.eq.s32.totalorder %v1650, 1
      %vm1843 = vcmp.eq.s32.totalorder %v1653, 1
      %vm1844 = vcmp.eq.s32.totalorder %v1656, 1
      %vm1845 = vcmp.eq.s32.totalorder %v1659, 1
      %vm1846 = vcmp.eq.s32.totalorder %v1662, 1
      %vm1847 = vcmp.eq.s32.totalorder %v1665, 1
      %vm1848 = vcmp.eq.s32.totalorder %v1668, 1
      %vm1849 = vcmp.eq.s32.totalorder %v1671, 1
      %vm1850 = vcmp.eq.s32.totalorder %v1674, 1
      %vm1851 = vcmp.eq.s32.totalorder %v1677, 1
      %vm1852 = vcmp.eq.s32.totalorder %v1680, 1
      %vm1853 = vcmp.eq.s32.totalorder %v1683, 1
      %vm1854 = vcmp.eq.s32.totalorder %v1686, 1
      %vm1855 = vcmp.eq.s32.totalorder %v1689, 1
      %vm1856 = vcmp.eq.s32.totalorder %v1692, 1
      %vm1857 = vcmp.eq.s32.totalorder %v1695, 1
      %vm1858 = vcmp.eq.s32.totalorder %v1698, 1
      %vm1859 = vcmp.eq.s32.totalorder %v1701, 1
      %vm1860 = vcmp.eq.s32.totalorder %v1704, 1
      %vm1861 = vcmp.eq.s32.totalorder %v1707, 1
      %vm1862 = vcmp.eq.s32.totalorder %v1710, 1
      %vm1863 = vcmp.eq.s32.totalorder %v1713, 1
      %vm1864 = vcmp.eq.s32.totalorder %v1716, 1
      %vm1865 = vcmp.eq.s32.totalorder %v1719, 1
      %vm1866 = vcmp.eq.s32.totalorder %v1722, 1
      %vm1867 = vcmp.eq.s32.totalorder %v1725, 1
      %vm1868 = vcmp.eq.s32.totalorder %v1728, 1
      %vm1869 = vcmp.eq.s32.totalorder %v1731, 1
      %vm1870 = vcmp.eq.s32.totalorder %v1734, 1
      %vm1871 = vcmp.eq.s32.totalorder %v1737, 1
      %vm1872 = vcmp.eq.s32.totalorder %v1740, 1
      %vm1873 = vcmp.eq.s32.totalorder %v1743, 1
      %vm1874 = vcmp.eq.s32.totalorder %v1746, 1
      %vm1875 = vcmp.eq.s32.totalorder %v1749, 1
      %vm1876 = vcmp.eq.s32.totalorder %v1752, 1
      %vm1877 = vcmp.eq.s32.totalorder %v1755, 1
      %vm1878 = vcmp.eq.s32.totalorder %v1758, 1
      %vm1879 = vcmp.eq.s32.totalorder %v1761, 1
      %vm1880 = vcmp.eq.s32.totalorder %v1764, 1
      %vm1881 = vcmp.eq.s32.totalorder %v1767, 1
      %vm1882 = vcmp.eq.s32.totalorder %v1770, 1
      %vm1883 = vcmp.eq.s32.totalorder %v1773, 1
      %vm1884 = vcmp.eq.s32.totalorder %v1776, 1
      %vm1885 = vcmp.eq.s32.totalorder %v1779, 1
      %vm1886 = vcmp.eq.s32.totalorder %v1782, 1
      %vm1887 = vcmp.eq.s32.totalorder %v1785, 1
      %vm1888 = vcmp.eq.s32.totalorder %v1788, 1
      %vm1889 = vcmp.eq.s32.totalorder %v1791, 1
      %vm1890 = vcmp.eq.s32.totalorder %v1794, 1
      %vm1891 = vcmp.eq.s32.totalorder %v1797, 1
      %vm1892 = vcmp.eq.s32.totalorder %v1800, 1
      %vm1893 = vcmp.eq.s32.totalorder %v1803, 1
      %v1894 = vsel %vm1804, %v724, 0.0
      %v1895 = vsel %vm1805, %v725, 0.0
      %v1896 = vsel %vm1806, %v726, 0.0
      %v1897 = vsel %vm1807, %v727, 0.0
      %v1898 = vsel %vm1808, %v728, 0.0
      %v1899 = vsel %vm1809, %v729, 0.0
      %v1900 = vsel %vm1810, %v730, 0.0
      %v1901 = vsel %vm1811, %v731, 0.0
      %v1902 = vsel %vm1812, %v732, 0.0
      %v1903 = vsel %vm1813, %v733, 0.0
      %v1904 = vsel %vm1814, %v734, 0.0
      %v1905 = vsel %vm1815, %v735, 0.0
      %v1906 = vsel %vm1816, %v736, 0.0
      %v1907 = vsel %vm1817, %v737, 0.0
      %v1908 = vsel %vm1818, %v738, 0.0
      %v1909 = vsel %vm1819, %v739, 0.0
      %v1910 = vsel %vm1820, %v740, 0.0
      %v1911 = vsel %vm1821, %v741, 0.0
      %v1912 = vsel %vm1822, %v742, 0.0
      %v1913 = vsel %vm1823, %v743, 0.0
      %v1914 = vsel %vm1824, %v744, 0.0
      %v1915 = vsel %vm1825, %v745, 0.0
      %v1916 = vsel %vm1826, %v746, 0.0
      %v1917 = vsel %vm1827, %v747, 0.0
      %v1918 = vsel %vm1828, %v748, 0.0
      %v1919 = vsel %vm1829, %v749, 0.0
      %v1920 = vsel %vm1830, %v750, 0.0
      %v1921 = vsel %vm1831, %v751, 0.0
      %v1922 = vsel %vm1832, %v752, 0.0
      %v1923 = vsel %vm1833, %v753, 0.0
      %v1924 = vsel %vm1834, %v754, 0.0
      %v1925 = vsel %vm1835, %v755, 0.0
      %v1926 = vsel %vm1836, %v756, 0.0
      %v1927 = vsel %vm1837, %v757, 0.0
      %v1928 = vsel %vm1838, %v758, 0.0
      %v1929 = vsel %vm1839, %v759, 0.0
      %v1930 = vsel %vm1840, %v760, 0.0
      %v1931 = vsel %vm1841, %v761, 0.0
      %v1932 = vsel %vm1842, %v762, 0.0
      %v1933 = vsel %vm1843, %v763, 0.0
      %v1934 = vsel %vm1844, %v764, 0.0
      %v1935 = vsel %vm1845, %v765, 0.0
      %v1936 = vsel %vm1846, %v766, 0.0
      %v1937 = vsel %vm1847, %v767, 0.0
      %v1938 = vsel %vm1848, %v768, 0.0
      %v1939 = vsel %vm1849, %v769, 0.0
      %v1940 = vsel %vm1850, %v770, 0.0
      %v1941 = vsel %vm1851, %v771, 0.0
      %v1942 = vsel %vm1852, %v772, 0.0
      %v1943 = vsel %vm1853, %v773, 0.0
      %v1944 = vsel %vm1854, %v774, 0.0
      %v1945 = vsel %vm1855, %v775, 0.0
      %v1946 = vsel %vm1856, %v776, 0.0
      %v1947 = vsel %vm1857, %v777, 0.0
      %v1948 = vsel %vm1858, %v778, 0.0
      %v1949 = vsel %vm1859, %v779, 0.0
      %v1950 = vsel %vm1860, %v780, 0.0
      %v1951 = vsel %vm1861, %v781, 0.0
      %v1952 = vsel %vm1862, %v782, 0.0
      %v1953 = vsel %vm1863, %v783, 0.0
      %v1954 = vsel %vm1864, %v784, 0.0
      %v1955 = vsel %vm1865, %v785, 0.0
      %v1956 = vsel %vm1866, %v786, 0.0
      %v1957 = vsel %vm1867, %v787, 0.0
      %v1958 = vsel %vm1868, %v788, 0.0
      %v1959 = vsel %vm1869, %v789, 0.0
      %v1960 = vsel %vm1870, %v790, 0.0
      %v1961 = vsel %vm1871, %v791, 0.0
      %v1962 = vsel %vm1872, %v792, 0.0
      %v1963 = vsel %vm1873, %v793, 0.0
      %v1964 = vsel %vm1874, %v794, 0.0
      %v1965 = vsel %vm1875, %v795, 0.0
      %v1966 = vsel %vm1876, %v796, 0.0
      %v1967 = vsel %vm1877, %v797, 0.0
      %v1968 = vsel %vm1878, %v798, 0.0
      %v1969 = vsel %vm1879, %v799, 0.0
      %v1970 = vsel %vm1880, %v800, 0.0
      %v1971 = vsel %vm1881, %v801, 0.0
      %v1972 = vsel %vm1882, %v802, 0.0
      %v1973 = vsel %vm1883, %v803, 0.0
      %v1974 = vsel %vm1884, %v804, 0.0
      %v1975 = vsel %vm1885, %v805, 0.0
      %v1976 = vsel %vm1886, %v806, 0.0
      %v1977 = vsel %vm1887, %v807, 0.0
      %v1978 = vsel %vm1888, %v808, 0.0
      %v1979 = vsel %vm1889, %v809, 0.0
      %v1980 = vsel %vm1890, %v810, 0.0
      %v1981 = vsel %vm1891, %v811, 0.0
      %v1982 = vsel %vm1892, %v812, 0.0
      %v1983 = vsel %vm1893, %v813, 0.0
      %2074 = vrot.lane.b32.xlu0 %v544, 4
      %v2075 = vpop.permute.xlu0 %2074
      %2076 = vrot.lane.b32.xlu0 %v545, 4
      %v2077 = vpop.permute.xlu0 %2076
      %2078 = vrot.lane.b32.xlu0 %v546, 4
      %v2079 = vpop.permute.xlu0 %2078
      %2080 = vrot.lane.b32.xlu0 %v547, 4
      %v2081 = vpop.permute.xlu0 %2080
      %2082 = vrot.lane.b32.xlu0 %v548, 4
      %v2083 = vpop.permute.xlu0 %2082
      %2084 = vrot.lane.b32.xlu0 %v549, 4
      %v2085 = vpop.permute.xlu0 %2084
      %2086 = vrot.lane.b32.xlu0 %v550, 4
      %v2087 = vpop.permute.xlu0 %2086
      %2088 = vrot.lane.b32.xlu0 %v551, 4
      %v2089 = vpop.permute.xlu0 %2088
      %2090 = vrot.lane.b32.xlu0 %v552, 4
      %v2091 = vpop.permute.xlu0 %2090
      %2092 = vrot.lane.b32.xlu0 %v553, 4
      %v2093 = vpop.permute.xlu0 %2092
      %2094 = vrot.lane.b32.xlu0 %v554, 4
      %v2095 = vpop.permute.xlu0 %2094
      %2096 = vrot.lane.b32.xlu0 %v555, 4
      %v2097 = vpop.permute.xlu0 %2096
      %2098 = vrot.lane.b32.xlu0 %v556, 4
      %v2099 = vpop.permute.xlu0 %2098
      %2100 = vrot.lane.b32.xlu0 %v557, 4
      %v2101 = vpop.permute.xlu0 %2100
      %2102 = vrot.lane.b32.xlu0 %v558, 4
      %v2103 = vpop.permute.xlu0 %2102
      %2104 = vrot.lane.b32.xlu0 %v559, 4
      %v2105 = vpop.permute.xlu0 %2104
      %2106 = vrot.lane.b32.xlu0 %v560, 4
      %v2107 = vpop.permute.xlu0 %2106
      %2108 = vrot.lane.b32.xlu0 %v561, 4
      %v2109 = vpop.permute.xlu0 %2108
      %2110 = vrot.lane.b32.xlu0 %v562, 4
      %v2111 = vpop.permute.xlu0 %2110
      %2112 = vrot.lane.b32.xlu0 %v563, 4
      %v2113 = vpop.permute.xlu0 %2112
      %2114 = vrot.lane.b32.xlu0 %v564, 4
      %v2115 = vpop.permute.xlu0 %2114
      %2116 = vrot.lane.b32.xlu0 %v565, 4
      %v2117 = vpop.permute.xlu0 %2116
      %2118 = vrot.lane.b32.xlu0 %v566, 4
      %v2119 = vpop.permute.xlu0 %2118
      %2120 = vrot.lane.b32.xlu0 %v567, 4
      %v2121 = vpop.permute.xlu0 %2120
      %2122 = vrot.lane.b32.xlu0 %v568, 4
      %v2123 = vpop.permute.xlu0 %2122
      %2124 = vrot.lane.b32.xlu0 %v569, 4
      %v2125 = vpop.permute.xlu0 %2124
      %2126 = vrot.lane.b32.xlu0 %v570, 4
      %v2127 = vpop.permute.xlu0 %2126
      %2128 = vrot.lane.b32.xlu0 %v571, 4
      %v2129 = vpop.permute.xlu0 %2128
      %2130 = vrot.lane.b32.xlu0 %v572, 4
      %v2131 = vpop.permute.xlu0 %2130
      %2132 = vrot.lane.b32.xlu0 %v573, 4
      %v2133 = vpop.permute.xlu0 %2132
      %2134 = vrot.lane.b32.xlu0 %v574, 4
      %v2135 = vpop.permute.xlu0 %2134
      %2136 = vrot.lane.b32.xlu0 %v575, 4
      %v2137 = vpop.permute.xlu0 %2136
      %2138 = vrot.lane.b32.xlu0 %v576, 4
      %v2139 = vpop.permute.xlu0 %2138
      %2140 = vrot.lane.b32.xlu0 %v577, 4
      %v2141 = vpop.permute.xlu0 %2140
      %2142 = vrot.lane.b32.xlu0 %v578, 4
      %v2143 = vpop.permute.xlu0 %2142
      %2144 = vrot.lane.b32.xlu0 %v579, 4
      %v2145 = vpop.permute.xlu0 %2144
      %2146 = vrot.lane.b32.xlu0 %v580, 4
      %v2147 = vpop.permute.xlu0 %2146
      %2148 = vrot.lane.b32.xlu0 %v581, 4
      %v2149 = vpop.permute.xlu0 %2148
      %2150 = vrot.lane.b32.xlu0 %v582, 4
      %v2151 = vpop.permute.xlu0 %2150
      %2152 = vrot.lane.b32.xlu0 %v583, 4
      %v2153 = vpop.permute.xlu0 %2152
      %2154 = vrot.lane.b32.xlu0 %v584, 4
      %v2155 = vpop.permute.xlu0 %2154
      %2156 = vrot.lane.b32.xlu0 %v585, 4
      %v2157 = vpop.permute.xlu0 %2156
      %2158 = vrot.lane.b32.xlu0 %v586, 4
      %v2159 = vpop.permute.xlu0 %2158
      %2160 = vrot.lane.b32.xlu0 %v587, 4
      %v2161 = vpop.permute.xlu0 %2160
      %2162 = vrot.lane.b32.xlu0 %v588, 4
      %v2163 = vpop.permute.xlu0 %2162
      %2164 = vrot.lane.b32.xlu0 %v589, 4
      %v2165 = vpop.permute.xlu0 %2164
      %2166 = vrot.lane.b32.xlu0 %v590, 4
      %v2167 = vpop.permute.xlu0 %2166
      %2168 = vrot.lane.b32.xlu0 %v591, 4
      %v2169 = vpop.permute.xlu0 %2168
      %2170 = vrot.lane.b32.xlu0 %v592, 4
      %v2171 = vpop.permute.xlu0 %2170
      %2172 = vrot.lane.b32.xlu0 %v593, 4
      %v2173 = vpop.permute.xlu0 %2172
      %2174 = vrot.lane.b32.xlu0 %v594, 4
      %v2175 = vpop.permute.xlu0 %2174
      %2176 = vrot.lane.b32.xlu0 %v595, 4
      %v2177 = vpop.permute.xlu0 %2176
      %2178 = vrot.lane.b32.xlu0 %v596, 4
      %v2179 = vpop.permute.xlu0 %2178
      %2180 = vrot.lane.b32.xlu0 %v597, 4
      %v2181 = vpop.permute.xlu0 %2180
      %2182 = vrot.lane.b32.xlu0 %v598, 4
      %v2183 = vpop.permute.xlu0 %2182
      %2184 = vrot.lane.b32.xlu0 %v599, 4
      %v2185 = vpop.permute.xlu0 %2184
      %2186 = vrot.lane.b32.xlu0 %v600, 4
      %v2187 = vpop.permute.xlu0 %2186
      %2188 = vrot.lane.b32.xlu0 %v601, 4
      %v2189 = vpop.permute.xlu0 %2188
      %2190 = vrot.lane.b32.xlu0 %v602, 4
      %v2191 = vpop.permute.xlu0 %2190
      %2192 = vrot.lane.b32.xlu0 %v603, 4
      %v2193 = vpop.permute.xlu0 %2192
      %2194 = vrot.lane.b32.xlu0 %v604, 4
      %v2195 = vpop.permute.xlu0 %2194
      %2196 = vrot.lane.b32.xlu0 %v605, 4
      %v2197 = vpop.permute.xlu0 %2196
      %2198 = vrot.lane.b32.xlu0 %v606, 4
      %v2199 = vpop.permute.xlu0 %2198
      %2200 = vrot.lane.b32.xlu0 %v607, 4
      %v2201 = vpop.permute.xlu0 %2200
      %2202 = vrot.lane.b32.xlu0 %v608, 4
      %v2203 = vpop.permute.xlu0 %2202
      %2204 = vrot.lane.b32.xlu0 %v609, 4
      %v2205 = vpop.permute.xlu0 %2204
      %2206 = vrot.lane.b32.xlu0 %v610, 4
      %v2207 = vpop.permute.xlu0 %2206
      %2208 = vrot.lane.b32.xlu0 %v611, 4
      %v2209 = vpop.permute.xlu0 %2208
      %2210 = vrot.lane.b32.xlu0 %v612, 4
      %v2211 = vpop.permute.xlu0 %2210
      %2212 = vrot.lane.b32.xlu0 %v613, 4
      %v2213 = vpop.permute.xlu0 %2212
      %2214 = vrot.lane.b32.xlu0 %v614, 4
      %v2215 = vpop.permute.xlu0 %2214
      %2216 = vrot.lane.b32.xlu0 %v615, 4
      %v2217 = vpop.permute.xlu0 %2216
      %2218 = vrot.lane.b32.xlu0 %v616, 4
      %v2219 = vpop.permute.xlu0 %2218
      %2220 = vrot.lane.b32.xlu0 %v617, 4
      %v2221 = vpop.permute.xlu0 %2220
      %2222 = vrot.lane.b32.xlu0 %v618, 4
      %v2223 = vpop.permute.xlu0 %2222
      %2224 = vrot.lane.b32.xlu0 %v619, 4
      %v2225 = vpop.permute.xlu0 %2224
      %2226 = vrot.lane.b32.xlu0 %v620, 4
      %v2227 = vpop.permute.xlu0 %2226
      %2228 = vrot.lane.b32.xlu0 %v621, 4
      %v2229 = vpop.permute.xlu0 %2228
      %2230 = vrot.lane.b32.xlu0 %v622, 4
      %v2231 = vpop.permute.xlu0 %2230
      %2232 = vrot.lane.b32.xlu0 %v623, 4
      %v2233 = vpop.permute.xlu0 %2232
      %2234 = vrot.lane.b32.xlu0 %v624, 4
      %v2235 = vpop.permute.xlu0 %2234
      %2236 = vrot.lane.b32.xlu0 %v625, 4
      %v2237 = vpop.permute.xlu0 %2236
      %2238 = vrot.lane.b32.xlu0 %v626, 4
      %v2239 = vpop.permute.xlu0 %2238
      %2240 = vrot.lane.b32.xlu0 %v627, 4
      %v2241 = vpop.permute.xlu0 %2240
      %2242 = vrot.lane.b32.xlu0 %v628, 4
      %v2243 = vpop.permute.xlu0 %2242
      %2244 = vrot.lane.b32.xlu0 %v629, 4
      %v2245 = vpop.permute.xlu0 %2244
      %2246 = vrot.lane.b32.xlu0 %v630, 4
      %v2247 = vpop.permute.xlu0 %2246
      %2248 = vrot.lane.b32.xlu0 %v631, 4
      %v2249 = vpop.permute.xlu0 %2248
      %2250 = vrot.lane.b32.xlu0 %v632, 4
      %v2251 = vpop.permute.xlu0 %2250
      %2252 = vrot.lane.b32.xlu0 %v633, 4
      %v2253 = vpop.permute.xlu0 %2252
      %2434 = vrot.lane.b32.xlu0 %v1894, 8
      %v2435 = vpop.permute.xlu0 %2434
      %2436 = vrot.lane.b32.xlu0 %v1895, 8
      %v2437 = vpop.permute.xlu0 %2436
      %2438 = vrot.lane.b32.xlu0 %v1896, 8
      %v2439 = vpop.permute.xlu0 %2438
      %2440 = vrot.lane.b32.xlu0 %v1897, 8
      %v2441 = vpop.permute.xlu0 %2440
      %2442 = vrot.lane.b32.xlu0 %v1898, 8
      %v2443 = vpop.permute.xlu0 %2442
      %2444 = vrot.lane.b32.xlu0 %v1899, 8
      %v2445 = vpop.permute.xlu0 %2444
      %2446 = vrot.lane.b32.xlu0 %v1900, 8
      %v2447 = vpop.permute.xlu0 %2446
      %2448 = vrot.lane.b32.xlu0 %v1901, 8
      %v2449 = vpop.permute.xlu0 %2448
      %2450 = vrot.lane.b32.xlu0 %v1902, 8
      %v2451 = vpop.permute.xlu0 %2450
      %2452 = vrot.lane.b32.xlu0 %v1903, 8
      %v2453 = vpop.permute.xlu0 %2452
      %2454 = vrot.lane.b32.xlu0 %v1904, 8
      %v2455 = vpop.permute.xlu0 %2454
      %2456 = vrot.lane.b32.xlu0 %v1905, 8
      %v2457 = vpop.permute.xlu0 %2456
      %2458 = vrot.lane.b32.xlu0 %v1906, 8
      %v2459 = vpop.permute.xlu0 %2458
      %2460 = vrot.lane.b32.xlu0 %v1907, 8
      %v2461 = vpop.permute.xlu0 %2460
      %2462 = vrot.lane.b32.xlu0 %v1908, 8
      %v2463 = vpop.permute.xlu0 %2462
      %2464 = vrot.lane.b32.xlu0 %v1909, 8
      %v2465 = vpop.permute.xlu0 %2464
      %2466 = vrot.lane.b32.xlu0 %v1910, 8
      %v2467 = vpop.permute.xlu0 %2466
      %2468 = vrot.lane.b32.xlu0 %v1911, 8
      %v2469 = vpop.permute.xlu0 %2468
      %2470 = vrot.lane.b32.xlu0 %v1912, 8
      %v2471 = vpop.permute.xlu0 %2470
      %2472 = vrot.lane.b32.xlu0 %v1913, 8
      %v2473 = vpop.permute.xlu0 %2472
      %2474 = vrot.lane.b32.xlu0 %v1914, 8
      %v2475 = vpop.permute.xlu0 %2474
      %2476 = vrot.lane.b32.xlu0 %v1915, 8
      %v2477 = vpop.permute.xlu0 %2476
      %2478 = vrot.lane.b32.xlu0 %v1916, 8
      %v2479 = vpop.permute.xlu0 %2478
      %2480 = vrot.lane.b32.xlu0 %v1917, 8
      %v2481 = vpop.permute.xlu0 %2480
      %2482 = vrot.lane.b32.xlu0 %v1918, 8
      %v2483 = vpop.permute.xlu0 %2482
      %2484 = vrot.lane.b32.xlu0 %v1919, 8
      %v2485 = vpop.permute.xlu0 %2484
      %2486 = vrot.lane.b32.xlu0 %v1920, 8
      %v2487 = vpop.permute.xlu0 %2486
      %2488 = vrot.lane.b32.xlu0 %v1921, 8
      %v2489 = vpop.permute.xlu0 %2488
      %2490 = vrot.lane.b32.xlu0 %v1922, 8
      %v2491 = vpop.permute.xlu0 %2490
      %2492 = vrot.lane.b32.xlu0 %v1923, 8
      %v2493 = vpop.permute.xlu0 %2492
      %2494 = vrot.lane.b32.xlu0 %v1924, 8
      %v2495 = vpop.permute.xlu0 %2494
      %2496 = vrot.lane.b32.xlu0 %v1925, 8
      %v2497 = vpop.permute.xlu0 %2496
      %2498 = vrot.lane.b32.xlu0 %v1926, 8
      %v2499 = vpop.permute.xlu0 %2498
      %2500 = vrot.lane.b32.xlu0 %v1927, 8
      %v2501 = vpop.permute.xlu0 %2500
      %2502 = vrot.lane.b32.xlu0 %v1928, 8
      %v2503 = vpop.permute.xlu0 %2502
      %2504 = vrot.lane.b32.xlu0 %v1929, 8
      %v2505 = vpop.permute.xlu0 %2504
      %2506 = vrot.lane.b32.xlu0 %v1930, 8
      %v2507 = vpop.permute.xlu0 %2506
      %2508 = vrot.lane.b32.xlu0 %v1931, 8
      %v2509 = vpop.permute.xlu0 %2508
      %2510 = vrot.lane.b32.xlu0 %v1932, 8
      %v2511 = vpop.permute.xlu0 %2510
      %2512 = vrot.lane.b32.xlu0 %v1933, 8
      %v2513 = vpop.permute.xlu0 %2512
      %2514 = vrot.lane.b32.xlu0 %v1934, 8
      %v2515 = vpop.permute.xlu0 %2514
      %2516 = vrot.lane.b32.xlu0 %v1935, 8
      %v2517 = vpop.permute.xlu0 %2516
      %2518 = vrot.lane.b32.xlu0 %v1936, 8
      %v2519 = vpop.permute.xlu0 %2518
      %2520 = vrot.lane.b32.xlu0 %v1937, 8
      %v2521 = vpop.permute.xlu0 %2520
      %2522 = vrot.lane.b32.xlu0 %v1938, 8
      %v2523 = vpop.permute.xlu0 %2522
      %2524 = vrot.lane.b32.xlu0 %v1939, 8
      %v2525 = vpop.permute.xlu0 %2524
      %2526 = vrot.lane.b32.xlu0 %v1940, 8
      %v2527 = vpop.permute.xlu0 %2526
      %2528 = vrot.lane.b32.xlu0 %v1941, 8
      %v2529 = vpop.permute.xlu0 %2528
      %2530 = vrot.lane.b32.xlu0 %v1942, 8
      %v2531 = vpop.permute.xlu0 %2530
      %2532 = vrot.lane.b32.xlu0 %v1943, 8
      %v2533 = vpop.permute.xlu0 %2532
      %2534 = vrot.lane.b32.xlu0 %v1944, 8
      %v2535 = vpop.permute.xlu0 %2534
      %2536 = vrot.lane.b32.xlu0 %v1945, 8
      %v2537 = vpop.permute.xlu0 %2536
      %2538 = vrot.lane.b32.xlu0 %v1946, 8
      %v2539 = vpop.permute.xlu0 %2538
      %2540 = vrot.lane.b32.xlu0 %v1947, 8
      %v2541 = vpop.permute.xlu0 %2540
      %2542 = vrot.lane.b32.xlu0 %v1948, 8
      %v2543 = vpop.permute.xlu0 %2542
      %2544 = vrot.lane.b32.xlu0 %v1949, 8
      %v2545 = vpop.permute.xlu0 %2544
      %2546 = vrot.lane.b32.xlu0 %v1950, 8
      %v2547 = vpop.permute.xlu0 %2546
      %2548 = vrot.lane.b32.xlu0 %v1951, 8
      %v2549 = vpop.permute.xlu0 %2548
      %2550 = vrot.lane.b32.xlu0 %v1952, 8
      %v2551 = vpop.permute.xlu0 %2550
      %2552 = vrot.lane.b32.xlu0 %v1953, 8
      %v2553 = vpop.permute.xlu0 %2552
      %2554 = vrot.lane.b32.xlu0 %v1954, 8
      %v2555 = vpop.permute.xlu0 %2554
      %2556 = vrot.lane.b32.xlu0 %v1955, 8
      %v2557 = vpop.permute.xlu0 %2556
      %2558 = vrot.lane.b32.xlu0 %v1956, 8
      %v2559 = vpop.permute.xlu0 %2558
      %2560 = vrot.lane.b32.xlu0 %v1957, 8
      %v2561 = vpop.permute.xlu0 %2560
      %2562 = vrot.lane.b32.xlu0 %v1958, 8
      %v2563 = vpop.permute.xlu0 %2562
      %2564 = vrot.lane.b32.xlu0 %v1959, 8
      %v2565 = vpop.permute.xlu0 %2564
      %2566 = vrot.lane.b32.xlu0 %v1960, 8
      %v2567 = vpop.permute.xlu0 %2566
      %2568 = vrot.lane.b32.xlu0 %v1961, 8
      %v2569 = vpop.permute.xlu0 %2568
      %2570 = vrot.lane.b32.xlu0 %v1962, 8
      %v2571 = vpop.permute.xlu0 %2570
      %2572 = vrot.lane.b32.xlu0 %v1963, 8
      %v2573 = vpop.permute.xlu0 %2572
      %2574 = vrot.lane.b32.xlu0 %v1964, 8
      %v2575 = vpop.permute.xlu0 %2574
      %2576 = vrot.lane.b32.xlu0 %v1965, 8
      %v2577 = vpop.permute.xlu0 %2576
      %2578 = vrot.lane.b32.xlu0 %v1966, 8
      %v2579 = vpop.permute.xlu0 %2578
      %2580 = vrot.lane.b32.xlu0 %v1967, 8
      %v2581 = vpop.permute.xlu0 %2580
      %2582 = vrot.lane.b32.xlu0 %v1968, 8
      %v2583 = vpop.permute.xlu0 %2582
      %2584 = vrot.lane.b32.xlu0 %v1969, 8
      %v2585 = vpop.permute.xlu0 %2584
      %2586 = vrot.lane.b32.xlu0 %v1970, 8
      %v2587 = vpop.permute.xlu0 %2586
      %2588 = vrot.lane.b32.xlu0 %v1971, 8
      %v2589 = vpop.permute.xlu0 %2588
      %2590 = vrot.lane.b32.xlu0 %v1972, 8
      %v2591 = vpop.permute.xlu0 %2590
      %2592 = vrot.lane.b32.xlu0 %v1973, 8
      %v2593 = vpop.permute.xlu0 %2592
      %2594 = vrot.lane.b32.xlu0 %v1974, 8
      %v2595 = vpop.permute.xlu0 %2594
      %2596 = vrot.lane.b32.xlu0 %v1975, 8
      %v2597 = vpop.permute.xlu0 %2596
      %2598 = vrot.lane.b32.xlu0 %v1976, 8
      %v2599 = vpop.permute.xlu0 %2598
      %2600 = vrot.lane.b32.xlu0 %v1977, 8
      %v2601 = vpop.permute.xlu0 %2600
      %2602 = vrot.lane.b32.xlu0 %v1978, 8
      %v2603 = vpop.permute.xlu0 %2602
      %2604 = vrot.lane.b32.xlu0 %v1979, 8
      %v2605 = vpop.permute.xlu0 %2604
      %2606 = vrot.lane.b32.xlu0 %v1980, 8
      %v2607 = vpop.permute.xlu0 %2606
      %2608 = vrot.lane.b32.xlu0 %v1981, 8
      %v2609 = vpop.permute.xlu0 %2608
      %2610 = vrot.lane.b32.xlu0 %v1982, 8
      %v2611 = vpop.permute.xlu0 %2610
      %2612 = vrot.lane.b32.xlu0 %v1983, 8
      %v2613 = vpop.permute.xlu0 %2612
      %v2704 = vsel %vm452, %v1444, %v2075
      %v2705 = vsel %vm452, %v1445, %v2077
      %v2706 = vsel %vm452, %v1446, %v2079
      %v2707 = vsel %vm452, %v1447, %v2081
      %v2708 = vsel %vm452, %v1448, %v2083
      %v2709 = vsel %vm452, %v1449, %v2085
      %v2710 = vsel %vm452, %v1450, %v2087
      %v2711 = vsel %vm452, %v1451, %v2089
      %v2712 = vsel %vm452, %v1452, %v2091
      %v2713 = vsel %vm452, %v1453, %v2093
      %v2714 = vsel %vm452, %v1454, %v2095
      %v2715 = vsel %vm452, %v1455, %v2097
      %v2716 = vsel %vm452, %v1456, %v2099
      %v2717 = vsel %vm452, %v1457, %v2101
      %v2718 = vsel %vm452, %v1458, %v2103
      %v2719 = vsel %vm452, %v1459, %v2105
      %v2720 = vsel %vm452, %v1460, %v2107
      %v2721 = vsel %vm452, %v1461, %v2109
      %v2722 = vsel %vm452, %v1462, %v2111
      %v2723 = vsel %vm452, %v1463, %v2113
      %v2724 = vsel %vm452, %v1464, %v2115
      %v2725 = vsel %vm452, %v1465, %v2117
      %v2726 = vsel %vm452, %v1466, %v2119
      %v2727 = vsel %vm452, %v1467, %v2121
      %v2728 = vsel %vm452, %v1468, %v2123
      %v2729 = vsel %vm452, %v1469, %v2125
      %v2730 = vsel %vm452, %v1470, %v2127
      %v2731 = vsel %vm452, %v1471, %v2129
      %v2732 = vsel %vm452, %v1472, %v2131
      %v2733 = vsel %vm452, %v1473, %v2133
      %v2734 = vsel %vm452, %v1474, %v2135
      %v2735 = vsel %vm452, %v1475, %v2137
      %v2736 = vsel %vm452, %v1476, %v2139
      %v2737 = vsel %vm452, %v1477, %v2141
      %v2738 = vsel %vm452, %v1478, %v2143
      %v2739 = vsel %vm452, %v1479, %v2145
      %v2740 = vsel %vm452, %v1480, %v2147
      %v2741 = vsel %vm452, %v1481, %v2149
      %v2742 = vsel %vm452, %v1482, %v2151
      %v2743 = vsel %vm452, %v1483, %v2153
      %v2744 = vsel %vm452, %v1484, %v2155
      %v2745 = vsel %vm452, %v1485, %v2157
      %v2746 = vsel %vm452, %v1486, %v2159
      %v2747 = vsel %vm452, %v1487, %v2161
      %v2748 = vsel %vm452, %v1488, %v2163
      %v2749 = vsel %vm452, %v1489, %v2165
      %v2750 = vsel %vm452, %v1490, %v2167
      %v2751 = vsel %vm452, %v1491, %v2169
      %v2752 = vsel %vm452, %v1492, %v2171
      %v2753 = vsel %vm452, %v1493, %v2173
      %v2754 = vsel %vm452, %v1494, %v2175
      %v2755 = vsel %vm452, %v1495, %v2177
      %v2756 = vsel %vm452, %v1496, %v2179
      %v2757 = vsel %vm452, %v1497, %v2181
      %v2758 = vsel %vm452, %v1498, %v2183
      %v2759 = vsel %vm452, %v1499, %v2185
      %v2760 = vsel %vm452, %v1500, %v2187
      %v2761 = vsel %vm452, %v1501, %v2189
      %v2762 = vsel %vm452, %v1502, %v2191
      %v2763 = vsel %vm452, %v1503, %v2193
      %v2764 = vsel %vm452, %v1504, %v2195
      %v2765 = vsel %vm452, %v1505, %v2197
      %v2766 = vsel %vm452, %v1506, %v2199
      %v2767 = vsel %vm452, %v1507, %v2201
      %v2768 = vsel %vm452, %v1508, %v2203
      %v2769 = vsel %vm452, %v1509, %v2205
      %v2770 = vsel %vm452, %v1510, %v2207
      %v2771 = vsel %vm452, %v1511, %v2209
      %v2772 = vsel %vm452, %v1512, %v2211
      %v2773 = vsel %vm452, %v1513, %v2213
      %v2774 = vsel %vm452, %v1514, %v2215
      %v2775 = vsel %vm452, %v1515, %v2217
      %v2776 = vsel %vm452, %v1516, %v2219
      %v2777 = vsel %vm452, %v1517, %v2221
      %v2778 = vsel %vm452, %v1518, %v2223
      %v2779 = vsel %vm452, %v1519, %v2225
      %v2780 = vsel %vm452, %v1520, %v2227
      %v2781 = vsel %vm452, %v1521, %v2229
      %v2782 = vsel %vm452, %v1522, %v2231
      %v2783 = vsel %vm452, %v1523, %v2233
      %v2784 = vsel %vm452, %v1524, %v2235
      %v2785 = vsel %vm452, %v1525, %v2237
      %v2786 = vsel %vm452, %v1526, %v2239
      %v2787 = vsel %vm452, %v1527, %v2241
      %v2788 = vsel %vm452, %v1528, %v2243
      %v2789 = vsel %vm452, %v1529, %v2245
      %v2790 = vsel %vm452, %v1530, %v2247
      %v2791 = vsel %vm452, %v1531, %v2249
      %v2792 = vsel %vm452, %v1532, %v2251
      %v2793 = vsel %vm452, %v1533, %v2253
      %vm2794 = vcmask 64512
      %v2795 = vsel %vm2794, %v2704, %v2435
      %v2796 = vsel %vm2794, %v2705, %v2437
      %v2797 = vsel %vm2794, %v2706, %v2439
      %v2798 = vsel %vm2794, %v2707, %v2441
      %v2799 = vsel %vm2794, %v2708, %v2443
      %v2800 = vsel %vm2794, %v2709, %v2445
      %v2801 = vsel %vm2794, %v2710, %v2447
      %v2802 = vsel %vm2794, %v2711, %v2449
      %v2803 = vsel %vm2794, %v2712, %v2451
      %v2804 = vsel %vm2794, %v2713, %v2453
      %v2805 = vsel %vm2794, %v2714, %v2455
      %v2806 = vsel %vm2794, %v2715, %v2457
      %v2807 = vsel %vm2794, %v2716, %v2459
      %v2808 = vsel %vm2794, %v2717, %v2461
      %v2809 = vsel %vm2794, %v2718, %v2463
      %v2810 = vsel %vm2794, %v2719, %v2465
      %v2811 = vsel %vm2794, %v2720, %v2467
      %v2812 = vsel %vm2794, %v2721, %v2469
      %v2813 = vsel %vm2794, %v2722, %v2471
      %v2814 = vsel %vm2794, %v2723, %v2473
      %v2815 = vsel %vm2794, %v2724, %v2475
      %v2816 = vsel %vm2794, %v2725, %v2477
      %v2817 = vsel %vm2794, %v2726, %v2479
      %v2818 = vsel %vm2794, %v2727, %v2481
      %v2819 = vsel %vm2794, %v2728, %v2483
      %v2820 = vsel %vm2794, %v2729, %v2485
      %v2821 = vsel %vm2794, %v2730, %v2487
      %v2822 = vsel %vm2794, %v2731, %v2489
      %v2823 = vsel %vm2794, %v2732, %v2491
      %v2824 = vsel %vm2794, %v2733, %v2493
      %v2825 = vsel %vm2794, %v2734, %v2495
      %v2826 = vsel %vm2794, %v2735, %v2497
      %v2827 = vsel %vm2794, %v2736, %v2499
      %v2828 = vsel %vm2794, %v2737, %v2501
      %v2829 = vsel %vm2794, %v2738, %v2503
      %v2830 = vsel %vm2794, %v2739, %v2505
      %v2831 = vsel %vm2794, %v2740, %v2507
      %v2832 = vsel %vm2794, %v2741, %v2509
      %v2833 = vsel %vm2794, %v2742, %v2511
      %v2834 = vsel %vm2794, %v2743, %v2513
      %v2835 = vsel %vm2794, %v2744, %v2515
      %v2836 = vsel %vm2794, %v2745, %v2517
      %v2837 = vsel %vm2794, %v2746, %v2519
      %v2838 = vsel %vm2794, %v2747, %v2521
      %v2839 = vsel %vm2794, %v2748, %v2523
      %v2840 = vsel %vm2794, %v2749, %v2525
      %v2841 = vsel %vm2794, %v2750, %v2527
      %v2842 = vsel %vm2794, %v2751, %v2529
      %v2843 = vsel %vm2794, %v2752, %v2531
      %v2844 = vsel %vm2794, %v2753, %v2533
      %v2845 = vsel %vm2794, %v2754, %v2535
      %v2846 = vsel %vm2794, %v2755, %v2537
      %v2847 = vsel %vm2794, %v2756, %v2539
      %v2848 = vsel %vm2794, %v2757, %v2541
      %v2849 = vsel %vm2794, %v2758, %v2543
      %v2850 = vsel %vm2794, %v2759, %v2545
      %v2851 = vsel %vm2794, %v2760, %v2547
      %v2852 = vsel %vm2794, %v2761, %v2549
      %v2853 = vsel %vm2794, %v2762, %v2551
      %v2854 = vsel %vm2794, %v2763, %v2553
      %v2855 = vsel %vm2794, %v2764, %v2555
      %v2856 = vsel %vm2794, %v2765, %v2557
      %v2857 = vsel %vm2794, %v2766, %v2559
      %v2858 = vsel %vm2794, %v2767, %v2561
      %v2859 = vsel %vm2794, %v2768, %v2563
      %v2860 = vsel %vm2794, %v2769, %v2565
      %v2861 = vsel %vm2794, %v2770, %v2567
      %v2862 = vsel %vm2794, %v2771, %v2569
      %v2863 = vsel %vm2794, %v2772, %v2571
      %v2864 = vsel %vm2794, %v2773, %v2573
      %v2865 = vsel %vm2794, %v2774, %v2575
      %v2866 = vsel %vm2794, %v2775, %v2577
      %v2867 = vsel %vm2794, %v2776, %v2579
      %v2868 = vsel %vm2794, %v2777, %v2581
      %v2869 = vsel %vm2794, %v2778, %v2583
      %v2870 = vsel %vm2794, %v2779, %v2585
      %v2871 = vsel %vm2794, %v2780, %v2587
      %v2872 = vsel %vm2794, %v2781, %v2589
      %v2873 = vsel %vm2794, %v2782, %v2591
      %v2874 = vsel %vm2794, %v2783, %v2593
      %v2875 = vsel %vm2794, %v2784, %v2595
      %v2876 = vsel %vm2794, %v2785, %v2597
      %v2877 = vsel %vm2794, %v2786, %v2599
      %v2878 = vsel %vm2794, %v2787, %v2601
      %v2879 = vsel %vm2794, %v2788, %v2603
      %v2880 = vsel %vm2794, %v2789, %v2605
      %v2881 = vsel %vm2794, %v2790, %v2607
      %v2882 = vsel %vm2794, %v2791, %v2609
      %v2883 = vsel %vm2794, %v2792, %v2611
      %v2884 = vsel %vm2794, %v2793, %v2613
      %v2885 = vld [vmem:[%s4] sm:$0xff]
      %v2886 = vld [vmem:[%s4 + $0x8] sm:$0xf]
      %v2887 = vld [vmem:[%s5] sm:$0x1]
      %v2889 = vperm.slane %v2887, 0
      %vm2891 = vcmask 97280
      %v2893 = vsel %vm2891, %v2795, 0
      %v2896 = vsel %vm2891, %v2796, 0
      %v2899 = vsel %vm2891, %v2797, 0
      %v2902 = vsel %vm2891, %v2798, 0
      %v2905 = vsel %vm2891, %v2799, 0
      %v2908 = vsel %vm2891, %v2800, 0
      %v2911 = vsel %vm2891, %v2801, 0
      %v2914 = vsel %vm2891, %v2802, 0
      %v2917 = vsel %vm2891, %v2803, 0
      %v2920 = vsel %vm2891, %v2804, 0
      %v2923 = vsel %vm2891, %v2805, 0
      %v2926 = vsel %vm2891, %v2806, 0
      %v2929 = vsel %vm2891, %v2807, 0
      %v2932 = vsel %vm2891, %v2808, 0
      %v2935 = vsel %vm2891, %v2809, 0
      %v2938 = vsel %vm2891, %v2810, 0
      %v2941 = vsel %vm2891, %v2811, 0
      %v2944 = vsel %vm2891, %v2812, 0
      %v2947 = vsel %vm2891, %v2813, 0
      %v2950 = vsel %vm2891, %v2814, 0
      %v2953 = vsel %vm2891, %v2815, 0
      %v2956 = vsel %vm2891, %v2816, 0
      %v2959 = vsel %vm2891, %v2817, 0
      %v2962 = vsel %vm2891, %v2818, 0
      %v2965 = vsel %vm2891, %v2819, 0
      %v2968 = vsel %vm2891, %v2820, 0
      %v2971 = vsel %vm2891, %v2821, 0
      %v2974 = vsel %vm2891, %v2822, 0
      %v2977 = vsel %vm2891, %v2823, 0
      %v2980 = vsel %vm2891, %v2824, 0
      %v2983 = vsel %vm2891, %v2825, 0
      %v2986 = vsel %vm2891, %v2826, 0
      %v2989 = vsel %vm2891, %v2827, 0
      %v2992 = vsel %vm2891, %v2828, 0
      %v2995 = vsel %vm2891, %v2829, 0
      %v2998 = vsel %vm2891, %v2830, 0
      %v3001 = vsel %vm2891, %v2831, 0
      %v3004 = vsel %vm2891, %v2832, 0
      %v3007 = vsel %vm2891, %v2833, 0
      %v3010 = vsel %vm2891, %v2834, 0
      %v3013 = vsel %vm2891, %v2835, 0
      %v3016 = vsel %vm2891, %v2836, 0
      %v3019 = vsel %vm2891, %v2837, 0
      %v3022 = vsel %vm2891, %v2838, 0
      %v3025 = vsel %vm2891, %v2839, 0
      %v3028 = vsel %vm2891, %v2840, 0
      %v3031 = vsel %vm2891, %v2841, 0
      %v3034 = vsel %vm2891, %v2842, 0
      %v3037 = vsel %vm2891, %v2843, 0
      %v3040 = vsel %vm2891, %v2844, 0
      %v3043 = vsel %vm2891, %v2845, 0
      %v3046 = vsel %vm2891, %v2846, 0
      %v3049 = vsel %vm2891, %v2847, 0
      %v3052 = vsel %vm2891, %v2848, 0
      %v3055 = vsel %vm2891, %v2849, 0
      %v3058 = vsel %vm2891, %v2850, 0
      %v3061 = vsel %vm2891, %v2851, 0
      %v3064 = vsel %vm2891, %v2852, 0
      %v3067 = vsel %vm2891, %v2853, 0
      %v3070 = vsel %vm2891, %v2854, 0
      %v3073 = vsel %vm2891, %v2855, 0
      %v3076 = vsel %vm2891, %v2856, 0
      %v3079 = vsel %vm2891, %v2857, 0
      %v3082 = vsel %vm2891, %v2858, 0
      %v3085 = vsel %vm2891, %v2859, 0
      %v3088 = vsel %vm2891, %v2860, 0
      %v3091 = vsel %vm2891, %v2861, 0
      %v3094 = vsel %vm2891, %v2862, 0
      %v3097 = vsel %vm2891, %v2863, 0
      %v3100 = vsel %vm2891, %v2864, 0
      %v3103 = vsel %vm2891, %v2865, 0
      %v3106 = vsel %vm2891, %v2866, 0
      %v3109 = vsel %vm2891, %v2867, 0
      %v3112 = vsel %vm2891, %v2868, 0
      %v3115 = vsel %vm2891, %v2869, 0
      %v3118 = vsel %vm2891, %v2870, 0
      %v3121 = vsel %vm2891, %v2871, 0
      %v3124 = vsel %vm2891, %v2872, 0
      %v3127 = vsel %vm2891, %v2873, 0
      %v3130 = vsel %vm2891, %v2874, 0
      %v3133 = vsel %vm2891, %v2875, 0
      %v3136 = vsel %vm2891, %v2876, 0
      %v3139 = vsel %vm2891, %v2877, 0
      %v3142 = vsel %vm2891, %v2878, 0
      %v3145 = vsel %vm2891, %v2879, 0
      %v3148 = vsel %vm2891, %v2880, 0
      %v3151 = vsel %vm2891, %v2881, 0
      %v3154 = vsel %vm2891, %v2882, 0
      %v3157 = vsel %vm2891, %v2883, 0
      %v3160 = vsel %vm2891, %v2884, 0
      %vm3162 = vcmask 1043456
      %v3164 = vsel %vm3162, %v2886, 0
      %3166 = vmatpush.msra.mxu0 0.0
      %3167 = vmatpush.msra.mxu0 0.0
      %3168 = vmatpush.msra.mxu0 0.0
      %3169 = vmatpush.msra.mxu0 0.0
      %3170 = vmatpush.msra.mxu0 0.0
      %3171 = vmatpush.msra.mxu0 0.0
      %3172 = vmatpush.msra.mxu0 0.0
      %3173 = vmatpush.msra.mxu0 0.0
      %3174 = vmatpush.msra.mxu0 0.0
      %3175 = vmatpush.msra.mxu0 0.0
      %3176 = vmatpush.msra.mxu0 0.0
      %3177 = vmatpush.msra.mxu0 0.0
      %3178 = vmatpush.msra.mxu0 0.0
      %3179 = vmatpush.msra.mxu0 0.0
      %3180 = vmatpush.msra.mxu0 %v3164
      %3181 = vmatpush.msra.mxu0 %v2885
      %3182 = vmatmul.f32.gmra.mxu0 %v2893
      %v3183 = vpop.f32.mrf.mxu0
      %v3184 = vadd.f32 %v2889, %v3183
      %3185 = vmatmul.f32.gmra.mxu0 %v2896
      %v3186 = vpop.f32.mrf.mxu0
      %v3187 = vadd.f32 %v2889, %v3186
      %3188 = vmatmul.f32.gmra.mxu0 %v2899
      %v3189 = vpop.f32.mrf.mxu0
      %v3190 = vadd.f32 %v2889, %v3189
      %3191 = vmatmul.f32.gmra.mxu0 %v2902
      %v3192 = vpop.f32.mrf.mxu0
      %v3193 = vadd.f32 %v2889, %v3192
      %3194 = vmatmul.f32.gmra.mxu0 %v2905
      %v3195 = vpop.f32.mrf.mxu0
      %v3196 = vadd.f32 %v2889, %v3195
      %3197 = vmatmul.f32.gmra.mxu0 %v2908
      %v3198 = vpop.f32.mrf.mxu0
      %v3199 = vadd.f32 %v2889, %v3198
      %3200 = vmatmul.f32.gmra.mxu0 %v2911
      %v3201 = vpop.f32.mrf.mxu0
      %v3202 = vadd.f32 %v2889, %v3201
      %3203 = vmatmul.f32.gmra.mxu0 %v2914
      %v3204 = vpop.f32.mrf.mxu0
      %v3205 = vadd.f32 %v2889, %v3204
      %3206 = vmatmul.f32.gmra.mxu0 %v2917
      %v3207 = vpop.f32.mrf.mxu0
      %v3208 = vadd.f32 %v2889, %v3207
      %3209 = vmatmul.f32.gmra.mxu0 %v2920
      %v3210 = vpop.f32.mrf.mxu0
      %v3211 = vadd.f32 %v2889, %v3210
      %3212 = vmatmul.f32.gmra.mxu0 %v2923
      %v3213 = vpop.f32.mrf.mxu0
      %v3214 = vadd.f32 %v2889, %v3213
      %3215 = vmatmul.f32.gmra.mxu0 %v2926
      %v3216 = vpop.f32.mrf.mxu0
      %v3217 = vadd.f32 %v2889, %v3216
      %3218 = vmatmul.f32.gmra.mxu0 %v2929
      %v3219 = vpop.f32.mrf.mxu0
      %v3220 = vadd.f32 %v2889, %v3219
      %3221 = vmatmul.f32.gmra.mxu0 %v2932
      %v3222 = vpop.f32.mrf.mxu0
      %v3223 = vadd.f32 %v2889, %v3222
      %3224 = vmatmul.f32.gmra.mxu0 %v2935
      %v3225 = vpop.f32.mrf.mxu0
      %v3226 = vadd.f32 %v2889, %v3225
      %3227 = vmatmul.f32.gmra.mxu0 %v2938
      %v3228 = vpop.f32.mrf.mxu0
      %v3229 = vadd.f32 %v2889, %v3228
      %3230 = vmatmul.f32.gmra.mxu0 %v2941
      %v3231 = vpop.f32.mrf.mxu0
      %v3232 = vadd.f32 %v2889, %v3231
      %3233 = vmatmul.f32.gmra.mxu0 %v2944
      %v3234 = vpop.f32.mrf.mxu0
      %v3235 = vadd.f32 %v2889, %v3234
      %3236 = vmatmul.f32.gmra.mxu0 %v2947
      %v3237 = vpop.f32.mrf.mxu0
      %v3238 = vadd.f32 %v2889, %v3237
      %3239 = vmatmul.f32.gmra.mxu0 %v2950
      %v3240 = vpop.f32.mrf.mxu0
      %v3241 = vadd.f32 %v2889, %v3240
      %3242 = vmatmul.f32.gmra.mxu0 %v2953
      %v3243 = vpop.f32.mrf.mxu0
      %v3244 = vadd.f32 %v2889, %v3243
      %3245 = vmatmul.f32.gmra.mxu0 %v2956
      %v3246 = vpop.f32.mrf.mxu0
      %v3247 = vadd.f32 %v2889, %v3246
      %3248 = vmatmul.f32.gmra.mxu0 %v2959
      %v3249 = vpop.f32.mrf.mxu0
      %v3250 = vadd.f32 %v2889, %v3249
      %3251 = vmatmul.f32.gmra.mxu0 %v2962
      %v3252 = vpop.f32.mrf.mxu0
      %v3253 = vadd.f32 %v2889, %v3252
      %3254 = vmatmul.f32.gmra.mxu0 %v2965
      %v3255 = vpop.f32.mrf.mxu0
      %v3256 = vadd.f32 %v2889, %v3255
      %3257 = vmatmul.f32.gmra.mxu0 %v2968
      %v3258 = vpop.f32.mrf.mxu0
      %v3259 = vadd.f32 %v2889, %v3258
      %3260 = vmatmul.f32.gmra.mxu0 %v2971
      %v3261 = vpop.f32.mrf.mxu0
      %v3262 = vadd.f32 %v2889, %v3261
      %3263 = vmatmul.f32.gmra.mxu0 %v2974
      %v3264 = vpop.f32.mrf.mxu0
      %v3265 = vadd.f32 %v2889, %v3264
      %3266 = vmatmul.f32.gmra.mxu0 %v2977
      %v3267 = vpop.f32.mrf.mxu0
      %v3268 = vadd.f32 %v2889, %v3267
      %3269 = vmatmul.f32.gmra.mxu0 %v2980
      %v3270 = vpop.f32.mrf.mxu0
      %v3271 = vadd.f32 %v2889, %v3270
      %3272 = vmatmul.f32.gmra.mxu0 %v2983
      %v3273 = vpop.f32.mrf.mxu0
      %v3274 = vadd.f32 %v2889, %v3273
      %3275 = vmatmul.f32.gmra.mxu0 %v2986
      %v3276 = vpop.f32.mrf.mxu0
      %v3277 = vadd.f32 %v2889, %v3276
      %3278 = vmatmul.f32.gmra.mxu0 %v2989
      %v3279 = vpop.f32.mrf.mxu0
      %v3280 = vadd.f32 %v2889, %v3279
      %3281 = vmatmul.f32.gmra.mxu0 %v2992
      %v3282 = vpop.f32.mrf.mxu0
      %v3283 = vadd.f32 %v2889, %v3282
      %3284 = vmatmul.f32.gmra.mxu0 %v2995
      %v3285 = vpop.f32.mrf.mxu0
      %v3286 = vadd.f32 %v2889, %v3285
      %3287 = vmatmul.f32.gmra.mxu0 %v2998
      %v3288 = vpop.f32.mrf.mxu0
      %v3289 = vadd.f32 %v2889, %v3288
      %3290 = vmatmul.f32.gmra.mxu0 %v3001
      %v3291 = vpop.f32.mrf.mxu0
      %v3292 = vadd.f32 %v2889, %v3291
      %3293 = vmatmul.f32.gmra.mxu0 %v3004
      %v3294 = vpop.f32.mrf.mxu0
      %v3295 = vadd.f32 %v2889, %v3294
      %3296 = vmatmul.f32.gmra.mxu0 %v3007
      %v3297 = vpop.f32.mrf.mxu0
      %v3298 = vadd.f32 %v2889, %v3297
      %3299 = vmatmul.f32.gmra.mxu0 %v3010
      %v3300 = vpop.f32.mrf.mxu0
      %v3301 = vadd.f32 %v2889, %v3300
      %3302 = vmatmul.f32.gmra.mxu0 %v3013
      %v3303 = vpop.f32.mrf.mxu0
      %v3304 = vadd.f32 %v2889, %v3303
      %3305 = vmatmul.f32.gmra.mxu0 %v3016
      %v3306 = vpop.f32.mrf.mxu0
      %v3307 = vadd.f32 %v2889, %v3306
      %3308 = vmatmul.f32.gmra.mxu0 %v3019
      %v3309 = vpop.f32.mrf.mxu0
      %v3310 = vadd.f32 %v2889, %v3309
      %3311 = vmatmul.f32.gmra.mxu0 %v3022
      %v3312 = vpop.f32.mrf.mxu0
      %v3313 = vadd.f32 %v2889, %v3312
      %3314 = vmatmul.f32.gmra.mxu0 %v3025
      %v3315 = vpop.f32.mrf.mxu0
      %v3316 = vadd.f32 %v2889, %v3315
      %3317 = vmatmul.f32.gmra.mxu0 %v3028
      %v3318 = vpop.f32.mrf.mxu0
      %v3319 = vadd.f32 %v2889, %v3318
      %3320 = vmatmul.f32.gmra.mxu0 %v3031
      %v3321 = vpop.f32.mrf.mxu0
      %v3322 = vadd.f32 %v2889, %v3321
      %3323 = vmatmul.f32.gmra.mxu0 %v3034
      %v3324 = vpop.f32.mrf.mxu0
      %v3325 = vadd.f32 %v2889, %v3324
      %3326 = vmatmul.f32.gmra.mxu0 %v3037
      %v3327 = vpop.f32.mrf.mxu0
      %v3328 = vadd.f32 %v2889, %v3327
      %3329 = vmatmul.f32.gmra.mxu0 %v3040
      %v3330 = vpop.f32.mrf.mxu0
      %v3331 = vadd.f32 %v2889, %v3330
      %3332 = vmatmul.f32.gmra.mxu0 %v3043
      %v3333 = vpop.f32.mrf.mxu0
      %v3334 = vadd.f32 %v2889, %v3333
      %3335 = vmatmul.f32.gmra.mxu0 %v3046
      %v3336 = vpop.f32.mrf.mxu0
      %v3337 = vadd.f32 %v2889, %v3336
      %3338 = vmatmul.f32.gmra.mxu0 %v3049
      %v3339 = vpop.f32.mrf.mxu0
      %v3340 = vadd.f32 %v2889, %v3339
      %3341 = vmatmul.f32.gmra.mxu0 %v3052
      %v3342 = vpop.f32.mrf.mxu0
      %v3343 = vadd.f32 %v2889, %v3342
      %3344 = vmatmul.f32.gmra.mxu0 %v3055
      %v3345 = vpop.f32.mrf.mxu0
      %v3346 = vadd.f32 %v2889, %v3345
      %3347 = vmatmul.f32.gmra.mxu0 %v3058
      %v3348 = vpop.f32.mrf.mxu0
      %v3349 = vadd.f32 %v2889, %v3348
      %3350 = vmatmul.f32.gmra.mxu0 %v3061
      %v3351 = vpop.f32.mrf.mxu0
      %v3352 = vadd.f32 %v2889, %v3351
      %3353 = vmatmul.f32.gmra.mxu0 %v3064
      %v3354 = vpop.f32.mrf.mxu0
      %v3355 = vadd.f32 %v2889, %v3354
      %3356 = vmatmul.f32.gmra.mxu0 %v3067
      %v3357 = vpop.f32.mrf.mxu0
      %v3358 = vadd.f32 %v2889, %v3357
      %3359 = vmatmul.f32.gmra.mxu0 %v3070
      %v3360 = vpop.f32.mrf.mxu0
      %v3361 = vadd.f32 %v2889, %v3360
      %3362 = vmatmul.f32.gmra.mxu0 %v3073
      %v3363 = vpop.f32.mrf.mxu0
      %v3364 = vadd.f32 %v2889, %v3363
      %3365 = vmatmul.f32.gmra.mxu0 %v3076
      %v3366 = vpop.f32.mrf.mxu0
      %v3367 = vadd.f32 %v2889, %v3366
      %3368 = vmatmul.f32.gmra.mxu0 %v3079
      %v3369 = vpop.f32.mrf.mxu0
      %v3370 = vadd.f32 %v2889, %v3369
      %3371 = vmatmul.f32.gmra.mxu0 %v3082
      %v3372 = vpop.f32.mrf.mxu0
      %v3373 = vadd.f32 %v2889, %v3372
      %3374 = vmatmul.f32.gmra.mxu0 %v3085
      %v3375 = vpop.f32.mrf.mxu0
      %v3376 = vadd.f32 %v2889, %v3375
      %3377 = vmatmul.f32.gmra.mxu0 %v3088
      %v3378 = vpop.f32.mrf.mxu0
      %v3379 = vadd.f32 %v2889, %v3378
      %3380 = vmatmul.f32.gmra.mxu0 %v3091
      %v3381 = vpop.f32.mrf.mxu0
      %v3382 = vadd.f32 %v2889, %v3381
      %3383 = vmatmul.f32.gmra.mxu0 %v3094
      %v3384 = vpop.f32.mrf.mxu0
      %v3385 = vadd.f32 %v2889, %v3384
      %3386 = vmatmul.f32.gmra.mxu0 %v3097
      %v3387 = vpop.f32.mrf.mxu0
      %v3388 = vadd.f32 %v2889, %v3387
      %3389 = vmatmul.f32.gmra.mxu0 %v3100
      %v3390 = vpop.f32.mrf.mxu0
      %v3391 = vadd.f32 %v2889, %v3390
      %3392 = vmatmul.f32.gmra.mxu0 %v3103
      %v3393 = vpop.f32.mrf.mxu0
      %v3394 = vadd.f32 %v2889, %v3393
      %3395 = vmatmul.f32.gmra.mxu0 %v3106
      %v3396 = vpop.f32.mrf.mxu0
      %v3397 = vadd.f32 %v2889, %v3396
      %3398 = vmatmul.f32.gmra.mxu0 %v3109
      %v3399 = vpop.f32.mrf.mxu0
      %v3400 = vadd.f32 %v2889, %v3399
      %3401 = vmatmul.f32.gmra.mxu0 %v3112
      %v3402 = vpop.f32.mrf.mxu0
      %v3403 = vadd.f32 %v2889, %v3402
      %3404 = vmatmul.f32.gmra.mxu0 %v3115
      %v3405 = vpop.f32.mrf.mxu0
      %v3406 = vadd.f32 %v2889, %v3405
      %3407 = vmatmul.f32.gmra.mxu0 %v3118
      %v3408 = vpop.f32.mrf.mxu0
      %v3409 = vadd.f32 %v2889, %v3408
      %3410 = vmatmul.f32.gmra.mxu0 %v3121
      %v3411 = vpop.f32.mrf.mxu0
      %v3412 = vadd.f32 %v2889, %v3411
      %3413 = vmatmul.f32.gmra.mxu0 %v3124
      %v3414 = vpop.f32.mrf.mxu0
      %v3415 = vadd.f32 %v2889, %v3414
      %3416 = vmatmul.f32.gmra.mxu0 %v3127
      %v3417 = vpop.f32.mrf.mxu0
      %v3418 = vadd.f32 %v2889, %v3417
      %3419 = vmatmul.f32.gmra.mxu0 %v3130
      %v3420 = vpop.f32.mrf.mxu0
      %v3421 = vadd.f32 %v2889, %v3420
      %3422 = vmatmul.f32.gmra.mxu0 %v3133
      %v3423 = vpop.f32.mrf.mxu0
      %v3424 = vadd.f32 %v2889, %v3423
      %3425 = vmatmul.f32.gmra.mxu0 %v3136
      %v3426 = vpop.f32.mrf.mxu0
      %v3427 = vadd.f32 %v2889, %v3426
      %3428 = vmatmul.f32.gmra.mxu0 %v3139
      %v3429 = vpop.f32.mrf.mxu0
      %v3430 = vadd.f32 %v2889, %v3429
      %3431 = vmatmul.f32.gmra.mxu0 %v3142
      %v3432 = vpop.f32.mrf.mxu0
      %v3433 = vadd.f32 %v2889, %v3432
      %3434 = vmatmul.f32.gmra.mxu0 %v3145
      %v3435 = vpop.f32.mrf.mxu0
      %v3436 = vadd.f32 %v2889, %v3435
      %3437 = vmatmul.f32.gmra.mxu0 %v3148
      %v3438 = vpop.f32.mrf.mxu0
      %v3439 = vadd.f32 %v2889, %v3438
      %3440 = vmatmul.f32.gmra.mxu0 %v3151
      %v3441 = vpop.f32.mrf.mxu0
      %v3442 = vadd.f32 %v2889, %v3441
      %3443 = vmatmul.f32.gmra.mxu0 %v3154
      %v3444 = vpop.f32.mrf.mxu0
      %v3445 = vadd.f32 %v2889, %v3444
      %3446 = vmatmul.f32.gmra.mxu0 %v3157
      %v3447 = vpop.f32.mrf.mxu0
      %v3448 = vadd.f32 %v2889, %v3447
      %3449 = vmatmul.f32.gmra.mxu0 %v3160
      %v3450 = vpop.f32.mrf.mxu0
      %v3451 = vadd.f32 %v2889, %v3450
      %3452 = vdwg.mxu0
      %v3453 = vmax.f32 %v3184, 0.0
      %v3454 = vmax.f32 %v3187, 0.0
      %v3455 = vmax.f32 %v3190, 0.0
      %v3456 = vmax.f32 %v3193, 0.0
      %v3457 = vmax.f32 %v3196, 0.0
      %v3458 = vmax.f32 %v3199, 0.0
      %v3459 = vmax.f32 %v3202, 0.0
      %v3460 = vmax.f32 %v3205, 0.0
      %v3461 = vmax.f32 %v3208, 0.0
      %v3462 = vmax.f32 %v3211, 0.0
      %v3463 = vmax.f32 %v3214, 0.0
      %v3464 = vmax.f32 %v3217, 0.0
      %v3465 = vmax.f32 %v3220, 0.0
      %v3466 = vmax.f32 %v3223, 0.0
      %v3467 = vmax.f32 %v3226, 0.0
      %v3468 = vmax.f32 %v3229, 0.0
      %v3469 = vmax.f32 %v3232, 0.0
      %v3470 = vmax.f32 %v3235, 0.0
      %v3471 = vmax.f32 %v3238, 0.0
      %v3472 = vmax.f32 %v3241, 0.0
      %v3473 = vmax.f32 %v3244, 0.0
      %v3474 = vmax.f32 %v3247, 0.0
      %v3475 = vmax.f32 %v3250, 0.0
      %v3476 = vmax.f32 %v3253, 0.0
      %v3477 = vmax.f32 %v3256, 0.0
      %v3478 = vmax.f32 %v3259, 0.0
      %v3479 = vmax.f32 %v3262, 0.0
      %v3480 = vmax.f32 %v3265, 0.0
      %v3481 = vmax.f32 %v3268, 0.0
      %v3482 = vmax.f32 %v3271, 0.0
      %v3483 = vmax.f32 %v3274, 0.0
      %v3484 = vmax.f32 %v3277, 0.0
      %v3485 = vmax.f32 %v3280, 0.0
      %v3486 = vmax.f32 %v3283, 0.0
      %v3487 = vmax.f32 %v3286, 0.0
      %v3488 = vmax.f32 %v3289, 0.0
      %v3489 = vmax.f32 %v3292, 0.0
      %v3490 = vmax.f32 %v3295, 0.0
      %v3491 = vmax.f32 %v3298, 0.0
      %v3492 = vmax.f32 %v3301, 0.0
      %v3493 = vmax.f32 %v3304, 0.0
      %v3494 = vmax.f32 %v3307, 0.0
      %v3495 = vmax.f32 %v3310, 0.0
      %v3496 = vmax.f32 %v3313, 0.0
      %v3497 = vmax.f32 %v3316, 0.0
      %v3498 = vmax.f32 %v3319, 0.0
      %v3499 = vmax.f32 %v3322, 0.0
      %v3500 = vmax.f32 %v3325, 0.0
      %v3501 = vmax.f32 %v3328, 0.0
      %v3502 = vmax.f32 %v3331, 0.0
      %v3503 = vmax.f32 %v3334, 0.0
      %v3504 = vmax.f32 %v3337, 0.0
      %v3505 = vmax.f32 %v3340, 0.0
      %v3506 = vmax.f32 %v3343, 0.0
      %v3507 = vmax.f32 %v3346, 0.0
      %v3508 = vmax.f32 %v3349, 0.0
      %v3509 = vmax.f32 %v3352, 0.0
      %v3510 = vmax.f32 %v3355, 0.0
      %v3511 = vmax.f32 %v3358, 0.0
      %v3512 = vmax.f32 %v3361, 0.0
      %v3513 = vmax.f32 %v3364, 0.0
      %v3514 = vmax.f32 %v3367, 0.0
      %v3515 = vmax.f32 %v3370, 0.0
      %v3516 = vmax.f32 %v3373, 0.0
      %v3517 = vmax.f32 %v3376, 0.0
      %v3518 = vmax.f32 %v3379, 0.0
      %v3519 = vmax.f32 %v3382, 0.0
      %v3520 = vmax.f32 %v3385, 0.0
      %v3521 = vmax.f32 %v3388, 0.0
      %v3522 = vmax.f32 %v3391, 0.0
      %v3523 = vmax.f32 %v3394, 0.0
      %v3524 = vmax.f32 %v3397, 0.0
      %v3525 = vmax.f32 %v3400, 0.0
      %v3526 = vmax.f32 %v3403, 0.0
      %v3527 = vmax.f32 %v3406, 0.0
      %v3528 = vmax.f32 %v3409, 0.0
      %v3529 = vmax.f32 %v3412, 0.0
      %v3530 = vmax.f32 %v3415, 0.0
      %v3531 = vmax.f32 %v3418, 0.0
      %v3532 = vmax.f32 %v3421, 0.0
      %v3533 = vmax.f32 %v3424, 0.0
      %v3534 = vmax.f32 %v3427, 0.0
      %v3535 = vmax.f32 %v3430, 0.0
      %v3536 = vmax.f32 %v3433, 0.0
      %v3537 = vmax.f32 %v3436, 0.0
      %v3538 = vmax.f32 %v3439, 0.0
      %v3539 = vmax.f32 %v3442, 0.0
      %v3540 = vmax.f32 %v3445, 0.0
      %v3541 = vmax.f32 %v3448, 0.0
      %v3542 = vmax.f32 %v3451, 0.0
      %vm3543 = vcmask 261120
      %3544 = vst.msk [vmem:[#allocation3] sm:$0xff] %vm3543, %v3453
      %3545 = vst.msk [vmem:[#allocation3 + $0x8] sm:$0xff] %vm3543, %v3454
      %3546 = vst.msk [vmem:[#allocation3 + $0x10] sm:$0xff] %vm3543, %v3455
      %3547 = vst.msk [vmem:[#allocation3 + $0x18] sm:$0xff] %vm3543, %v3456
      %3548 = vst.msk [vmem:[#allocation3 + $0x20] sm:$0xff] %vm3543, %v3457
      %3549 = vst.msk [vmem:[#allocation3 + $0x28] sm:$0xff] %vm3543, %v3458
      %3550 = vst.msk [vmem:[#allocation3 + $0x30] sm:$0xff] %vm3543, %v3459
      %3551 = vst.msk [vmem:[#allocation3 + $0x38] sm:$0xff] %vm3543, %v3460
      %3552 = vst.msk [vmem:[#allocation3 + $0x40] sm:$0xff] %vm3543, %v3461
      %3553 = vst.msk [vmem:[#allocation3 + $0x48] sm:$0xff] %vm3543, %v3462
      %3554 = vst.msk [vmem:[#allocation3 + $0x50] sm:$0xff] %vm3543, %v3463
      %3555 = vst.msk [vmem:[#allocation3 + $0x58] sm:$0xff] %vm3543, %v3464
      %3556 = vst.msk [vmem:[#allocation3 + $0x60] sm:$0xff] %vm3543, %v3465
      %3557 = vst.msk [vmem:[#allocation3 + $0x68] sm:$0xff] %vm3543, %v3466
      %3558 = vst.msk [vmem:[#allocation3 + $0x70] sm:$0xff] %vm3543, %v3467
      %3559 = vst.msk [vmem:[#allocation3 + $0x78] sm:$0xff] %vm3543, %v3468
      %3560 = vst.msk [vmem:[#allocation3 + $0x80] sm:$0xff] %vm3543, %v3469
      %3561 = vst.msk [vmem:[#allocation3 + $0x88] sm:$0xff] %vm3543, %v3470
      %3562 = vst.msk [vmem:[#allocation3 + $0x90] sm:$0xff] %vm3543, %v3471
      %3563 = vst.msk [vmem:[#allocation3 + $0x98] sm:$0xff] %vm3543, %v3472
      %3564 = vst.msk [vmem:[#allocation3 + $0xa0] sm:$0xff] %vm3543, %v3473
      %3565 = vst.msk [vmem:[#allocation3 + $0xa8] sm:$0xff] %vm3543, %v3474
      %3566 = vst.msk [vmem:[#allocation3 + $0xb0] sm:$0xff] %vm3543, %v3475
      %3567 = vst.msk [vmem:[#allocation3 + $0xb8] sm:$0xff] %vm3543, %v3476
      %3568 = vst.msk [vmem:[#allocation3 + $0xc0] sm:$0xff] %vm3543, %v3477
      %3569 = vst.msk [vmem:[#allocation3 + $0xc8] sm:$0xff] %vm3543, %v3478
      %3570 = vst.msk [vmem:[#allocation3 + $0xd0] sm:$0xff] %vm3543, %v3479
      %3571 = vst.msk [vmem:[#allocation3 + $0xd8] sm:$0xff] %vm3543, %v3480
      %3572 = vst.msk [vmem:[#allocation3 + $0xe0] sm:$0xff] %vm3543, %v3481
      %3573 = vst.msk [vmem:[#allocation3 + $0xe8] sm:$0xff] %vm3543, %v3482
      %3574 = vst.msk [vmem:[#allocation3 + $0xf0] sm:$0xff] %vm3543, %v3483
      %3575 = vst.msk [vmem:[#allocation3 + $0xf8] sm:$0xff] %vm3543, %v3484
      %3576 = vst.msk [vmem:[#allocation3 + $0x100] sm:$0xff] %vm3543, %v3485
      %3577 = vst.msk [vmem:[#allocation3 + $0x108] sm:$0xff] %vm3543, %v3486
      %3578 = vst.msk [vmem:[#allocation3 + $0x110] sm:$0xff] %vm3543, %v3487
      %3579 = vst.msk [vmem:[#allocation3 + $0x118] sm:$0xff] %vm3543, %v3488
      %3580 = vst.msk [vmem:[#allocation3 + $0x120] sm:$0xff] %vm3543, %v3489
      %3581 = vst.msk [vmem:[#allocation3 + $0x128] sm:$0xff] %vm3543, %v3490
      %3582 = vst.msk [vmem:[#allocation3 + $0x130] sm:$0xff] %vm3543, %v3491
      %3583 = vst.msk [vmem:[#allocation3 + $0x138] sm:$0xff] %vm3543, %v3492
      %3584 = vst.msk [vmem:[#allocation3 + $0x140] sm:$0xff] %vm3543, %v3493
      %3585 = vst.msk [vmem:[#allocation3 + $0x148] sm:$0xff] %vm3543, %v3494
      %3586 = vst.msk [vmem:[#allocation3 + $0x150] sm:$0xff] %vm3543, %v3495
      %3587 = vst.msk [vmem:[#allocation3 + $0x158] sm:$0xff] %vm3543, %v3496
      %3588 = vst.msk [vmem:[#allocation3 + $0x160] sm:$0xff] %vm3543, %v3497
      %3589 = vst.msk [vmem:[#allocation3 + $0x168] sm:$0xff] %vm3543, %v3498
      %3590 = vst.msk [vmem:[#allocation3 + $0x170] sm:$0xff] %vm3543, %v3499
      %3591 = vst.msk [vmem:[#allocation3 + $0x178] sm:$0xff] %vm3543, %v3500
      %3592 = vst.msk [vmem:[#allocation3 + $0x180] sm:$0xff] %vm3543, %v3501
      %3593 = vst.msk [vmem:[#allocation3 + $0x188] sm:$0xff] %vm3543, %v3502
      %3594 = vst.msk [vmem:[#allocation3 + $0x190] sm:$0xff] %vm3543, %v3503
      %3595 = vst.msk [vmem:[#allocation3 + $0x198] sm:$0xff] %vm3543, %v3504
      %3596 = vst.msk [vmem:[#allocation3 + $0x1a0] sm:$0xff] %vm3543, %v3505
      %3597 = vst.msk [vmem:[#allocation3 + $0x1a8] sm:$0xff] %vm3543, %v3506
      %3598 = vst.msk [vmem:[#allocation3 + $0x1b0] sm:$0xff] %vm3543, %v3507
      %3599 = vst.msk [vmem:[#allocation3 + $0x1b8] sm:$0xff] %vm3543, %v3508
      %3600 = vst.msk [vmem:[#allocation3 + $0x1c0] sm:$0xff] %vm3543, %v3509
      %3601 = vst.msk [vmem:[#allocation3 + $0x1c8] sm:$0xff] %vm3543, %v3510
      %3602 = vst.msk [vmem:[#allocation3 + $0x1d0] sm:$0xff] %vm3543, %v3511
      %3603 = vst.msk [vmem:[#allocation3 + $0x1d8] sm:$0xff] %vm3543, %v3512
      %3604 = vst.msk [vmem:[#allocation3 + $0x1e0] sm:$0xff] %vm3543, %v3513
      %3605 = vst.msk [vmem:[#allocation3 + $0x1e8] sm:$0xff] %vm3543, %v3514
      %3606 = vst.msk [vmem:[#allocation3 + $0x1f0] sm:$0xff] %vm3543, %v3515
      %3607 = vst.msk [vmem:[#allocation3 + $0x1f8] sm:$0xff] %vm3543, %v3516
      %3608 = vst.msk [vmem:[#allocation3 + $0x200] sm:$0xff] %vm3543, %v3517
      %3609 = vst.msk [vmem:[#allocation3 + $0x208] sm:$0xff] %vm3543, %v3518
      %3610 = vst.msk [vmem:[#allocation3 + $0x210] sm:$0xff] %vm3543, %v3519
      %3611 = vst.msk [vmem:[#allocation3 + $0x218] sm:$0xff] %vm3543, %v3520
      %3612 = vst.msk [vmem:[#allocation3 + $0x220] sm:$0xff] %vm3543, %v3521
      %3613 = vst.msk [vmem:[#allocation3 + $0x228] sm:$0xff] %vm3543, %v3522
      %3614 = vst.msk [vmem:[#allocation3 + $0x230] sm:$0xff] %vm3543, %v3523
      %3615 = vst.msk [vmem:[#allocation3 + $0x238] sm:$0xff] %vm3543, %v3524
      %3616 = vst.msk [vmem:[#allocation3 + $0x240] sm:$0xff] %vm3543, %v3525
      %3617 = vst.msk [vmem:[#allocation3 + $0x248] sm:$0xff] %vm3543, %v3526
      %3618 = vst.msk [vmem:[#allocation3 + $0x250] sm:$0xff] %vm3543, %v3527
      %3619 = vst.msk [vmem:[#allocation3 + $0x258] sm:$0xff] %vm3543, %v3528
      %3620 = vst.msk [vmem:[#allocation3 + $0x260] sm:$0xff] %vm3543, %v3529
      %3621 = vst.msk [vmem:[#allocation3 + $0x268] sm:$0xff] %vm3543, %v3530
      %3622 = vst.msk [vmem:[#allocation3 + $0x270] sm:$0xff] %vm3543, %v3531
      %3623 = vst.msk [vmem:[#allocation3 + $0x278] sm:$0xff] %vm3543, %v3532
      %3624 = vst.msk [vmem:[#allocation3 + $0x280] sm:$0xff] %vm3543, %v3533
      %3625 = vst.msk [vmem:[#allocation3 + $0x288] sm:$0xff] %vm3543, %v3534
      %3626 = vst.msk [vmem:[#allocation3 + $0x290] sm:$0xff] %vm3543, %v3535
      %3627 = vst.msk [vmem:[#allocation3 + $0x298] sm:$0xff] %vm3543, %v3536
      %3628 = vst.msk [vmem:[#allocation3 + $0x2a0] sm:$0xff] %vm3543, %v3537
      %3629 = vst.msk [vmem:[#allocation3 + $0x2a8] sm:$0xff] %vm3543, %v3538
      %3630 = vst.msk [vmem:[#allocation3 + $0x2b0] sm:$0xff] %vm3543, %v3539
      %3631 = vst.msk [vmem:[#allocation3 + $0x2b8] sm:$0xff] %vm3543, %v3540
      %3632 = vst.msk [vmem:[#allocation3 + $0x2c0] sm:$0xff] %vm3543, %v3541
      %3633 = vst.msk [vmem:[#allocation3 + $0x2c8] sm:$0xff] %vm3543, %v3542
      %v3634 = vld [vmem:[#allocation3] ss:$2 sm:$0xff]
      %s3635 = scalar_lea.vmem [#allocation3], 16
      %v3636 = vld [vmem:[%s3635] ss:$2 sm:$0xff]
      %s3637 = scalar_lea.vmem [#allocation3], 32
      %v3638 = vld [vmem:[%s3637] ss:$2 sm:$0xff]
      %s3639 = scalar_lea.vmem [#allocation3], 48
      %v3640 = vld [vmem:[%s3639] ss:$2 sm:$0xff]
      %s3641 = scalar_lea.vmem [#allocation3], 64
      %v3642 = vld [vmem:[%s3641] ss:$2 sm:$0xff]
      %s3643 = scalar_lea.vmem [#allocation3], 80
      %v3644 = vld [vmem:[%s3643] ss:$2 sm:$0xff]
      %s3645 = scalar_lea.vmem [#allocation3], 96
      %v3646 = vld [vmem:[%s3645] ss:$2 sm:$0xff]
      %s3647 = scalar_lea.vmem [#allocation3], 112
      %v3648 = vld [vmem:[%s3647] ss:$2 sm:$0xff]
      %s3649 = scalar_lea.vmem [#allocation3], 128
      %v3650 = vld [vmem:[%s3649] ss:$2 sm:$0xff]
      %s3651 = scalar_lea.vmem [#allocation3], 144
      %v3652 = vld [vmem:[%s3651] ss:$2 sm:$0xff]
      %s3653 = scalar_lea.vmem [#allocation3], 160
      %v3654 = vld [vmem:[%s3653] ss:$2 sm:$0xff]
      %s3655 = scalar_lea.vmem [#allocation3], 176
      %v3656 = vld [vmem:[%s3655] ss:$2 sm:$0xff]
      %s3657 = scalar_lea.vmem [#allocation3], 192
      %v3658 = vld [vmem:[%s3657] ss:$2 sm:$0xff]
      %s3659 = scalar_lea.vmem [#allocation3], 208
      %v3660 = vld [vmem:[%s3659] ss:$2 sm:$0xff]
      %s3661 = scalar_lea.vmem [#allocation3], 224
      %v3662 = vld [vmem:[%s3661] ss:$2 sm:$0xff]
      %s3663 = scalar_lea.vmem [#allocation3], 240
      %v3664 = vld [vmem:[%s3663] ss:$2 sm:$0xff]
      %s3665 = scalar_lea.vmem [#allocation3], 256
      %v3666 = vld [vmem:[%s3665] ss:$2 sm:$0xff]
      %s3667 = scalar_lea.vmem [#allocation3], 272
      %v3668 = vld [vmem:[%s3667] ss:$2 sm:$0xff]
      %s3669 = scalar_lea.vmem [#allocation3], 288
      %v3670 = vld [vmem:[%s3669] ss:$2 sm:$0xff]
      %s3671 = scalar_lea.vmem [#allocation3], 304
      %v3672 = vld [vmem:[%s3671] ss:$2 sm:$0xff]
      %s3673 = scalar_lea.vmem [#allocation3], 320
      %v3674 = vld [vmem:[%s3673] ss:$2 sm:$0xff]
      %s3675 = scalar_lea.vmem [#allocation3], 336
      %v3676 = vld [vmem:[%s3675] ss:$2 sm:$0xff]
      %s3677 = scalar_lea.vmem [#allocation3], 352
      %v3678 = vld [vmem:[%s3677] ss:$2 sm:$0xff]
      %s3679 = scalar_lea.vmem [#allocation3], 368
      %v3680 = vld [vmem:[%s3679] ss:$2 sm:$0xff]
      %s3681 = scalar_lea.vmem [#allocation3], 384
      %v3682 = vld [vmem:[%s3681] ss:$2 sm:$0xff]
      %s3683 = scalar_lea.vmem [#allocation3], 400
      %v3684 = vld [vmem:[%s3683] ss:$2 sm:$0xff]
      %s3685 = scalar_lea.vmem [#allocation3], 416
      %v3686 = vld [vmem:[%s3685] ss:$2 sm:$0xff]
      %s3687 = scalar_lea.vmem [#allocation3], 432
      %v3688 = vld [vmem:[%s3687] ss:$2 sm:$0xff]
      %s3689 = scalar_lea.vmem [#allocation3], 448
      %v3690 = vld [vmem:[%s3689] ss:$2 sm:$0xff]
      %s3691 = scalar_lea.vmem [#allocation3], 464
      %v3692 = vld [vmem:[%s3691] ss:$2 sm:$0xff]
      %s3693 = scalar_lea.vmem [#allocation3], 480
      %v3694 = vld [vmem:[%s3693] ss:$2 sm:$0xff]
      %s3695 = scalar_lea.vmem [#allocation3], 496
      %v3696 = vld [vmem:[%s3695] ss:$2 sm:$0xff]
      %s3697 = scalar_lea.vmem [#allocation3], 512
      %v3698 = vld [vmem:[%s3697] ss:$2 sm:$0xff]
      %s3699 = scalar_lea.vmem [#allocation3], 528
      %v3700 = vld [vmem:[%s3699] ss:$2 sm:$0xff]
      %s3701 = scalar_lea.vmem [#allocation3], 544
      %v3702 = vld [vmem:[%s3701] ss:$2 sm:$0xff]
      %s3703 = scalar_lea.vmem [#allocation3], 560
      %v3704 = vld [vmem:[%s3703] ss:$2 sm:$0xff]
      %s3705 = scalar_lea.vmem [#allocation3], 576
      %v3706 = vld [vmem:[%s3705] ss:$2 sm:$0xff]
      %s3707 = scalar_lea.vmem [#allocation3], 592
      %v3708 = vld [vmem:[%s3707] ss:$2 sm:$0xff]
      %s3709 = scalar_lea.vmem [#allocation3], 608
      %v3710 = vld [vmem:[%s3709] ss:$2 sm:$0xff]
      %s3711 = scalar_lea.vmem [#allocation3], 624
      %v3712 = vld [vmem:[%s3711] ss:$2 sm:$0xff]
      %s3713 = scalar_lea.vmem [#allocation3], 640
      %v3714 = vld [vmem:[%s3713] ss:$2 sm:$0xff]
      %s3715 = scalar_lea.vmem [#allocation3], 656
      %v3716 = vld [vmem:[%s3715] ss:$2 sm:$0xff]
      %s3717 = scalar_lea.vmem [#allocation3], 672
      %v3718 = vld [vmem:[%s3717] ss:$2 sm:$0xff]
      %s3719 = scalar_lea.vmem [#allocation3], 688
      %v3720 = vld [vmem:[%s3719] ss:$2 sm:$0xff]
      %s3721 = scalar_lea.vmem [#allocation3], 704
      %v3722 = vld [vmem:[%s3721] ss:$2 sm:$0xff]
      %s3723 = scalar_lea.vmem [#allocation3], 1
      %v3724 = vld [vmem:[%s3723] ss:$2 sm:$0xff]
      %s3725 = scalar_lea.vmem [#allocation3], 17
      %v3726 = vld [vmem:[%s3725] ss:$2 sm:$0xff]
      %s3727 = scalar_lea.vmem [#allocation3], 33
      %v3728 = vld [vmem:[%s3727] ss:$2 sm:$0xff]
      %s3729 = scalar_lea.vmem [#allocation3], 49
      %v3730 = vld [vmem:[%s3729] ss:$2 sm:$0xff]
      %s3731 = scalar_lea.vmem [#allocation3], 65
      %v3732 = vld [vmem:[%s3731] ss:$2 sm:$0xff]
      %s3733 = scalar_lea.vmem [#allocation3], 81
      %v3734 = vld [vmem:[%s3733] ss:$2 sm:$0xff]
      %s3735 = scalar_lea.vmem [#allocation3], 97
      %v3736 = vld [vmem:[%s3735] ss:$2 sm:$0xff]
      %s3737 = scalar_lea.vmem [#allocation3], 113
      %v3738 = vld [vmem:[%s3737] ss:$2 sm:$0xff]
      %s3739 = scalar_lea.vmem [#allocation3], 129
      %v3740 = vld [vmem:[%s3739] ss:$2 sm:$0xff]
      %s3741 = scalar_lea.vmem [#allocation3], 145
      %v3742 = vld [vmem:[%s3741] ss:$2 sm:$0xff]
      %s3743 = scalar_lea.vmem [#allocation3], 161
      %v3744 = vld [vmem:[%s3743] ss:$2 sm:$0xff]
      %s3745 = scalar_lea.vmem [#allocation3], 177
      %v3746 = vld [vmem:[%s3745] ss:$2 sm:$0xff]
      %s3747 = scalar_lea.vmem [#allocation3], 193
      %v3748 = vld [vmem:[%s3747] ss:$2 sm:$0xff]
      %s3749 = scalar_lea.vmem [#allocation3], 209
      %v3750 = vld [vmem:[%s3749] ss:$2 sm:$0xff]
      %s3751 = scalar_lea.vmem [#allocation3], 225
      %v3752 = vld [vmem:[%s3751] ss:$2 sm:$0xff]
      %s3753 = scalar_lea.vmem [#allocation3], 241
      %v3754 = vld [vmem:[%s3753] ss:$2 sm:$0xff]
      %s3755 = scalar_lea.vmem [#allocation3], 257
      %v3756 = vld [vmem:[%s3755] ss:$2 sm:$0xff]
      %s3757 = scalar_lea.vmem [#allocation3], 273
      %v3758 = vld [vmem:[%s3757] ss:$2 sm:$0xff]
      %s3759 = scalar_lea.vmem [#allocation3], 289
      %v3760 = vld [vmem:[%s3759] ss:$2 sm:$0xff]
      %s3761 = scalar_lea.vmem [#allocation3], 305
      %v3762 = vld [vmem:[%s3761] ss:$2 sm:$0xff]
      %s3763 = scalar_lea.vmem [#allocation3], 321
      %v3764 = vld [vmem:[%s3763] ss:$2 sm:$0xff]
      %s3765 = scalar_lea.vmem [#allocation3], 337
      %v3766 = vld [vmem:[%s3765] ss:$2 sm:$0xff]
      %s3767 = scalar_lea.vmem [#allocation3], 353
      %v3768 = vld [vmem:[%s3767] ss:$2 sm:$0xff]
      %s3769 = scalar_lea.vmem [#allocation3], 369
      %v3770 = vld [vmem:[%s3769] ss:$2 sm:$0xff]
      %s3771 = scalar_lea.vmem [#allocation3], 385
      %v3772 = vld [vmem:[%s3771] ss:$2 sm:$0xff]
      %s3773 = scalar_lea.vmem [#allocation3], 401
      %v3774 = vld [vmem:[%s3773] ss:$2 sm:$0xff]
      %s3775 = scalar_lea.vmem [#allocation3], 417
      %v3776 = vld [vmem:[%s3775] ss:$2 sm:$0xff]
      %s3777 = scalar_lea.vmem [#allocation3], 433
      %v3778 = vld [vmem:[%s3777] ss:$2 sm:$0xff]
      %s3779 = scalar_lea.vmem [#allocation3], 449
      %v3780 = vld [vmem:[%s3779] ss:$2 sm:$0xff]
      %s3781 = scalar_lea.vmem [#allocation3], 465
      %v3782 = vld [vmem:[%s3781] ss:$2 sm:$0xff]
      %s3783 = scalar_lea.vmem [#allocation3], 481
      %v3784 = vld [vmem:[%s3783] ss:$2 sm:$0xff]
      %s3785 = scalar_lea.vmem [#allocation3], 497
      %v3786 = vld [vmem:[%s3785] ss:$2 sm:$0xff]
      %s3787 = scalar_lea.vmem [#allocation3], 513
      %v3788 = vld [vmem:[%s3787] ss:$2 sm:$0xff]
      %s3789 = scalar_lea.vmem [#allocation3], 529
      %v3790 = vld [vmem:[%s3789] ss:$2 sm:$0xff]
      %s3791 = scalar_lea.vmem [#allocation3], 545
      %v3792 = vld [vmem:[%s3791] ss:$2 sm:$0xff]
      %s3793 = scalar_lea.vmem [#allocation3], 561
      %v3794 = vld [vmem:[%s3793] ss:$2 sm:$0xff]
      %s3795 = scalar_lea.vmem [#allocation3], 577
      %v3796 = vld [vmem:[%s3795] ss:$2 sm:$0xff]
      %s3797 = scalar_lea.vmem [#allocation3], 593
      %v3798 = vld [vmem:[%s3797] ss:$2 sm:$0xff]
      %s3799 = scalar_lea.vmem [#allocation3], 609
      %v3800 = vld [vmem:[%s3799] ss:$2 sm:$0xff]
      %s3801 = scalar_lea.vmem [#allocation3], 625
      %v3802 = vld [vmem:[%s3801] ss:$2 sm:$0xff]
      %s3803 = scalar_lea.vmem [#allocation3], 641
      %v3804 = vld [vmem:[%s3803] ss:$2 sm:$0xff]
      %s3805 = scalar_lea.vmem [#allocation3], 657
      %v3806 = vld [vmem:[%s3805] ss:$2 sm:$0xff]
      %s3807 = scalar_lea.vmem [#allocation3], 673
      %v3808 = vld [vmem:[%s3807] ss:$2 sm:$0xff]
      %s3809 = scalar_lea.vmem [#allocation3], 689
      %v3810 = vld [vmem:[%s3809] ss:$2 sm:$0xff]
      %s3811 = scalar_lea.vmem [#allocation3], 705
      %v3812 = vld [vmem:[%s3811] ss:$2 sm:$0xff]
      %v3813 = vmax.f32 %v3634, %v3724
      %v3814 = vmax.f32 %v3636, %v3726
      %v3815 = vmax.f32 %v3638, %v3728
      %v3816 = vmax.f32 %v3640, %v3730
      %v3817 = vmax.f32 %v3642, %v3732
      %v3818 = vmax.f32 %v3644, %v3734
      %v3819 = vmax.f32 %v3646, %v3736
      %v3820 = vmax.f32 %v3648, %v3738
      %v3821 = vmax.f32 %v3650, %v3740
      %v3822 = vmax.f32 %v3652, %v3742
      %v3823 = vmax.f32 %v3654, %v3744
      %v3824 = vmax.f32 %v3656, %v3746
      %v3825 = vmax.f32 %v3658, %v3748
      %v3826 = vmax.f32 %v3660, %v3750
      %v3827 = vmax.f32 %v3662, %v3752
      %v3828 = vmax.f32 %v3664, %v3754
      %v3829 = vmax.f32 %v3666, %v3756
      %v3830 = vmax.f32 %v3668, %v3758
      %v3831 = vmax.f32 %v3670, %v3760
      %v3832 = vmax.f32 %v3672, %v3762
      %v3833 = vmax.f32 %v3674, %v3764
      %v3834 = vmax.f32 %v3676, %v3766
      %v3835 = vmax.f32 %v3678, %v3768
      %v3836 = vmax.f32 %v3680, %v3770
      %v3837 = vmax.f32 %v3682, %v3772
      %v3838 = vmax.f32 %v3684, %v3774
      %v3839 = vmax.f32 %v3686, %v3776
      %v3840 = vmax.f32 %v3688, %v3778
      %v3841 = vmax.f32 %v3690, %v3780
      %v3842 = vmax.f32 %v3692, %v3782
      %v3843 = vmax.f32 %v3694, %v3784
      %v3844 = vmax.f32 %v3696, %v3786
      %v3845 = vmax.f32 %v3698, %v3788
      %v3846 = vmax.f32 %v3700, %v3790
      %v3847 = vmax.f32 %v3702, %v3792
      %v3848 = vmax.f32 %v3704, %v3794
      %v3849 = vmax.f32 %v3706, %v3796
      %v3850 = vmax.f32 %v3708, %v3798
      %v3851 = vmax.f32 %v3710, %v3800
      %v3852 = vmax.f32 %v3712, %v3802
      %v3853 = vmax.f32 %v3714, %v3804
      %v3854 = vmax.f32 %v3716, %v3806
      %v3855 = vmax.f32 %v3718, %v3808
      %v3856 = vmax.f32 %v3720, %v3810
      %v3857 = vmax.f32 %v3722, %v3812
      %vm3858 = vcmask 253952
      %3859 = vst.msk [vmem:[#allocation4 + $0x7] sm:$0x1] %vm3858, 0.0
      %3860 = vst.msk [vmem:[#allocation4 + $0x8] sm:$0xff] %vm3543, %v3813
      %3861 = vst.msk [vmem:[#allocation4 + $0x10] sm:$0xff] %vm3543, %v3814
      %3862 = vst.msk [vmem:[#allocation4 + $0x18] sm:$0xff] %vm3543, %v3815
      %3863 = vst.msk [vmem:[#allocation4 + $0x20] sm:$0xff] %vm3543, %v3816
      %3864 = vst.msk [vmem:[#allocation4 + $0x28] sm:$0xff] %vm3543, %v3817
      %3865 = vst.msk [vmem:[#allocation4 + $0x30] sm:$0xff] %vm3543, %v3818
      %3866 = vst.msk [vmem:[#allocation4 + $0x38] sm:$0xff] %vm3543, %v3819
      %3867 = vst.msk [vmem:[#allocation4 + $0x40] sm:$0xff] %vm3543, %v3820
      %3868 = vst.msk [vmem:[#allocation4 + $0x48] sm:$0xff] %vm3543, %v3821
      %3869 = vst.msk [vmem:[#allocation4 + $0x50] sm:$0xff] %vm3543, %v3822
      %3870 = vst.msk [vmem:[#allocation4 + $0x58] sm:$0xff] %vm3543, %v3823
      %3871 = vst.msk [vmem:[#allocation4 + $0x60] sm:$0xff] %vm3543, %v3824
      %3872 = vst.msk [vmem:[#allocation4 + $0x68] sm:$0xff] %vm3543, %v3825
      %3873 = vst.msk [vmem:[#allocation4 + $0x70] sm:$0xff] %vm3543, %v3826
      %3874 = vst.msk [vmem:[#allocation4 + $0x78] sm:$0xff] %vm3543, %v3827
      %3875 = vst.msk [vmem:[#allocation4 + $0x80] sm:$0xff] %vm3543, %v3828
      %3876 = vst.msk [vmem:[#allocation4 + $0x88] sm:$0xff] %vm3543, %v3829
      %3877 = vst.msk [vmem:[#allocation4 + $0x90] sm:$0xff] %vm3543, %v3830
      %3878 = vst.msk [vmem:[#allocation4 + $0x98] sm:$0xff] %vm3543, %v3831
      %3879 = vst.msk [vmem:[#allocation4 + $0xa0] sm:$0xff] %vm3543, %v3832
      %3880 = vst.msk [vmem:[#allocation4 + $0xa8] sm:$0xff] %vm3543, %v3833
      %3881 = vst.msk [vmem:[#allocation4 + $0xb0] sm:$0xff] %vm3543, %v3834
      %3882 = vst.msk [vmem:[#allocation4 + $0xb8] sm:$0xff] %vm3543, %v3835
      %3883 = vst.msk [vmem:[#allocation4 + $0xc0] sm:$0xff] %vm3543, %v3836
      %3884 = vst.msk [vmem:[#allocation4 + $0xc8] sm:$0xff] %vm3543, %v3837
      %3885 = vst.msk [vmem:[#allocation4 + $0xd0] sm:$0xff] %vm3543, %v3838
      %3886 = vst.msk [vmem:[#allocation4 + $0xd8] sm:$0xff] %vm3543, %v3839
      %3887 = vst.msk [vmem:[#allocation4 + $0xe0] sm:$0xff] %vm3543, %v3840
      %3888 = vst.msk [vmem:[#allocation4 + $0xe8] sm:$0xff] %vm3543, %v3841
      %3889 = vst.msk [vmem:[#allocation4 + $0xf0] sm:$0xff] %vm3543, %v3842
      %3890 = vst.msk [vmem:[#allocation4 + $0xf8] sm:$0xff] %vm3543, %v3843
      %3891 = vst.msk [vmem:[#allocation4 + $0x100] sm:$0xff] %vm3543, %v3844
      %3892 = vst.msk [vmem:[#allocation4 + $0x108] sm:$0xff] %vm3543, %v3845
      %3893 = vst.msk [vmem:[#allocation4 + $0x110] sm:$0xff] %vm3543, %v3846
      %3894 = vst.msk [vmem:[#allocation4 + $0x118] sm:$0xff] %vm3543, %v3847
      %3895 = vst.msk [vmem:[#allocation4 + $0x120] sm:$0xff] %vm3543, %v3848
      %3896 = vst.msk [vmem:[#allocation4 + $0x128] sm:$0xff] %vm3543, %v3849
      %3897 = vst.msk [vmem:[#allocation4 + $0x130] sm:$0xff] %vm3543, %v3850
      %3898 = vst.msk [vmem:[#allocation4 + $0x138] sm:$0xff] %vm3543, %v3851
      %3899 = vst.msk [vmem:[#allocation4 + $0x140] sm:$0xff] %vm3543, %v3852
      %3900 = vst.msk [vmem:[#allocation4 + $0x148] sm:$0xff] %vm3543, %v3853
      %3901 = vst.msk [vmem:[#allocation4 + $0x150] sm:$0xff] %vm3543, %v3854
      %3902 = vst.msk [vmem:[#allocation4 + $0x158] sm:$0xff] %vm3543, %v3855
      %3903 = vst.msk [vmem:[#allocation4 + $0x160] sm:$0xff] %vm3543, %v3856
      %3904 = vst.msk [vmem:[#allocation4 + $0x168] sm:$0xff] %vm3543, %v3857
      %3905 = vst.msk [vmem:[#allocation4 + $0x170] sm:$0x1] %vm3858, 0.0
      %v3906 = vld [vmem:[#allocation4 + $0x8] sm:$0xff]
      %v3907 = vld [vmem:[#allocation4 + $0x10] sm:$0xff]
      %v3908 = vld [vmem:[#allocation4 + $0x18] sm:$0xff]
      %v3909 = vld [vmem:[#allocation4 + $0x20] sm:$0xff]
      %v3910 = vld [vmem:[#allocation4 + $0x28] sm:$0xff]
      %v3911 = vld [vmem:[#allocation4 + $0x30] sm:$0xff]
      %v3912 = vld [vmem:[#allocation4 + $0x38] sm:$0xff]
      %v3913 = vld [vmem:[#allocation4 + $0x40] sm:$0xff]
      %v3914 = vld [vmem:[#allocation4 + $0x48] sm:$0xff]
      %v3915 = vld [vmem:[#allocation4 + $0x50] sm:$0xff]
      %v3916 = vld [vmem:[#allocation4 + $0x58] sm:$0xff]
      %v3917 = vld [vmem:[#allocation4 + $0x60] sm:$0xff]
      %v3918 = vld [vmem:[#allocation4 + $0x68] sm:$0xff]
      %v3919 = vld [vmem:[#allocation4 + $0x70] sm:$0xff]
      %v3920 = vld [vmem:[#allocation4 + $0x78] sm:$0xff]
      %v3921 = vld [vmem:[#allocation4 + $0x80] sm:$0xff]
      %v3922 = vld [vmem:[#allocation4 + $0x88] sm:$0xff]
      %v3923 = vld [vmem:[#allocation4 + $0x90] sm:$0xff]
      %v3924 = vld [vmem:[#allocation4 + $0x98] sm:$0xff]
      %v3925 = vld [vmem:[#allocation4 + $0xa0] sm:$0xff]
      %v3926 = vld [vmem:[#allocation4 + $0xa8] sm:$0xff]
      %v3927 = vld [vmem:[#allocation4 + $0xb0] sm:$0xff]
      %v3928 = vld [vmem:[#allocation4 + $0xb8] sm:$0xff]
      %v3929 = vld [vmem:[#allocation4 + $0xc0] sm:$0xff]
      %v3930 = vld [vmem:[#allocation4 + $0xc8] sm:$0xff]
      %v3931 = vld [vmem:[#allocation4 + $0xd0] sm:$0xff]
      %v3932 = vld [vmem:[#allocation4 + $0xd8] sm:$0xff]
      %v3933 = vld [vmem:[#allocation4 + $0xe0] sm:$0xff]
      %v3934 = vld [vmem:[#allocation4 + $0xe8] sm:$0xff]
      %v3935 = vld [vmem:[#allocation4 + $0xf0] sm:$0xff]
      %v3936 = vld [vmem:[#allocation4 + $0xf8] sm:$0xff]
      %v3937 = vld [vmem:[#allocation4 + $0x100] sm:$0xff]
      %v3938 = vld [vmem:[#allocation4 + $0x108] sm:$0xff]
      %v3939 = vld [vmem:[#allocation4 + $0x110] sm:$0xff]
      %v3940 = vld [vmem:[#allocation4 + $0x118] sm:$0xff]
      %v3941 = vld [vmem:[#allocation4 + $0x120] sm:$0xff]
      %v3942 = vld [vmem:[#allocation4 + $0x128] sm:$0xff]
      %v3943 = vld [vmem:[#allocation4 + $0x130] sm:$0xff]
      %v3944 = vld [vmem:[#allocation4 + $0x138] sm:$0xff]
      %v3945 = vld [vmem:[#allocation4 + $0x140] sm:$0xff]
      %v3946 = vld [vmem:[#allocation4 + $0x148] sm:$0xff]
      %v3947 = vld [vmem:[#allocation4 + $0x150] sm:$0xff]
      %v3948 = vld [vmem:[#allocation4 + $0x158] sm:$0xff]
      %v3949 = vld [vmem:[#allocation4 + $0x160] sm:$0xff]
      %v3950 = vld [vmem:[#allocation4 + $0x168] sm:$0xff]
      %v3951 = vld [vmem:[#allocation4 + $0x7] sm:$0xff]
      %v3952 = vld [vmem:[#allocation4 + $0xf] sm:$0xff]
      %v3953 = vld [vmem:[#allocation4 + $0x17] sm:$0xff]
      %v3954 = vld [vmem:[#allocation4 + $0x1f] sm:$0xff]
      %v3955 = vld [vmem:[#allocation4 + $0x27] sm:$0xff]
      %v3956 = vld [vmem:[#allocation4 + $0x2f] sm:$0xff]
      %v3957 = vld [vmem:[#allocation4 + $0x37] sm:$0xff]
      %v3958 = vld [vmem:[#allocation4 + $0x3f] sm:$0xff]
      %v3959 = vld [vmem:[#allocation4 + $0x47] sm:$0xff]
      %v3960 = vld [vmem:[#allocation4 + $0x4f] sm:$0xff]
      %v3961 = vld [vmem:[#allocation4 + $0x57] sm:$0xff]
      %v3962 = vld [vmem:[#allocation4 + $0x5f] sm:$0xff]
      %v3963 = vld [vmem:[#allocation4 + $0x67] sm:$0xff]
      %v3964 = vld [vmem:[#allocation4 + $0x6f] sm:$0xff]
      %v3965 = vld [vmem:[#allocation4 + $0x77] sm:$0xff]
      %v3966 = vld [vmem:[#allocation4 + $0x7f] sm:$0xff]
      %v3967 = vld [vmem:[#allocation4 + $0x87] sm:$0xff]
      %v3968 = vld [vmem:[#allocation4 + $0x8f] sm:$0xff]
      %v3969 = vld [vmem:[#allocation4 + $0x97] sm:$0xff]
      %v3970 = vld [vmem:[#allocation4 + $0x9f] sm:$0xff]
      %v3971 = vld [vmem:[#allocation4 + $0xa7] sm:$0xff]
      %v3972 = vld [vmem:[#allocation4 + $0xaf] sm:$0xff]
      %v3973 = vld [vmem:[#allocation4 + $0xb7] sm:$0xff]
      %v3974 = vld [vmem:[#allocation4 + $0xbf] sm:$0xff]
      %v3975 = vld [vmem:[#allocation4 + $0xc7] sm:$0xff]
      %v3976 = vld [vmem:[#allocation4 + $0xcf] sm:$0xff]
      %v3977 = vld [vmem:[#allocation4 + $0xd7] sm:$0xff]
      %v3978 = vld [vmem:[#allocation4 + $0xdf] sm:$0xff]
      %v3979 = vld [vmem:[#allocation4 + $0xe7] sm:$0xff]
      %v3980 = vld [vmem:[#allocation4 + $0xef] sm:$0xff]
      %v3981 = vld [vmem:[#allocation4 + $0xf7] sm:$0xff]
      %v3982 = vld [vmem:[#allocation4 + $0xff] sm:$0xff]
      %v3983 = vld [vmem:[#allocation4 + $0x107] sm:$0xff]
      %v3984 = vld [vmem:[#allocation4 + $0x10f] sm:$0xff]
      %v3985 = vld [vmem:[#allocation4 + $0x117] sm:$0xff]
      %v3986 = vld [vmem:[#allocation4 + $0x11f] sm:$0xff]
      %v3987 = vld [vmem:[#allocation4 + $0x127] sm:$0xff]
      %v3988 = vld [vmem:[#allocation4 + $0x12f] sm:$0xff]
      %v3989 = vld [vmem:[#allocation4 + $0x137] sm:$0xff]
      %v3990 = vld [vmem:[#allocation4 + $0x13f] sm:$0xff]
      %v3991 = vld [vmem:[#allocation4 + $0x147] sm:$0xff]
      %v3992 = vld [vmem:[#allocation4 + $0x14f] sm:$0xff]
      %v3993 = vld [vmem:[#allocation4 + $0x157] sm:$0xff]
      %v3994 = vld [vmem:[#allocation4 + $0x15f] sm:$0xff]
      %v3995 = vld [vmem:[#allocation4 + $0x167] sm:$0xff]
      %v3996 = vld [vmem:[#allocation4 + $0x9] sm:$0xff]
      %v3997 = vld [vmem:[#allocation4 + $0x11] sm:$0xff]
      %v3998 = vld [vmem:[#allocation4 + $0x19] sm:$0xff]
      %v3999 = vld [vmem:[#allocation4 + $0x21] sm:$0xff]
      %v4000 = vld [vmem:[#allocation4 + $0x29] sm:$0xff]
      %v4001 = vld [vmem:[#allocation4 + $0x31] sm:$0xff]
      %v4002 = vld [vmem:[#allocation4 + $0x39] sm:$0xff]
      %v4003 = vld [vmem:[#allocation4 + $0x41] sm:$0xff]
      %v4004 = vld [vmem:[#allocation4 + $0x49] sm:$0xff]
      %v4005 = vld [vmem:[#allocation4 + $0x51] sm:$0xff]
      %v4006 = vld [vmem:[#allocation4 + $0x59] sm:$0xff]
      %v4007 = vld [vmem:[#allocation4 + $0x61] sm:$0xff]
      %v4008 = vld [vmem:[#allocation4 + $0x69] sm:$0xff]
      %v4009 = vld [vmem:[#allocation4 + $0x71] sm:$0xff]
      %v4010 = vld [vmem:[#allocation4 + $0x79] sm:$0xff]
      %v4011 = vld [vmem:[#allocation4 + $0x81] sm:$0xff]
      %v4012 = vld [vmem:[#allocation4 + $0x89] sm:$0xff]
      %v4013 = vld [vmem:[#allocation4 + $0x91] sm:$0xff]
      %v4014 = vld [vmem:[#allocation4 + $0x99] sm:$0xff]
      %v4015 = vld [vmem:[#allocation4 + $0xa1] sm:$0xff]
      %v4016 = vld [vmem:[#allocation4 + $0xa9] sm:$0xff]
      %v4017 = vld [vmem:[#allocation4 + $0xb1] sm:$0xff]
      %v4018 = vld [vmem:[#allocation4 + $0xb9] sm:$0xff]
      %v4019 = vld [vmem:[#allocation4 + $0xc1] sm:$0xff]
      %v4020 = vld [vmem:[#allocation4 + $0xc9] sm:$0xff]
      %v4021 = vld [vmem:[#allocation4 + $0xd1] sm:$0xff]
      %v4022 = vld [vmem:[#allocation4 + $0xd9] sm:$0xff]
      %v4023 = vld [vmem:[#allocation4 + $0xe1] sm:$0xff]
      %v4024 = vld [vmem:[#allocation4 + $0xe9] sm:$0xff]
      %v4025 = vld [vmem:[#allocation4 + $0xf1] sm:$0xff]
      %v4026 = vld [vmem:[#allocation4 + $0xf9] sm:$0xff]
      %v4027 = vld [vmem:[#allocation4 + $0x101] sm:$0xff]
      %v4028 = vld [vmem:[#allocation4 + $0x109] sm:$0xff]
      %v4029 = vld [vmem:[#allocation4 + $0x111] sm:$0xff]
      %v4030 = vld [vmem:[#allocation4 + $0x119] sm:$0xff]
      %v4031 = vld [vmem:[#allocation4 + $0x121] sm:$0xff]
      %v4032 = vld [vmem:[#allocation4 + $0x129] sm:$0xff]
      %v4033 = vld [vmem:[#allocation4 + $0x131] sm:$0xff]
      %v4034 = vld [vmem:[#allocation4 + $0x139] sm:$0xff]
      %v4035 = vld [vmem:[#allocation4 + $0x141] sm:$0xff]
      %v4036 = vld [vmem:[#allocation4 + $0x149] sm:$0xff]
      %v4037 = vld [vmem:[#allocation4 + $0x151] sm:$0xff]
      %v4038 = vld [vmem:[#allocation4 + $0x159] sm:$0xff]
      %v4039 = vld [vmem:[#allocation4 + $0x161] sm:$0xff]
      %v4040 = vld [vmem:[#allocation4 + $0x169] sm:$0xff]
      %v4041 = vld [vmem:[%s2] sm:$0xff]
      %v4042 = vld [vmem:[%s2 + $0x8] sm:$0xff]
      %v4043 = vld [vmem:[%s2 + $0x10] sm:$0xff]
      %v4044 = vld [vmem:[%s2 + $0x18] sm:$0xff]
      %v4045 = vld [vmem:[%s2 + $0x20] sm:$0xff]
      %v4046 = vld [vmem:[%s2 + $0x28] sm:$0xff]
      %v4047 = vld [vmem:[%s2 + $0x30] sm:$0xff]
      %v4048 = vld [vmem:[%s2 + $0x38] sm:$0xff]
      %v4049 = vld [vmem:[%s2 + $0x40] sm:$0xff]
      %v4050 = vld [vmem:[%s2 + $0x48] sm:$0xff]
      %v4051 = vld [vmem:[%s2 + $0x50] sm:$0xff]
      %v4052 = vld [vmem:[%s2 + $0x58] sm:$0xff]
      %v4053 = vld [vmem:[%s2 + $0x60] sm:$0xff]
      %v4054 = vld [vmem:[%s2 + $0x68] sm:$0xff]
      %v4055 = vld [vmem:[%s2 + $0x70] sm:$0xff]
      %v4056 = vld [vmem:[%s2 + $0x78] sm:$0xff]
      %v4057 = vld [vmem:[%s2 + $0x80] sm:$0xff]
      %v4058 = vld [vmem:[%s2 + $0x88] sm:$0xff]
      %v4059 = vld [vmem:[%s2 + $0x90] sm:$0xff]
      %v4060 = vld [vmem:[%s2 + $0x98] sm:$0xff]
      %v4061 = vld [vmem:[%s2 + $0xa0] sm:$0xff]
      %v4062 = vld [vmem:[%s2 + $0xa8] sm:$0xff]
      %v4063 = vld [vmem:[%s2 + $0xb0] sm:$0xff]
      %v4064 = vld [vmem:[%s2 + $0xb8] sm:$0xff]
      %v4065 = vld [vmem:[%s2 + $0xc0] sm:$0xff]
      %v4066 = vld [vmem:[%s2 + $0xc8] sm:$0xff]
      %v4067 = vld [vmem:[%s2 + $0xd0] sm:$0xff]
      %v4068 = vld [vmem:[%s2 + $0xd8] sm:$0xff]
      %v4069 = vld [vmem:[%s2 + $0xe0] sm:$0xff]
      %v4070 = vld [vmem:[%s2 + $0xe8] sm:$0xff]
      %v4071 = vld [vmem:[%s2 + $0xf0] sm:$0xff]
      %v4072 = vld [vmem:[%s2 + $0xf8] sm:$0xff]
      %v4073 = vld [vmem:[%s2 + $0x100] sm:$0xff]
      %v4074 = vld [vmem:[%s2 + $0x108] sm:$0xff]
      %v4075 = vld [vmem:[%s2 + $0x110] sm:$0xff]
      %v4076 = vld [vmem:[%s2 + $0x118] sm:$0xff]
      %v4077 = vld [vmem:[%s2 + $0x120] sm:$0xff]
      %v4078 = vld [vmem:[%s2 + $0x128] sm:$0xff]
      %v4079 = vld [vmem:[%s2 + $0x130] sm:$0xff]
      %v4080 = vld [vmem:[%s2 + $0x138] sm:$0xff]
      %v4081 = vld [vmem:[%s2 + $0x140] sm:$0xff]
      %v4082 = vld [vmem:[%s2 + $0x148] sm:$0xff]
      %v4083 = vld [vmem:[%s2 + $0x150] sm:$0xff]
      %v4084 = vld [vmem:[%s2 + $0x158] sm:$0xff]
      %v4085 = vld [vmem:[%s2 + $0x160] sm:$0xff]
      %vm4086 = vcmp.gt.f32.partialorder %v4041, 0.5
      %vm4087 = vcmp.gt.f32.partialorder %v4042, 0.5
      %vm4088 = vcmp.gt.f32.partialorder %v4043, 0.5
      %vm4089 = vcmp.gt.f32.partialorder %v4044, 0.5
      %vm4090 = vcmp.gt.f32.partialorder %v4045, 0.5
      %vm4091 = vcmp.gt.f32.partialorder %v4046, 0.5
      %vm4092 = vcmp.gt.f32.partialorder %v4047, 0.5
      %vm4093 = vcmp.gt.f32.partialorder %v4048, 0.5
      %vm4094 = vcmp.gt.f32.partialorder %v4049, 0.5
      %vm4095 = vcmp.gt.f32.partialorder %v4050, 0.5
      %vm4096 = vcmp.gt.f32.partialorder %v4051, 0.5
      %vm4097 = vcmp.gt.f32.partialorder %v4052, 0.5
      %vm4098 = vcmp.gt.f32.partialorder %v4053, 0.5
      %vm4099 = vcmp.gt.f32.partialorder %v4054, 0.5
      %vm4100 = vcmp.gt.f32.partialorder %v4055, 0.5
      %vm4101 = vcmp.gt.f32.partialorder %v4056, 0.5
      %vm4102 = vcmp.gt.f32.partialorder %v4057, 0.5
      %vm4103 = vcmp.gt.f32.partialorder %v4058, 0.5
      %vm4104 = vcmp.gt.f32.partialorder %v4059, 0.5
      %vm4105 = vcmp.gt.f32.partialorder %v4060, 0.5
      %vm4106 = vcmp.gt.f32.partialorder %v4061, 0.5
      %vm4107 = vcmp.gt.f32.partialorder %v4062, 0.5
      %vm4108 = vcmp.gt.f32.partialorder %v4063, 0.5
      %vm4109 = vcmp.gt.f32.partialorder %v4064, 0.5
      %vm4110 = vcmp.gt.f32.partialorder %v4065, 0.5
      %vm4111 = vcmp.gt.f32.partialorder %v4066, 0.5
      %vm4112 = vcmp.gt.f32.partialorder %v4067, 0.5
      %vm4113 = vcmp.gt.f32.partialorder %v4068, 0.5
      %vm4114 = vcmp.gt.f32.partialorder %v4069, 0.5
      %vm4115 = vcmp.gt.f32.partialorder %v4070, 0.5
      %vm4116 = vcmp.gt.f32.partialorder %v4071, 0.5
      %vm4117 = vcmp.gt.f32.partialorder %v4072, 0.5
      %vm4118 = vcmp.gt.f32.partialorder %v4073, 0.5
      %vm4119 = vcmp.gt.f32.partialorder %v4074, 0.5
      %vm4120 = vcmp.gt.f32.partialorder %v4075, 0.5
      %vm4121 = vcmp.gt.f32.partialorder %v4076, 0.5
      %vm4122 = vcmp.gt.f32.partialorder %v4077, 0.5
      %vm4123 = vcmp.gt.f32.partialorder %v4078, 0.5
      %vm4124 = vcmp.gt.f32.partialorder %v4079, 0.5
      %vm4125 = vcmp.gt.f32.partialorder %v4080, 0.5
      %vm4126 = vcmp.gt.f32.partialorder %v4081, 0.5
      %vm4127 = vcmp.gt.f32.partialorder %v4082, 0.5
      %vm4128 = vcmp.gt.f32.partialorder %v4083, 0.5
      %vm4129 = vcmp.gt.f32.partialorder %v4084, 0.5
      %vm4130 = vcmp.gt.f32.partialorder %v4085, 0.5
      %v4131 = vsel %vm4086, 1, 0
      %v4132 = vsel %vm4087, 1, 0
      %v4133 = vsel %vm4088, 1, 0
      %v4134 = vsel %vm4089, 1, 0
      %v4135 = vsel %vm4090, 1, 0
      %v4136 = vsel %vm4091, 1, 0
      %v4137 = vsel %vm4092, 1, 0
      %v4138 = vsel %vm4093, 1, 0
      %v4139 = vsel %vm4094, 1, 0
      %v4140 = vsel %vm4095, 1, 0
      %v4141 = vsel %vm4096, 1, 0
      %v4142 = vsel %vm4097, 1, 0
      %v4143 = vsel %vm4098, 1, 0
      %v4144 = vsel %vm4099, 1, 0
      %v4145 = vsel %vm4100, 1, 0
      %v4146 = vsel %vm4101, 1, 0
      %v4147 = vsel %vm4102, 1, 0
      %v4148 = vsel %vm4103, 1, 0
      %v4149 = vsel %vm4104, 1, 0
      %v4150 = vsel %vm4105, 1, 0
      %v4151 = vsel %vm4106, 1, 0
      %v4152 = vsel %vm4107, 1, 0
      %v4153 = vsel %vm4108, 1, 0
      %v4154 = vsel %vm4109, 1, 0
      %v4155 = vsel %vm4110, 1, 0
      %v4156 = vsel %vm4111, 1, 0
      %v4157 = vsel %vm4112, 1, 0
      %v4158 = vsel %vm4113, 1, 0
      %v4159 = vsel %vm4114, 1, 0
      %v4160 = vsel %vm4115, 1, 0
      %v4161 = vsel %vm4116, 1, 0
      %v4162 = vsel %vm4117, 1, 0
      %v4163 = vsel %vm4118, 1, 0
      %v4164 = vsel %vm4119, 1, 0
      %v4165 = vsel %vm4120, 1, 0
      %v4166 = vsel %vm4121, 1, 0
      %v4167 = vsel %vm4122, 1, 0
      %v4168 = vsel %vm4123, 1, 0
      %v4169 = vsel %vm4124, 1, 0
      %v4170 = vsel %vm4125, 1, 0
      %v4171 = vsel %vm4126, 1, 0
      %v4172 = vsel %vm4127, 1, 0
      %v4173 = vsel %vm4128, 1, 0
      %v4174 = vsel %vm4129, 1, 0
      %v4175 = vsel %vm4130, 1, 0
      %4176 = vset.pattern.permute.xlu0 0
      %4177 = vperm.xlu0 %4176, %v4131
      %v4178 = vpop.permute.xlu0 %4177
      %4179 = vset.pattern.permute.xlu0 0
      %4180 = vperm.xlu0 %4179, %v4132
      %v4181 = vpop.permute.xlu0 %4180
      %4182 = vset.pattern.permute.xlu0 0
      %4183 = vperm.xlu0 %4182, %v4133
      %v4184 = vpop.permute.xlu0 %4183
      %4185 = vset.pattern.permute.xlu0 0
      %4186 = vperm.xlu0 %4185, %v4134
      %v4187 = vpop.permute.xlu0 %4186
      %4188 = vset.pattern.permute.xlu0 0
      %4189 = vperm.xlu0 %4188, %v4135
      %v4190 = vpop.permute.xlu0 %4189
      %4191 = vset.pattern.permute.xlu0 0
      %4192 = vperm.xlu0 %4191, %v4136
      %v4193 = vpop.permute.xlu0 %4192
      %4194 = vset.pattern.permute.xlu0 0
      %4195 = vperm.xlu0 %4194, %v4137
      %v4196 = vpop.permute.xlu0 %4195
      %4197 = vset.pattern.permute.xlu0 0
      %4198 = vperm.xlu0 %4197, %v4138
      %v4199 = vpop.permute.xlu0 %4198
      %4200 = vset.pattern.permute.xlu0 0
      %4201 = vperm.xlu0 %4200, %v4139
      %v4202 = vpop.permute.xlu0 %4201
      %4203 = vset.pattern.permute.xlu0 0
      %4204 = vperm.xlu0 %4203, %v4140
      %v4205 = vpop.permute.xlu0 %4204
      %4206 = vset.pattern.permute.xlu0 0
      %4207 = vperm.xlu0 %4206, %v4141
      %v4208 = vpop.permute.xlu0 %4207
      %4209 = vset.pattern.permute.xlu0 0
      %4210 = vperm.xlu0 %4209, %v4142
      %v4211 = vpop.permute.xlu0 %4210
      %4212 = vset.pattern.permute.xlu0 0
      %4213 = vperm.xlu0 %4212, %v4143
      %v4214 = vpop.permute.xlu0 %4213
      %4215 = vset.pattern.permute.xlu0 0
      %4216 = vperm.xlu0 %4215, %v4144
      %v4217 = vpop.permute.xlu0 %4216
      %4218 = vset.pattern.permute.xlu0 0
      %4219 = vperm.xlu0 %4218, %v4145
      %v4220 = vpop.permute.xlu0 %4219
      %4221 = vset.pattern.permute.xlu0 0
      %4222 = vperm.xlu0 %4221, %v4146
      %v4223 = vpop.permute.xlu0 %4222
      %4224 = vset.pattern.permute.xlu0 0
      %4225 = vperm.xlu0 %4224, %v4147
      %v4226 = vpop.permute.xlu0 %4225
      %4227 = vset.pattern.permute.xlu0 0
      %4228 = vperm.xlu0 %4227, %v4148
      %v4229 = vpop.permute.xlu0 %4228
      %4230 = vset.pattern.permute.xlu0 0
      %4231 = vperm.xlu0 %4230, %v4149
      %v4232 = vpop.permute.xlu0 %4231
      %4233 = vset.pattern.permute.xlu0 0
      %4234 = vperm.xlu0 %4233, %v4150
      %v4235 = vpop.permute.xlu0 %4234
      %4236 = vset.pattern.permute.xlu0 0
      %4237 = vperm.xlu0 %4236, %v4151
      %v4238 = vpop.permute.xlu0 %4237
      %4239 = vset.pattern.permute.xlu0 0
      %4240 = vperm.xlu0 %4239, %v4152
      %v4241 = vpop.permute.xlu0 %4240
      %4242 = vset.pattern.permute.xlu0 0
      %4243 = vperm.xlu0 %4242, %v4153
      %v4244 = vpop.permute.xlu0 %4243
      %4245 = vset.pattern.permute.xlu0 0
      %4246 = vperm.xlu0 %4245, %v4154
      %v4247 = vpop.permute.xlu0 %4246
      %4248 = vset.pattern.permute.xlu0 0
      %4249 = vperm.xlu0 %4248, %v4155
      %v4250 = vpop.permute.xlu0 %4249
      %4251 = vset.pattern.permute.xlu0 0
      %4252 = vperm.xlu0 %4251, %v4156
      %v4253 = vpop.permute.xlu0 %4252
      %4254 = vset.pattern.permute.xlu0 0
      %4255 = vperm.xlu0 %4254, %v4157
      %v4256 = vpop.permute.xlu0 %4255
      %4257 = vset.pattern.permute.xlu0 0
      %4258 = vperm.xlu0 %4257, %v4158
      %v4259 = vpop.permute.xlu0 %4258
      %4260 = vset.pattern.permute.xlu0 0
      %4261 = vperm.xlu0 %4260, %v4159
      %v4262 = vpop.permute.xlu0 %4261
      %4263 = vset.pattern.permute.xlu0 0
      %4264 = vperm.xlu0 %4263, %v4160
      %v4265 = vpop.permute.xlu0 %4264
      %4266 = vset.pattern.permute.xlu0 0
      %4267 = vperm.xlu0 %4266, %v4161
      %v4268 = vpop.permute.xlu0 %4267
      %4269 = vset.pattern.permute.xlu0 0
      %4270 = vperm.xlu0 %4269, %v4162
      %v4271 = vpop.permute.xlu0 %4270
      %4272 = vset.pattern.permute.xlu0 0
      %4273 = vperm.xlu0 %4272, %v4163
      %v4274 = vpop.permute.xlu0 %4273
      %4275 = vset.pattern.permute.xlu0 0
      %4276 = vperm.xlu0 %4275, %v4164
      %v4277 = vpop.permute.xlu0 %4276
      %4278 = vset.pattern.permute.xlu0 0
      %4279 = vperm.xlu0 %4278, %v4165
      %v4280 = vpop.permute.xlu0 %4279
      %4281 = vset.pattern.permute.xlu0 0
      %4282 = vperm.xlu0 %4281, %v4166
      %v4283 = vpop.permute.xlu0 %4282
      %4284 = vset.pattern.permute.xlu0 0
      %4285 = vperm.xlu0 %4284, %v4167
      %v4286 = vpop.permute.xlu0 %4285
      %4287 = vset.pattern.permute.xlu0 0
      %4288 = vperm.xlu0 %4287, %v4168
      %v4289 = vpop.permute.xlu0 %4288
      %4290 = vset.pattern.permute.xlu0 0
      %4291 = vperm.xlu0 %4290, %v4169
      %v4292 = vpop.permute.xlu0 %4291
      %4293 = vset.pattern.permute.xlu0 0
      %4294 = vperm.xlu0 %4293, %v4170
      %v4295 = vpop.permute.xlu0 %4294
      %4296 = vset.pattern.permute.xlu0 0
      %4297 = vperm.xlu0 %4296, %v4171
      %v4298 = vpop.permute.xlu0 %4297
      %4299 = vset.pattern.permute.xlu0 0
      %4300 = vperm.xlu0 %4299, %v4172
      %v4301 = vpop.permute.xlu0 %4300
      %4302 = vset.pattern.permute.xlu0 0
      %4303 = vperm.xlu0 %4302, %v4173
      %v4304 = vpop.permute.xlu0 %4303
      %4305 = vset.pattern.permute.xlu0 0
      %4306 = vperm.xlu0 %4305, %v4174
      %v4307 = vpop.permute.xlu0 %4306
      %4308 = vset.pattern.permute.xlu0 0
      %4309 = vperm.xlu0 %4308, %v4175
      %v4310 = vpop.permute.xlu0 %4309
      %vm4311 = vcmp.eq.s32.totalorder %v4178, 1
      %vm4312 = vcmp.eq.s32.totalorder %v4181, 1
      %vm4313 = vcmp.eq.s32.totalorder %v4184, 1
      %vm4314 = vcmp.eq.s32.totalorder %v4187, 1
      %vm4315 = vcmp.eq.s32.totalorder %v4190, 1
      %vm4316 = vcmp.eq.s32.totalorder %v4193, 1
      %vm4317 = vcmp.eq.s32.totalorder %v4196, 1
      %vm4318 = vcmp.eq.s32.totalorder %v4199, 1
      %vm4319 = vcmp.eq.s32.totalorder %v4202, 1
      %vm4320 = vcmp.eq.s32.totalorder %v4205, 1
      %vm4321 = vcmp.eq.s32.totalorder %v4208, 1
      %vm4322 = vcmp.eq.s32.totalorder %v4211, 1
      %vm4323 = vcmp.eq.s32.totalorder %v4214, 1
      %vm4324 = vcmp.eq.s32.totalorder %v4217, 1
      %vm4325 = vcmp.eq.s32.totalorder %v4220, 1
      %vm4326 = vcmp.eq.s32.totalorder %v4223, 1
      %vm4327 = vcmp.eq.s32.totalorder %v4226, 1
      %vm4328 = vcmp.eq.s32.totalorder %v4229, 1
      %vm4329 = vcmp.eq.s32.totalorder %v4232, 1
      %vm4330 = vcmp.eq.s32.totalorder %v4235, 1
      %vm4331 = vcmp.eq.s32.totalorder %v4238, 1
      %vm4332 = vcmp.eq.s32.totalorder %v4241, 1
      %vm4333 = vcmp.eq.s32.totalorder %v4244, 1
      %vm4334 = vcmp.eq.s32.totalorder %v4247, 1
      %vm4335 = vcmp.eq.s32.totalorder %v4250, 1
      %vm4336 = vcmp.eq.s32.totalorder %v4253, 1
      %vm4337 = vcmp.eq.s32.totalorder %v4256, 1
      %vm4338 = vcmp.eq.s32.totalorder %v4259, 1
      %vm4339 = vcmp.eq.s32.totalorder %v4262, 1
      %vm4340 = vcmp.eq.s32.totalorder %v4265, 1
      %vm4341 = vcmp.eq.s32.totalorder %v4268, 1
      %vm4342 = vcmp.eq.s32.totalorder %v4271, 1
      %vm4343 = vcmp.eq.s32.totalorder %v4274, 1
      %vm4344 = vcmp.eq.s32.totalorder %v4277, 1
      %vm4345 = vcmp.eq.s32.totalorder %v4280, 1
      %vm4346 = vcmp.eq.s32.totalorder %v4283, 1
      %vm4347 = vcmp.eq.s32.totalorder %v4286, 1
      %vm4348 = vcmp.eq.s32.totalorder %v4289, 1
      %vm4349 = vcmp.eq.s32.totalorder %v4292, 1
      %vm4350 = vcmp.eq.s32.totalorder %v4295, 1
      %vm4351 = vcmp.eq.s32.totalorder %v4298, 1
      %vm4352 = vcmp.eq.s32.totalorder %v4301, 1
      %vm4353 = vcmp.eq.s32.totalorder %v4304, 1
      %vm4354 = vcmp.eq.s32.totalorder %v4307, 1
      %vm4355 = vcmp.eq.s32.totalorder %v4310, 1
      %v4356 = vsel %vm4311, %v3951, 0.0
      %v4357 = vsel %vm4312, %v3952, 0.0
      %v4358 = vsel %vm4313, %v3953, 0.0
      %v4359 = vsel %vm4314, %v3954, 0.0
      %v4360 = vsel %vm4315, %v3955, 0.0
      %v4361 = vsel %vm4316, %v3956, 0.0
      %v4362 = vsel %vm4317, %v3957, 0.0
      %v4363 = vsel %vm4318, %v3958, 0.0
      %v4364 = vsel %vm4319, %v3959, 0.0
      %v4365 = vsel %vm4320, %v3960, 0.0
      %v4366 = vsel %vm4321, %v3961, 0.0
      %v4367 = vsel %vm4322, %v3962, 0.0
      %v4368 = vsel %vm4323, %v3963, 0.0
      %v4369 = vsel %vm4324, %v3964, 0.0
      %v4370 = vsel %vm4325, %v3965, 0.0
      %v4371 = vsel %vm4326, %v3966, 0.0
      %v4372 = vsel %vm4327, %v3967, 0.0
      %v4373 = vsel %vm4328, %v3968, 0.0
      %v4374 = vsel %vm4329, %v3969, 0.0
      %v4375 = vsel %vm4330, %v3970, 0.0
      %v4376 = vsel %vm4331, %v3971, 0.0
      %v4377 = vsel %vm4332, %v3972, 0.0
      %v4378 = vsel %vm4333, %v3973, 0.0
      %v4379 = vsel %vm4334, %v3974, 0.0
      %v4380 = vsel %vm4335, %v3975, 0.0
      %v4381 = vsel %vm4336, %v3976, 0.0
      %v4382 = vsel %vm4337, %v3977, 0.0
      %v4383 = vsel %vm4338, %v3978, 0.0
      %v4384 = vsel %vm4339, %v3979, 0.0
      %v4385 = vsel %vm4340, %v3980, 0.0
      %v4386 = vsel %vm4341, %v3981, 0.0
      %v4387 = vsel %vm4342, %v3982, 0.0
      %v4388 = vsel %vm4343, %v3983, 0.0
      %v4389 = vsel %vm4344, %v3984, 0.0
      %v4390 = vsel %vm4345, %v3985, 0.0
      %v4391 = vsel %vm4346, %v3986, 0.0
      %v4392 = vsel %vm4347, %v3987, 0.0
      %v4393 = vsel %vm4348, %v3988, 0.0
      %v4394 = vsel %vm4349, %v3989, 0.0
      %v4395 = vsel %vm4350, %v3990, 0.0
      %v4396 = vsel %vm4351, %v3991, 0.0
      %v4397 = vsel %vm4352, %v3992, 0.0
      %v4398 = vsel %vm4353, %v3993, 0.0
      %v4399 = vsel %vm4354, %v3994, 0.0
      %v4400 = vsel %vm4355, %v3995, 0.0
      %4401 = vset.pattern.permute.xlu0 1
      %4402 = vperm.xlu0 %4401, %v4131
      %v4403 = vpop.permute.xlu0 %4402
      %4404 = vset.pattern.permute.xlu0 1
      %4405 = vperm.xlu0 %4404, %v4132
      %v4406 = vpop.permute.xlu0 %4405
      %4407 = vset.pattern.permute.xlu0 1
      %4408 = vperm.xlu0 %4407, %v4133
      %v4409 = vpop.permute.xlu0 %4408
      %4410 = vset.pattern.permute.xlu0 1
      %4411 = vperm.xlu0 %4410, %v4134
      %v4412 = vpop.permute.xlu0 %4411
      %4413 = vset.pattern.permute.xlu0 1
      %4414 = vperm.xlu0 %4413, %v4135
      %v4415 = vpop.permute.xlu0 %4414
      %4416 = vset.pattern.permute.xlu0 1
      %4417 = vperm.xlu0 %4416, %v4136
      %v4418 = vpop.permute.xlu0 %4417
      %4419 = vset.pattern.permute.xlu0 1
      %4420 = vperm.xlu0 %4419, %v4137
      %v4421 = vpop.permute.xlu0 %4420
      %4422 = vset.pattern.permute.xlu0 1
      %4423 = vperm.xlu0 %4422, %v4138
      %v4424 = vpop.permute.xlu0 %4423
      %4425 = vset.pattern.permute.xlu0 1
      %4426 = vperm.xlu0 %4425, %v4139
      %v4427 = vpop.permute.xlu0 %4426
      %4428 = vset.pattern.permute.xlu0 1
      %4429 = vperm.xlu0 %4428, %v4140
      %v4430 = vpop.permute.xlu0 %4429
      %4431 = vset.pattern.permute.xlu0 1
      %4432 = vperm.xlu0 %4431, %v4141
      %v4433 = vpop.permute.xlu0 %4432
      %4434 = vset.pattern.permute.xlu0 1
      %4435 = vperm.xlu0 %4434, %v4142
      %v4436 = vpop.permute.xlu0 %4435
      %4437 = vset.pattern.permute.xlu0 1
      %4438 = vperm.xlu0 %4437, %v4143
      %v4439 = vpop.permute.xlu0 %4438
      %4440 = vset.pattern.permute.xlu0 1
      %4441 = vperm.xlu0 %4440, %v4144
      %v4442 = vpop.permute.xlu0 %4441
      %4443 = vset.pattern.permute.xlu0 1
      %4444 = vperm.xlu0 %4443, %v4145
      %v4445 = vpop.permute.xlu0 %4444
      %4446 = vset.pattern.permute.xlu0 1
      %4447 = vperm.xlu0 %4446, %v4146
      %v4448 = vpop.permute.xlu0 %4447
      %4449 = vset.pattern.permute.xlu0 1
      %4450 = vperm.xlu0 %4449, %v4147
      %v4451 = vpop.permute.xlu0 %4450
      %4452 = vset.pattern.permute.xlu0 1
      %4453 = vperm.xlu0 %4452, %v4148
      %v4454 = vpop.permute.xlu0 %4453
      %4455 = vset.pattern.permute.xlu0 1
      %4456 = vperm.xlu0 %4455, %v4149
      %v4457 = vpop.permute.xlu0 %4456
      %4458 = vset.pattern.permute.xlu0 1
      %4459 = vperm.xlu0 %4458, %v4150
      %v4460 = vpop.permute.xlu0 %4459
      %4461 = vset.pattern.permute.xlu0 1
      %4462 = vperm.xlu0 %4461, %v4151
      %v4463 = vpop.permute.xlu0 %4462
      %4464 = vset.pattern.permute.xlu0 1
      %4465 = vperm.xlu0 %4464, %v4152
      %v4466 = vpop.permute.xlu0 %4465
      %4467 = vset.pattern.permute.xlu0 1
      %4468 = vperm.xlu0 %4467, %v4153
      %v4469 = vpop.permute.xlu0 %4468
      %4470 = vset.pattern.permute.xlu0 1
      %4471 = vperm.xlu0 %4470, %v4154
      %v4472 = vpop.permute.xlu0 %4471
      %4473 = vset.pattern.permute.xlu0 1
      %4474 = vperm.xlu0 %4473, %v4155
      %v4475 = vpop.permute.xlu0 %4474
      %4476 = vset.pattern.permute.xlu0 1
      %4477 = vperm.xlu0 %4476, %v4156
      %v4478 = vpop.permute.xlu0 %4477
      %4479 = vset.pattern.permute.xlu0 1
      %4480 = vperm.xlu0 %4479, %v4157
      %v4481 = vpop.permute.xlu0 %4480
      %4482 = vset.pattern.permute.xlu0 1
      %4483 = vperm.xlu0 %4482, %v4158
      %v4484 = vpop.permute.xlu0 %4483
      %4485 = vset.pattern.permute.xlu0 1
      %4486 = vperm.xlu0 %4485, %v4159
      %v4487 = vpop.permute.xlu0 %4486
      %4488 = vset.pattern.permute.xlu0 1
      %4489 = vperm.xlu0 %4488, %v4160
      %v4490 = vpop.permute.xlu0 %4489
      %4491 = vset.pattern.permute.xlu0 1
      %4492 = vperm.xlu0 %4491, %v4161
      %v4493 = vpop.permute.xlu0 %4492
      %4494 = vset.pattern.permute.xlu0 1
      %4495 = vperm.xlu0 %4494, %v4162
      %v4496 = vpop.permute.xlu0 %4495
      %4497 = vset.pattern.permute.xlu0 1
      %4498 = vperm.xlu0 %4497, %v4163
      %v4499 = vpop.permute.xlu0 %4498
      %4500 = vset.pattern.permute.xlu0 1
      %4501 = vperm.xlu0 %4500, %v4164
      %v4502 = vpop.permute.xlu0 %4501
      %4503 = vset.pattern.permute.xlu0 1
      %4504 = vperm.xlu0 %4503, %v4165
      %v4505 = vpop.permute.xlu0 %4504
      %4506 = vset.pattern.permute.xlu0 1
      %4507 = vperm.xlu0 %4506, %v4166
      %v4508 = vpop.permute.xlu0 %4507
      %4509 = vset.pattern.permute.xlu0 1
      %4510 = vperm.xlu0 %4509, %v4167
      %v4511 = vpop.permute.xlu0 %4510
      %4512 = vset.pattern.permute.xlu0 1
      %4513 = vperm.xlu0 %4512, %v4168
      %v4514 = vpop.permute.xlu0 %4513
      %4515 = vset.pattern.permute.xlu0 1
      %4516 = vperm.xlu0 %4515, %v4169
      %v4517 = vpop.permute.xlu0 %4516
      %4518 = vset.pattern.permute.xlu0 1
      %4519 = vperm.xlu0 %4518, %v4170
      %v4520 = vpop.permute.xlu0 %4519
      %4521 = vset.pattern.permute.xlu0 1
      %4522 = vperm.xlu0 %4521, %v4171
      %v4523 = vpop.permute.xlu0 %4522
      %4524 = vset.pattern.permute.xlu0 1
      %4525 = vperm.xlu0 %4524, %v4172
      %v4526 = vpop.permute.xlu0 %4525
      %4527 = vset.pattern.permute.xlu0 1
      %4528 = vperm.xlu0 %4527, %v4173
      %v4529 = vpop.permute.xlu0 %4528
      %4530 = vset.pattern.permute.xlu0 1
      %4531 = vperm.xlu0 %4530, %v4174
      %v4532 = vpop.permute.xlu0 %4531
      %4533 = vset.pattern.permute.xlu0 1
      %4534 = vperm.xlu0 %4533, %v4175
      %v4535 = vpop.permute.xlu0 %4534
      %vm4536 = vcmp.eq.s32.totalorder %v4403, 1
      %vm4537 = vcmp.eq.s32.totalorder %v4406, 1
      %vm4538 = vcmp.eq.s32.totalorder %v4409, 1
      %vm4539 = vcmp.eq.s32.totalorder %v4412, 1
      %vm4540 = vcmp.eq.s32.totalorder %v4415, 1
      %vm4541 = vcmp.eq.s32.totalorder %v4418, 1
      %vm4542 = vcmp.eq.s32.totalorder %v4421, 1
      %vm4543 = vcmp.eq.s32.totalorder %v4424, 1
      %vm4544 = vcmp.eq.s32.totalorder %v4427, 1
      %vm4545 = vcmp.eq.s32.totalorder %v4430, 1
      %vm4546 = vcmp.eq.s32.totalorder %v4433, 1
      %vm4547 = vcmp.eq.s32.totalorder %v4436, 1
      %vm4548 = vcmp.eq.s32.totalorder %v4439, 1
      %vm4549 = vcmp.eq.s32.totalorder %v4442, 1
      %vm4550 = vcmp.eq.s32.totalorder %v4445, 1
      %vm4551 = vcmp.eq.s32.totalorder %v4448, 1
      %vm4552 = vcmp.eq.s32.totalorder %v4451, 1
      %vm4553 = vcmp.eq.s32.totalorder %v4454, 1
      %vm4554 = vcmp.eq.s32.totalorder %v4457, 1
      %vm4555 = vcmp.eq.s32.totalorder %v4460, 1
      %vm4556 = vcmp.eq.s32.totalorder %v4463, 1
      %vm4557 = vcmp.eq.s32.totalorder %v4466, 1
      %vm4558 = vcmp.eq.s32.totalorder %v4469, 1
      %vm4559 = vcmp.eq.s32.totalorder %v4472, 1
      %vm4560 = vcmp.eq.s32.totalorder %v4475, 1
      %vm4561 = vcmp.eq.s32.totalorder %v4478, 1
      %vm4562 = vcmp.eq.s32.totalorder %v4481, 1
      %vm4563 = vcmp.eq.s32.totalorder %v4484, 1
      %vm4564 = vcmp.eq.s32.totalorder %v4487, 1
      %vm4565 = vcmp.eq.s32.totalorder %v4490, 1
      %vm4566 = vcmp.eq.s32.totalorder %v4493, 1
      %vm4567 = vcmp.eq.s32.totalorder %v4496, 1
      %vm4568 = vcmp.eq.s32.totalorder %v4499, 1
      %vm4569 = vcmp.eq.s32.totalorder %v4502, 1
      %vm4570 = vcmp.eq.s32.totalorder %v4505, 1
      %vm4571 = vcmp.eq.s32.totalorder %v4508, 1
      %vm4572 = vcmp.eq.s32.totalorder %v4511, 1
      %vm4573 = vcmp.eq.s32.totalorder %v4514, 1
      %vm4574 = vcmp.eq.s32.totalorder %v4517, 1
      %vm4575 = vcmp.eq.s32.totalorder %v4520, 1
      %vm4576 = vcmp.eq.s32.totalorder %v4523, 1
      %vm4577 = vcmp.eq.s32.totalorder %v4526, 1
      %vm4578 = vcmp.eq.s32.totalorder %v4529, 1
      %vm4579 = vcmp.eq.s32.totalorder %v4532, 1
      %vm4580 = vcmp.eq.s32.totalorder %v4535, 1
      %v4581 = vsel %vm4536, %v3996, 0.0
      %v4582 = vsel %vm4537, %v3997, 0.0
      %v4583 = vsel %vm4538, %v3998, 0.0
      %v4584 = vsel %vm4539, %v3999, 0.0
      %v4585 = vsel %vm4540, %v4000, 0.0
      %v4586 = vsel %vm4541, %v4001, 0.0
      %v4587 = vsel %vm4542, %v4002, 0.0
      %v4588 = vsel %vm4543, %v4003, 0.0
      %v4589 = vsel %vm4544, %v4004, 0.0
      %v4590 = vsel %vm4545, %v4005, 0.0
      %v4591 = vsel %vm4546, %v4006, 0.0
      %v4592 = vsel %vm4547, %v4007, 0.0
      %v4593 = vsel %vm4548, %v4008, 0.0
      %v4594 = vsel %vm4549, %v4009, 0.0
      %v4595 = vsel %vm4550, %v4010, 0.0
      %v4596 = vsel %vm4551, %v4011, 0.0
      %v4597 = vsel %vm4552, %v4012, 0.0
      %v4598 = vsel %vm4553, %v4013, 0.0
      %v4599 = vsel %vm4554, %v4014, 0.0
      %v4600 = vsel %vm4555, %v4015, 0.0
      %v4601 = vsel %vm4556, %v4016, 0.0
      %v4602 = vsel %vm4557, %v4017, 0.0
      %v4603 = vsel %vm4558, %v4018, 0.0
      %v4604 = vsel %vm4559, %v4019, 0.0
      %v4605 = vsel %vm4560, %v4020, 0.0
      %v4606 = vsel %vm4561, %v4021, 0.0
      %v4607 = vsel %vm4562, %v4022, 0.0
      %v4608 = vsel %vm4563, %v4023, 0.0
      %v4609 = vsel %vm4564, %v4024, 0.0
      %v4610 = vsel %vm4565, %v4025, 0.0
      %v4611 = vsel %vm4566, %v4026, 0.0
      %v4612 = vsel %vm4567, %v4027, 0.0
      %v4613 = vsel %vm4568, %v4028, 0.0
      %v4614 = vsel %vm4569, %v4029, 0.0
      %v4615 = vsel %vm4570, %v4030, 0.0
      %v4616 = vsel %vm4571, %v4031, 0.0
      %v4617 = vsel %vm4572, %v4032, 0.0
      %v4618 = vsel %vm4573, %v4033, 0.0
      %v4619 = vsel %vm4574, %v4034, 0.0
      %v4620 = vsel %vm4575, %v4035, 0.0
      %v4621 = vsel %vm4576, %v4036, 0.0
      %v4622 = vsel %vm4577, %v4037, 0.0
      %v4623 = vsel %vm4578, %v4038, 0.0
      %v4624 = vsel %vm4579, %v4039, 0.0
      %v4625 = vsel %vm4580, %v4040, 0.0
      %4671 = vrot.lane.b32.xlu0 %v3906, 32
      %v4672 = vpop.permute.xlu0 %4671
      %4673 = vrot.lane.b32.xlu0 %v3907, 32
      %v4674 = vpop.permute.xlu0 %4673
      %4675 = vrot.lane.b32.xlu0 %v3908, 32
      %v4676 = vpop.permute.xlu0 %4675
      %4677 = vrot.lane.b32.xlu0 %v3909, 32
      %v4678 = vpop.permute.xlu0 %4677
      %4679 = vrot.lane.b32.xlu0 %v3910, 32
      %v4680 = vpop.permute.xlu0 %4679
      %4681 = vrot.lane.b32.xlu0 %v3911, 32
      %v4682 = vpop.permute.xlu0 %4681
      %4683 = vrot.lane.b32.xlu0 %v3912, 32
      %v4684 = vpop.permute.xlu0 %4683
      %4685 = vrot.lane.b32.xlu0 %v3913, 32
      %v4686 = vpop.permute.xlu0 %4685
      %4687 = vrot.lane.b32.xlu0 %v3914, 32
      %v4688 = vpop.permute.xlu0 %4687
      %4689 = vrot.lane.b32.xlu0 %v3915, 32
      %v4690 = vpop.permute.xlu0 %4689
      %4691 = vrot.lane.b32.xlu0 %v3916, 32
      %v4692 = vpop.permute.xlu0 %4691
      %4693 = vrot.lane.b32.xlu0 %v3917, 32
      %v4694 = vpop.permute.xlu0 %4693
      %4695 = vrot.lane.b32.xlu0 %v3918, 32
      %v4696 = vpop.permute.xlu0 %4695
      %4697 = vrot.lane.b32.xlu0 %v3919, 32
      %v4698 = vpop.permute.xlu0 %4697
      %4699 = vrot.lane.b32.xlu0 %v3920, 32
      %v4700 = vpop.permute.xlu0 %4699
      %4701 = vrot.lane.b32.xlu0 %v3921, 32
      %v4702 = vpop.permute.xlu0 %4701
      %4703 = vrot.lane.b32.xlu0 %v3922, 32
      %v4704 = vpop.permute.xlu0 %4703
      %4705 = vrot.lane.b32.xlu0 %v3923, 32
      %v4706 = vpop.permute.xlu0 %4705
      %4707 = vrot.lane.b32.xlu0 %v3924, 32
      %v4708 = vpop.permute.xlu0 %4707
      %4709 = vrot.lane.b32.xlu0 %v3925, 32
      %v4710 = vpop.permute.xlu0 %4709
      %4711 = vrot.lane.b32.xlu0 %v3926, 32
      %v4712 = vpop.permute.xlu0 %4711
      %4713 = vrot.lane.b32.xlu0 %v3927, 32
      %v4714 = vpop.permute.xlu0 %4713
      %4715 = vrot.lane.b32.xlu0 %v3928, 32
      %v4716 = vpop.permute.xlu0 %4715
      %4717 = vrot.lane.b32.xlu0 %v3929, 32
      %v4718 = vpop.permute.xlu0 %4717
      %4719 = vrot.lane.b32.xlu0 %v3930, 32
      %v4720 = vpop.permute.xlu0 %4719
      %4721 = vrot.lane.b32.xlu0 %v3931, 32
      %v4722 = vpop.permute.xlu0 %4721
      %4723 = vrot.lane.b32.xlu0 %v3932, 32
      %v4724 = vpop.permute.xlu0 %4723
      %4725 = vrot.lane.b32.xlu0 %v3933, 32
      %v4726 = vpop.permute.xlu0 %4725
      %4727 = vrot.lane.b32.xlu0 %v3934, 32
      %v4728 = vpop.permute.xlu0 %4727
      %4729 = vrot.lane.b32.xlu0 %v3935, 32
      %v4730 = vpop.permute.xlu0 %4729
      %4731 = vrot.lane.b32.xlu0 %v3936, 32
      %v4732 = vpop.permute.xlu0 %4731
      %4733 = vrot.lane.b32.xlu0 %v3937, 32
      %v4734 = vpop.permute.xlu0 %4733
      %4735 = vrot.lane.b32.xlu0 %v3938, 32
      %v4736 = vpop.permute.xlu0 %4735
      %4737 = vrot.lane.b32.xlu0 %v3939, 32
      %v4738 = vpop.permute.xlu0 %4737
      %4739 = vrot.lane.b32.xlu0 %v3940, 32
      %v4740 = vpop.permute.xlu0 %4739
      %4741 = vrot.lane.b32.xlu0 %v3941, 32
      %v4742 = vpop.permute.xlu0 %4741
      %4743 = vrot.lane.b32.xlu0 %v3942, 32
      %v4744 = vpop.permute.xlu0 %4743
      %4745 = vrot.lane.b32.xlu0 %v3943, 32
      %v4746 = vpop.permute.xlu0 %4745
      %4747 = vrot.lane.b32.xlu0 %v3944, 32
      %v4748 = vpop.permute.xlu0 %4747
      %4749 = vrot.lane.b32.xlu0 %v3945, 32
      %v4750 = vpop.permute.xlu0 %4749
      %4751 = vrot.lane.b32.xlu0 %v3946, 32
      %v4752 = vpop.permute.xlu0 %4751
      %4753 = vrot.lane.b32.xlu0 %v3947, 32
      %v4754 = vpop.permute.xlu0 %4753
      %4755 = vrot.lane.b32.xlu0 %v3948, 32
      %v4756 = vpop.permute.xlu0 %4755
      %4757 = vrot.lane.b32.xlu0 %v3949, 32
      %v4758 = vpop.permute.xlu0 %4757
      %4759 = vrot.lane.b32.xlu0 %v3950, 32
      %v4760 = vpop.permute.xlu0 %4759
      %4851 = vrot.lane.b32.xlu0 %v4581, 64
      %v4852 = vpop.permute.xlu0 %4851
      %4853 = vrot.lane.b32.xlu0 %v4582, 64
      %v4854 = vpop.permute.xlu0 %4853
      %4855 = vrot.lane.b32.xlu0 %v4583, 64
      %v4856 = vpop.permute.xlu0 %4855
      %4857 = vrot.lane.b32.xlu0 %v4584, 64
      %v4858 = vpop.permute.xlu0 %4857
      %4859 = vrot.lane.b32.xlu0 %v4585, 64
      %v4860 = vpop.permute.xlu0 %4859
      %4861 = vrot.lane.b32.xlu0 %v4586, 64
      %v4862 = vpop.permute.xlu0 %4861
      %4863 = vrot.lane.b32.xlu0 %v4587, 64
      %v4864 = vpop.permute.xlu0 %4863
      %4865 = vrot.lane.b32.xlu0 %v4588, 64
      %v4866 = vpop.permute.xlu0 %4865
      %4867 = vrot.lane.b32.xlu0 %v4589, 64
      %v4868 = vpop.permute.xlu0 %4867
      %4869 = vrot.lane.b32.xlu0 %v4590, 64
      %v4870 = vpop.permute.xlu0 %4869
      %4871 = vrot.lane.b32.xlu0 %v4591, 64
      %v4872 = vpop.permute.xlu0 %4871
      %4873 = vrot.lane.b32.xlu0 %v4592, 64
      %v4874 = vpop.permute.xlu0 %4873
      %4875 = vrot.lane.b32.xlu0 %v4593, 64
      %v4876 = vpop.permute.xlu0 %4875
      %4877 = vrot.lane.b32.xlu0 %v4594, 64
      %v4878 = vpop.permute.xlu0 %4877
      %4879 = vrot.lane.b32.xlu0 %v4595, 64
      %v4880 = vpop.permute.xlu0 %4879
      %4881 = vrot.lane.b32.xlu0 %v4596, 64
      %v4882 = vpop.permute.xlu0 %4881
      %4883 = vrot.lane.b32.xlu0 %v4597, 64
      %v4884 = vpop.permute.xlu0 %4883
      %4885 = vrot.lane.b32.xlu0 %v4598, 64
      %v4886 = vpop.permute.xlu0 %4885
      %4887 = vrot.lane.b32.xlu0 %v4599, 64
      %v4888 = vpop.permute.xlu0 %4887
      %4889 = vrot.lane.b32.xlu0 %v4600, 64
      %v4890 = vpop.permute.xlu0 %4889
      %4891 = vrot.lane.b32.xlu0 %v4601, 64
      %v4892 = vpop.permute.xlu0 %4891
      %4893 = vrot.lane.b32.xlu0 %v4602, 64
      %v4894 = vpop.permute.xlu0 %4893
      %4895 = vrot.lane.b32.xlu0 %v4603, 64
      %v4896 = vpop.permute.xlu0 %4895
      %4897 = vrot.lane.b32.xlu0 %v4604, 64
      %v4898 = vpop.permute.xlu0 %4897
      %4899 = vrot.lane.b32.xlu0 %v4605, 64
      %v4900 = vpop.permute.xlu0 %4899
      %4901 = vrot.lane.b32.xlu0 %v4606, 64
      %v4902 = vpop.permute.xlu0 %4901
      %4903 = vrot.lane.b32.xlu0 %v4607, 64
      %v4904 = vpop.permute.xlu0 %4903
      %4905 = vrot.lane.b32.xlu0 %v4608, 64
      %v4906 = vpop.permute.xlu0 %4905
      %4907 = vrot.lane.b32.xlu0 %v4609, 64
      %v4908 = vpop.permute.xlu0 %4907
      %4909 = vrot.lane.b32.xlu0 %v4610, 64
      %v4910 = vpop.permute.xlu0 %4909
      %4911 = vrot.lane.b32.xlu0 %v4611, 64
      %v4912 = vpop.permute.xlu0 %4911
      %4913 = vrot.lane.b32.xlu0 %v4612, 64
      %v4914 = vpop.permute.xlu0 %4913
      %4915 = vrot.lane.b32.xlu0 %v4613, 64
      %v4916 = vpop.permute.xlu0 %4915
      %4917 = vrot.lane.b32.xlu0 %v4614, 64
      %v4918 = vpop.permute.xlu0 %4917
      %4919 = vrot.lane.b32.xlu0 %v4615, 64
      %v4920 = vpop.permute.xlu0 %4919
      %4921 = vrot.lane.b32.xlu0 %v4616, 64
      %v4922 = vpop.permute.xlu0 %4921
      %4923 = vrot.lane.b32.xlu0 %v4617, 64
      %v4924 = vpop.permute.xlu0 %4923
      %4925 = vrot.lane.b32.xlu0 %v4618, 64
      %v4926 = vpop.permute.xlu0 %4925
      %4927 = vrot.lane.b32.xlu0 %v4619, 64
      %v4928 = vpop.permute.xlu0 %4927
      %4929 = vrot.lane.b32.xlu0 %v4620, 64
      %v4930 = vpop.permute.xlu0 %4929
      %4931 = vrot.lane.b32.xlu0 %v4621, 64
      %v4932 = vpop.permute.xlu0 %4931
      %4933 = vrot.lane.b32.xlu0 %v4622, 64
      %v4934 = vpop.permute.xlu0 %4933
      %4935 = vrot.lane.b32.xlu0 %v4623, 64
      %v4936 = vpop.permute.xlu0 %4935
      %4937 = vrot.lane.b32.xlu0 %v4624, 64
      %v4938 = vpop.permute.xlu0 %4937
      %4939 = vrot.lane.b32.xlu0 %v4625, 64
      %v4940 = vpop.permute.xlu0 %4939
      %v4986 = vsel %vm3543, %v4356, %v4672
      %v4987 = vsel %vm3543, %v4357, %v4674
      %v4988 = vsel %vm3543, %v4358, %v4676
      %v4989 = vsel %vm3543, %v4359, %v4678
      %v4990 = vsel %vm3543, %v4360, %v4680
      %v4991 = vsel %vm3543, %v4361, %v4682
      %v4992 = vsel %vm3543, %v4362, %v4684
      %v4993 = vsel %vm3543, %v4363, %v4686
      %v4994 = vsel %vm3543, %v4364, %v4688
      %v4995 = vsel %vm3543, %v4365, %v4690
      %v4996 = vsel %vm3543, %v4366, %v4692
      %v4997 = vsel %vm3543, %v4367, %v4694
      %v4998 = vsel %vm3543, %v4368, %v4696
      %v4999 = vsel %vm3543, %v4369, %v4698
      %v5000 = vsel %vm3543, %v4370, %v4700
      %v5001 = vsel %vm3543, %v4371, %v4702
      %v5002 = vsel %vm3543, %v4372, %v4704
      %v5003 = vsel %vm3543, %v4373, %v4706
      %v5004 = vsel %vm3543, %v4374, %v4708
      %v5005 = vsel %vm3543, %v4375, %v4710
      %v5006 = vsel %vm3543, %v4376, %v4712
      %v5007 = vsel %vm3543, %v4377, %v4714
      %v5008 = vsel %vm3543, %v4378, %v4716
      %v5009 = vsel %vm3543, %v4379, %v4718
      %v5010 = vsel %vm3543, %v4380, %v4720
      %v5011 = vsel %vm3543, %v4381, %v4722
      %v5012 = vsel %vm3543, %v4382, %v4724
      %v5013 = vsel %vm3543, %v4383, %v4726
      %v5014 = vsel %vm3543, %v4384, %v4728
      %v5015 = vsel %vm3543, %v4385, %v4730
      %v5016 = vsel %vm3543, %v4386, %v4732
      %v5017 = vsel %vm3543, %v4387, %v4734
      %v5018 = vsel %vm3543, %v4388, %v4736
      %v5019 = vsel %vm3543, %v4389, %v4738
      %v5020 = vsel %vm3543, %v4390, %v4740
      %v5021 = vsel %vm3543, %v4391, %v4742
      %v5022 = vsel %vm3543, %v4392, %v4744
      %v5023 = vsel %vm3543, %v4393, %v4746
      %v5024 = vsel %vm3543, %v4394, %v4748
      %v5025 = vsel %vm3543, %v4395, %v4750
      %v5026 = vsel %vm3543, %v4396, %v4752
      %v5027 = vsel %vm3543, %v4397, %v4754
      %v5028 = vsel %vm3543, %v4398, %v4756
      %v5029 = vsel %vm3543, %v4399, %v4758
      %v5030 = vsel %vm3543, %v4400, %v4760
      %vm5031 = vcmask 523264
      %v5032 = vsel %vm5031, %v4986, %v4852
      %v5033 = vsel %vm5031, %v4987, %v4854
      %v5034 = vsel %vm5031, %v4988, %v4856
      %v5035 = vsel %vm5031, %v4989, %v4858
      %v5036 = vsel %vm5031, %v4990, %v4860
      %v5037 = vsel %vm5031, %v4991, %v4862
      %v5038 = vsel %vm5031, %v4992, %v4864
      %v5039 = vsel %vm5031, %v4993, %v4866
      %v5040 = vsel %vm5031, %v4994, %v4868
      %v5041 = vsel %vm5031, %v4995, %v4870
      %v5042 = vsel %vm5031, %v4996, %v4872
      %v5043 = vsel %vm5031, %v4997, %v4874
      %v5044 = vsel %vm5031, %v4998, %v4876
      %v5045 = vsel %vm5031, %v4999, %v4878
      %v5046 = vsel %vm5031, %v5000, %v4880
      %v5047 = vsel %vm5031, %v5001, %v4882
      %v5048 = vsel %vm5031, %v5002, %v4884
      %v5049 = vsel %vm5031, %v5003, %v4886
      %v5050 = vsel %vm5031, %v5004, %v4888
      %v5051 = vsel %vm5031, %v5005, %v4890
      %v5052 = vsel %vm5031, %v5006, %v4892
      %v5053 = vsel %vm5031, %v5007, %v4894
      %v5054 = vsel %vm5031, %v5008, %v4896
      %v5055 = vsel %vm5031, %v5009, %v4898
      %v5056 = vsel %vm5031, %v5010, %v4900
      %v5057 = vsel %vm5031, %v5011, %v4902
      %v5058 = vsel %vm5031, %v5012, %v4904
      %v5059 = vsel %vm5031, %v5013, %v4906
      %v5060 = vsel %vm5031, %v5014, %v4908
      %v5061 = vsel %vm5031, %v5015, %v4910
      %v5062 = vsel %vm5031, %v5016, %v4912
      %v5063 = vsel %vm5031, %v5017, %v4914
      %v5064 = vsel %vm5031, %v5018, %v4916
      %v5065 = vsel %vm5031, %v5019, %v4918
      %v5066 = vsel %vm5031, %v5020, %v4920
      %v5067 = vsel %vm5031, %v5021, %v4922
      %v5068 = vsel %vm5031, %v5022, %v4924
      %v5069 = vsel %vm5031, %v5023, %v4926
      %v5070 = vsel %vm5031, %v5024, %v4928
      %v5071 = vsel %vm5031, %v5025, %v4930
      %v5072 = vsel %vm5031, %v5026, %v4932
      %v5073 = vsel %vm5031, %v5027, %v4934
      %v5074 = vsel %vm5031, %v5028, %v4936
      %v5075 = vsel %vm5031, %v5029, %v4938
      %v5076 = vsel %vm5031, %v5030, %v4940
      %v5077 = vld [vmem:[%s6] sm:$0xff]
      %v5078 = vld [vmem:[%s6 + $0x8] sm:$0xff]
      %v5079 = vld [vmem:[%s6 + $0x10] sm:$0xff]
      %v5080 = vld [vmem:[%s6 + $0x18] sm:$0xff]
      %v5081 = vld [vmem:[%s6 + $0x20] sm:$0xff]
      %v5082 = vld [vmem:[%s6 + $0x28] sm:$0xff]
      %v5083 = vld [vmem:[%s6 + $0x30] sm:$0xff]
      %v5084 = vld [vmem:[%s6 + $0x38] sm:$0xff]
      %v5085 = vld [vmem:[%s6 + $0x40] sm:$0xff]
      %v5086 = vld [vmem:[%s6 + $0x48] sm:$0xff]
      %v5087 = vld [vmem:[%s6 + $0x50] sm:$0xff]
      %v5088 = vld [vmem:[%s6 + $0x58] sm:$0xff]
      %v5089 = vld [vmem:[%s7] sm:$0x1]
      %v5091 = vperm.slane %v5089, 0
      %vm5093 = vcmask 785408
      %v5095 = vsel %vm5093, %v5032, 0
      %v5098 = vsel %vm5093, %v5033, 0
      %v5101 = vsel %vm5093, %v5034, 0
      %v5104 = vsel %vm5093, %v5035, 0
      %v5107 = vsel %vm5093, %v5036, 0
      %v5110 = vsel %vm5093, %v5037, 0
      %v5113 = vsel %vm5093, %v5038, 0
      %v5116 = vsel %vm5093, %v5039, 0
      %v5119 = vsel %vm5093, %v5040, 0
      %v5122 = vsel %vm5093, %v5041, 0
      %v5125 = vsel %vm5093, %v5042, 0
      %v5128 = vsel %vm5093, %v5043, 0
      %v5131 = vsel %vm5093, %v5044, 0
      %v5134 = vsel %vm5093, %v5045, 0
      %v5137 = vsel %vm5093, %v5046, 0
      %v5140 = vsel %vm5093, %v5047, 0
      %v5143 = vsel %vm5093, %v5048, 0
      %v5146 = vsel %vm5093, %v5049, 0
      %v5149 = vsel %vm5093, %v5050, 0
      %v5152 = vsel %vm5093, %v5051, 0
      %v5155 = vsel %vm5093, %v5052, 0
      %v5158 = vsel %vm5093, %v5053, 0
      %v5161 = vsel %vm5093, %v5054, 0
      %v5164 = vsel %vm5093, %v5055, 0
      %v5167 = vsel %vm5093, %v5056, 0
      %v5170 = vsel %vm5093, %v5057, 0
      %v5173 = vsel %vm5093, %v5058, 0
      %v5176 = vsel %vm5093, %v5059, 0
      %v5179 = vsel %vm5093, %v5060, 0
      %v5182 = vsel %vm5093, %v5061, 0
      %v5185 = vsel %vm5093, %v5062, 0
      %v5188 = vsel %vm5093, %v5063, 0
      %v5191 = vsel %vm5093, %v5064, 0
      %v5194 = vsel %vm5093, %v5065, 0
      %v5197 = vsel %vm5093, %v5066, 0
      %v5200 = vsel %vm5093, %v5067, 0
      %v5203 = vsel %vm5093, %v5068, 0
      %v5206 = vsel %vm5093, %v5069, 0
      %v5209 = vsel %vm5093, %v5070, 0
      %v5212 = vsel %vm5093, %v5071, 0
      %v5215 = vsel %vm5093, %v5072, 0
      %v5218 = vsel %vm5093, %v5073, 0
      %v5221 = vsel %vm5093, %v5074, 0
      %v5224 = vsel %vm5093, %v5075, 0
      %v5227 = vsel %vm5093, %v5076, 0
      %5229 = vmatpush.msra.mxu0 0.0
      %5230 = vmatpush.msra.mxu0 0.0
      %5231 = vmatpush.msra.mxu0 0.0
      %5232 = vmatpush.msra.mxu0 0.0
      %5233 = vmatpush.msra.mxu0 %v5088
      %5234 = vmatpush.msra.mxu0 %v5087
      %5235 = vmatpush.msra.mxu0 %v5086
      %5236 = vmatpush.msra.mxu0 %v5085
      %5237 = vmatpush.msra.mxu0 %v5084
      %5238 = vmatpush.msra.mxu0 %v5083
      %5239 = vmatpush.msra.mxu0 %v5082
      %5240 = vmatpush.msra.mxu0 %v5081
      %5241 = vmatpush.msra.mxu0 %v5080
      %5242 = vmatpush.msra.mxu0 %v5079
      %5243 = vmatpush.msra.mxu0 %v5078
      %5244 = vmatpush.msra.mxu0 %v5077
      %5245 = vmatmul.f32.gmra.mxu0 %v5095
      %v5246 = vpop.f32.mrf.mxu0
      %v5247 = vadd.f32 %v5091, %v5246
      %5248 = vmatmul.f32.gmra.mxu0 %v5098
      %v5249 = vpop.f32.mrf.mxu0
      %v5250 = vadd.f32 %v5091, %v5249
      %5251 = vmatmul.f32.gmra.mxu0 %v5101
      %v5252 = vpop.f32.mrf.mxu0
      %v5253 = vadd.f32 %v5091, %v5252
      %5254 = vmatmul.f32.gmra.mxu0 %v5104
      %v5255 = vpop.f32.mrf.mxu0
      %v5256 = vadd.f32 %v5091, %v5255
      %5257 = vmatmul.f32.gmra.mxu0 %v5107
      %v5258 = vpop.f32.mrf.mxu0
      %v5259 = vadd.f32 %v5091, %v5258
      %5260 = vmatmul.f32.gmra.mxu0 %v5110
      %v5261 = vpop.f32.mrf.mxu0
      %v5262 = vadd.f32 %v5091, %v5261
      %5263 = vmatmul.f32.gmra.mxu0 %v5113
      %v5264 = vpop.f32.mrf.mxu0
      %v5265 = vadd.f32 %v5091, %v5264
      %5266 = vmatmul.f32.gmra.mxu0 %v5116
      %v5267 = vpop.f32.mrf.mxu0
      %v5268 = vadd.f32 %v5091, %v5267
      %5269 = vmatmul.f32.gmra.mxu0 %v5119
      %v5270 = vpop.f32.mrf.mxu0
      %v5271 = vadd.f32 %v5091, %v5270
      %5272 = vmatmul.f32.gmra.mxu0 %v5122
      %v5273 = vpop.f32.mrf.mxu0
      %v5274 = vadd.f32 %v5091, %v5273
      %5275 = vmatmul.f32.gmra.mxu0 %v5125
      %v5276 = vpop.f32.mrf.mxu0
      %v5277 = vadd.f32 %v5091, %v5276
      %5278 = vmatmul.f32.gmra.mxu0 %v5128
      %v5279 = vpop.f32.mrf.mxu0
      %v5280 = vadd.f32 %v5091, %v5279
      %5281 = vmatmul.f32.gmra.mxu0 %v5131
      %v5282 = vpop.f32.mrf.mxu0
      %v5283 = vadd.f32 %v5091, %v5282
      %5284 = vmatmul.f32.gmra.mxu0 %v5134
      %v5285 = vpop.f32.mrf.mxu0
      %v5286 = vadd.f32 %v5091, %v5285
      %5287 = vmatmul.f32.gmra.mxu0 %v5137
      %v5288 = vpop.f32.mrf.mxu0
      %v5289 = vadd.f32 %v5091, %v5288
      %5290 = vmatmul.f32.gmra.mxu0 %v5140
      %v5291 = vpop.f32.mrf.mxu0
      %v5292 = vadd.f32 %v5091, %v5291
      %5293 = vmatmul.f32.gmra.mxu0 %v5143
      %v5294 = vpop.f32.mrf.mxu0
      %v5295 = vadd.f32 %v5091, %v5294
      %5296 = vmatmul.f32.gmra.mxu0 %v5146
      %v5297 = vpop.f32.mrf.mxu0
      %v5298 = vadd.f32 %v5091, %v5297
      %5299 = vmatmul.f32.gmra.mxu0 %v5149
      %v5300 = vpop.f32.mrf.mxu0
      %v5301 = vadd.f32 %v5091, %v5300
      %5302 = vmatmul.f32.gmra.mxu0 %v5152
      %v5303 = vpop.f32.mrf.mxu0
      %v5304 = vadd.f32 %v5091, %v5303
      %5305 = vmatmul.f32.gmra.mxu0 %v5155
      %v5306 = vpop.f32.mrf.mxu0
      %v5307 = vadd.f32 %v5091, %v5306
      %5308 = vmatmul.f32.gmra.mxu0 %v5158
      %v5309 = vpop.f32.mrf.mxu0
      %v5310 = vadd.f32 %v5091, %v5309
      %5311 = vmatmul.f32.gmra.mxu0 %v5161
      %v5312 = vpop.f32.mrf.mxu0
      %v5313 = vadd.f32 %v5091, %v5312
      %5314 = vmatmul.f32.gmra.mxu0 %v5164
      %v5315 = vpop.f32.mrf.mxu0
      %v5316 = vadd.f32 %v5091, %v5315
      %5317 = vmatmul.f32.gmra.mxu0 %v5167
      %v5318 = vpop.f32.mrf.mxu0
      %v5319 = vadd.f32 %v5091, %v5318
      %5320 = vmatmul.f32.gmra.mxu0 %v5170
      %v5321 = vpop.f32.mrf.mxu0
      %v5322 = vadd.f32 %v5091, %v5321
      %5323 = vmatmul.f32.gmra.mxu0 %v5173
      %v5324 = vpop.f32.mrf.mxu0
      %v5325 = vadd.f32 %v5091, %v5324
      %5326 = vmatmul.f32.gmra.mxu0 %v5176
      %v5327 = vpop.f32.mrf.mxu0
      %v5328 = vadd.f32 %v5091, %v5327
      %5329 = vmatmul.f32.gmra.mxu0 %v5179
      %v5330 = vpop.f32.mrf.mxu0
      %v5331 = vadd.f32 %v5091, %v5330
      %5332 = vmatmul.f32.gmra.mxu0 %v5182
      %v5333 = vpop.f32.mrf.mxu0
      %v5334 = vadd.f32 %v5091, %v5333
      %5335 = vmatmul.f32.gmra.mxu0 %v5185
      %v5336 = vpop.f32.mrf.mxu0
      %v5337 = vadd.f32 %v5091, %v5336
      %5338 = vmatmul.f32.gmra.mxu0 %v5188
      %v5339 = vpop.f32.mrf.mxu0
      %v5340 = vadd.f32 %v5091, %v5339
      %5341 = vmatmul.f32.gmra.mxu0 %v5191
      %v5342 = vpop.f32.mrf.mxu0
      %v5343 = vadd.f32 %v5091, %v5342
      %5344 = vmatmul.f32.gmra.mxu0 %v5194
      %v5345 = vpop.f32.mrf.mxu0
      %v5346 = vadd.f32 %v5091, %v5345
      %5347 = vmatmul.f32.gmra.mxu0 %v5197
      %v5348 = vpop.f32.mrf.mxu0
      %v5349 = vadd.f32 %v5091, %v5348
      %5350 = vmatmul.f32.gmra.mxu0 %v5200
      %v5351 = vpop.f32.mrf.mxu0
      %v5352 = vadd.f32 %v5091, %v5351
      %5353 = vmatmul.f32.gmra.mxu0 %v5203
      %v5354 = vpop.f32.mrf.mxu0
      %v5355 = vadd.f32 %v5091, %v5354
      %5356 = vmatmul.f32.gmra.mxu0 %v5206
      %v5357 = vpop.f32.mrf.mxu0
      %v5358 = vadd.f32 %v5091, %v5357
      %5359 = vmatmul.f32.gmra.mxu0 %v5209
      %v5360 = vpop.f32.mrf.mxu0
      %v5361 = vadd.f32 %v5091, %v5360
      %5362 = vmatmul.f32.gmra.mxu0 %v5212
      %v5363 = vpop.f32.mrf.mxu0
      %v5364 = vadd.f32 %v5091, %v5363
      %5365 = vmatmul.f32.gmra.mxu0 %v5215
      %v5366 = vpop.f32.mrf.mxu0
      %v5367 = vadd.f32 %v5091, %v5366
      %5368 = vmatmul.f32.gmra.mxu0 %v5218
      %v5369 = vpop.f32.mrf.mxu0
      %v5370 = vadd.f32 %v5091, %v5369
      %5371 = vmatmul.f32.gmra.mxu0 %v5221
      %v5372 = vpop.f32.mrf.mxu0
      %v5373 = vadd.f32 %v5091, %v5372
      %5374 = vmatmul.f32.gmra.mxu0 %v5224
      %v5375 = vpop.f32.mrf.mxu0
      %v5376 = vadd.f32 %v5091, %v5375
      %5377 = vmatmul.f32.gmra.mxu0 %v5227
      %v5378 = vpop.f32.mrf.mxu0
      %v5379 = vadd.f32 %v5091, %v5378
      %5380 = vdwg.mxu0
      %v5381 = vmax.f32 %v5247, 0.0
      %v5382 = vmax.f32 %v5250, 0.0
      %v5383 = vmax.f32 %v5253, 0.0
      %v5384 = vmax.f32 %v5256, 0.0
      %v5385 = vmax.f32 %v5259, 0.0
      %v5386 = vmax.f32 %v5262, 0.0
      %v5387 = vmax.f32 %v5265, 0.0
      %v5388 = vmax.f32 %v5268, 0.0
      %v5389 = vmax.f32 %v5271, 0.0
      %v5390 = vmax.f32 %v5274, 0.0
      %v5391 = vmax.f32 %v5277, 0.0
      %v5392 = vmax.f32 %v5280, 0.0
      %v5393 = vmax.f32 %v5283, 0.0
      %v5394 = vmax.f32 %v5286, 0.0
      %v5395 = vmax.f32 %v5289, 0.0
      %v5396 = vmax.f32 %v5292, 0.0
      %v5397 = vmax.f32 %v5295, 0.0
      %v5398 = vmax.f32 %v5298, 0.0
      %v5399 = vmax.f32 %v5301, 0.0
      %v5400 = vmax.f32 %v5304, 0.0
      %v5401 = vmax.f32 %v5307, 0.0
      %v5402 = vmax.f32 %v5310, 0.0
      %v5403 = vmax.f32 %v5313, 0.0
      %v5404 = vmax.f32 %v5316, 0.0
      %v5405 = vmax.f32 %v5319, 0.0
      %v5406 = vmax.f32 %v5322, 0.0
      %v5407 = vmax.f32 %v5325, 0.0
      %v5408 = vmax.f32 %v5328, 0.0
      %v5409 = vmax.f32 %v5331, 0.0
      %v5410 = vmax.f32 %v5334, 0.0
      %v5411 = vmax.f32 %v5337, 0.0
      %v5412 = vmax.f32 %v5340, 0.0
      %v5413 = vmax.f32 %v5343, 0.0
      %v5414 = vmax.f32 %v5346, 0.0
      %v5415 = vmax.f32 %v5349, 0.0
      %v5416 = vmax.f32 %v5352, 0.0
      %v5417 = vmax.f32 %v5355, 0.0
      %v5418 = vmax.f32 %v5358, 0.0
      %v5419 = vmax.f32 %v5361, 0.0
      %v5420 = vmax.f32 %v5364, 0.0
      %v5421 = vmax.f32 %v5367, 0.0
      %v5422 = vmax.f32 %v5370, 0.0
      %v5423 = vmax.f32 %v5373, 0.0
      %v5424 = vmax.f32 %v5376, 0.0
      %v5425 = vmax.f32 %v5379, 0.0
      %5426 = vst.msk [vmem:[#allocation5] sm:$0xff] %vm5031, %v5381
      %5427 = vst.msk [vmem:[#allocation5 + $0x8] sm:$0xff] %vm5031, %v5382
      %5428 = vst.msk [vmem:[#allocation5 + $0x10] sm:$0xff] %vm5031, %v5383
      %5429 = vst.msk [vmem:[#allocation5 + $0x18] sm:$0xff] %vm5031, %v5384
      %5430 = vst.msk [vmem:[#allocation5 + $0x20] sm:$0xff] %vm5031, %v5385
      %5431 = vst.msk [vmem:[#allocation5 + $0x28] sm:$0xff] %vm5031, %v5386
      %5432 = vst.msk [vmem:[#allocation5 + $0x30] sm:$0xff] %vm5031, %v5387
      %5433 = vst.msk [vmem:[#allocation5 + $0x38] sm:$0xff] %vm5031, %v5388
      %5434 = vst.msk [vmem:[#allocation5 + $0x40] sm:$0xff] %vm5031, %v5389
      %5435 = vst.msk [vmem:[#allocation5 + $0x48] sm:$0xff] %vm5031, %v5390
      %5436 = vst.msk [vmem:[#allocation5 + $0x50] sm:$0xff] %vm5031, %v5391
      %5437 = vst.msk [vmem:[#allocation5 + $0x58] sm:$0xff] %vm5031, %v5392
      %5438 = vst.msk [vmem:[#allocation5 + $0x60] sm:$0xff] %vm5031, %v5393
      %5439 = vst.msk [vmem:[#allocation5 + $0x68] sm:$0xff] %vm5031, %v5394
      %5440 = vst.msk [vmem:[#allocation5 + $0x70] sm:$0xff] %vm5031, %v5395
      %5441 = vst.msk [vmem:[#allocation5 + $0x78] sm:$0xff] %vm5031, %v5396
      %5442 = vst.msk [vmem:[#allocation5 + $0x80] sm:$0xff] %vm5031, %v5397
      %5443 = vst.msk [vmem:[#allocation5 + $0x88] sm:$0xff] %vm5031, %v5398
      %5444 = vst.msk [vmem:[#allocation5 + $0x90] sm:$0xff] %vm5031, %v5399
      %5445 = vst.msk [vmem:[#allocation5 + $0x98] sm:$0xff] %vm5031, %v5400
      %5446 = vst.msk [vmem:[#allocation5 + $0xa0] sm:$0xff] %vm5031, %v5401
      %5447 = vst.msk [vmem:[#allocation5 + $0xa8] sm:$0xff] %vm5031, %v5402
      %5448 = vst.msk [vmem:[#allocation5 + $0xb0] sm:$0xff] %vm5031, %v5403
      %5449 = vst.msk [vmem:[#allocation5 + $0xb8] sm:$0xff] %vm5031, %v5404
      %5450 = vst.msk [vmem:[#allocation5 + $0xc0] sm:$0xff] %vm5031, %v5405
      %5451 = vst.msk [vmem:[#allocation5 + $0xc8] sm:$0xff] %vm5031, %v5406
      %5452 = vst.msk [vmem:[#allocation5 + $0xd0] sm:$0xff] %vm5031, %v5407
      %5453 = vst.msk [vmem:[#allocation5 + $0xd8] sm:$0xff] %vm5031, %v5408
      %5454 = vst.msk [vmem:[#allocation5 + $0xe0] sm:$0xff] %vm5031, %v5409
      %5455 = vst.msk [vmem:[#allocation5 + $0xe8] sm:$0xff] %vm5031, %v5410
      %5456 = vst.msk [vmem:[#allocation5 + $0xf0] sm:$0xff] %vm5031, %v5411
      %5457 = vst.msk [vmem:[#allocation5 + $0xf8] sm:$0xff] %vm5031, %v5412
      %5458 = vst.msk [vmem:[#allocation5 + $0x100] sm:$0xff] %vm5031, %v5413
      %5459 = vst.msk [vmem:[#allocation5 + $0x108] sm:$0xff] %vm5031, %v5414
      %5460 = vst.msk [vmem:[#allocation5 + $0x110] sm:$0xff] %vm5031, %v5415
      %5461 = vst.msk [vmem:[#allocation5 + $0x118] sm:$0xff] %vm5031, %v5416
      %5462 = vst.msk [vmem:[#allocation5 + $0x120] sm:$0xff] %vm5031, %v5417
      %5463 = vst.msk [vmem:[#allocation5 + $0x128] sm:$0xff] %vm5031, %v5418
      %5464 = vst.msk [vmem:[#allocation5 + $0x130] sm:$0xff] %vm5031, %v5419
      %5465 = vst.msk [vmem:[#allocation5 + $0x138] sm:$0xff] %vm5031, %v5420
      %5466 = vst.msk [vmem:[#allocation5 + $0x140] sm:$0xff] %vm5031, %v5421
      %5467 = vst.msk [vmem:[#allocation5 + $0x148] sm:$0xff] %vm5031, %v5422
      %5468 = vst.msk [vmem:[#allocation5 + $0x150] sm:$0xff] %vm5031, %v5423
      %5469 = vst.msk [vmem:[#allocation5 + $0x158] sm:$0xff] %vm5031, %v5424
      %5470 = vst.msk [vmem:[#allocation5 + $0x160] sm:$0xff] %vm5031, %v5425
      %v5471 = vld [vmem:[#allocation5] ss:$2 sm:$0xff]
      %s5472 = scalar_lea.vmem [#allocation5], 16
      %v5473 = vld [vmem:[%s5472] ss:$2 sm:$0xff]
      %s5474 = scalar_lea.vmem [#allocation5], 32
      %v5475 = vld [vmem:[%s5474] ss:$2 sm:$0xff]
      %s5476 = scalar_lea.vmem [#allocation5], 48
      %v5477 = vld [vmem:[%s5476] ss:$2 sm:$0xff]
      %s5478 = scalar_lea.vmem [#allocation5], 64
      %v5479 = vld [vmem:[%s5478] ss:$2 sm:$0xff]
      %s5480 = scalar_lea.vmem [#allocation5], 80
      %v5481 = vld [vmem:[%s5480] ss:$2 sm:$0xff]
      %s5482 = scalar_lea.vmem [#allocation5], 96
      %v5483 = vld [vmem:[%s5482] ss:$2 sm:$0xff]
      %s5484 = scalar_lea.vmem [#allocation5], 112
      %v5485 = vld [vmem:[%s5484] ss:$2 sm:$0xff]
      %s5486 = scalar_lea.vmem [#allocation5], 128
      %v5487 = vld [vmem:[%s5486] ss:$2 sm:$0xff]
      %s5488 = scalar_lea.vmem [#allocation5], 144
      %v5489 = vld [vmem:[%s5488] ss:$2 sm:$0xff]
      %s5490 = scalar_lea.vmem [#allocation5], 160
      %v5491 = vld [vmem:[%s5490] ss:$2 sm:$0xff]
      %s5492 = scalar_lea.vmem [#allocation5], 176
      %v5493 = vld [vmem:[%s5492] ss:$2 sm:$0xff]
      %s5494 = scalar_lea.vmem [#allocation5], 192
      %v5495 = vld [vmem:[%s5494] ss:$2 sm:$0xff]
      %s5496 = scalar_lea.vmem [#allocation5], 208
      %v5497 = vld [vmem:[%s5496] ss:$2 sm:$0xff]
      %s5498 = scalar_lea.vmem [#allocation5], 224
      %v5499 = vld [vmem:[%s5498] ss:$2 sm:$0xff]
      %s5500 = scalar_lea.vmem [#allocation5], 240
      %v5501 = vld [vmem:[%s5500] ss:$2 sm:$0xff]
      %s5502 = scalar_lea.vmem [#allocation5], 256
      %v5503 = vld [vmem:[%s5502] ss:$2 sm:$0xff]
      %s5504 = scalar_lea.vmem [#allocation5], 272
      %v5505 = vld [vmem:[%s5504] ss:$2 sm:$0xff]
      %s5506 = scalar_lea.vmem [#allocation5], 288
      %v5507 = vld [vmem:[%s5506] ss:$2 sm:$0xff]
      %s5508 = scalar_lea.vmem [#allocation5], 304
      %v5509 = vld [vmem:[%s5508] ss:$2 sm:$0xff]
      %s5510 = scalar_lea.vmem [#allocation5], 320
      %v5511 = vld [vmem:[%s5510] ss:$2 sm:$0xff]
      %s5512 = scalar_lea.vmem [#allocation5], 336
      %v5513 = vld [vmem:[%s5512] ss:$2 sm:$0xff]
      %s5514 = scalar_lea.vmem [#allocation5], 352
      %v5515 = vld [vmem:[%s5514] ss:$2 sm:$0xf]
      %s5516 = scalar_lea.vmem [#allocation5], 1
      %v5517 = vld [vmem:[%s5516] ss:$2 sm:$0xff]
      %s5518 = scalar_lea.vmem [#allocation5], 17
      %v5519 = vld [vmem:[%s5518] ss:$2 sm:$0xff]
      %s5520 = scalar_lea.vmem [#allocation5], 33
      %v5521 = vld [vmem:[%s5520] ss:$2 sm:$0xff]
      %s5522 = scalar_lea.vmem [#allocation5], 49
      %v5523 = vld [vmem:[%s5522] ss:$2 sm:$0xff]
      %s5524 = scalar_lea.vmem [#allocation5], 65
      %v5525 = vld [vmem:[%s5524] ss:$2 sm:$0xff]
      %s5526 = scalar_lea.vmem [#allocation5], 81
      %v5527 = vld [vmem:[%s5526] ss:$2 sm:$0xff]
      %s5528 = scalar_lea.vmem [#allocation5], 97
      %v5529 = vld [vmem:[%s5528] ss:$2 sm:$0xff]
      %s5530 = scalar_lea.vmem [#allocation5], 113
      %v5531 = vld [vmem:[%s5530] ss:$2 sm:$0xff]
      %s5532 = scalar_lea.vmem [#allocation5], 129
      %v5533 = vld [vmem:[%s5532] ss:$2 sm:$0xff]
      %s5534 = scalar_lea.vmem [#allocation5], 145
      %v5535 = vld [vmem:[%s5534] ss:$2 sm:$0xff]
      %s5536 = scalar_lea.vmem [#allocation5], 161
      %v5537 = vld [vmem:[%s5536] ss:$2 sm:$0xff]
      %s5538 = scalar_lea.vmem [#allocation5], 177
      %v5539 = vld [vmem:[%s5538] ss:$2 sm:$0xff]
      %s5540 = scalar_lea.vmem [#allocation5], 193
      %v5541 = vld [vmem:[%s5540] ss:$2 sm:$0xff]
      %s5542 = scalar_lea.vmem [#allocation5], 209
      %v5543 = vld [vmem:[%s5542] ss:$2 sm:$0xff]
      %s5544 = scalar_lea.vmem [#allocation5], 225
      %v5545 = vld [vmem:[%s5544] ss:$2 sm:$0xff]
      %s5546 = scalar_lea.vmem [#allocation5], 241
      %v5547 = vld [vmem:[%s5546] ss:$2 sm:$0xff]
      %s5548 = scalar_lea.vmem [#allocation5], 257
      %v5549 = vld [vmem:[%s5548] ss:$2 sm:$0xff]
      %s5550 = scalar_lea.vmem [#allocation5], 273
      %v5551 = vld [vmem:[%s5550] ss:$2 sm:$0xff]
      %s5552 = scalar_lea.vmem [#allocation5], 289
      %v5553 = vld [vmem:[%s5552] ss:$2 sm:$0xff]
      %s5554 = scalar_lea.vmem [#allocation5], 305
      %v5555 = vld [vmem:[%s5554] ss:$2 sm:$0xff]
      %s5556 = scalar_lea.vmem [#allocation5], 321
      %v5557 = vld [vmem:[%s5556] ss:$2 sm:$0xff]
      %s5558 = scalar_lea.vmem [#allocation5], 337
      %v5559 = vld [vmem:[%s5558] ss:$2 sm:$0xff]
      %s5560 = scalar_lea.vmem [#allocation5], 353
      %v5561 = vld [vmem:[%s5560] ss:$2 sm:$0xf]
      %v5562 = vmax.f32 %v5471, %v5517
      %v5563 = vmax.f32 %v5473, %v5519
      %v5564 = vmax.f32 %v5475, %v5521
      %v5565 = vmax.f32 %v5477, %v5523
      %v5566 = vmax.f32 %v5479, %v5525
      %v5567 = vmax.f32 %v5481, %v5527
      %v5568 = vmax.f32 %v5483, %v5529
      %v5569 = vmax.f32 %v5485, %v5531
      %v5570 = vmax.f32 %v5487, %v5533
      %v5571 = vmax.f32 %v5489, %v5535
      %v5572 = vmax.f32 %v5491, %v5537
      %v5573 = vmax.f32 %v5493, %v5539
      %v5574 = vmax.f32 %v5495, %v5541
      %v5575 = vmax.f32 %v5497, %v5543
      %v5576 = vmax.f32 %v5499, %v5545
      %v5577 = vmax.f32 %v5501, %v5547
      %v5578 = vmax.f32 %v5503, %v5549
      %v5579 = vmax.f32 %v5505, %v5551
      %v5580 = vmax.f32 %v5507, %v5553
      %v5581 = vmax.f32 %v5509, %v5555
      %v5582 = vmax.f32 %v5511, %v5557
      %v5583 = vmax.f32 %v5513, %v5559
      %v5584 = vmax.f32 %v5515, %v5561
      %vm5585 = vcmask 516096
      %5586 = vst.msk [vmem:[#allocation6 + $0x7] sm:$0x1] %vm5585, 0.0
      %5587 = vst.msk [vmem:[#allocation6 + $0x8] sm:$0xff] %vm5031, %v5562
      %5588 = vst.msk [vmem:[#allocation6 + $0x10] sm:$0xff] %vm5031, %v5563
      %5589 = vst.msk [vmem:[#allocation6 + $0x18] sm:$0xff] %vm5031, %v5564
      %5590 = vst.msk [vmem:[#allocation6 + $0x20] sm:$0xff] %vm5031, %v5565
      %5591 = vst.msk [vmem:[#allocation6 + $0x28] sm:$0xff] %vm5031, %v5566
      %5592 = vst.msk [vmem:[#allocation6 + $0x30] sm:$0xff] %vm5031, %v5567
      %5593 = vst.msk [vmem:[#allocation6 + $0x38] sm:$0xff] %vm5031, %v5568
      %5594 = vst.msk [vmem:[#allocation6 + $0x40] sm:$0xff] %vm5031, %v5569
      %5595 = vst.msk [vmem:[#allocation6 + $0x48] sm:$0xff] %vm5031, %v5570
      %5596 = vst.msk [vmem:[#allocation6 + $0x50] sm:$0xff] %vm5031, %v5571
      %5597 = vst.msk [vmem:[#allocation6 + $0x58] sm:$0xff] %vm5031, %v5572
      %5598 = vst.msk [vmem:[#allocation6 + $0x60] sm:$0xff] %vm5031, %v5573
      %5599 = vst.msk [vmem:[#allocation6 + $0x68] sm:$0xff] %vm5031, %v5574
      %5600 = vst.msk [vmem:[#allocation6 + $0x70] sm:$0xff] %vm5031, %v5575
      %5601 = vst.msk [vmem:[#allocation6 + $0x78] sm:$0xff] %vm5031, %v5576
      %5602 = vst.msk [vmem:[#allocation6 + $0x80] sm:$0xff] %vm5031, %v5577
      %5603 = vst.msk [vmem:[#allocation6 + $0x88] sm:$0xff] %vm5031, %v5578
      %5604 = vst.msk [vmem:[#allocation6 + $0x90] sm:$0xff] %vm5031, %v5579
      %5605 = vst.msk [vmem:[#allocation6 + $0x98] sm:$0xff] %vm5031, %v5580
      %5606 = vst.msk [vmem:[#allocation6 + $0xa0] sm:$0xff] %vm5031, %v5581
      %5607 = vst.msk [vmem:[#allocation6 + $0xa8] sm:$0xff] %vm5031, %v5582
      %5608 = vst.msk [vmem:[#allocation6 + $0xb0] sm:$0xff] %vm5031, %v5583
      %vm5609 = vcmask 519168
      %5610 = vst.msk [vmem:[#allocation6 + $0xb8] sm:$0xf] %vm5609, %v5584
      %5611 = vst.msk [vmem:[#allocation6 + $0xbc] sm:$0x1] %vm5585, 0.0
      %v5612 = vld [vmem:[#allocation6 + $0x8] sm:$0xff]
      %v5613 = vld [vmem:[#allocation6 + $0x10] sm:$0xff]
      %v5614 = vld [vmem:[#allocation6 + $0x18] sm:$0xff]
      %v5615 = vld [vmem:[#allocation6 + $0x20] sm:$0xff]
      %v5616 = vld [vmem:[#allocation6 + $0x28] sm:$0xff]
      %v5617 = vld [vmem:[#allocation6 + $0x30] sm:$0xff]
      %v5618 = vld [vmem:[#allocation6 + $0x38] sm:$0xff]
      %v5619 = vld [vmem:[#allocation6 + $0x40] sm:$0xff]
      %v5620 = vld [vmem:[#allocation6 + $0x48] sm:$0xff]
      %v5621 = vld [vmem:[#allocation6 + $0x50] sm:$0xff]
      %v5622 = vld [vmem:[#allocation6 + $0x58] sm:$0xff]
      %v5623 = vld [vmem:[#allocation6 + $0x60] sm:$0xff]
      %v5624 = vld [vmem:[#allocation6 + $0x68] sm:$0xff]
      %v5625 = vld [vmem:[#allocation6 + $0x70] sm:$0xff]
      %v5626 = vld [vmem:[#allocation6 + $0x78] sm:$0xff]
      %v5627 = vld [vmem:[#allocation6 + $0x80] sm:$0xff]
      %v5628 = vld [vmem:[#allocation6 + $0x88] sm:$0xff]
      %v5629 = vld [vmem:[#allocation6 + $0x90] sm:$0xff]
      %v5630 = vld [vmem:[#allocation6 + $0x98] sm:$0xff]
      %v5631 = vld [vmem:[#allocation6 + $0xa0] sm:$0xff]
      %v5632 = vld [vmem:[#allocation6 + $0xa8] sm:$0xff]
      %v5633 = vld [vmem:[#allocation6 + $0xb0] sm:$0xff]
      %v5634 = vld [vmem:[#allocation6 + $0xb8] sm:$0xf]
      %v5635 = vld [vmem:[#allocation6 + $0x7] sm:$0xff]
      %v5636 = vld [vmem:[#allocation6 + $0xf] sm:$0xff]
      %v5637 = vld [vmem:[#allocation6 + $0x17] sm:$0xff]
      %v5638 = vld [vmem:[#allocation6 + $0x1f] sm:$0xff]
      %v5639 = vld [vmem:[#allocation6 + $0x27] sm:$0xff]
      %v5640 = vld [vmem:[#allocation6 + $0x2f] sm:$0xff]
      %v5641 = vld [vmem:[#allocation6 + $0x37] sm:$0xff]
      %v5642 = vld [vmem:[#allocation6 + $0x3f] sm:$0xff]
      %v5643 = vld [vmem:[#allocation6 + $0x47] sm:$0xff]
      %v5644 = vld [vmem:[#allocation6 + $0x4f] sm:$0xff]
      %v5645 = vld [vmem:[#allocation6 + $0x57] sm:$0xff]
      %v5646 = vld [vmem:[#allocation6 + $0x5f] sm:$0xff]
      %v5647 = vld [vmem:[#allocation6 + $0x67] sm:$0xff]
      %v5648 = vld [vmem:[#allocation6 + $0x6f] sm:$0xff]
      %v5649 = vld [vmem:[#allocation6 + $0x77] sm:$0xff]
      %v5650 = vld [vmem:[#allocation6 + $0x7f] sm:$0xff]
      %v5651 = vld [vmem:[#allocation6 + $0x87] sm:$0xff]
      %v5652 = vld [vmem:[#allocation6 + $0x8f] sm:$0xff]
      %v5653 = vld [vmem:[#allocation6 + $0x97] sm:$0xff]
      %v5654 = vld [vmem:[#allocation6 + $0x9f] sm:$0xff]
      %v5655 = vld [vmem:[#allocation6 + $0xa7] sm:$0xff]
      %v5656 = vld [vmem:[#allocation6 + $0xaf] sm:$0xff]
      %v5657 = vld [vmem:[#allocation6 + $0xb7] sm:$0xf]
      %v5658 = vld [vmem:[#allocation6 + $0x9] sm:$0xff]
      %v5659 = vld [vmem:[#allocation6 + $0x11] sm:$0xff]
      %v5660 = vld [vmem:[#allocation6 + $0x19] sm:$0xff]
      %v5661 = vld [vmem:[#allocation6 + $0x21] sm:$0xff]
      %v5662 = vld [vmem:[#allocation6 + $0x29] sm:$0xff]
      %v5663 = vld [vmem:[#allocation6 + $0x31] sm:$0xff]
      %v5664 = vld [vmem:[#allocation6 + $0x39] sm:$0xff]
      %v5665 = vld [vmem:[#allocation6 + $0x41] sm:$0xff]
      %v5666 = vld [vmem:[#allocation6 + $0x49] sm:$0xff]
      %v5667 = vld [vmem:[#allocation6 + $0x51] sm:$0xff]
      %v5668 = vld [vmem:[#allocation6 + $0x59] sm:$0xff]
      %v5669 = vld [vmem:[#allocation6 + $0x61] sm:$0xff]
      %v5670 = vld [vmem:[#allocation6 + $0x69] sm:$0xff]
      %v5671 = vld [vmem:[#allocation6 + $0x71] sm:$0xff]
      %v5672 = vld [vmem:[#allocation6 + $0x79] sm:$0xff]
      %v5673 = vld [vmem:[#allocation6 + $0x81] sm:$0xff]
      %v5674 = vld [vmem:[#allocation6 + $0x89] sm:$0xff]
      %v5675 = vld [vmem:[#allocation6 + $0x91] sm:$0xff]
      %v5676 = vld [vmem:[#allocation6 + $0x99] sm:$0xff]
      %v5677 = vld [vmem:[#allocation6 + $0xa1] sm:$0xff]
      %v5678 = vld [vmem:[#allocation6 + $0xa9] sm:$0xff]
      %v5679 = vld [vmem:[#allocation6 + $0xb1] sm:$0xff]
      %v5680 = vld [vmem:[#allocation6 + $0xb9] sm:$0xf]
      %v5681 = vld [vmem:[%s3] sm:$0xff]
      %v5682 = vld [vmem:[%s3 + $0x8] sm:$0xff]
      %v5683 = vld [vmem:[%s3 + $0x10] sm:$0xff]
      %v5684 = vld [vmem:[%s3 + $0x18] sm:$0xff]
      %v5685 = vld [vmem:[%s3 + $0x20] sm:$0xff]
      %v5686 = vld [vmem:[%s3 + $0x28] sm:$0xff]
      %v5687 = vld [vmem:[%s3 + $0x30] sm:$0xff]
      %v5688 = vld [vmem:[%s3 + $0x38] sm:$0xff]
      %v5689 = vld [vmem:[%s3 + $0x40] sm:$0xff]
      %v5690 = vld [vmem:[%s3 + $0x48] sm:$0xff]
      %v5691 = vld [vmem:[%s3 + $0x50] sm:$0xff]
      %v5692 = vld [vmem:[%s3 + $0x58] sm:$0xff]
      %v5693 = vld [vmem:[%s3 + $0x60] sm:$0xff]
      %v5694 = vld [vmem:[%s3 + $0x68] sm:$0xff]
      %v5695 = vld [vmem:[%s3 + $0x70] sm:$0xff]
      %v5696 = vld [vmem:[%s3 + $0x78] sm:$0xff]
      %v5697 = vld [vmem:[%s3 + $0x80] sm:$0xff]
      %v5698 = vld [vmem:[%s3 + $0x88] sm:$0xff]
      %v5699 = vld [vmem:[%s3 + $0x90] sm:$0xff]
      %v5700 = vld [vmem:[%s3 + $0x98] sm:$0xff]
      %v5701 = vld [vmem:[%s3 + $0xa0] sm:$0xff]
      %v5702 = vld [vmem:[%s3 + $0xa8] sm:$0xff]
      %v5703 = vld [vmem:[%s3 + $0xb0] sm:$0xf]
      %vm5704 = vcmp.gt.f32.partialorder %v5681, 0.5
      %vm5705 = vcmp.gt.f32.partialorder %v5682, 0.5
      %vm5706 = vcmp.gt.f32.partialorder %v5683, 0.5
      %vm5707 = vcmp.gt.f32.partialorder %v5684, 0.5
      %vm5708 = vcmp.gt.f32.partialorder %v5685, 0.5
      %vm5709 = vcmp.gt.f32.partialorder %v5686, 0.5
      %vm5710 = vcmp.gt.f32.partialorder %v5687, 0.5
      %vm5711 = vcmp.gt.f32.partialorder %v5688, 0.5
      %vm5712 = vcmp.gt.f32.partialorder %v5689, 0.5
      %vm5713 = vcmp.gt.f32.partialorder %v5690, 0.5
      %vm5714 = vcmp.gt.f32.partialorder %v5691, 0.5
      %vm5715 = vcmp.gt.f32.partialorder %v5692, 0.5
      %vm5716 = vcmp.gt.f32.partialorder %v5693, 0.5
      %vm5717 = vcmp.gt.f32.partialorder %v5694, 0.5
      %vm5718 = vcmp.gt.f32.partialorder %v5695, 0.5
      %vm5719 = vcmp.gt.f32.partialorder %v5696, 0.5
      %vm5720 = vcmp.gt.f32.partialorder %v5697, 0.5
      %vm5721 = vcmp.gt.f32.partialorder %v5698, 0.5
      %vm5722 = vcmp.gt.f32.partialorder %v5699, 0.5
      %vm5723 = vcmp.gt.f32.partialorder %v5700, 0.5
      %vm5724 = vcmp.gt.f32.partialorder %v5701, 0.5
      %vm5725 = vcmp.gt.f32.partialorder %v5702, 0.5
      %vm5726 = vcmp.gt.f32.partialorder %v5703, 0.5
      %v5727 = vsel %vm5704, 1, 0
      %v5728 = vsel %vm5705, 1, 0
      %v5729 = vsel %vm5706, 1, 0
      %v5730 = vsel %vm5707, 1, 0
      %v5731 = vsel %vm5708, 1, 0
      %v5732 = vsel %vm5709, 1, 0
      %v5733 = vsel %vm5710, 1, 0
      %v5734 = vsel %vm5711, 1, 0
      %v5735 = vsel %vm5712, 1, 0
      %v5736 = vsel %vm5713, 1, 0
      %v5737 = vsel %vm5714, 1, 0
      %v5738 = vsel %vm5715, 1, 0
      %v5739 = vsel %vm5716, 1, 0
      %v5740 = vsel %vm5717, 1, 0
      %v5741 = vsel %vm5718, 1, 0
      %v5742 = vsel %vm5719, 1, 0
      %v5743 = vsel %vm5720, 1, 0
      %v5744 = vsel %vm5721, 1, 0
      %v5745 = vsel %vm5722, 1, 0
      %v5746 = vsel %vm5723, 1, 0
      %v5747 = vsel %vm5724, 1, 0
      %v5748 = vsel %vm5725, 1, 0
      %v5749 = vsel %vm5726, 1, 0
      %5750 = vset.pattern.permute.xlu0 0
      %5751 = vperm.xlu0 %5750, %v5727
      %v5752 = vpop.permute.xlu0 %5751
      %5753 = vset.pattern.permute.xlu0 0
      %5754 = vperm.xlu0 %5753, %v5728
      %v5755 = vpop.permute.xlu0 %5754
      %5756 = vset.pattern.permute.xlu0 0
      %5757 = vperm.xlu0 %5756, %v5729
      %v5758 = vpop.permute.xlu0 %5757
      %5759 = vset.pattern.permute.xlu0 0
      %5760 = vperm.xlu0 %5759, %v5730
      %v5761 = vpop.permute.xlu0 %5760
      %5762 = vset.pattern.permute.xlu0 0
      %5763 = vperm.xlu0 %5762, %v5731
      %v5764 = vpop.permute.xlu0 %5763
      %5765 = vset.pattern.permute.xlu0 0
      %5766 = vperm.xlu0 %5765, %v5732
      %v5767 = vpop.permute.xlu0 %5766
      %5768 = vset.pattern.permute.xlu0 0
      %5769 = vperm.xlu0 %5768, %v5733
      %v5770 = vpop.permute.xlu0 %5769
      %5771 = vset.pattern.permute.xlu0 0
      %5772 = vperm.xlu0 %5771, %v5734
      %v5773 = vpop.permute.xlu0 %5772
      %5774 = vset.pattern.permute.xlu0 0
      %5775 = vperm.xlu0 %5774, %v5735
      %v5776 = vpop.permute.xlu0 %5775
      %5777 = vset.pattern.permute.xlu0 0
      %5778 = vperm.xlu0 %5777, %v5736
      %v5779 = vpop.permute.xlu0 %5778
      %5780 = vset.pattern.permute.xlu0 0
      %5781 = vperm.xlu0 %5780, %v5737
      %v5782 = vpop.permute.xlu0 %5781
      %5783 = vset.pattern.permute.xlu0 0
      %5784 = vperm.xlu0 %5783, %v5738
      %v5785 = vpop.permute.xlu0 %5784
      %5786 = vset.pattern.permute.xlu0 0
      %5787 = vperm.xlu0 %5786, %v5739
      %v5788 = vpop.permute.xlu0 %5787
      %5789 = vset.pattern.permute.xlu0 0
      %5790 = vperm.xlu0 %5789, %v5740
      %v5791 = vpop.permute.xlu0 %5790
      %5792 = vset.pattern.permute.xlu0 0
      %5793 = vperm.xlu0 %5792, %v5741
      %v5794 = vpop.permute.xlu0 %5793
      %5795 = vset.pattern.permute.xlu0 0
      %5796 = vperm.xlu0 %5795, %v5742
      %v5797 = vpop.permute.xlu0 %5796
      %5798 = vset.pattern.permute.xlu0 0
      %5799 = vperm.xlu0 %5798, %v5743
      %v5800 = vpop.permute.xlu0 %5799
      %5801 = vset.pattern.permute.xlu0 0
      %5802 = vperm.xlu0 %5801, %v5744
      %v5803 = vpop.permute.xlu0 %5802
      %5804 = vset.pattern.permute.xlu0 0
      %5805 = vperm.xlu0 %5804, %v5745
      %v5806 = vpop.permute.xlu0 %5805
      %5807 = vset.pattern.permute.xlu0 0
      %5808 = vperm.xlu0 %5807, %v5746
      %v5809 = vpop.permute.xlu0 %5808
      %5810 = vset.pattern.permute.xlu0 0
      %5811 = vperm.xlu0 %5810, %v5747
      %v5812 = vpop.permute.xlu0 %5811
      %5813 = vset.pattern.permute.xlu0 0
      %5814 = vperm.xlu0 %5813, %v5748
      %v5815 = vpop.permute.xlu0 %5814
      %5816 = vset.pattern.permute.xlu0 0
      %5817 = vperm.xlu0 %5816, %v5749
      %v5818 = vpop.permute.xlu0 %5817
      %vm5819 = vcmp.eq.s32.totalorder %v5752, 1
      %vm5820 = vcmp.eq.s32.totalorder %v5755, 1
      %vm5821 = vcmp.eq.s32.totalorder %v5758, 1
      %vm5822 = vcmp.eq.s32.totalorder %v5761, 1
      %vm5823 = vcmp.eq.s32.totalorder %v5764, 1
      %vm5824 = vcmp.eq.s32.totalorder %v5767, 1
      %vm5825 = vcmp.eq.s32.totalorder %v5770, 1
      %vm5826 = vcmp.eq.s32.totalorder %v5773, 1
      %vm5827 = vcmp.eq.s32.totalorder %v5776, 1
      %vm5828 = vcmp.eq.s32.totalorder %v5779, 1
      %vm5829 = vcmp.eq.s32.totalorder %v5782, 1
      %vm5830 = vcmp.eq.s32.totalorder %v5785, 1
      %vm5831 = vcmp.eq.s32.totalorder %v5788, 1
      %vm5832 = vcmp.eq.s32.totalorder %v5791, 1
      %vm5833 = vcmp.eq.s32.totalorder %v5794, 1
      %vm5834 = vcmp.eq.s32.totalorder %v5797, 1
      %vm5835 = vcmp.eq.s32.totalorder %v5800, 1
      %vm5836 = vcmp.eq.s32.totalorder %v5803, 1
      %vm5837 = vcmp.eq.s32.totalorder %v5806, 1
      %vm5838 = vcmp.eq.s32.totalorder %v5809, 1
      %vm5839 = vcmp.eq.s32.totalorder %v5812, 1
      %vm5840 = vcmp.eq.s32.totalorder %v5815, 1
      %vm5841 = vcmp.eq.s32.totalorder %v5818, 1
      %v5842 = vsel %vm5819, %v5635, 0.0
      %v5843 = vsel %vm5820, %v5636, 0.0
      %v5844 = vsel %vm5821, %v5637, 0.0
      %v5845 = vsel %vm5822, %v5638, 0.0
      %v5846 = vsel %vm5823, %v5639, 0.0
      %v5847 = vsel %vm5824, %v5640, 0.0
      %v5848 = vsel %vm5825, %v5641, 0.0
      %v5849 = vsel %vm5826, %v5642, 0.0
      %v5850 = vsel %vm5827, %v5643, 0.0
      %v5851 = vsel %vm5828, %v5644, 0.0
      %v5852 = vsel %vm5829, %v5645, 0.0
      %v5853 = vsel %vm5830, %v5646, 0.0
      %v5854 = vsel %vm5831, %v5647, 0.0
      %v5855 = vsel %vm5832, %v5648, 0.0
      %v5856 = vsel %vm5833, %v5649, 0.0
      %v5857 = vsel %vm5834, %v5650, 0.0
      %v5858 = vsel %vm5835, %v5651, 0.0
      %v5859 = vsel %vm5836, %v5652, 0.0
      %v5860 = vsel %vm5837, %v5653, 0.0
      %v5861 = vsel %vm5838, %v5654, 0.0
      %v5862 = vsel %vm5839, %v5655, 0.0
      %v5863 = vsel %vm5840, %v5656, 0.0
      %v5864 = vsel %vm5841, %v5657, 0.0
      %5865 = vset.pattern.permute.xlu0 1
      %5866 = vperm.xlu0 %5865, %v5727
      %v5867 = vpop.permute.xlu0 %5866
      %5868 = vset.pattern.permute.xlu0 1
      %5869 = vperm.xlu0 %5868, %v5728
      %v5870 = vpop.permute.xlu0 %5869
      %5871 = vset.pattern.permute.xlu0 1
      %5872 = vperm.xlu0 %5871, %v5729
      %v5873 = vpop.permute.xlu0 %5872
      %5874 = vset.pattern.permute.xlu0 1
      %5875 = vperm.xlu0 %5874, %v5730
      %v5876 = vpop.permute.xlu0 %5875
      %5877 = vset.pattern.permute.xlu0 1
      %5878 = vperm.xlu0 %5877, %v5731
      %v5879 = vpop.permute.xlu0 %5878
      %5880 = vset.pattern.permute.xlu0 1
      %5881 = vperm.xlu0 %5880, %v5732
      %v5882 = vpop.permute.xlu0 %5881
      %5883 = vset.pattern.permute.xlu0 1
      %5884 = vperm.xlu0 %5883, %v5733
      %v5885 = vpop.permute.xlu0 %5884
      %5886 = vset.pattern.permute.xlu0 1
      %5887 = vperm.xlu0 %5886, %v5734
      %v5888 = vpop.permute.xlu0 %5887
      %5889 = vset.pattern.permute.xlu0 1
      %5890 = vperm.xlu0 %5889, %v5735
      %v5891 = vpop.permute.xlu0 %5890
      %5892 = vset.pattern.permute.xlu0 1
      %5893 = vperm.xlu0 %5892, %v5736
      %v5894 = vpop.permute.xlu0 %5893
      %5895 = vset.pattern.permute.xlu0 1
      %5896 = vperm.xlu0 %5895, %v5737
      %v5897 = vpop.permute.xlu0 %5896
      %5898 = vset.pattern.permute.xlu0 1
      %5899 = vperm.xlu0 %5898, %v5738
      %v5900 = vpop.permute.xlu0 %5899
      %5901 = vset.pattern.permute.xlu0 1
      %5902 = vperm.xlu0 %5901, %v5739
      %v5903 = vpop.permute.xlu0 %5902
      %5904 = vset.pattern.permute.xlu0 1
      %5905 = vperm.xlu0 %5904, %v5740
      %v5906 = vpop.permute.xlu0 %5905
      %5907 = vset.pattern.permute.xlu0 1
      %5908 = vperm.xlu0 %5907, %v5741
      %v5909 = vpop.permute.xlu0 %5908
      %5910 = vset.pattern.permute.xlu0 1
      %5911 = vperm.xlu0 %5910, %v5742
      %v5912 = vpop.permute.xlu0 %5911
      %5913 = vset.pattern.permute.xlu0 1
      %5914 = vperm.xlu0 %5913, %v5743
      %v5915 = vpop.permute.xlu0 %5914
      %5916 = vset.pattern.permute.xlu0 1
      %5917 = vperm.xlu0 %5916, %v5744
      %v5918 = vpop.permute.xlu0 %5917
      %5919 = vset.pattern.permute.xlu0 1
      %5920 = vperm.xlu0 %5919, %v5745
      %v5921 = vpop.permute.xlu0 %5920
      %5922 = vset.pattern.permute.xlu0 1
      %5923 = vperm.xlu0 %5922, %v5746
      %v5924 = vpop.permute.xlu0 %5923
      %5925 = vset.pattern.permute.xlu0 1
      %5926 = vperm.xlu0 %5925, %v5747
      %v5927 = vpop.permute.xlu0 %5926
      %5928 = vset.pattern.permute.xlu0 1
      %5929 = vperm.xlu0 %5928, %v5748
      %v5930 = vpop.permute.xlu0 %5929
      %5931 = vset.pattern.permute.xlu0 1
      %5932 = vperm.xlu0 %5931, %v5749
      %v5933 = vpop.permute.xlu0 %5932
      %vm5934 = vcmp.eq.s32.totalorder %v5867, 1
      %vm5935 = vcmp.eq.s32.totalorder %v5870, 1
      %vm5936 = vcmp.eq.s32.totalorder %v5873, 1
      %vm5937 = vcmp.eq.s32.totalorder %v5876, 1
      %vm5938 = vcmp.eq.s32.totalorder %v5879, 1
      %vm5939 = vcmp.eq.s32.totalorder %v5882, 1
      %vm5940 = vcmp.eq.s32.totalorder %v5885, 1
      %vm5941 = vcmp.eq.s32.totalorder %v5888, 1
      %vm5942 = vcmp.eq.s32.totalorder %v5891, 1
      %vm5943 = vcmp.eq.s32.totalorder %v5894, 1
      %vm5944 = vcmp.eq.s32.totalorder %v5897, 1
      %vm5945 = vcmp.eq.s32.totalorder %v5900, 1
      %vm5946 = vcmp.eq.s32.totalorder %v5903, 1
      %vm5947 = vcmp.eq.s32.totalorder %v5906, 1
      %vm5948 = vcmp.eq.s32.totalorder %v5909, 1
      %vm5949 = vcmp.eq.s32.totalorder %v5912, 1
      %vm5950 = vcmp.eq.s32.totalorder %v5915, 1
      %vm5951 = vcmp.eq.s32.totalorder %v5918, 1
      %vm5952 = vcmp.eq.s32.totalorder %v5921, 1
      %vm5953 = vcmp.eq.s32.totalorder %v5924, 1
      %vm5954 = vcmp.eq.s32.totalorder %v5927, 1
      %vm5955 = vcmp.eq.s32.totalorder %v5930, 1
      %vm5956 = vcmp.eq.s32.totalorder %v5933, 1
      %v5957 = vsel %vm5934, %v5658, 0.0
      %v5958 = vsel %vm5935, %v5659, 0.0
      %v5959 = vsel %vm5936, %v5660, 0.0
      %v5960 = vsel %vm5937, %v5661, 0.0
      %v5961 = vsel %vm5938, %v5662, 0.0
      %v5962 = vsel %vm5939, %v5663, 0.0
      %v5963 = vsel %vm5940, %v5664, 0.0
      %v5964 = vsel %vm5941, %v5665, 0.0
      %v5965 = vsel %vm5942, %v5666, 0.0
      %v5966 = vsel %vm5943, %v5667, 0.0
      %v5967 = vsel %vm5944, %v5668, 0.0
      %v5968 = vsel %vm5945, %v5669, 0.0
      %v5969 = vsel %vm5946, %v5670, 0.0
      %v5970 = vsel %vm5947, %v5671, 0.0
      %v5971 = vsel %vm5948, %v5672, 0.0
      %v5972 = vsel %vm5949, %v5673, 0.0
      %v5973 = vsel %vm5950, %v5674, 0.0
      %v5974 = vsel %vm5951, %v5675, 0.0
      %v5975 = vsel %vm5952, %v5676, 0.0
      %v5976 = vsel %vm5953, %v5677, 0.0
      %v5977 = vsel %vm5954, %v5678, 0.0
      %v5978 = vsel %vm5955, %v5679, 0.0
      %v5979 = vsel %vm5956, %v5680, 0.0
      %6003 = vrot.lane.b32.xlu0 %v5612, 64
      %v6004 = vpop.permute.xlu0 %6003
      %6005 = vrot.lane.b32.xlu0 %v5613, 64
      %v6006 = vpop.permute.xlu0 %6005
      %6007 = vrot.lane.b32.xlu0 %v5614, 64
      %v6008 = vpop.permute.xlu0 %6007
      %6009 = vrot.lane.b32.xlu0 %v5615, 64
      %v6010 = vpop.permute.xlu0 %6009
      %6011 = vrot.lane.b32.xlu0 %v5616, 64
      %v6012 = vpop.permute.xlu0 %6011
      %6013 = vrot.lane.b32.xlu0 %v5617, 64
      %v6014 = vpop.permute.xlu0 %6013
      %6015 = vrot.lane.b32.xlu0 %v5618, 64
      %v6016 = vpop.permute.xlu0 %6015
      %6017 = vrot.lane.b32.xlu0 %v5619, 64
      %v6018 = vpop.permute.xlu0 %6017
      %6019 = vrot.lane.b32.xlu0 %v5620, 64
      %v6020 = vpop.permute.xlu0 %6019
      %6021 = vrot.lane.b32.xlu0 %v5621, 64
      %v6022 = vpop.permute.xlu0 %6021
      %6023 = vrot.lane.b32.xlu0 %v5622, 64
      %v6024 = vpop.permute.xlu0 %6023
      %6025 = vrot.lane.b32.xlu0 %v5623, 64
      %v6026 = vpop.permute.xlu0 %6025
      %6027 = vrot.lane.b32.xlu0 %v5624, 64
      %v6028 = vpop.permute.xlu0 %6027
      %6029 = vrot.lane.b32.xlu0 %v5625, 64
      %v6030 = vpop.permute.xlu0 %6029
      %6031 = vrot.lane.b32.xlu0 %v5626, 64
      %v6032 = vpop.permute.xlu0 %6031
      %6033 = vrot.lane.b32.xlu0 %v5627, 64
      %v6034 = vpop.permute.xlu0 %6033
      %6035 = vrot.lane.b32.xlu0 %v5628, 64
      %v6036 = vpop.permute.xlu0 %6035
      %6037 = vrot.lane.b32.xlu0 %v5629, 64
      %v6038 = vpop.permute.xlu0 %6037
      %6039 = vrot.lane.b32.xlu0 %v5630, 64
      %v6040 = vpop.permute.xlu0 %6039
      %6041 = vrot.lane.b32.xlu0 %v5631, 64
      %v6042 = vpop.permute.xlu0 %6041
      %6043 = vrot.lane.b32.xlu0 %v5632, 64
      %v6044 = vpop.permute.xlu0 %6043
      %6045 = vrot.lane.b32.xlu0 %v5633, 64
      %v6046 = vpop.permute.xlu0 %6045
      %6047 = vrot.lane.b32.xlu0 %v5634, 64
      %v6048 = vpop.permute.xlu0 %6047
      %v6072 = vsel %vm5031, %v5842, %v6004
      %v6073 = vsel %vm5031, %v5843, %v6006
      %v6074 = vsel %vm5031, %v5844, %v6008
      %v6075 = vsel %vm5031, %v5845, %v6010
      %v6076 = vsel %vm5031, %v5846, %v6012
      %v6077 = vsel %vm5031, %v5847, %v6014
      %v6078 = vsel %vm5031, %v5848, %v6016
      %v6079 = vsel %vm5031, %v5849, %v6018
      %v6080 = vsel %vm5031, %v5850, %v6020
      %v6081 = vsel %vm5031, %v5851, %v6022
      %v6082 = vsel %vm5031, %v5852, %v6024
      %v6083 = vsel %vm5031, %v5853, %v6026
      %v6084 = vsel %vm5031, %v5854, %v6028
      %v6085 = vsel %vm5031, %v5855, %v6030
      %v6086 = vsel %vm5031, %v5856, %v6032
      %v6087 = vsel %vm5031, %v5857, %v6034
      %v6088 = vsel %vm5031, %v5858, %v6036
      %v6089 = vsel %vm5031, %v5859, %v6038
      %v6090 = vsel %vm5031, %v5860, %v6040
      %v6091 = vsel %vm5031, %v5861, %v6042
      %v6092 = vsel %vm5031, %v5862, %v6044
      %v6093 = vsel %vm5031, %v5863, %v6046
      %v6094 = vsel %vm5031, %v5864, %v6048
      %v6095 = vld [vmem:[%s8] sm:$0xff]
      %v6096 = vld [vmem:[%s8 + $0x8] sm:$0xff]
      %v6097 = vld [vmem:[%s8 + $0x10] sm:$0xff]
      %v6098 = vld [vmem:[%s8 + $0x18] sm:$0xff]
      %v6099 = vld [vmem:[%s8 + $0x20] sm:$0xff]
      %v6100 = vld [vmem:[%s8 + $0x28] sm:$0xff]
      %v6101 = vld [vmem:[%s8 + $0x30] sm:$0xff]
      %v6102 = vld [vmem:[%s8 + $0x38] sm:$0xff]
      %v6103 = vld [vmem:[%s8 + $0x40] sm:$0xff]
      %v6104 = vld [vmem:[%s8 + $0x48] sm:$0xff]
      %v6105 = vld [vmem:[%s8 + $0x50] sm:$0xff]
      %v6106 = vld [vmem:[%s8 + $0x58] sm:$0xff]
      %v6107 = vld [vmem:[%s8 + $0x60] sm:$0xff]
      %v6108 = vld [vmem:[%s8 + $0x68] sm:$0xff]
      %v6109 = vld [vmem:[%s8 + $0x70] sm:$0xff]
      %v6110 = vld [vmem:[%s8 + $0x78] sm:$0xff]
      %v6111 = vld [vmem:[%s8 + $0x80] sm:$0xff]
      %v6112 = vld [vmem:[%s8 + $0x88] sm:$0xff]
      %v6113 = vld [vmem:[%s8 + $0x90] sm:$0xff]
      %v6114 = vld [vmem:[%s8 + $0x98] sm:$0xff]
      %v6115 = vld [vmem:[%s8 + $0xa0] sm:$0xff]
      %v6116 = vld [vmem:[%s8 + $0xa8] sm:$0xff]
      %v6117 = vld [vmem:[%s8 + $0xb0] sm:$0xff]
      %v6118 = vld [vmem:[%s8 + $0xb8] sm:$0xff]
      %v6119 = vld [vmem:[%s9] sm:$0x1]
      %v6121 = vperm.slane %v6119, 0
      %v6124 = vsel %vm5031, %v5957, 0
      %v6127 = vsel %vm5031, %v5958, 0
      %v6130 = vsel %vm5031, %v5959, 0
      %v6133 = vsel %vm5031, %v5960, 0
      %v6136 = vsel %vm5031, %v5961, 0
      %v6139 = vsel %vm5031, %v5962, 0
      %v6142 = vsel %vm5031, %v5963, 0
      %v6145 = vsel %vm5031, %v5964, 0
      %v6148 = vsel %vm5031, %v5965, 0
      %v6151 = vsel %vm5031, %v5966, 0
      %v6154 = vsel %vm5031, %v5967, 0
      %v6157 = vsel %vm5031, %v5968, 0
      %v6160 = vsel %vm5031, %v5969, 0
      %v6163 = vsel %vm5031, %v5970, 0
      %v6166 = vsel %vm5031, %v5971, 0
      %v6169 = vsel %vm5031, %v5972, 0
      %v6172 = vsel %vm5031, %v5973, 0
      %v6175 = vsel %vm5031, %v5974, 0
      %v6178 = vsel %vm5031, %v5975, 0
      %v6181 = vsel %vm5031, %v5976, 0
      %v6184 = vsel %vm5031, %v5977, 0
      %v6187 = vsel %vm5031, %v5978, 0
      %v6190 = vsel %vm5031, %v5979, 0
      %6192 = vmatpush.msra.mxu0 %v6110
      %6193 = vmatpush.msra.mxu0 %v6109
      %6194 = vmatpush.msra.mxu0 %v6108
      %6195 = vmatpush.msra.mxu0 %v6107
      %6196 = vmatpush.msra.mxu0 %v6106
      %6197 = vmatpush.msra.mxu0 %v6105
      %6198 = vmatpush.msra.mxu0 %v6104
      %6199 = vmatpush.msra.mxu0 %v6103
      %6200 = vmatpush.msra.mxu0 %v6102
      %6201 = vmatpush.msra.mxu0 %v6101
      %6202 = vmatpush.msra.mxu0 %v6100
      %6203 = vmatpush.msra.mxu0 %v6099
      %6204 = vmatpush.msra.mxu0 %v6098
      %6205 = vmatpush.msra.mxu0 %v6097
      %6206 = vmatpush.msra.mxu0 %v6096
      %6207 = vmatpush.msra.mxu0 %v6095
      %6208 = vmatmul.f32.gmra.mxu0 %v6072
      %v6209 = vpop.f32.mrf.mxu0
      %v6210 = vadd.f32 %v6121, %v6209
      %6211 = vmatmul.f32.gmra.mxu0 %v6073
      %v6212 = vpop.f32.mrf.mxu0
      %v6213 = vadd.f32 %v6121, %v6212
      %6214 = vmatmul.f32.gmra.mxu0 %v6074
      %v6215 = vpop.f32.mrf.mxu0
      %v6216 = vadd.f32 %v6121, %v6215
      %6217 = vmatmul.f32.gmra.mxu0 %v6075
      %v6218 = vpop.f32.mrf.mxu0
      %v6219 = vadd.f32 %v6121, %v6218
      %6220 = vmatmul.f32.gmra.mxu0 %v6076
      %v6221 = vpop.f32.mrf.mxu0
      %v6222 = vadd.f32 %v6121, %v6221
      %6223 = vmatmul.f32.gmra.mxu0 %v6077
      %v6224 = vpop.f32.mrf.mxu0
      %v6225 = vadd.f32 %v6121, %v6224
      %6226 = vmatmul.f32.gmra.mxu0 %v6078
      %v6227 = vpop.f32.mrf.mxu0
      %v6228 = vadd.f32 %v6121, %v6227
      %6229 = vmatmul.f32.gmra.mxu0 %v6079
      %v6230 = vpop.f32.mrf.mxu0
      %v6231 = vadd.f32 %v6121, %v6230
      %6232 = vmatmul.f32.gmra.mxu0 %v6080
      %v6233 = vpop.f32.mrf.mxu0
      %v6234 = vadd.f32 %v6121, %v6233
      %6235 = vmatmul.f32.gmra.mxu0 %v6081
      %v6236 = vpop.f32.mrf.mxu0
      %v6237 = vadd.f32 %v6121, %v6236
      %6238 = vmatmul.f32.gmra.mxu0 %v6082
      %v6239 = vpop.f32.mrf.mxu0
      %v6240 = vadd.f32 %v6121, %v6239
      %6241 = vmatmul.f32.gmra.mxu0 %v6083
      %v6242 = vpop.f32.mrf.mxu0
      %v6243 = vadd.f32 %v6121, %v6242
      %6244 = vmatmul.f32.gmra.mxu0 %v6084
      %v6245 = vpop.f32.mrf.mxu0
      %v6246 = vadd.f32 %v6121, %v6245
      %6247 = vmatmul.f32.gmra.mxu0 %v6085
      %v6248 = vpop.f32.mrf.mxu0
      %v6249 = vadd.f32 %v6121, %v6248
      %6250 = vmatmul.f32.gmra.mxu0 %v6086
      %v6251 = vpop.f32.mrf.mxu0
      %v6252 = vadd.f32 %v6121, %v6251
      %6253 = vmatmul.f32.gmra.mxu0 %v6087
      %v6254 = vpop.f32.mrf.mxu0
      %v6255 = vadd.f32 %v6121, %v6254
      %6256 = vmatmul.f32.gmra.mxu0 %v6088
      %v6257 = vpop.f32.mrf.mxu0
      %v6258 = vadd.f32 %v6121, %v6257
      %6259 = vmatmul.f32.gmra.mxu0 %v6089
      %v6260 = vpop.f32.mrf.mxu0
      %v6261 = vadd.f32 %v6121, %v6260
      %6262 = vmatmul.f32.gmra.mxu0 %v6090
      %v6263 = vpop.f32.mrf.mxu0
      %v6264 = vadd.f32 %v6121, %v6263
      %6265 = vmatmul.f32.gmra.mxu0 %v6091
      %v6266 = vpop.f32.mrf.mxu0
      %v6267 = vadd.f32 %v6121, %v6266
      %6268 = vmatmul.f32.gmra.mxu0 %v6092
      %v6269 = vpop.f32.mrf.mxu0
      %v6270 = vadd.f32 %v6121, %v6269
      %6271 = vmatmul.f32.gmra.mxu0 %v6093
      %v6272 = vpop.f32.mrf.mxu0
      %v6273 = vadd.f32 %v6121, %v6272
      %6274 = vmatmul.f32.gmra.mxu0 %v6094
      %v6275 = vpop.f32.mrf.mxu0
      %v6276 = vadd.f32 %v6121, %v6275
      %6277 = vdwg.mxu0
      %6278 = vmatpush.msra.mxu0 0.0
      %6279 = vmatpush.msra.mxu0 0.0
      %6280 = vmatpush.msra.mxu0 0.0
      %6281 = vmatpush.msra.mxu0 0.0
      %6282 = vmatpush.msra.mxu0 0.0
      %6283 = vmatpush.msra.mxu0 0.0
      %6284 = vmatpush.msra.mxu0 0.0
      %6285 = vmatpush.msra.mxu0 0.0
      %6286 = vmatpush.msra.mxu0 %v6118
      %6287 = vmatpush.msra.mxu0 %v6117
      %6288 = vmatpush.msra.mxu0 %v6116
      %6289 = vmatpush.msra.mxu0 %v6115
      %6290 = vmatpush.msra.mxu0 %v6114
      %6291 = vmatpush.msra.mxu0 %v6113
      %6292 = vmatpush.msra.mxu0 %v6112
      %6293 = vmatpush.msra.mxu0 %v6111
      %6294 = vmatmul.f32.gmra.mxu0 %v6124
      %v6295 = vpop.f32.mrf.mxu0
      %v6296 = vadd.f32 %v6210, %v6295
      %6297 = vmatmul.f32.gmra.mxu0 %v6127
      %v6298 = vpop.f32.mrf.mxu0
      %v6299 = vadd.f32 %v6213, %v6298
      %6300 = vmatmul.f32.gmra.mxu0 %v6130
      %v6301 = vpop.f32.mrf.mxu0
      %v6302 = vadd.f32 %v6216, %v6301
      %6303 = vmatmul.f32.gmra.mxu0 %v6133
      %v6304 = vpop.f32.mrf.mxu0
      %v6305 = vadd.f32 %v6219, %v6304
      %6306 = vmatmul.f32.gmra.mxu0 %v6136
      %v6307 = vpop.f32.mrf.mxu0
      %v6308 = vadd.f32 %v6222, %v6307
      %6309 = vmatmul.f32.gmra.mxu0 %v6139
      %v6310 = vpop.f32.mrf.mxu0
      %v6311 = vadd.f32 %v6225, %v6310
      %6312 = vmatmul.f32.gmra.mxu0 %v6142
      %v6313 = vpop.f32.mrf.mxu0
      %v6314 = vadd.f32 %v6228, %v6313
      %6315 = vmatmul.f32.gmra.mxu0 %v6145
      %v6316 = vpop.f32.mrf.mxu0
      %v6317 = vadd.f32 %v6231, %v6316
      %6318 = vmatmul.f32.gmra.mxu0 %v6148
      %v6319 = vpop.f32.mrf.mxu0
      %v6320 = vadd.f32 %v6234, %v6319
      %6321 = vmatmul.f32.gmra.mxu0 %v6151
      %v6322 = vpop.f32.mrf.mxu0
      %v6323 = vadd.f32 %v6237, %v6322
      %6324 = vmatmul.f32.gmra.mxu0 %v6154
      %v6325 = vpop.f32.mrf.mxu0
      %v6326 = vadd.f32 %v6240, %v6325
      %6327 = vmatmul.f32.gmra.mxu0 %v6157
      %v6328 = vpop.f32.mrf.mxu0
      %v6329 = vadd.f32 %v6243, %v6328
      %6330 = vmatmul.f32.gmra.mxu0 %v6160
      %v6331 = vpop.f32.mrf.mxu0
      %v6332 = vadd.f32 %v6246, %v6331
      %6333 = vmatmul.f32.gmra.mxu0 %v6163
      %v6334 = vpop.f32.mrf.mxu0
      %v6335 = vadd.f32 %v6249, %v6334
      %6336 = vmatmul.f32.gmra.mxu0 %v6166
      %v6337 = vpop.f32.mrf.mxu0
      %v6338 = vadd.f32 %v6252, %v6337
      %6339 = vmatmul.f32.gmra.mxu0 %v6169
      %v6340 = vpop.f32.mrf.mxu0
      %v6341 = vadd.f32 %v6255, %v6340
      %6342 = vmatmul.f32.gmra.mxu0 %v6172
      %v6343 = vpop.f32.mrf.mxu0
      %v6344 = vadd.f32 %v6258, %v6343
      %6345 = vmatmul.f32.gmra.mxu0 %v6175
      %v6346 = vpop.f32.mrf.mxu0
      %v6347 = vadd.f32 %v6261, %v6346
      %6348 = vmatmul.f32.gmra.mxu0 %v6178
      %v6349 = vpop.f32.mrf.mxu0
      %v6350 = vadd.f32 %v6264, %v6349
      %6351 = vmatmul.f32.gmra.mxu0 %v6181
      %v6352 = vpop.f32.mrf.mxu0
      %v6353 = vadd.f32 %v6267, %v6352
      %6354 = vmatmul.f32.gmra.mxu0 %v6184
      %v6355 = vpop.f32.mrf.mxu0
      %v6356 = vadd.f32 %v6270, %v6355
      %6357 = vmatmul.f32.gmra.mxu0 %v6187
      %v6358 = vpop.f32.mrf.mxu0
      %v6359 = vadd.f32 %v6273, %v6358
      %6360 = vmatmul.f32.gmra.mxu0 %v6190
      %v6361 = vpop.f32.mrf.mxu0
      %v6362 = vadd.f32 %v6276, %v6361
      %6363 = vdwg.mxu0
      %v6364 = vmax.f32 %v6296, 0.0
      %v6365 = vmax.f32 %v6299, 0.0
      %v6366 = vmax.f32 %v6302, 0.0
      %v6367 = vmax.f32 %v6305, 0.0
      %v6368 = vmax.f32 %v6308, 0.0
      %v6369 = vmax.f32 %v6311, 0.0
      %v6370 = vmax.f32 %v6314, 0.0
      %v6371 = vmax.f32 %v6317, 0.0
      %v6372 = vmax.f32 %v6320, 0.0
      %v6373 = vmax.f32 %v6323, 0.0
      %v6374 = vmax.f32 %v6326, 0.0
      %v6375 = vmax.f32 %v6329, 0.0
      %v6376 = vmax.f32 %v6332, 0.0
      %v6377 = vmax.f32 %v6335, 0.0
      %v6378 = vmax.f32 %v6338, 0.0
      %v6379 = vmax.f32 %v6341, 0.0
      %v6380 = vmax.f32 %v6344, 0.0
      %v6381 = vmax.f32 %v6347, 0.0
      %v6382 = vmax.f32 %v6350, 0.0
      %v6383 = vmax.f32 %v6353, 0.0
      %v6384 = vmax.f32 %v6356, 0.0
      %v6385 = vmax.f32 %v6359, 0.0
      %v6386 = vmax.f32 %v6362, 0.0
      %vm6387 = vcmask 130048
      %6388 = vst.msk [vmem:[#allocation7] sm:$0xff] %vm6387, %v6364
      %6389 = vst.msk [vmem:[#allocation7 + $0x8] sm:$0xff] %vm6387, %v6365
      %6390 = vst.msk [vmem:[#allocation7 + $0x10] sm:$0xff] %vm6387, %v6366
      %6391 = vst.msk [vmem:[#allocation7 + $0x18] sm:$0xff] %vm6387, %v6367
      %6392 = vst.msk [vmem:[#allocation7 + $0x20] sm:$0xff] %vm6387, %v6368
      %6393 = vst.msk [vmem:[#allocation7 + $0x28] sm:$0xff] %vm6387, %v6369
      %6394 = vst.msk [vmem:[#allocation7 + $0x30] sm:$0xff] %vm6387, %v6370
      %6395 = vst.msk [vmem:[#allocation7 + $0x38] sm:$0xff] %vm6387, %v6371
      %6396 = vst.msk [vmem:[#allocation7 + $0x40] sm:$0xff] %vm6387, %v6372
      %6397 = vst.msk [vmem:[#allocation7 + $0x48] sm:$0xff] %vm6387, %v6373
      %6398 = vst.msk [vmem:[#allocation7 + $0x50] sm:$0xff] %vm6387, %v6374
      %6399 = vst.msk [vmem:[#allocation7 + $0x58] sm:$0xff] %vm6387, %v6375
      %6400 = vst.msk [vmem:[#allocation7 + $0x60] sm:$0xff] %vm6387, %v6376
      %6401 = vst.msk [vmem:[#allocation7 + $0x68] sm:$0xff] %vm6387, %v6377
      %6402 = vst.msk [vmem:[#allocation7 + $0x70] sm:$0xff] %vm6387, %v6378
      %6403 = vst.msk [vmem:[#allocation7 + $0x78] sm:$0xff] %vm6387, %v6379
      %6404 = vst.msk [vmem:[#allocation7 + $0x80] sm:$0xff] %vm6387, %v6380
      %6405 = vst.msk [vmem:[#allocation7 + $0x88] sm:$0xff] %vm6387, %v6381
      %6406 = vst.msk [vmem:[#allocation7 + $0x90] sm:$0xff] %vm6387, %v6382
      %6407 = vst.msk [vmem:[#allocation7 + $0x98] sm:$0xff] %vm6387, %v6383
      %6408 = vst.msk [vmem:[#allocation7 + $0xa0] sm:$0xff] %vm6387, %v6384
      %6409 = vst.msk [vmem:[#allocation7 + $0xa8] sm:$0xff] %vm6387, %v6385
      %vm6410 = vcmask 125952
      %6411 = vst.msk [vmem:[#allocation7 + $0xb0] sm:$0xf] %vm6410, %v6386
      %v6412 = vld [vmem:[#allocation7] ss:$2 sm:$0xff]
      %s6413 = scalar_lea.vmem [#allocation7], 16
      %v6414 = vld [vmem:[%s6413] ss:$2 sm:$0xff]
      %s6415 = scalar_lea.vmem [#allocation7], 32
      %v6416 = vld [vmem:[%s6415] ss:$2 sm:$0xff]
      %s6417 = scalar_lea.vmem [#allocation7], 48
      %v6418 = vld [vmem:[%s6417] ss:$2 sm:$0xff]
      %s6419 = scalar_lea.vmem [#allocation7], 64
      %v6420 = vld [vmem:[%s6419] ss:$2 sm:$0xff]
      %s6421 = scalar_lea.vmem [#allocation7], 80
      %v6422 = vld [vmem:[%s6421] ss:$2 sm:$0xff]
      %s6423 = scalar_lea.vmem [#allocation7], 96
      %v6424 = vld [vmem:[%s6423] ss:$2 sm:$0xff]
      %s6425 = scalar_lea.vmem [#allocation7], 112
      %v6426 = vld [vmem:[%s6425] ss:$2 sm:$0xff]
      %s6427 = scalar_lea.vmem [#allocation7], 128
      %v6428 = vld [vmem:[%s6427] ss:$2 sm:$0xff]
      %s6429 = scalar_lea.vmem [#allocation7], 144
      %v6430 = vld [vmem:[%s6429] ss:$2 sm:$0xff]
      %s6431 = scalar_lea.vmem [#allocation7], 160
      %v6432 = vld [vmem:[%s6431] ss:$2 sm:$0xff]
      %s6433 = scalar_lea.vmem [#allocation7], 176
      %v6434 = vld [vmem:[%s6433] ss:$2 sm:$0x3]
      %s6435 = scalar_lea.vmem [#allocation7], 1
      %v6436 = vld [vmem:[%s6435] ss:$2 sm:$0xff]
      %s6437 = scalar_lea.vmem [#allocation7], 17
      %v6438 = vld [vmem:[%s6437] ss:$2 sm:$0xff]
      %s6439 = scalar_lea.vmem [#allocation7], 33
      %v6440 = vld [vmem:[%s6439] ss:$2 sm:$0xff]
      %s6441 = scalar_lea.vmem [#allocation7], 49
      %v6442 = vld [vmem:[%s6441] ss:$2 sm:$0xff]
      %s6443 = scalar_lea.vmem [#allocation7], 65
      %v6444 = vld [vmem:[%s6443] ss:$2 sm:$0xff]
      %s6445 = scalar_lea.vmem [#allocation7], 81
      %v6446 = vld [vmem:[%s6445] ss:$2 sm:$0xff]
      %s6447 = scalar_lea.vmem [#allocation7], 97
      %v6448 = vld [vmem:[%s6447] ss:$2 sm:$0xff]
      %s6449 = scalar_lea.vmem [#allocation7], 113
      %v6450 = vld [vmem:[%s6449] ss:$2 sm:$0xff]
      %s6451 = scalar_lea.vmem [#allocation7], 129
      %v6452 = vld [vmem:[%s6451] ss:$2 sm:$0xff]
      %s6453 = scalar_lea.vmem [#allocation7], 145
      %v6454 = vld [vmem:[%s6453] ss:$2 sm:$0xff]
      %s6455 = scalar_lea.vmem [#allocation7], 161
      %v6456 = vld [vmem:[%s6455] ss:$2 sm:$0xff]
      %s6457 = scalar_lea.vmem [#allocation7], 177
      %v6458 = vld [vmem:[%s6457] ss:$2 sm:$0x3]
      %v6459 = vmax.f32 %v6412, %v6436
      %v6460 = vmax.f32 %v6414, %v6438
      %v6461 = vmax.f32 %v6416, %v6440
      %v6462 = vmax.f32 %v6418, %v6442
      %v6463 = vmax.f32 %v6420, %v6444
      %v6464 = vmax.f32 %v6422, %v6446
      %v6465 = vmax.f32 %v6424, %v6448
      %v6466 = vmax.f32 %v6426, %v6450
      %v6467 = vmax.f32 %v6428, %v6452
      %v6468 = vmax.f32 %v6430, %v6454
      %v6469 = vmax.f32 %v6432, %v6456
      %v6470 = vmax.f32 %v6434, %v6458
      %6471 = vst.msk [vmem:[%s359] sm:$0xff] %vm6387, %v6459
      %6472 = vst.msk [vmem:[%s359 + $0x8] sm:$0xff] %vm6387, %v6460
      %6473 = vst.msk [vmem:[%s359 + $0x10] sm:$0xff] %vm6387, %v6461
      %6474 = vst.msk [vmem:[%s359 + $0x18] sm:$0xff] %vm6387, %v6462
      %6475 = vst.msk [vmem:[%s359 + $0x20] sm:$0xff] %vm6387, %v6463
      %6476 = vst.msk [vmem:[%s359 + $0x28] sm:$0xff] %vm6387, %v6464
      %6477 = vst.msk [vmem:[%s359 + $0x30] sm:$0xff] %vm6387, %v6465
      %6478 = vst.msk [vmem:[%s359 + $0x38] sm:$0xff] %vm6387, %v6466
      %6479 = vst.msk [vmem:[%s359 + $0x40] sm:$0xff] %vm6387, %v6467
      %6480 = vst.msk [vmem:[%s359 + $0x48] sm:$0xff] %vm6387, %v6468
      %6481 = vst.msk [vmem:[%s359 + $0x50] sm:$0xff] %vm6387, %v6469
      %vm6482 = vcmask 123904
      %6483 = vst.msk [vmem:[%s359 + $0x58] sm:$0x3] %vm6482, %v6470
      %p6484 = scmp.lt.s32.totalorder %s21, 1
      %s6485 = scalar_select %p6484, %s21, 1
      %s6486 = smul.addr %s6485, 12
      %s6487 = smul.addr %s6486, 8
      %s6488 = scalar_lea.vmem %s10, %s6487
      // Predicated region
      $region61: #{tpu_custom_call.1} parent=59 // pred_check
        %p6489 = pneg %p254
      $region62: #{tpu_custom_call.1} parent=59 // pred_check_branch
        %6491 = sbr.rel (%p6489) target = $region64
      $region63: #{tpu_custom_call.1} parent=59 // pred_region
        _
      $region64: #{tpu_custom_call.1} parent=59 // pred_fallthru
        _
    $region60: #{tpu_custom_call.1} parent=5 // pred_fallthru
      _
    %p6492 = scmp.le.s32.totalorder 2, %s16
    // Predicated region
    $region65: #{tpu_custom_call.1} parent=5 // pred_check
      %p6493 = pneg %p6492
    $region66: #{tpu_custom_call.1} parent=5 // pred_check_branch
      %6495 = sbr.rel (%p6493) target = $region68
    $region67: #{tpu_custom_call.1} parent=5 // pred_region
      %s6496 = ssub.s32 %s16, 2
      // Predicated region
      $region69: #{tpu_custom_call.1} parent=67 // pred_check
        %p6497 = pneg %p260
      $region70: #{tpu_custom_call.1} parent=67 // pred_check_branch
        %6499 = sbr.rel (%p6497) target = $region72
      $region71: #{tpu_custom_call.1} parent=67 // pred_region
        %p6500 = scmp.lt.s32.totalorder %s22, 1
        %s6501 = scalar_select %p6500, %s22, 1
        %s6502 = smul.addr %s6501, 12
        %s6503 = smul.addr %s6502, 8
        %s6504 = scalar_lea.vmem %s10, %s6503
      $region72: #{tpu_custom_call.1} parent=67 // pred_fallthru
        _
    $region68: #{tpu_custom_call.1} parent=5 // pred_fallthru
      _
  $region6: #{tpu_custom_call.1} parent=0 // loop_footer
    %s20 = sadd.s32 1, %s16
  $region7: #{tpu_custom_call.1} parent=0 // loop_footer_branch
    %15 = sbr.rel target = $region3
  $region8: #{tpu_custom_call.1} parent=0 // loop_exit
    _

</llo_original>
